<compile_context>
chip_gen: v6e
topology: v6e:2x2x1
jax: 0.10.0
libtpu: 0.0.40
codegen_flags: <defaults>
</compile_context>

<pallas_src>
import functools

import jax
import jax.numpy as jnp
from jax import lax
from jax.experimental import pallas as pl
from jax.experimental.pallas import tpu as pltpu


def _resblock_kernel(x_ref, hal_ref, w1_ref, b1_ref, w2t_ref, b2_ref, out_ref,
                     s_ref, m_ref, slab_ref, *, res_scale, th, w, c, k):
    # x_ref   : (1, C, TH*W)      lane-dense input row-tile (channels x pixels)
    # hal_ref : (1, 4p, W, C)     2p rows above + 2p rows below the tile (zeros at image edge)
    # w1_ref  : (K*K*C, C)  bf16  conv1 weights, im2col layout
    # b1_ref  : (1, C)      f32
    # w2t_ref : (C, K*K*C)  bf16  conv2 weights, transposed im2col layout
    # b2_ref  : (C, 1)      f32
    # out_ref : (1, C, TH*W)      lane-dense output row-tile
    # s_ref   : (TH+4p, W+4p, C)  f32 scratch: zero-padded input tile
    # m_ref   : (TH+2p, W+2p, C)  f32 scratch: conv1 output incl. p-px halo
    # slab_ref: ((TH+2p)*(W+2p), K*K*C) bf16 scratch: im2col slab (reused by both convs)
    p = k // 2
    oh, ow = th + 2 * p, w + 2 * p
    np1 = oh * ow                       # conv1 output pixels (incl. halo)
    np2 = th * w                        # conv2 / final output pixels
    r = pl.program_id(1)
    last_r = pl.num_programs(1) - 1

    # ---- assemble zero-padded input tile in s_ref -------------------------
    # interior: (C, TH*W) lane-dense block -> (TH, W, C) via one 2-D transpose
    x_hwc = jnp.transpose(x_ref[0]).reshape(th, w, c)
    s_ref[2 * p:2 * p + th, 2 * p:2 * p + w, :] = x_hwc
    # top / bottom row halo (already zero at the image boundary, host-prepared)
    halo = hal_ref[0]                                            # (4p, W, C)
    s_ref[0:2 * p, 2 * p:2 * p + w, :] = halo[0:2 * p]
    s_ref[2 * p + th:4 * p + th, 2 * p:2 * p + w, :] = halo[2 * p:4 * p]
    # left / right zero border columns (tiny; rewritten every step so grid
    # steps carry no state and both axes can be "parallel")
    zcol = jnp.zeros((th + 4 * p, 2 * p, c), jnp.float32)
    s_ref[:, 0:2 * p, :] = zcol
    s_ref[:, 2 * p + w:4 * p + w, :] = zcol

    # ---- conv1: im2col slab + single MXU matmul ---------------------------
    for kh in range(k):
        for kw in range(k):
            t = kh * k + kw
            patch = s_ref[kh:kh + oh, kw:kw + ow, :]             # (oh, ow, C)
            slab_ref[0:np1, t * c:(t + 1) * c] = (
                patch.reshape(np1, c).astype(jnp.bfloat16))
    z1 = jnp.dot(slab_ref[0:np1, :], w1_ref[...],
                 preferred_element_type=jnp.float32)             # (np1, C) f32
    y1 = jnp.maximum(z1 + b1_ref[...], 0.0)
    m_ref[...] = y1.reshape(oh, ow, c)

    # conv2's input must be exactly zero OUTSIDE the image (SAME padding of the
    # intermediate): zero the column border always, the row border only at the
    # top / bottom tiles of the image.
    zc = jnp.zeros((oh, p, c), jnp.float32)
    m_ref[:, 0:p, :] = zc
    m_ref[:, w + p:w + 2 * p, :] = zc

    @pl.when(r == 0)
    def _():
        m_ref[0:p, :, :] = jnp.zeros((p, ow, c), jnp.float32)

    @pl.when(r == last_r)
    def _():
        m_ref[th + p:th + 2 * p, :, :] = jnp.zeros((p, ow, c), jnp.float32)

    # ---- conv2: im2col slab + matmul against pre-transposed weights so the
    # result lands directly in the lane-dense (C, TH*W) output layout ---------
    for kh in range(k):
        for kw in range(k):
            t = kh * k + kw
            patch = m_ref[kh:kh + th, kw:kw + w, :]              # (TH, W, C)
            slab_ref[0:np2, t * c:(t + 1) * c] = (
                patch.reshape(np2, c).astype(jnp.bfloat16))
    z2 = lax.dot_general(w2t_ref[...], slab_ref[0:np2, :],
                         dimension_numbers=(((1,), (1,)), ((), ())),
                         preferred_element_type=jnp.float32)     # (C, TH*W) f32

    # ---- residual scale + add, lane-dense store ---------------------------
    out_ref[0] = ((z2 + b2_ref[...]) * res_scale + x_ref[0]).astype(out_ref.dtype)


def _pick_row_tile(h, w, p, target):
    """Largest divisor TH of H with TH*W a multiple of 128 (lane-dense blocks)
    and TH >= 2p (row halo fits in one neighbouring tile); falls back to TH=H."""
    for t in range(min(target, h), 2 * p - 1, -1):
        if h % t == 0 and (t * w) % 128 == 0:
            return t
    return h


def resblock_pallas(x_nchw, w1, b1, w2, b2, res_scale=1.0, row_tile=64):
    """x_nchw: (N, C, H, W) float32.  Weights HWIO (K, K, C, C), biases (C,)."""
    n, c, h, w = x_nchw.shape
    k = w1.shape[0]
    assert w1.shape == (k, k, c, c) and w2.shape == (k, k, c, c)
    assert k % 2 == 1 and k >= 3
    p = k // 2

    th = _pick_row_tile(h, w, p, row_tile)
    r_tiles = h // th

    x_flat = x_nchw.reshape(n, c, h * w)

    # Host-side halo rows for every row tile (zeros at the image top / bottom).
    # Only 4p rows per tile are duplicated; the full input is never padded or
    # transposed on the host.
    if r_tiles > 1:
        x5 = x_nchw.reshape(n, c, r_tiles, th, w)
        zrows = jnp.zeros((n, c, 1, 2 * p, w), x_nchw.dtype)
        tops = jnp.concatenate(
            [zrows, x5[:, :, :r_tiles - 1, th - 2 * p:, :]], axis=2)
        bots = jnp.concatenate(
            [x5[:, :, 1:, :2 * p, :], zrows], axis=2)
        hal = jnp.concatenate([tops, bots], axis=3)          # (N, C, R, 4p, W)
        hal = jnp.transpose(hal, (0, 2, 3, 4, 1)).reshape(
            n * r_tiles, 4 * p, w, c)
    else:
        hal = jnp.zeros((n * r_tiles, 4 * p, w, c), x_nchw.dtype)

    # matmul operands: im2col weight layouts, bf16 (f32 accumulation on the MXU)
    w1m = w1.reshape(k * k * c, c).astype(jnp.bfloat16)
    w2t = jnp.transpose(w2.reshape(k * k * c, c)).astype(jnp.bfloat16)
    b1r = b1.reshape(1, c).astype(jnp.float32)
    b2r = b2.reshape(c, 1).astype(jnp.float32)

    kernel = functools.partial(_resblock_kernel, res_scale=float(res_scale),
                               th=th, w=w, c=c, k=k)

    out_flat = pl.pallas_call(
        kernel,
        out_shape=jax.ShapeDtypeStruct((n, c, h * w), x_nchw.dtype),
        grid_spec=pltpu.PrefetchScalarGridSpec(
            num_scalar_prefetch=0,
            grid=(n, r_tiles),
            in_specs=[
                pl.BlockSpec((1, c, th * w), lambda b, r: (b, 0, r)),
                pl.BlockSpec((1, 4 * p, w, c),
                             lambda b, r: (b * r_tiles + r, 0, 0, 0)),
                pl.BlockSpec((k * k * c, c), lambda b, r: (0, 0)),
                pl.BlockSpec((1, c), lambda b, r: (0, 0)),
                pl.BlockSpec((c, k * k * c), lambda b, r: (0, 0)),
                pl.BlockSpec((c, 1), lambda b, r: (0, 0)),
            ],
            out_specs=pl.BlockSpec((1, c, th * w), lambda b, r: (b, 0, r)),
            scratch_shapes=[
                pltpu.VMEM((th + 4 * p, w + 4 * p, c), jnp.float32),   # padded input tile
                pltpu.VMEM((th + 2 * p, w + 2 * p, c), jnp.float32),   # conv1 output (+halo)
                pltpu.VMEM(((th + 2 * p) * (w + 2 * p), k * k * c),
                           jnp.bfloat16),                              # im2col slab
            ],
        ),
        compiler_params=pltpu.CompilerParams(
            dimension_semantics=("parallel", "parallel"),
            vmem_limit_bytes=48 * 1024 * 1024),
    )(x_flat, hal, w1m, b1r, w2t, b2r)

    return out_flat.reshape(n, c, h, w)


def _reference(x_nchw, w1, b1, w2, b2, res_scale):
    # pure-JAX reference using lax.conv_general_dilated (NHWC / HWIO), f32
    x = jnp.transpose(x_nchw, (0, 2, 3, 1))
    dn = lax.conv_dimension_numbers(x.shape, w1.shape, ("NHWC", "HWIO", "NHWC"))
    y = lax.conv_general_dilated(x, w1, (1, 1), "SAME", dimension_numbers=dn) + b1
    y = jnp.maximum(y, 0.0)
    y = lax.conv_general_dilated(y, w2, (1, 1), "SAME", dimension_numbers=dn) + b2
    y = y * res_scale + x
    return jnp.transpose(y, (0, 3, 1, 2))


if __name__ == "__main__":
    N, C, H, W = 2, 8, 16, 16
    K = 3
    res_scale = 1.0

    key = jax.random.PRNGKey(0)
    kx, kw1, kb1, kw2, kb2 = jax.random.split(key, 5)

    x = jax.random.normal(kx, (N, C, H, W), dtype=jnp.float32)
    # deterministic synthetic parameters (n_feat=C, kernel_size=3, bias=True)
    w1 = jax.random.normal(kw1, (K, K, C, C), dtype=jnp.float32) * 0.1
    b1 = jax.random.normal(kb1, (C,), dtype=jnp.float32) * 0.1
    w2 = jax.random.normal(kw2, (K, K, C, C), dtype=jnp.float32) * 0.1
    b2 = jax.random.normal(kb2, (C,), dtype=jnp.float32) * 0.1

    # row_tile=8 -> TH=8, 2 row tiles per image, grid = (2, 2): exercises the
    # halo path both at image boundaries and across interior tile boundaries.
    out = resblock_pallas(x, w1, b1, w2, b2, res_scale, row_tile=8)
    out = jax.block_until_ready(out)

    ref = _reference(x, w1, b1, w2, b2, res_scale)
    assert out.shape == (N, C, H, W)
    max_err = float(jnp.max(jnp.abs(out - ref)))
    # bf16 matmul inputs (f32 accumulation) -> ~1e-3-level absolute error budget
    assert jnp.allclose(out, ref, atol=5e-2, rtol=5e-2), f"max abs err {max_err}"

    print("KERNEL_OK")
</pallas_src>

<mosaic_0001>
module attributes {stable_mosaic.version = 11 : i64} {
  func.func @_resblock_kernel(%arg0: i32, %arg1: i32, %arg2: memref<1x8x128xf32, #tpu.memory_space<vmem>>, %arg3: memref<1x4x16x8xf32, #tpu.memory_space<vmem>>, %arg4: memref<72x8xbf16, #tpu.memory_space<vmem>>, %arg5: memref<1x8xf32, #tpu.memory_space<vmem>>, %arg6: memref<8x72xbf16, #tpu.memory_space<vmem>>, %arg7: memref<8x1xf32, #tpu.memory_space<vmem>>, %arg8: memref<1x8x128xf32, #tpu.memory_space<vmem>>, %arg9: memref<12x20x8xf32, #tpu.memory_space<vmem>>, %arg10: memref<10x18x8xf32, #tpu.memory_space<vmem>>, %arg11: memref<180x72xbf16, #tpu.memory_space<vmem>>) attributes {dimension_semantics = [#tpu.dimension_semantics<parallel>, #tpu.dimension_semantics<parallel>], iteration_bounds = array<i64: 2, 2>, scalar_prefetch = 0 : i64, scratch_operands = 3 : i64, tpu.core_type = #tpu.core_type<tc>, window_params = [{transform_indices = @transform_0, window_bounds = array<i64: 1, 8, 128>}, {transform_indices = @transform_1, window_bounds = array<i64: 1, 4, 16, 8>}, {pipeline_mode = #tpu.pipeline_mode<synchronous>, transform_indices = @transform_2, window_bounds = array<i64: 72, 8>}, {pipeline_mode = #tpu.pipeline_mode<synchronous>, transform_indices = @transform_3, window_bounds = array<i64: 1, 8>}, {pipeline_mode = #tpu.pipeline_mode<synchronous>, transform_indices = @transform_4, window_bounds = array<i64: 8, 72>}, {pipeline_mode = #tpu.pipeline_mode<synchronous>, transform_indices = @transform_5, window_bounds = array<i64: 8, 1>}, {transform_indices = @transform_6, window_bounds = array<i64: 1, 8, 128>}]} {
    %c0 = arith.constant 0 : index
    %c0_0 = arith.constant 0 : index
    %c0_1 = arith.constant 0 : index
    %0 = vector.load %arg2[%c0, %c0_0, %c0_1] : memref<1x8x128xf32, #tpu.memory_space<vmem>>, vector<1x8x128xf32>
    %1 = vector.shape_cast %0 : vector<1x8x128xf32> to vector<8x128xf32>
    %2 = tpu.transpose %1, [1, 0] : vector<8x128xf32> -> vector<128x8xf32>
    %3 = vector.shape_cast %2 : vector<128x8xf32> to vector<8x16x8xf32>
    %c2 = arith.constant 2 : index
    %c2_2 = arith.constant 2 : index
    %c0_3 = arith.constant 0 : index
    %4 = vector.load %arg9[%c2, %c2_2, %c0_3] : memref<12x20x8xf32, #tpu.memory_space<vmem>>, vector<8x16x8xf32>
    tpu.vector_store %arg9[%c2, %c2_2, %c0_3], %3 {strides = array<i32>} : memref<12x20x8xf32, #tpu.memory_space<vmem>>, vector<8x16x8xf32>,
    %c0_4 = arith.constant 0 : index
    %c0_5 = arith.constant 0 : index
    %c0_6 = arith.constant 0 : index
    %c0_7 = arith.constant 0 : index
    %5 = vector.load %arg3[%c0_4, %c0_5, %c0_6, %c0_7] : memref<1x4x16x8xf32, #tpu.memory_space<vmem>>, vector<1x4x16x8xf32>
    %6 = vector.shape_cast %5 : vector<1x4x16x8xf32> to vector<4x16x8xf32>
    %7 = vector.extract_strided_slice %6 {offsets = [0, 0, 0], sizes = [2, 16, 8], strides = [1, 1, 1]} : vector<4x16x8xf32> to vector<2x16x8xf32>
    %c0_8 = arith.constant 0 : index
    %c2_9 = arith.constant 2 : index
    %c0_10 = arith.constant 0 : index
    %8 = vector.load %arg9[%c0_8, %c2_9, %c0_10] : memref<12x20x8xf32, #tpu.memory_space<vmem>>, vector<2x16x8xf32>
    tpu.vector_store %arg9[%c0_8, %c2_9, %c0_10], %7 {strides = array<i32>} : memref<12x20x8xf32, #tpu.memory_space<vmem>>, vector<2x16x8xf32>,
    %9 = vector.extract_strided_slice %6 {offsets = [2, 0, 0], sizes = [2, 16, 8], strides = [1, 1, 1]} : vector<4x16x8xf32> to vector<2x16x8xf32>
    %c10 = arith.constant 10 : index
    %c2_11 = arith.constant 2 : index
    %c0_12 = arith.constant 0 : index
    %10 = vector.load %arg9[%c10, %c2_11, %c0_12] : memref<12x20x8xf32, #tpu.memory_space<vmem>>, vector<2x16x8xf32>
    tpu.vector_store %arg9[%c10, %c2_11, %c0_12], %9 {strides = array<i32>} : memref<12x20x8xf32, #tpu.memory_space<vmem>>, vector<2x16x8xf32>,
    %cst = arith.constant 0.000000e+00 : f32
    %11 = vector.broadcast %cst : f32 to vector<12x2x8xf32>
    %c0_13 = arith.constant 0 : index
    %c0_14 = arith.constant 0 : index
    %c0_15 = arith.constant 0 : index
    %12 = vector.load %arg9[%c0_13, %c0_14, %c0_15] : memref<12x20x8xf32, #tpu.memory_space<vmem>>, vector<12x2x8xf32>
    tpu.vector_store %arg9[%c0_13, %c0_14, %c0_15], %11 {strides = array<i32>} : memref<12x20x8xf32, #tpu.memory_space<vmem>>, vector<12x2x8xf32>,
    %c0_16 = arith.constant 0 : index
    %c18 = arith.constant 18 : index
    %c0_17 = arith.constant 0 : index
    %13 = vector.load %arg9[%c0_16, %c18, %c0_17] : memref<12x20x8xf32, #tpu.memory_space<vmem>>, vector<12x2x8xf32>
    tpu.vector_store %arg9[%c0_16, %c18, %c0_17], %11 {strides = array<i32>} : memref<12x20x8xf32, #tpu.memory_space<vmem>>, vector<12x2x8xf32>,
    %c0_18 = arith.constant 0 : index
    %c0_19 = arith.constant 0 : index
    %c0_20 = arith.constant 0 : index
    %14 = vector.load %arg9[%c0_18, %c0_19, %c0_20] : memref<12x20x8xf32, #tpu.memory_space<vmem>>, vector<10x18x8xf32>
    %15 = vector.shape_cast %14 : vector<10x18x8xf32> to vector<180x8xf32>
    %16 = arith.truncf %15 : vector<180x8xf32> to vector<180x8xbf16>
    %c0_21 = arith.constant 0 : index
    %c0_22 = arith.constant 0 : index
    %17 = vector.load %arg11[%c0_21, %c0_22] : memref<180x72xbf16, #tpu.memory_space<vmem>>, vector<180x8xbf16>
    tpu.vector_store %arg11[%c0_21, %c0_22], %16 {strides = array<i32>} : memref<180x72xbf16, #tpu.memory_space<vmem>>, vector<180x8xbf16>,
    %c0_23 = arith.constant 0 : index
    %c1 = arith.constant 1 : index
    %c0_24 = arith.constant 0 : index
    %18 = vector.load %arg9[%c0_23, %c1, %c0_24] : memref<12x20x8xf32, #tpu.memory_space<vmem>>, vector<10x18x8xf32>
    %19 = vector.shape_cast %18 : vector<10x18x8xf32> to vector<180x8xf32>
    %20 = arith.truncf %19 : vector<180x8xf32> to vector<180x8xbf16>
    %c0_25 = arith.constant 0 : index
    %c8 = arith.constant 8 : index
    %21 = vector.load %arg11[%c0_25, %c8] : memref<180x72xbf16, #tpu.memory_space<vmem>>, vector<180x8xbf16>
    tpu.vector_store %arg11[%c0_25, %c8], %20 {strides = array<i32>} : memref<180x72xbf16, #tpu.memory_space<vmem>>, vector<180x8xbf16>,
    %c0_26 = arith.constant 0 : index
    %c2_27 = arith.constant 2 : index
    %c0_28 = arith.constant 0 : index
    %22 = vector.load %arg9[%c0_26, %c2_27, %c0_28] : memref<12x20x8xf32, #tpu.memory_space<vmem>>, vector<10x18x8xf32>
    %23 = vector.shape_cast %22 : vector<10x18x8xf32> to vector<180x8xf32>
    %24 = arith.truncf %23 : vector<180x8xf32> to vector<180x8xbf16>
    %c0_29 = arith.constant 0 : index
    %c16 = arith.constant 16 : index
    %25 = vector.load %arg11[%c0_29, %c16] : memref<180x72xbf16, #tpu.memory_space<vmem>>, vector<180x8xbf16>
    tpu.vector_store %arg11[%c0_29, %c16], %24 {strides = array<i32>} : memref<180x72xbf16, #tpu.memory_space<vmem>>, vector<180x8xbf16>,
    %c1_30 = arith.constant 1 : index
    %c0_31 = arith.constant 0 : index
    %c0_32 = arith.constant 0 : index
    %26 = vector.load %arg9[%c1_30, %c0_31, %c0_32] : memref<12x20x8xf32, #tpu.memory_space<vmem>>, vector<10x18x8xf32>
    %27 = vector.shape_cast %26 : vector<10x18x8xf32> to vector<180x8xf32>
    %28 = arith.truncf %27 : vector<180x8xf32> to vector<180x8xbf16>
    %c0_33 = arith.constant 0 : index
    %c24 = arith.constant 24 : index
    %29 = vector.load %arg11[%c0_33, %c24] : memref<180x72xbf16, #tpu.memory_space<vmem>>, vector<180x8xbf16>
    tpu.vector_store %arg11[%c0_33, %c24], %28 {strides = array<i32>} : memref<180x72xbf16, #tpu.memory_space<vmem>>, vector<180x8xbf16>,
    %c1_34 = arith.constant 1 : index
    %c1_35 = arith.constant 1 : index
    %c0_36 = arith.constant 0 : index
    %30 = vector.load %arg9[%c1_34, %c1_35, %c0_36] : memref<12x20x8xf32, #tpu.memory_space<vmem>>, vector<10x18x8xf32>
    %31 = vector.shape_cast %30 : vector<10x18x8xf32> to vector<180x8xf32>
    %32 = arith.truncf %31 : vector<180x8xf32> to vector<180x8xbf16>
    %c0_37 = arith.constant 0 : index
    %c32 = arith.constant 32 : index
    %33 = vector.load %arg11[%c0_37, %c32] : memref<180x72xbf16, #tpu.memory_space<vmem>>, vector<180x8xbf16>
    tpu.vector_store %arg11[%c0_37, %c32], %32 {strides = array<i32>} : memref<180x72xbf16, #tpu.memory_space<vmem>>, vector<180x8xbf16>,
    %c1_38 = arith.constant 1 : index
    %c2_39 = arith.constant 2 : index
    %c0_40 = arith.constant 0 : index
    %34 = vector.load %arg9[%c1_38, %c2_39, %c0_40] : memref<12x20x8xf32, #tpu.memory_space<vmem>>, vector<10x18x8xf32>
    %35 = vector.shape_cast %34 : vector<10x18x8xf32> to vector<180x8xf32>
    %36 = arith.truncf %35 : vector<180x8xf32> to vector<180x8xbf16>
    %c0_41 = arith.constant 0 : index
    %c40 = arith.constant 40 : index
    %37 = vector.load %arg11[%c0_41, %c40] : memref<180x72xbf16, #tpu.memory_space<vmem>>, vector<180x8xbf16>
    tpu.vector_store %arg11[%c0_41, %c40], %36 {strides = array<i32>} : memref<180x72xbf16, #tpu.memory_space<vmem>>, vector<180x8xbf16>,
    %c2_42 = arith.constant 2 : index
    %c0_43 = arith.constant 0 : index
    %c0_44 = arith.constant 0 : index
    %38 = vector.load %arg9[%c2_42, %c0_43, %c0_44] : memref<12x20x8xf32, #tpu.memory_space<vmem>>, vector<10x18x8xf32>
    %39 = vector.shape_cast %38 : vector<10x18x8xf32> to vector<180x8xf32>
    %40 = arith.truncf %39 : vector<180x8xf32> to vector<180x8xbf16>
    %c0_45 = arith.constant 0 : index
    %c48 = arith.constant 48 : index
    %41 = vector.load %arg11[%c0_45, %c48] : memref<180x72xbf16, #tpu.memory_space<vmem>>, vector<180x8xbf16>
    tpu.vector_store %arg11[%c0_45, %c48], %40 {strides = array<i32>} : memref<180x72xbf16, #tpu.memory_space<vmem>>, vector<180x8xbf16>,
    %c2_46 = arith.constant 2 : index
    %c1_47 = arith.constant 1 : index
    %c0_48 = arith.constant 0 : index
    %42 = vector.load %arg9[%c2_46, %c1_47, %c0_48] : memref<12x20x8xf32, #tpu.memory_space<vmem>>, vector<10x18x8xf32>
    %43 = vector.shape_cast %42 : vector<10x18x8xf32> to vector<180x8xf32>
    %44 = arith.truncf %43 : vector<180x8xf32> to vector<180x8xbf16>
    %c0_49 = arith.constant 0 : index
    %c56 = arith.constant 56 : index
    %45 = vector.load %arg11[%c0_49, %c56] : memref<180x72xbf16, #tpu.memory_space<vmem>>, vector<180x8xbf16>
    tpu.vector_store %arg11[%c0_49, %c56], %44 {strides = array<i32>} : memref<180x72xbf16, #tpu.memory_space<vmem>>, vector<180x8xbf16>,
    %c2_50 = arith.constant 2 : index
    %c2_51 = arith.constant 2 : index
    %c0_52 = arith.constant 0 : index
    %46 = vector.load %arg9[%c2_50, %c2_51, %c0_52] : memref<12x20x8xf32, #tpu.memory_space<vmem>>, vector<10x18x8xf32>
    %47 = vector.shape_cast %46 : vector<10x18x8xf32> to vector<180x8xf32>
    %48 = arith.truncf %47 : vector<180x8xf32> to vector<180x8xbf16>
    %c0_53 = arith.constant 0 : index
    %c64 = arith.constant 64 : index
    %49 = vector.load %arg11[%c0_53, %c64] : memref<180x72xbf16, #tpu.memory_space<vmem>>, vector<180x8xbf16>
    tpu.vector_store %arg11[%c0_53, %c64], %48 {strides = array<i32>} : memref<180x72xbf16, #tpu.memory_space<vmem>>, vector<180x8xbf16>,
    %c0_54 = arith.constant 0 : index
    %c0_55 = arith.constant 0 : index
    %50 = vector.load %arg11[%c0_54, %c0_55] : memref<180x72xbf16, #tpu.memory_space<vmem>>, vector<180x72xbf16>
    %c0_56 = arith.constant 0 : index
    %c0_57 = arith.constant 0 : index
    %51 = vector.load %arg4[%c0_56, %c0_57] : memref<72x8xbf16, #tpu.memory_space<vmem>>, vector<72x8xbf16>
    %cst_58 = arith.constant dense<0.000000e+00> : vector<180x8xf32>
    %52 = tpu.matmul %50, %51, %cst_58 {dimension_numbers = #tpu.dot_dimension_numbers<[1], [0], [0], [1], [0, 0, 1, 1], [], []>} : vector<180x72xbf16>, vector<72x8xbf16>, vector<180x8xf32> -> vector<180x8xf32>
    %c0_59 = arith.constant 0 : index
    %c0_60 = arith.constant 0 : index
    %53 = vector.load %arg5[%c0_59, %c0_60] : memref<1x8xf32, #tpu.memory_space<vmem>>, vector<1x8xf32>
    %54 = vector.broadcast %53 : vector<1x8xf32> to vector<180x8xf32>
    %55 = arith.addf %52, %54 : vector<180x8xf32>
    %cst_61 = arith.constant 0.000000e+00 : f32
    %56 = vector.broadcast %cst_61 : f32 to vector<180x8xf32>
    %57 = arith.maximumf %55, %56 : vector<180x8xf32>
    %58 = vector.shape_cast %57 : vector<180x8xf32> to vector<10x18x8xf32>
    %c0_62 = arith.constant 0 : index
    %c0_63 = arith.constant 0 : index
    %c0_64 = arith.constant 0 : index
    %59 = vector.load %arg10[%c0_62, %c0_63, %c0_64] : memref<10x18x8xf32, #tpu.memory_space<vmem>>, vector<10x18x8xf32>
    tpu.vector_store %arg10[%c0_62, %c0_63, %c0_64], %58 {strides = array<i32>} : memref<10x18x8xf32, #tpu.memory_space<vmem>>, vector<10x18x8xf32>,
    %cst_65 = arith.constant 0.000000e+00 : f32
    %60 = vector.broadcast %cst_65 : f32 to vector<10x1x8xf32>
    %c0_66 = arith.constant 0 : index
    %c0_67 = arith.constant 0 : index
    %c0_68 = arith.constant 0 : index
    %61 = vector.load %arg10[%c0_66, %c0_67, %c0_68] : memref<10x18x8xf32, #tpu.memory_space<vmem>>, vector<10x1x8xf32>
    tpu.vector_store %arg10[%c0_66, %c0_67, %c0_68], %60 {strides = array<i32>} : memref<10x18x8xf32, #tpu.memory_space<vmem>>, vector<10x1x8xf32>,
    %c0_69 = arith.constant 0 : index
    %c17 = arith.constant 17 : index
    %c0_70 = arith.constant 0 : index
    %62 = vector.load %arg10[%c0_69, %c17, %c0_70] : memref<10x18x8xf32, #tpu.memory_space<vmem>>, vector<10x1x8xf32>
    tpu.vector_store %arg10[%c0_69, %c17, %c0_70], %60 {strides = array<i32>} : memref<10x18x8xf32, #tpu.memory_space<vmem>>, vector<10x1x8xf32>,
    %c0_i32 = arith.constant 0 : i32
    %63 = arith.cmpi eq, %arg1, %c0_i32 : i32
    %64 = arith.extui %63 : i1 to i32
    %c0_i32_71 = arith.constant 0 : i32
    %65 = arith.cmpi ne, %64, %c0_i32_71 : i32
    scf.if %65 {
      %cst_132 = arith.constant 0.000000e+00 : f32
      %119 = vector.broadcast %cst_132 : f32 to vector<1x18x8xf32>
      %c0_133 = arith.constant 0 : index
      %c0_134 = arith.constant 0 : index
      %c0_135 = arith.constant 0 : index
      %120 = vector.load %arg10[%c0_133, %c0_134, %c0_135] : memref<10x18x8xf32, #tpu.memory_space<vmem>>, vector<1x18x8xf32>
      tpu.vector_store %arg10[%c0_133, %c0_134, %c0_135], %119 {strides = array<i32>} : memref<10x18x8xf32, #tpu.memory_space<vmem>>, vector<1x18x8xf32>,
    } else {
    }
    %c1_i32 = arith.constant 1 : i32
    %66 = arith.cmpi eq, %arg1, %c1_i32 : i32
    %67 = arith.extui %66 : i1 to i32
    %c0_i32_72 = arith.constant 0 : i32
    %68 = arith.cmpi ne, %67, %c0_i32_72 : i32
    scf.if %68 {
      %cst_132 = arith.constant 0.000000e+00 : f32
      %119 = vector.broadcast %cst_132 : f32 to vector<1x18x8xf32>
      %c9 = arith.constant 9 : index
      %c0_133 = arith.constant 0 : index
      %c0_134 = arith.constant 0 : index
      %120 = vector.load %arg10[%c9, %c0_133, %c0_134] : memref<10x18x8xf32, #tpu.memory_space<vmem>>, vector<1x18x8xf32>
      tpu.vector_store %arg10[%c9, %c0_133, %c0_134], %119 {strides = array<i32>} : memref<10x18x8xf32, #tpu.memory_space<vmem>>, vector<1x18x8xf32>,
    } else {
    }
    %c0_73 = arith.constant 0 : index
    %c0_74 = arith.constant 0 : index
    %c0_75 = arith.constant 0 : index
    %69 = vector.load %arg10[%c0_73, %c0_74, %c0_75] : memref<10x18x8xf32, #tpu.memory_space<vmem>>, vector<8x16x8xf32>
    %70 = vector.shape_cast %69 : vector<8x16x8xf32> to vector<128x8xf32>
    %71 = arith.truncf %70 : vector<128x8xf32> to vector<128x8xbf16>
    %c0_76 = arith.constant 0 : index
    %c0_77 = arith.constant 0 : index
    %72 = vector.load %arg11[%c0_76, %c0_77] : memref<180x72xbf16, #tpu.memory_space<vmem>>, vector<128x8xbf16>
    tpu.vector_store %arg11[%c0_76, %c0_77], %71 {strides = array<i32>} : memref<180x72xbf16, #tpu.memory_space<vmem>>, vector<128x8xbf16>,
    %c0_78 = arith.constant 0 : index
    %c1_79 = arith.constant 1 : index
    %c0_80 = arith.constant 0 : index
    %73 = vector.load %arg10[%c0_78, %c1_79, %c0_80] : memref<10x18x8xf32, #tpu.memory_space<vmem>>, vector<8x16x8xf32>
    %74 = vector.shape_cast %73 : vector<8x16x8xf32> to vector<128x8xf32>
    %75 = arith.truncf %74 : vector<128x8xf32> to vector<128x8xbf16>
    %c0_81 = arith.constant 0 : index
    %c8_82 = arith.constant 8 : index
    %76 = vector.load %arg11[%c0_81, %c8_82] : memref<180x72xbf16, #tpu.memory_space<vmem>>, vector<128x8xbf16>
    tpu.vector_store %arg11[%c0_81, %c8_82], %75 {strides = array<i32>} : memref<180x72xbf16, #tpu.memory_space<vmem>>, vector<128x8xbf16>,
    %c0_83 = arith.constant 0 : index
    %c2_84 = arith.constant 2 : index
    %c0_85 = arith.constant 0 : index
    %77 = vector.load %arg10[%c0_83, %c2_84, %c0_85] : memref<10x18x8xf32, #tpu.memory_space<vmem>>, vector<8x16x8xf32>
    %78 = vector.shape_cast %77 : vector<8x16x8xf32> to vector<128x8xf32>
    %79 = arith.truncf %78 : vector<128x8xf32> to vector<128x8xbf16>
    %c0_86 = arith.constant 0 : index
    %c16_87 = arith.constant 16 : index
    %80 = vector.load %arg11[%c0_86, %c16_87] : memref<180x72xbf16, #tpu.memory_space<vmem>>, vector<128x8xbf16>
    tpu.vector_store %arg11[%c0_86, %c16_87], %79 {strides = array<i32>} : memref<180x72xbf16, #tpu.memory_space<vmem>>, vector<128x8xbf16>,
    %c1_88 = arith.constant 1 : index
    %c0_89 = arith.constant 0 : index
    %c0_90 = arith.constant 0 : index
    %81 = vector.load %arg10[%c1_88, %c0_89, %c0_90] : memref<10x18x8xf32, #tpu.memory_space<vmem>>, vector<8x16x8xf32>
    %82 = vector.shape_cast %81 : vector<8x16x8xf32> to vector<128x8xf32>
    %83 = arith.truncf %82 : vector<128x8xf32> to vector<128x8xbf16>
    %c0_91 = arith.constant 0 : index
    %c24_92 = arith.constant 24 : index
    %84 = vector.load %arg11[%c0_91, %c24_92] : memref<180x72xbf16, #tpu.memory_space<vmem>>, vector<128x8xbf16>
    tpu.vector_store %arg11[%c0_91, %c24_92], %83 {strides = array<i32>} : memref<180x72xbf16, #tpu.memory_space<vmem>>, vector<128x8xbf16>,
    %c1_93 = arith.constant 1 : index
    %c1_94 = arith.constant 1 : index
    %c0_95 = arith.constant 0 : index
    %85 = vector.load %arg10[%c1_93, %c1_94, %c0_95] : memref<10x18x8xf32, #tpu.memory_space<vmem>>, vector<8x16x8xf32>
    %86 = vector.shape_cast %85 : vector<8x16x8xf32> to vector<128x8xf32>
    %87 = arith.truncf %86 : vector<128x8xf32> to vector<128x8xbf16>
    %c0_96 = arith.constant 0 : index
    %c32_97 = arith.constant 32 : index
    %88 = vector.load %arg11[%c0_96, %c32_97] : memref<180x72xbf16, #tpu.memory_space<vmem>>, vector<128x8xbf16>
    tpu.vector_store %arg11[%c0_96, %c32_97], %87 {strides = array<i32>} : memref<180x72xbf16, #tpu.memory_space<vmem>>, vector<128x8xbf16>,
    %c1_98 = arith.constant 1 : index
    %c2_99 = arith.constant 2 : index
    %c0_100 = arith.constant 0 : index
    %89 = vector.load %arg10[%c1_98, %c2_99, %c0_100] : memref<10x18x8xf32, #tpu.memory_space<vmem>>, vector<8x16x8xf32>
    %90 = vector.shape_cast %89 : vector<8x16x8xf32> to vector<128x8xf32>
    %91 = arith.truncf %90 : vector<128x8xf32> to vector<128x8xbf16>
    %c0_101 = arith.constant 0 : index
    %c40_102 = arith.constant 40 : index
    %92 = vector.load %arg11[%c0_101, %c40_102] : memref<180x72xbf16, #tpu.memory_space<vmem>>, vector<128x8xbf16>
    tpu.vector_store %arg11[%c0_101, %c40_102], %91 {strides = array<i32>} : memref<180x72xbf16, #tpu.memory_space<vmem>>, vector<128x8xbf16>,
    %c2_103 = arith.constant 2 : index
    %c0_104 = arith.constant 0 : index
    %c0_105 = arith.constant 0 : index
    %93 = vector.load %arg10[%c2_103, %c0_104, %c0_105] : memref<10x18x8xf32, #tpu.memory_space<vmem>>, vector<8x16x8xf32>
    %94 = vector.shape_cast %93 : vector<8x16x8xf32> to vector<128x8xf32>
    %95 = arith.truncf %94 : vector<128x8xf32> to vector<128x8xbf16>
    %c0_106 = arith.constant 0 : index
    %c48_107 = arith.constant 48 : index
    %96 = vector.load %arg11[%c0_106, %c48_107] : memref<180x72xbf16, #tpu.memory_space<vmem>>, vector<128x8xbf16>
    tpu.vector_store %arg11[%c0_106, %c48_107], %95 {strides = array<i32>} : memref<180x72xbf16, #tpu.memory_space<vmem>>, vector<128x8xbf16>,
    %c2_108 = arith.constant 2 : index
    %c1_109 = arith.constant 1 : index
    %c0_110 = arith.constant 0 : index
    %97 = vector.load %arg10[%c2_108, %c1_109, %c0_110] : memref<10x18x8xf32, #tpu.memory_space<vmem>>, vector<8x16x8xf32>
    %98 = vector.shape_cast %97 : vector<8x16x8xf32> to vector<128x8xf32>
    %99 = arith.truncf %98 : vector<128x8xf32> to vector<128x8xbf16>
    %c0_111 = arith.constant 0 : index
    %c56_112 = arith.constant 56 : index
    %100 = vector.load %arg11[%c0_111, %c56_112] : memref<180x72xbf16, #tpu.memory_space<vmem>>, vector<128x8xbf16>
    tpu.vector_store %arg11[%c0_111, %c56_112], %99 {strides = array<i32>} : memref<180x72xbf16, #tpu.memory_space<vmem>>, vector<128x8xbf16>,
    %c2_113 = arith.constant 2 : index
    %c2_114 = arith.constant 2 : index
    %c0_115 = arith.constant 0 : index
    %101 = vector.load %arg10[%c2_113, %c2_114, %c0_115] : memref<10x18x8xf32, #tpu.memory_space<vmem>>, vector<8x16x8xf32>
    %102 = vector.shape_cast %101 : vector<8x16x8xf32> to vector<128x8xf32>
    %103 = arith.truncf %102 : vector<128x8xf32> to vector<128x8xbf16>
    %c0_116 = arith.constant 0 : index
    %c64_117 = arith.constant 64 : index
    %104 = vector.load %arg11[%c0_116, %c64_117] : memref<180x72xbf16, #tpu.memory_space<vmem>>, vector<128x8xbf16>
    tpu.vector_store %arg11[%c0_116, %c64_117], %103 {strides = array<i32>} : memref<180x72xbf16, #tpu.memory_space<vmem>>, vector<128x8xbf16>,
    %c0_118 = arith.constant 0 : index
    %c0_119 = arith.constant 0 : index
    %105 = vector.load %arg6[%c0_118, %c0_119] : memref<8x72xbf16, #tpu.memory_space<vmem>>, vector<8x72xbf16>
    %c0_120 = arith.constant 0 : index
    %c0_121 = arith.constant 0 : index
    %106 = vector.load %arg11[%c0_120, %c0_121] : memref<180x72xbf16, #tpu.memory_space<vmem>>, vector<128x72xbf16>
    %cst_122 = arith.constant dense<0.000000e+00> : vector<8x128xf32>
    %107 = tpu.matmul %105, %106, %cst_122 {dimension_numbers = #tpu.dot_dimension_numbers<[1], [1], [0], [0], [0, 0, 1, 0], [], []>} : vector<8x72xbf16>, vector<128x72xbf16>, vector<8x128xf32> -> vector<8x128xf32>
    %c0_123 = arith.constant 0 : index
    %c0_124 = arith.constant 0 : index
    %108 = vector.load %arg7[%c0_123, %c0_124] : memref<8x1xf32, #tpu.memory_space<vmem>>, vector<8x1xf32>
    %109 = vector.broadcast %108 : vector<8x1xf32> to vector<8x128xf32>
    %110 = arith.addf %107, %109 : vector<8x128xf32>
    %cst_125 = arith.constant 1.000000e+00 : f32
    %111 = vector.broadcast %cst_125 : f32 to vector<8x128xf32>
    %112 = arith.mulf %110, %111 : vector<8x128xf32>
    %c0_126 = arith.constant 0 : index
    %c0_127 = arith.constant 0 : index
    %c0_128 = arith.constant 0 : index
    %113 = vector.load %arg2[%c0_126, %c0_127, %c0_128] : memref<1x8x128xf32, #tpu.memory_space<vmem>>, vector<1x8x128xf32>
    %114 = vector.shape_cast %113 : vector<1x8x128xf32> to vector<8x128xf32>
    %115 = arith.addf %112, %114 : vector<8x128xf32>
    %c0_129 = arith.constant 0 : index
    %c0_130 = arith.constant 0 : index
    %c0_131 = arith.constant 0 : index
    %116 = vector.load %arg8[%c0_129, %c0_130, %c0_131] : memref<1x8x128xf32, #tpu.memory_space<vmem>>, vector<1x8x128xf32>
    %117 = vector.shape_cast %116 : vector<1x8x128xf32> to vector<8x128xf32>
    %118 = vector.shape_cast %115 : vector<8x128xf32> to vector<1x8x128xf32>
    tpu.vector_store %arg8[%c0_129, %c0_130, %c0_131], %118 {strides = array<i32>} : memref<1x8x128xf32, #tpu.memory_space<vmem>>, vector<1x8x128xf32>,
    return
  }
  func.func @transform_0(%arg0: i32, %arg1: i32) -> (i32, i32, i32) {
    %c0_i32 = arith.constant 0 : i32
    %c0_i32_0 = arith.constant 0 : i32
    return %arg0, %c0_i32, %arg1 : i32, i32, i32
  }
  func.func @transform_1(%arg0: i32, %arg1: i32) -> (i32, i32, i32, i32) {
    %c2_i32 = arith.constant 2 : i32
    %0 = arith.muli %arg0, %c2_i32 : i32
    %1 = arith.addi %0, %arg1 : i32
    %c0_i32 = arith.constant 0 : i32
    %c0_i32_0 = arith.constant 0 : i32
    %c0_i32_1 = arith.constant 0 : i32
    %c0_i32_2 = arith.constant 0 : i32
    return %1, %c0_i32, %c0_i32_0, %c0_i32_1 : i32, i32, i32, i32
  }
  func.func @transform_2(%arg0: i32, %arg1: i32) -> (i32, i32) {
    %c0_i32 = arith.constant 0 : i32
    %c0_i32_0 = arith.constant 0 : i32
    %c0_i32_1 = arith.constant 0 : i32
    return %c0_i32, %c0_i32_0 : i32, i32
  }
  func.func @transform_3(%arg0: i32, %arg1: i32) -> (i32, i32) {
    %c0_i32 = arith.constant 0 : i32
    %c0_i32_0 = arith.constant 0 : i32
    %c0_i32_1 = arith.constant 0 : i32
    return %c0_i32, %c0_i32_0 : i32, i32
  }
  func.func @transform_4(%arg0: i32, %arg1: i32) -> (i32, i32) {
    %c0_i32 = arith.constant 0 : i32
    %c0_i32_0 = arith.constant 0 : i32
    %c0_i32_1 = arith.constant 0 : i32
    return %c0_i32, %c0_i32_0 : i32, i32
  }
  func.func @transform_5(%arg0: i32, %arg1: i32) -> (i32, i32) {
    %c0_i32 = arith.constant 0 : i32
    %c0_i32_0 = arith.constant 0 : i32
    %c0_i32_1 = arith.constant 0 : i32
    return %c0_i32, %c0_i32_0 : i32, i32
  }
  func.func @transform_6(%arg0: i32, %arg1: i32) -> (i32, i32, i32) {
    %c0_i32 = arith.constant 0 : i32
    %c0_i32_0 = arith.constant 0 : i32
    return %arg0, %c0_i32, %arg1 : i32, i32, i32
  }
}

</mosaic_0001>

<llo_original>
// kernel: tpu_custom_call.1
$region0: #{tpu_custom_call.1}
  #allocation0 [shape = 'u32[]', space=smem, size = 0x4, offset = 0x4, fixed_abs, tag = 'smem constant byte address 0x4 - core index']
  #allocation1 [shape = 'u32[144,128]{1,0:T(1,128)}', space=vmem, size = 0x12000, scoped, tag = 'internal scratch']
  #allocation2 [shape = 'f32[12,20,8]{2,1,0:T(8,128)}', space=vmem, size = 0x24000, scoped, tag = 'scratch operand']
  #allocation3 [shape = 'f32[10,18,8]{2,1,0:T(8,128)}', space=vmem, size = 0x1e000, scoped, tag = 'scratch operand']
  #allocation4 [shape = 'bf16[180,72]{1,0:T(8,128)(2,1)}', space=vmem, size = 0xb800, scoped, tag = 'scratch operand']
  %s0 = inlined_call_operand.vmem [shape: f32[2,8,256], index: 0, kind: input, shape index: {}]
  %s1 = inlined_call_operand.vmem [shape: f32[4,4,16,8], index: 1, kind: input, shape index: {}]
  %s2 = inlined_call_operand.vmem [shape: bf16[72,8], index: 2, kind: input, shape index: {}]
  %s3 = inlined_call_operand.vmem [shape: f32[1,8], index: 3, kind: input, shape index: {}]
  %s4 = inlined_call_operand.vmem [shape: bf16[8,72], index: 4, kind: input, shape index: {}]
  %s5 = inlined_call_operand.vmem [shape: f32[8,1], index: 5, kind: input, shape index: {}]
  %s6 = inlined_call_operand.hbm [shape: f32[2,8,256], index: 6, kind: output, shape index: {}]
  %s7 = sld [smem:[#allocation0]]
  $region65: #{tpu_custom_call.1} parent=0
    _
  %s9 = ssub.s32 1, %s7
  %s10 = scalar_select 0, %s9, %s7
  $region1: #{tpu_custom_call.1} parent=0
    #allocation5 [shape = 'u8[8192]{0}', space=vmem, size = 0x2000, scoped, tag = 'output window, operand 0']
    #allocation6 [shape = 's32[2]{0}', space=sflag, size = 0x8, scoped, tag = 'scoped memory for tpu_custom_call.1']
    %11 = vsyncpa [#allocation6], 0
    %s12 = scalar_lea.sflag [#allocation6], 1
    %13 = vsyncpa %s12, 0
    loop: start=0, step=1, limit=6
    $region2: #{tpu_custom_call.1} parent=1 // loop_pre_header
      _
    $region3: #{tpu_custom_call.1} parent=1 // loop_header
      %s15 = sphi 0, %s19
      %p16 = scmp.ge.s32.totalorder %s15, 6
      %s22 = sphi 0, %s34
      %s23 = sphi 0, %s30
      %s24 = sphi 0, %s22
      %s25 = sphi 0, %s23
      %s26 = sphi 0, %s24
      %s27 = sphi 0, %s25
      %s39 = sphi 0, %s41
      %s42 = sphi 0, %s39
      %s43 = sphi 0, %s42
      %s59 = sphi 0, %s43
      %s69 = sphi 0, %s71
      %s72 = sphi 0, %s69
      %s73 = sphi 0, %s72
      %s89 = sphi 0, %s73
      %s93 = sphi 0, %s93
      %s95 = sphi 0, %s93
      %s96 = sphi 0, %s95
      %s110 = sphi 0, %s96
      %s114 = sphi 0, %s114
      %s116 = sphi 0, %s114
      %s117 = sphi 0, %s116
      %s131 = sphi 0, %s117
      %s135 = sphi 0, %s135
      %s137 = sphi 0, %s135
      %s138 = sphi 0, %s137
      %s152 = sphi 0, %s138
      %s156 = sphi 0, %s156
      %s158 = sphi 0, %s156
      %s159 = sphi 0, %s158
      %s173 = sphi 0, %s159
      %s181 = sphi 0, %s183
      %s184 = sphi 0, %s181
      %s185 = sphi 0, %s184
      %s201 = sphi 0, %s185
    $region4: #{tpu_custom_call.1} parent=1 // loop_header_branch
      %18 = sbr.rel (%p16) target = $region8
    $region5: #{tpu_custom_call.1} parent=1 // loop_body
      %s20 = ssub.s32 %s15, 1
      %s21 = ssub.s32 %s15, 2
      %s28 = sadd.s32 1, %s23
      %p29 = scmp.ge.s32.totalorder %s28, 2
      %s30 = scalar_select %p29, 0, %s28
      %s31 = sadd.s32 1, %s22
      %s32 = scalar_select %p29, %s31, %s22
      %p33 = scmp.ge.s32.totalorder %s32, 2
      %s34 = scalar_select %p33, 0, %s32
      %s35 = ssub.s32 %s22, %s34
      %s36 = ssub.s32 %s23, %s30
      %s37 = sor.u32 %s35, %s36
      %p38 = scmp.eq.s32.totalorder %s37, 0
      %s40 = sadd.s32 %s39, 1
      %s41 = scalar_select %p38, %s39, %s40
      %p44 = pneg %p38
      %p45 = scmp.eq.s32.totalorder %s15, 3
      %p46 = por %p44, %p45
      %p47 = scmp.ne.s32.totalorder %s39, %s42
      %p48 = scmp.eq.s32.totalorder %s15, 0
      %p49 = por %p47, %p48
      %p50 = scmp.ne.s32.totalorder %s39, %s42
      %p51 = scmp.eq.s32.totalorder %s20, 3
      %p52 = por %p50, %p51
      %p53 = scmp.ne.s32.totalorder %s42, %s43
      %p54 = scmp.eq.s32.totalorder %s20, 0
      %p55 = por %p53, %p54
      %p56 = scmp.ne.s32.totalorder %s42, %s43
      %p57 = scmp.eq.s32.totalorder %s21, 3
      %p58 = por %p56, %p57
      %p60 = scmp.ne.s32.totalorder %s43, %s59
      %p61 = scmp.eq.s32.totalorder %s21, 0
      %p62 = por %p60, %p61
      %s63 = smul.u32 %s22, 2
      %s64 = sadd.s32 %s63, %s23
      %s65 = smul.u32 %s34, 2
      %s66 = sadd.s32 %s65, %s30
      %s67 = ssub.s32 %s64, %s66
      %p68 = scmp.eq.s32.totalorder %s67, 0
      %s70 = sadd.s32 %s69, 1
      %s71 = scalar_select %p68, %s69, %s70
      %p74 = pneg %p68
      %p75 = scmp.eq.s32.totalorder %s15, 3
      %p76 = por %p74, %p75
      %p77 = scmp.ne.s32.totalorder %s69, %s72
      %p78 = scmp.eq.s32.totalorder %s15, 0
      %p79 = por %p77, %p78
      %p80 = scmp.ne.s32.totalorder %s69, %s72
      %p81 = scmp.eq.s32.totalorder %s20, 3
      %p82 = por %p80, %p81
      %p83 = scmp.ne.s32.totalorder %s72, %s73
      %p84 = scmp.eq.s32.totalorder %s20, 0
      %p85 = por %p83, %p84
      %p86 = scmp.ne.s32.totalorder %s72, %s73
      %p87 = scmp.eq.s32.totalorder %s21, 3
      %p88 = por %p86, %p87
      %p90 = scmp.ne.s32.totalorder %s73, %s89
      %p91 = scmp.eq.s32.totalorder %s21, 0
      %p92 = por %p90, %p91
      %s94 = sadd.s32 %s93, 1
      %p97 = scmp.eq.s32.totalorder %s15, 3
      %p98 = scmp.ne.s32.totalorder %s93, %s95
      %p99 = scmp.eq.s32.totalorder %s15, 0
      %p100 = por %p98, %p99
      %p101 = scmp.ne.s32.totalorder %s93, %s95
      %p102 = scmp.eq.s32.totalorder %s20, 3
      %p103 = por %p101, %p102
      %p104 = scmp.ne.s32.totalorder %s95, %s96
      %p105 = scmp.eq.s32.totalorder %s20, 0
      %p106 = por %p104, %p105
      %p107 = scmp.ne.s32.totalorder %s95, %s96
      %p108 = scmp.eq.s32.totalorder %s21, 3
      %p109 = por %p107, %p108
      %p111 = scmp.ne.s32.totalorder %s96, %s110
      %p112 = scmp.eq.s32.totalorder %s21, 0
      %p113 = por %p111, %p112
      %s115 = sadd.s32 %s114, 1
      %p118 = scmp.eq.s32.totalorder %s15, 3
      %p119 = scmp.ne.s32.totalorder %s114, %s116
      %p120 = scmp.eq.s32.totalorder %s15, 0
      %p121 = por %p119, %p120
      %p122 = scmp.ne.s32.totalorder %s114, %s116
      %p123 = scmp.eq.s32.totalorder %s20, 3
      %p124 = por %p122, %p123
      %p125 = scmp.ne.s32.totalorder %s116, %s117
      %p126 = scmp.eq.s32.totalorder %s20, 0
      %p127 = por %p125, %p126
      %p128 = scmp.ne.s32.totalorder %s116, %s117
      %p129 = scmp.eq.s32.totalorder %s21, 3
      %p130 = por %p128, %p129
      %p132 = scmp.ne.s32.totalorder %s117, %s131
      %p133 = scmp.eq.s32.totalorder %s21, 0
      %p134 = por %p132, %p133
      %s136 = sadd.s32 %s135, 1
      %p139 = scmp.eq.s32.totalorder %s15, 3
      %p140 = scmp.ne.s32.totalorder %s135, %s137
      %p141 = scmp.eq.s32.totalorder %s15, 0
      %p142 = por %p140, %p141
      %p143 = scmp.ne.s32.totalorder %s135, %s137
      %p144 = scmp.eq.s32.totalorder %s20, 3
      %p145 = por %p143, %p144
      %p146 = scmp.ne.s32.totalorder %s137, %s138
      %p147 = scmp.eq.s32.totalorder %s20, 0
      %p148 = por %p146, %p147
      %p149 = scmp.ne.s32.totalorder %s137, %s138
      %p150 = scmp.eq.s32.totalorder %s21, 3
      %p151 = por %p149, %p150
      %p153 = scmp.ne.s32.totalorder %s138, %s152
      %p154 = scmp.eq.s32.totalorder %s21, 0
      %p155 = por %p153, %p154
      %s157 = sadd.s32 %s156, 1
      %p160 = scmp.eq.s32.totalorder %s15, 3
      %p161 = scmp.ne.s32.totalorder %s156, %s158
      %p162 = scmp.eq.s32.totalorder %s15, 0
      %p163 = por %p161, %p162
      %p164 = scmp.ne.s32.totalorder %s156, %s158
      %p165 = scmp.eq.s32.totalorder %s20, 3
      %p166 = por %p164, %p165
      %p167 = scmp.ne.s32.totalorder %s158, %s159
      %p168 = scmp.eq.s32.totalorder %s20, 0
      %p169 = por %p167, %p168
      %p170 = scmp.ne.s32.totalorder %s158, %s159
      %p171 = scmp.eq.s32.totalorder %s21, 3
      %p172 = por %p170, %p171
      %p174 = scmp.ne.s32.totalorder %s159, %s173
      %p175 = scmp.eq.s32.totalorder %s21, 0
      %p176 = por %p174, %p175
      %s177 = ssub.s32 %s22, %s34
      %s178 = ssub.s32 %s23, %s30
      %s179 = sor.u32 %s177, %s178
      %p180 = scmp.eq.s32.totalorder %s179, 0
      %s182 = sadd.s32 %s181, 1
      %s183 = scalar_select %p180, %s181, %s182
      %p186 = pneg %p180
      %p187 = scmp.eq.s32.totalorder %s15, 3
      %p188 = por %p186, %p187
      %p189 = scmp.ne.s32.totalorder %s181, %s184
      %p190 = scmp.eq.s32.totalorder %s15, 0
      %p191 = por %p189, %p190
      %p192 = scmp.ne.s32.totalorder %s181, %s184
      %p193 = scmp.eq.s32.totalorder %s20, 3
      %p194 = por %p192, %p193
      %p195 = scmp.ne.s32.totalorder %s184, %s185
      %p196 = scmp.eq.s32.totalorder %s20, 0
      %p197 = por %p195, %p196
      %p198 = scmp.ne.s32.totalorder %s184, %s185
      %p199 = scmp.eq.s32.totalorder %s21, 3
      %p200 = por %p198, %p199
      %p202 = scmp.ne.s32.totalorder %s185, %s201
      %p203 = scmp.eq.s32.totalorder %s21, 0
      %p204 = por %p202, %p203
      %p205 = scmp.le.s32.totalorder 1, %s15
      %p206 = scmp.lt.s32.totalorder %s15, 5
      %p207 = pnand %p205, %p206
      %p208 = pneg %p207
      // Predicated region
      $region9: #{tpu_custom_call.1} parent=5 // pred_check
        _
      $region10: #{tpu_custom_call.1} parent=5 // pred_check_branch
        %210 = sbr.rel (%p207) target = $region12
      $region11: #{tpu_custom_call.1} parent=5 // pred_region
        %s211 = ssub.s32 %s15, 1
        // Predicated region
        $region13: #{tpu_custom_call.1} parent=11 // pred_check
          %p212 = pneg %p106
        $region14: #{tpu_custom_call.1} parent=11 // pred_check_branch
          %214 = sbr.rel (%p212) target = $region16
        $region15: #{tpu_custom_call.1} parent=11 // pred_region
          _
        $region16: #{tpu_custom_call.1} parent=11 // pred_fallthru
          _
        // Predicated region
        $region17: #{tpu_custom_call.1} parent=11 // pred_check
          %p215 = pneg %p127
        $region18: #{tpu_custom_call.1} parent=11 // pred_check_branch
          %217 = sbr.rel (%p215) target = $region20
        $region19: #{tpu_custom_call.1} parent=11 // pred_region
          _
        $region20: #{tpu_custom_call.1} parent=11 // pred_fallthru
          _
        // Predicated region
        $region21: #{tpu_custom_call.1} parent=11 // pred_check
          %p218 = pneg %p148
        $region22: #{tpu_custom_call.1} parent=11 // pred_check_branch
          %220 = sbr.rel (%p218) target = $region24
        $region23: #{tpu_custom_call.1} parent=11 // pred_region
          _
        $region24: #{tpu_custom_call.1} parent=11 // pred_fallthru
          _
        // Predicated region
        $region25: #{tpu_custom_call.1} parent=11 // pred_check
          %p221 = pneg %p169
        $region26: #{tpu_custom_call.1} parent=11 // pred_check_branch
          %223 = sbr.rel (%p221) target = $region28
        $region27: #{tpu_custom_call.1} parent=11 // pred_region
          _
        $region28: #{tpu_custom_call.1} parent=11 // pred_fallthru
          _
      $region12: #{tpu_custom_call.1} parent=5 // pred_fallthru
        _
      %p224 = scmp.lt.s32.totalorder %s15, 4
      // Predicated region
      $region29: #{tpu_custom_call.1} parent=5 // pred_check
        %p225 = pneg %p224
      $region30: #{tpu_custom_call.1} parent=5 // pred_check_branch
        %227 = sbr.rel (%p225) target = $region32
      $region31: #{tpu_custom_call.1} parent=5 // pred_region
        // Predicated region
        $region33: #{tpu_custom_call.1} parent=31 // pred_check
          %p228 = pneg %p49
        $region34: #{tpu_custom_call.1} parent=31 // pred_check_branch
          %230 = sbr.rel (%p228) target = $region36
        $region35: #{tpu_custom_call.1} parent=31 // pred_region
          %p231 = scmp.lt.s32.totalorder %s22, 1
          %s232 = scalar_select %p231, %s22, 1
          %p233 = scmp.lt.s32.totalorder %s23, 1
          %s234 = scalar_select %p233, %s23, 1
          %s235 = smul.addr %s232, 2
          %s236 = sadd.s32 %s234, %s235
          %s237 = smul.addr %s236, 8
          %s238 = scalar_lea.vmem %s0, %s237
        $region36: #{tpu_custom_call.1} parent=31 // pred_fallthru
          _
        // Predicated region
        $region37: #{tpu_custom_call.1} parent=31 // pred_check
          %p239 = pneg %p79
        $region38: #{tpu_custom_call.1} parent=31 // pred_check_branch
          %241 = sbr.rel (%p239) target = $region40
        $region39: #{tpu_custom_call.1} parent=31 // pred_region
          %s242 = smul.u32 %s22, 2
          %s243 = sadd.s32 %s242, %s23
          %p244 = scmp.lt.s32.totalorder %s243, 3
          %s245 = scalar_select %p244, %s243, 3
          %s246 = smul.addr %s245, 8
          %s247 = smul.addr %s246, 8
          %s248 = scalar_lea.vmem %s1, %s247
          %s249 = smul.u32 %s22, 2
          %s250 = sadd.s32 %s249, %s23
        $region40: #{tpu_custom_call.1} parent=31 // pred_fallthru
          _
      $region32: #{tpu_custom_call.1} parent=5 // pred_fallthru
        _
      %p251 = scmp.le.s32.totalorder 1, %s15
      %p252 = scmp.lt.s32.totalorder %s15, 5
      %p253 = pnand %p251, %p252
      %p254 = pneg %p253
      // Predicated region
      $region41: #{tpu_custom_call.1} parent=5 // pred_check
        _
      $region42: #{tpu_custom_call.1} parent=5 // pred_check_branch
        %256 = sbr.rel (%p253) target = $region44
      $region43: #{tpu_custom_call.1} parent=5 // pred_region
        %s257 = ssub.s32 %s15, 1
        %p258 = scmp.lt.s32.totalorder %s24, 1
        %s259 = scalar_select %p258, %s24, 1
        %p260 = scmp.lt.s32.totalorder %s25, 1
        %s261 = scalar_select %p260, %s25, 1
        %s262 = smul.addr %s259, 2
        %s263 = sadd.s32 %s261, %s262
        %s264 = smul.addr %s263, 8
        %s265 = scalar_lea.vmem %s0, %s264
        %p266 = pneg %p55
        %p267 = pneg %p52
        %s268 = smul.u32 %s24, 2
        %s269 = sadd.s32 %s268, %s25
        %p270 = scmp.lt.s32.totalorder %s269, 3
        %s271 = scalar_select %p270, %s269, 3
        %s272 = smul.addr %s271, 8
        %s273 = smul.addr %s272, 8
        %s274 = scalar_lea.vmem %s1, %s273
        %p275 = pneg %p85
        %p276 = pneg %p82
        %p277 = pneg %p106
        %p278 = pneg %p103
        %p279 = pneg %p127
        %p280 = pneg %p124
        %p281 = pneg %p148
        %p282 = pneg %p145
        %p283 = pneg %p169
        %p284 = pneg %p166
        %p285 = pneg %p197
        %p286 = pneg %p194
        %s287 = sand.u32 %s184, 1
        %s288 = scalar_lea.sflag [#allocation6], %s287
        %s289 = sand.u32 %s184, 1
        %s290 = smul.addr %s289, 8
        %s291 = scalar_lea.vmem [#allocation5], %s290
        %p292 = scmp.lt.s32.totalorder %s24, 1
        %s293 = scalar_select %p292, %s24, 1
        %p294 = scmp.lt.s32.totalorder %s25, 1
        %s295 = scalar_select %p294, %s25, 1
        %s296 = smul.addr %s293, 2
        %s297 = sadd.s32 %s295, %s296
        %s298 = smul.addr %s297, 8
        %s299 = scalar_lea.vmem %s0, %s298
        %s300 = smul.u32 %s24, 2
        %s301 = sadd.s32 %s300, %s25
        %p302 = scmp.lt.s32.totalorder %s301, 3
        %s303 = scalar_select %p302, %s301, 3
        %s304 = smul.addr %s303, 8
        %s305 = smul.addr %s304, 8
        %s306 = scalar_lea.vmem %s1, %s305
        %s307 = smul.u32 %s24, 2
        %s308 = sadd.s32 %s307, %s25
        %v310 = vld [vmem:[%s299] sm:$0xff]
        %311 = vxpose.xlu0.b32.start [1/16] %v310, 128
        %312 = vxpose.xlu0.b32.cont [2/16] 0.0, 128
        %313 = vxpose.xlu0.b32.cont [3/16] 0.0, 128
        %314 = vxpose.xlu0.b32.cont [4/16] 0.0, 128
        %315 = vxpose.xlu0.b32.cont [5/16] 0.0, 128
        %316 = vxpose.xlu0.b32.cont [6/16] 0.0, 128
        %317 = vxpose.xlu0.b32.cont [7/16] 0.0, 128
        %318 = vxpose.xlu0.b32.cont [8/16] 0.0, 128
        %319 = vxpose.xlu0.b32.cont [9/16] 0.0, 128
        %320 = vxpose.xlu0.b32.cont [10/16] 0.0, 128
        %321 = vxpose.xlu0.b32.cont [11/16] 0.0, 128
        %322 = vxpose.xlu0.b32.cont [12/16] 0.0, 128
        %323 = vxpose.xlu0.b32.cont [13/16] 0.0, 128
        %324 = vxpose.xlu0.b32.cont [14/16] 0.0, 128
        %325 = vxpose.xlu0.b32.cont [15/16] 0.0, 128
        %326 = vxpose.xlu0.b32.end [16/16] 0.0, 128
        %v327 = vpop.trf.xlu0
        %v328 = vpop.trf.xlu0
        %v329 = vpop.trf.xlu0
        %v330 = vpop.trf.xlu0
        %v331 = vpop.trf.xlu0
        %v332 = vpop.trf.xlu0
        %v333 = vpop.trf.xlu0
        %v334 = vpop.trf.xlu0
        %v335 = vpop.trf.xlu0
        %v336 = vpop.trf.xlu0
        %v337 = vpop.trf.xlu0
        %v338 = vpop.trf.xlu0
        %v339 = vpop.trf.xlu0
        %v340 = vpop.trf.xlu0
        %v341 = vpop.trf.xlu0
        %v342 = vpop.trf.xlu0
        %s343 = scalar_lea.vmem [#allocation2], 48
        %vm344 = vcmask 64512
        %345 = vst.msk [vmem:[%s343 + $0x2] sm:$0xff] %vm344, %v327
        %346 = vst.msk [vmem:[%s343 + $0xa] sm:$0xff] %vm344, %v328
        %347 = vst.msk [vmem:[%s343 + $0x1a] sm:$0xff] %vm344, %v329
        %348 = vst.msk [vmem:[%s343 + $0x22] sm:$0xff] %vm344, %v330
        %349 = vst.msk [vmem:[%s343 + $0x32] sm:$0xff] %vm344, %v331
        %350 = vst.msk [vmem:[%s343 + $0x3a] sm:$0xff] %vm344, %v332
        %351 = vst.msk [vmem:[%s343 + $0x4a] sm:$0xff] %vm344, %v333
        %352 = vst.msk [vmem:[%s343 + $0x52] sm:$0xff] %vm344, %v334
        %353 = vst.msk [vmem:[%s343 + $0x62] sm:$0xff] %vm344, %v335
        %354 = vst.msk [vmem:[%s343 + $0x6a] sm:$0xff] %vm344, %v336
        %355 = vst.msk [vmem:[%s343 + $0x7a] sm:$0xff] %vm344, %v337
        %356 = vst.msk [vmem:[%s343 + $0x82] sm:$0xff] %vm344, %v338
        %357 = vst.msk [vmem:[%s343 + $0x92] sm:$0xff] %vm344, %v339
        %358 = vst.msk [vmem:[%s343 + $0x9a] sm:$0xff] %vm344, %v340
        %359 = vst.msk [vmem:[%s343 + $0xaa] sm:$0xff] %vm344, %v341
        %360 = vst.msk [vmem:[%s343 + $0xb2] sm:$0xff] %vm344, %v342
        %v361 = vld [vmem:[%s306] sm:$0xff]
        %v362 = vld [vmem:[%s306 + $0x8] sm:$0xff]
        %v363 = vld [vmem:[%s306 + $0x10] sm:$0xff]
        %v364 = vld [vmem:[%s306 + $0x18] sm:$0xff]
        %v365 = vld [vmem:[%s306 + $0x20] sm:$0xff]
        %v366 = vld [vmem:[%s306 + $0x28] sm:$0xff]
        %v367 = vld [vmem:[%s306 + $0x30] sm:$0xff]
        %v368 = vld [vmem:[%s306 + $0x38] sm:$0xff]
        %369 = vst.msk [vmem:[#allocation2 + $0x2] sm:$0xff] %vm344, %v361
        %370 = vst.msk [vmem:[#allocation2 + $0xa] sm:$0xff] %vm344, %v362
        %371 = vst.msk [vmem:[#allocation2 + $0x1a] sm:$0xff] %vm344, %v363
        %372 = vst.msk [vmem:[#allocation2 + $0x22] sm:$0xff] %vm344, %v364
        %s373 = scalar_lea.vmem [#allocation2], 240
        %374 = vst.msk [vmem:[%s373 + $0x2] sm:$0xff] %vm344, %v365
        %375 = vst.msk [vmem:[%s373 + $0xa] sm:$0xff] %vm344, %v366
        %376 = vst.msk [vmem:[%s373 + $0x1a] sm:$0xff] %vm344, %v367
        %377 = vst.msk [vmem:[%s373 + $0x22] sm:$0xff] %vm344, %v368
        %vm378 = vcmask 58368
        %379 = vst.msk [vmem:[#allocation2] sm:$0x3] %vm378, 0.0
        %380 = vst.msk [vmem:[#allocation2 + $0x18] sm:$0x3] %vm378, 0.0
        %381 = vst.msk [vmem:[#allocation2 + $0x30] sm:$0x3] %vm378, 0.0
        %382 = vst.msk [vmem:[#allocation2 + $0x48] sm:$0x3] %vm378, 0.0
        %383 = vst.msk [vmem:[#allocation2 + $0x60] sm:$0x3] %vm378, 0.0
        %384 = vst.msk [vmem:[#allocation2 + $0x78] sm:$0x3] %vm378, 0.0
        %385 = vst.msk [vmem:[#allocation2 + $0x90] sm:$0x3] %vm378, 0.0
        %386 = vst.msk [vmem:[#allocation2 + $0xa8] sm:$0x3] %vm378, 0.0
        %387 = vst.msk [vmem:[#allocation2 + $0xc0] sm:$0x3] %vm378, 0.0
        %388 = vst.msk [vmem:[#allocation2 + $0xd8] sm:$0x3] %vm378, 0.0
        %389 = vst.msk [vmem:[#allocation2 + $0xf0] sm:$0x3] %vm378, 0.0
        %390 = vst.msk [vmem:[#allocation2 + $0x108] sm:$0x3] %vm378, 0.0
        %391 = vst.msk [vmem:[#allocation2 + $0x12] sm:$0x3] %vm378, 0.0
        %392 = vst.msk [vmem:[#allocation2 + $0x2a] sm:$0x3] %vm378, 0.0
        %393 = vst.msk [vmem:[#allocation2 + $0x42] sm:$0x3] %vm378, 0.0
        %394 = vst.msk [vmem:[#allocation2 + $0x5a] sm:$0x3] %vm378, 0.0
        %395 = vst.msk [vmem:[#allocation2 + $0x72] sm:$0x3] %vm378, 0.0
        %396 = vst.msk [vmem:[#allocation2 + $0x8a] sm:$0x3] %vm378, 0.0
        %397 = vst.msk [vmem:[#allocation2 + $0xa2] sm:$0x3] %vm378, 0.0
        %398 = vst.msk [vmem:[#allocation2 + $0xba] sm:$0x3] %vm378, 0.0
        %399 = vst.msk [vmem:[#allocation2 + $0xd2] sm:$0x3] %vm378, 0.0
        %400 = vst.msk [vmem:[#allocation2 + $0xea] sm:$0x3] %vm378, 0.0
        %401 = vst.msk [vmem:[#allocation2 + $0x102] sm:$0x3] %vm378, 0.0
        %402 = vst.msk [vmem:[#allocation2 + $0x11a] sm:$0x3] %vm378, 0.0
        %v403 = vld [vmem:[#allocation2] sm:$0xff]
        %v404 = vld [vmem:[#allocation2 + $0x8] sm:$0xff]
        %v405 = vld [vmem:[#allocation2 + $0x10] sm:$0x3]
        %v406 = vld [vmem:[#allocation2 + $0x18] sm:$0xff]
        %v407 = vld [vmem:[#allocation2 + $0x20] sm:$0xff]
        %v408 = vld [vmem:[#allocation2 + $0x28] sm:$0x3]
        %v409 = vld [vmem:[#allocation2 + $0x30] sm:$0xff]
        %v410 = vld [vmem:[#allocation2 + $0x38] sm:$0xff]
        %v411 = vld [vmem:[#allocation2 + $0x40] sm:$0x3]
        %v412 = vld [vmem:[#allocation2 + $0x48] sm:$0xff]
        %v413 = vld [vmem:[#allocation2 + $0x50] sm:$0xff]
        %v414 = vld [vmem:[#allocation2 + $0x58] sm:$0x3]
        %v415 = vld [vmem:[#allocation2 + $0x60] sm:$0xff]
        %v416 = vld [vmem:[#allocation2 + $0x68] sm:$0xff]
        %v417 = vld [vmem:[#allocation2 + $0x70] sm:$0x3]
        %v418 = vld [vmem:[#allocation2 + $0x78] sm:$0xff]
        %v419 = vld [vmem:[#allocation2 + $0x80] sm:$0xff]
        %v420 = vld [vmem:[#allocation2 + $0x88] sm:$0x3]
        %v421 = vld [vmem:[#allocation2 + $0x90] sm:$0xff]
        %v422 = vld [vmem:[#allocation2 + $0x98] sm:$0xff]
        %v423 = vld [vmem:[#allocation2 + $0xa0] sm:$0x3]
        %v424 = vld [vmem:[#allocation2 + $0xa8] sm:$0xff]
        %v425 = vld [vmem:[#allocation2 + $0xb0] sm:$0xff]
        %v426 = vld [vmem:[#allocation2 + $0xb8] sm:$0x3]
        %v427 = vld [vmem:[#allocation2 + $0xc0] sm:$0xff]
        %v428 = vld [vmem:[#allocation2 + $0xc8] sm:$0xff]
        %v429 = vld [vmem:[#allocation2 + $0xd0] sm:$0x3]
        %v430 = vld [vmem:[#allocation2 + $0xd8] sm:$0xff]
        %v431 = vld [vmem:[#allocation2 + $0xe0] sm:$0xff]
        %v432 = vld [vmem:[#allocation2 + $0xe8] sm:$0x3]
        %v463 = vcombine.high %v403, %v403
        %v465 = vunpack.c.l.s4 1983009808
        %v466 = vunpack.c.0.s8 %v465
        %v467 = vlaneseq
        %v468 = vshrl.u32 %v467, 7
        %v469 = vsub.s32 %v466, %v468
        %v470 = vrot.slane %v403, %v469
        %v472 = vunpack.c.l.s4 1983009808
        %v473 = vunpack.c.0.s8 %v472
        %v474 = vlaneseq
        %v475 = vshrl.u32 %v474, 7
        %v476 = vsub.s32 %v473, %v475
        %v477 = vrot.slane %v463, %v476
        %v478 = vcombine.high %v470, %v470
        %v479 = vcombine.high %v477, %v477
        %v480 = vcombine.high %v404, %v404
        %v482 = vunpack.c.l.s4 1983009808
        %v483 = vunpack.c.0.s8 %v482
        %v484 = vlaneseq
        %v485 = vshrl.u32 %v484, 7
        %v486 = vsub.s32 %v483, %v485
        %v487 = vrot.slane %v404, %v486
        %v489 = vunpack.c.l.s4 1983009808
        %v490 = vunpack.c.0.s8 %v489
        %v491 = vlaneseq
        %v492 = vshrl.u32 %v491, 7
        %v493 = vsub.s32 %v490, %v492
        %v494 = vrot.slane %v480, %v493
        %v495 = vcombine.high %v487, %v487
        %v496 = vcombine.high %v494, %v494
        %v498 = vunpack.c.l.s4 1983009808
        %v499 = vunpack.c.0.s8 %v498
        %v500 = vlaneseq
        %v501 = vshrl.u32 %v500, 7
        %v502 = vsub.s32 %v499, %v501
        %v503 = vrot.slane %v405, %v502
        %v504 = vcombine.high %v406, %v406
        %v506 = vunpack.c.l.s4 1983009808
        %v507 = vunpack.c.0.s8 %v506
        %v508 = vlaneseq
        %v509 = vshrl.u32 %v508, 7
        %v510 = vsub.s32 %v507, %v509
        %v511 = vrot.slane %v406, %v510
        %v513 = vunpack.c.l.s4 1983009808
        %v514 = vunpack.c.0.s8 %v513
        %v515 = vlaneseq
        %v516 = vshrl.u32 %v515, 7
        %v517 = vsub.s32 %v514, %v516
        %v518 = vrot.slane %v504, %v517
        %v519 = vcombine.high %v511, %v511
        %v520 = vcombine.high %v518, %v518
        %v521 = vcombine.high %v407, %v407
        %v523 = vunpack.c.l.s4 1983009808
        %v524 = vunpack.c.0.s8 %v523
        %v525 = vlaneseq
        %v526 = vshrl.u32 %v525, 7
        %v527 = vsub.s32 %v524, %v526
        %v528 = vrot.slane %v407, %v527
        %v530 = vunpack.c.l.s4 1983009808
        %v531 = vunpack.c.0.s8 %v530
        %v532 = vlaneseq
        %v533 = vshrl.u32 %v532, 7
        %v534 = vsub.s32 %v531, %v533
        %v535 = vrot.slane %v521, %v534
        %v536 = vcombine.high %v528, %v528
        %v537 = vcombine.high %v535, %v535
        %v539 = vunpack.c.l.s4 1983009808
        %v540 = vunpack.c.0.s8 %v539
        %v541 = vlaneseq
        %v542 = vshrl.u32 %v541, 7
        %v543 = vsub.s32 %v540, %v542
        %v544 = vrot.slane %v408, %v543
        %v545 = vcombine.high %v409, %v409
        %v547 = vunpack.c.l.s4 1983009808
        %v548 = vunpack.c.0.s8 %v547
        %v549 = vlaneseq
        %v550 = vshrl.u32 %v549, 7
        %v551 = vsub.s32 %v548, %v550
        %v552 = vrot.slane %v409, %v551
        %v554 = vunpack.c.l.s4 1983009808
        %v555 = vunpack.c.0.s8 %v554
        %v556 = vlaneseq
        %v557 = vshrl.u32 %v556, 7
        %v558 = vsub.s32 %v555, %v557
        %v559 = vrot.slane %v545, %v558
        %v560 = vcombine.high %v552, %v552
        %v561 = vcombine.high %v559, %v559
        %v562 = vcombine.high %v410, %v410
        %v564 = vunpack.c.l.s4 1983009808
        %v565 = vunpack.c.0.s8 %v564
        %v566 = vlaneseq
        %v567 = vshrl.u32 %v566, 7
        %v568 = vsub.s32 %v565, %v567
        %v569 = vrot.slane %v410, %v568
        %v571 = vunpack.c.l.s4 1983009808
        %v572 = vunpack.c.0.s8 %v571
        %v573 = vlaneseq
        %v574 = vshrl.u32 %v573, 7
        %v575 = vsub.s32 %v572, %v574
        %v576 = vrot.slane %v562, %v575
        %v577 = vcombine.high %v569, %v569
        %v578 = vcombine.high %v576, %v576
        %v580 = vunpack.c.l.s4 1983009808
        %v581 = vunpack.c.0.s8 %v580
        %v582 = vlaneseq
        %v583 = vshrl.u32 %v582, 7
        %v584 = vsub.s32 %v581, %v583
        %v585 = vrot.slane %v411, %v584
        %v586 = vcombine.high %v412, %v412
        %v588 = vunpack.c.l.s4 1983009808
        %v589 = vunpack.c.0.s8 %v588
        %v590 = vlaneseq
        %v591 = vshrl.u32 %v590, 7
        %v592 = vsub.s32 %v589, %v591
        %v593 = vrot.slane %v412, %v592
        %v595 = vunpack.c.l.s4 1983009808
        %v596 = vunpack.c.0.s8 %v595
        %v597 = vlaneseq
        %v598 = vshrl.u32 %v597, 7
        %v599 = vsub.s32 %v596, %v598
        %v600 = vrot.slane %v586, %v599
        %v601 = vcombine.high %v593, %v593
        %v602 = vcombine.high %v600, %v600
        %v603 = vcombine.high %v413, %v413
        %v605 = vunpack.c.l.s4 1983009808
        %v606 = vunpack.c.0.s8 %v605
        %v607 = vlaneseq
        %v608 = vshrl.u32 %v607, 7
        %v609 = vsub.s32 %v606, %v608
        %v610 = vrot.slane %v413, %v609
        %v612 = vunpack.c.l.s4 1983009808
        %v613 = vunpack.c.0.s8 %v612
        %v614 = vlaneseq
        %v615 = vshrl.u32 %v614, 7
        %v616 = vsub.s32 %v613, %v615
        %v617 = vrot.slane %v603, %v616
        %v618 = vcombine.high %v610, %v610
        %v619 = vcombine.high %v617, %v617
        %v621 = vunpack.c.l.s4 1983009808
        %v622 = vunpack.c.0.s8 %v621
        %v623 = vlaneseq
        %v624 = vshrl.u32 %v623, 7
        %v625 = vsub.s32 %v622, %v624
        %v626 = vrot.slane %v414, %v625
        %v627 = vcombine.high %v415, %v415
        %v629 = vunpack.c.l.s4 1983009808
        %v630 = vunpack.c.0.s8 %v629
        %v631 = vlaneseq
        %v632 = vshrl.u32 %v631, 7
        %v633 = vsub.s32 %v630, %v632
        %v634 = vrot.slane %v415, %v633
        %v636 = vunpack.c.l.s4 1983009808
        %v637 = vunpack.c.0.s8 %v636
        %v638 = vlaneseq
        %v639 = vshrl.u32 %v638, 7
        %v640 = vsub.s32 %v637, %v639
        %v641 = vrot.slane %v627, %v640
        %v642 = vcombine.high %v634, %v634
        %v643 = vcombine.high %v641, %v641
        %v644 = vcombine.high %v416, %v416
        %v646 = vunpack.c.l.s4 1983009808
        %v647 = vunpack.c.0.s8 %v646
        %v648 = vlaneseq
        %v649 = vshrl.u32 %v648, 7
        %v650 = vsub.s32 %v647, %v649
        %v651 = vrot.slane %v416, %v650
        %v653 = vunpack.c.l.s4 1983009808
        %v654 = vunpack.c.0.s8 %v653
        %v655 = vlaneseq
        %v656 = vshrl.u32 %v655, 7
        %v657 = vsub.s32 %v654, %v656
        %v658 = vrot.slane %v644, %v657
        %v659 = vcombine.high %v651, %v651
        %v660 = vcombine.high %v658, %v658
        %v662 = vunpack.c.l.s4 1983009808
        %v663 = vunpack.c.0.s8 %v662
        %v664 = vlaneseq
        %v665 = vshrl.u32 %v664, 7
        %v666 = vsub.s32 %v663, %v665
        %v667 = vrot.slane %v417, %v666
        %v668 = vcombine.high %v418, %v418
        %v670 = vunpack.c.l.s4 1983009808
        %v671 = vunpack.c.0.s8 %v670
        %v672 = vlaneseq
        %v673 = vshrl.u32 %v672, 7
        %v674 = vsub.s32 %v671, %v673
        %v675 = vrot.slane %v418, %v674
        %v677 = vunpack.c.l.s4 1983009808
        %v678 = vunpack.c.0.s8 %v677
        %v679 = vlaneseq
        %v680 = vshrl.u32 %v679, 7
        %v681 = vsub.s32 %v678, %v680
        %v682 = vrot.slane %v668, %v681
        %v683 = vcombine.high %v675, %v675
        %v684 = vcombine.high %v682, %v682
        %v685 = vcombine.high %v419, %v419
        %v687 = vunpack.c.l.s4 1983009808
        %v688 = vunpack.c.0.s8 %v687
        %v689 = vlaneseq
        %v690 = vshrl.u32 %v689, 7
        %v691 = vsub.s32 %v688, %v690
        %v692 = vrot.slane %v419, %v691
        %v694 = vunpack.c.l.s4 1983009808
        %v695 = vunpack.c.0.s8 %v694
        %v696 = vlaneseq
        %v697 = vshrl.u32 %v696, 7
        %v698 = vsub.s32 %v695, %v697
        %v699 = vrot.slane %v685, %v698
        %v700 = vcombine.high %v692, %v692
        %v701 = vcombine.high %v699, %v699
        %v703 = vunpack.c.l.s4 1983009808
        %v704 = vunpack.c.0.s8 %v703
        %v705 = vlaneseq
        %v706 = vshrl.u32 %v705, 7
        %v707 = vsub.s32 %v704, %v706
        %v708 = vrot.slane %v420, %v707
        %v709 = vcombine.high %v421, %v421
        %v711 = vunpack.c.l.s4 1983009808
        %v712 = vunpack.c.0.s8 %v711
        %v713 = vlaneseq
        %v714 = vshrl.u32 %v713, 7
        %v715 = vsub.s32 %v712, %v714
        %v716 = vrot.slane %v421, %v715
        %v718 = vunpack.c.l.s4 1983009808
        %v719 = vunpack.c.0.s8 %v718
        %v720 = vlaneseq
        %v721 = vshrl.u32 %v720, 7
        %v722 = vsub.s32 %v719, %v721
        %v723 = vrot.slane %v709, %v722
        %v724 = vcombine.high %v716, %v716
        %v725 = vcombine.high %v723, %v723
        %v726 = vcombine.high %v422, %v422
        %v728 = vunpack.c.l.s4 1983009808
        %v729 = vunpack.c.0.s8 %v728
        %v730 = vlaneseq
        %v731 = vshrl.u32 %v730, 7
        %v732 = vsub.s32 %v729, %v731
        %v733 = vrot.slane %v422, %v732
        %v735 = vunpack.c.l.s4 1983009808
        %v736 = vunpack.c.0.s8 %v735
        %v737 = vlaneseq
        %v738 = vshrl.u32 %v737, 7
        %v739 = vsub.s32 %v736, %v738
        %v740 = vrot.slane %v726, %v739
        %v741 = vcombine.high %v733, %v733
        %v742 = vcombine.high %v740, %v740
        %v744 = vunpack.c.l.s4 1983009808
        %v745 = vunpack.c.0.s8 %v744
        %v746 = vlaneseq
        %v747 = vshrl.u32 %v746, 7
        %v748 = vsub.s32 %v745, %v747
        %v749 = vrot.slane %v423, %v748
        %v750 = vcombine.high %v424, %v424
        %v752 = vunpack.c.l.s4 1983009808
        %v753 = vunpack.c.0.s8 %v752
        %v754 = vlaneseq
        %v755 = vshrl.u32 %v754, 7
        %v756 = vsub.s32 %v753, %v755
        %v757 = vrot.slane %v424, %v756
        %v759 = vunpack.c.l.s4 1983009808
        %v760 = vunpack.c.0.s8 %v759
        %v761 = vlaneseq
        %v762 = vshrl.u32 %v761, 7
        %v763 = vsub.s32 %v760, %v762
        %v764 = vrot.slane %v750, %v763
        %v765 = vcombine.high %v757, %v757
        %v766 = vcombine.high %v764, %v764
        %v767 = vcombine.high %v425, %v425
        %v769 = vunpack.c.l.s4 1983009808
        %v770 = vunpack.c.0.s8 %v769
        %v771 = vlaneseq
        %v772 = vshrl.u32 %v771, 7
        %v773 = vsub.s32 %v770, %v772
        %v774 = vrot.slane %v425, %v773
        %v776 = vunpack.c.l.s4 1983009808
        %v777 = vunpack.c.0.s8 %v776
        %v778 = vlaneseq
        %v779 = vshrl.u32 %v778, 7
        %v780 = vsub.s32 %v777, %v779
        %v781 = vrot.slane %v767, %v780
        %v782 = vcombine.high %v774, %v774
        %v783 = vcombine.high %v781, %v781
        %v785 = vunpack.c.l.s4 1983009808
        %v786 = vunpack.c.0.s8 %v785
        %v787 = vlaneseq
        %v788 = vshrl.u32 %v787, 7
        %v789 = vsub.s32 %v786, %v788
        %v790 = vrot.slane %v426, %v789
        %v791 = vcombine.high %v427, %v427
        %v793 = vunpack.c.l.s4 1983009808
        %v794 = vunpack.c.0.s8 %v793
        %v795 = vlaneseq
        %v796 = vshrl.u32 %v795, 7
        %v797 = vsub.s32 %v794, %v796
        %v798 = vrot.slane %v427, %v797
        %v800 = vunpack.c.l.s4 1983009808
        %v801 = vunpack.c.0.s8 %v800
        %v802 = vlaneseq
        %v803 = vshrl.u32 %v802, 7
        %v804 = vsub.s32 %v801, %v803
        %v805 = vrot.slane %v791, %v804
        %v806 = vcombine.high %v798, %v798
        %v807 = vcombine.high %v805, %v805
        %v808 = vcombine.high %v428, %v428
        %v810 = vunpack.c.l.s4 1983009808
        %v811 = vunpack.c.0.s8 %v810
        %v812 = vlaneseq
        %v813 = vshrl.u32 %v812, 7
        %v814 = vsub.s32 %v811, %v813
        %v815 = vrot.slane %v428, %v814
        %v817 = vunpack.c.l.s4 1983009808
        %v818 = vunpack.c.0.s8 %v817
        %v819 = vlaneseq
        %v820 = vshrl.u32 %v819, 7
        %v821 = vsub.s32 %v818, %v820
        %v822 = vrot.slane %v808, %v821
        %v823 = vcombine.high %v815, %v815
        %v824 = vcombine.high %v822, %v822
        %v826 = vunpack.c.l.s4 1983009808
        %v827 = vunpack.c.0.s8 %v826
        %v828 = vlaneseq
        %v829 = vshrl.u32 %v828, 7
        %v830 = vsub.s32 %v827, %v829
        %v831 = vrot.slane %v429, %v830
        %v832 = vcombine.high %v430, %v430
        %v834 = vunpack.c.l.s4 1983009808
        %v835 = vunpack.c.0.s8 %v834
        %v836 = vlaneseq
        %v837 = vshrl.u32 %v836, 7
        %v838 = vsub.s32 %v835, %v837
        %v839 = vrot.slane %v430, %v838
        %v841 = vunpack.c.l.s4 1983009808
        %v842 = vunpack.c.0.s8 %v841
        %v843 = vlaneseq
        %v844 = vshrl.u32 %v843, 7
        %v845 = vsub.s32 %v842, %v844
        %v846 = vrot.slane %v832, %v845
        %v847 = vcombine.high %v839, %v839
        %v848 = vcombine.high %v846, %v846
        %v849 = vcombine.high %v431, %v431
        %v851 = vunpack.c.l.s4 1983009808
        %v852 = vunpack.c.0.s8 %v851
        %v853 = vlaneseq
        %v854 = vshrl.u32 %v853, 7
        %v855 = vsub.s32 %v852, %v854
        %v856 = vrot.slane %v431, %v855
        %v858 = vunpack.c.l.s4 1983009808
        %v859 = vunpack.c.0.s8 %v858
        %v860 = vlaneseq
        %v861 = vshrl.u32 %v860, 7
        %v862 = vsub.s32 %v859, %v861
        %v863 = vrot.slane %v849, %v862
        %v864 = vcombine.high %v856, %v856
        %v865 = vcombine.high %v863, %v863
        %v867 = vunpack.c.l.s4 1983009808
        %v868 = vunpack.c.0.s8 %v867
        %v869 = vlaneseq
        %v870 = vshrl.u32 %v869, 7
        %v871 = vsub.s32 %v868, %v870
        %v872 = vrot.slane %v432, %v871
        %v873 = vcombine.low %v470, %v478
        %v874 = vcombine.low %v477, %v479
        %v876 = vunpack.c.l.s4 1983009808
        %v877 = vunpack.c.0.s8 %v876
        %v878 = vlaneseq
        %v879 = vshrl.u32 %v878, 7
        %v880 = vsub.s32 %v877, %v879
        %v881 = vrot.slane %v873, %v880
        %v883 = vunpack.c.l.s4 1983009808
        %v884 = vunpack.c.0.s8 %v883
        %v885 = vlaneseq
        %v886 = vshrl.u32 %v885, 7
        %v887 = vsub.s32 %v884, %v886
        %v888 = vrot.slane %v874, %v887
        %v889 = vcombine.low %v881, %v888
        %v890 = vcombine.low %v487, %v495
        %v891 = vcombine.low %v494, %v496
        %v893 = vunpack.c.l.s4 1983009808
        %v894 = vunpack.c.0.s8 %v893
        %v895 = vlaneseq
        %v896 = vshrl.u32 %v895, 7
        %v897 = vsub.s32 %v894, %v896
        %v898 = vrot.slane %v890, %v897
        %v900 = vunpack.c.l.s4 1983009808
        %v901 = vunpack.c.0.s8 %v900
        %v902 = vlaneseq
        %v903 = vshrl.u32 %v902, 7
        %v904 = vsub.s32 %v901, %v903
        %v905 = vrot.slane %v891, %v904
        %v906 = vcombine.low %v898, %v905
        %v907 = vcombine.low %v503, %v511
        %v908 = vcombine.low %v519, %v518
        %v910 = vunpack.c.l.s4 1983009808
        %v911 = vunpack.c.0.s8 %v910
        %v912 = vlaneseq
        %v913 = vshrl.u32 %v912, 7
        %v914 = vsub.s32 %v911, %v913
        %v915 = vrot.slane %v907, %v914
        %v917 = vunpack.c.l.s4 1983009808
        %v918 = vunpack.c.0.s8 %v917
        %v919 = vlaneseq
        %v920 = vshrl.u32 %v919, 7
        %v921 = vsub.s32 %v918, %v920
        %v922 = vrot.slane %v908, %v921
        %v923 = vcombine.low %v915, %v922
        %v924 = vcombine.low %v520, %v528
        %v925 = vcombine.low %v536, %v535
        %v927 = vunpack.c.l.s4 1983009808
        %v928 = vunpack.c.0.s8 %v927
        %v929 = vlaneseq
        %v930 = vshrl.u32 %v929, 7
        %v931 = vsub.s32 %v928, %v930
        %v932 = vrot.slane %v924, %v931
        %v934 = vunpack.c.l.s4 1983009808
        %v935 = vunpack.c.0.s8 %v934
        %v936 = vlaneseq
        %v937 = vshrl.u32 %v936, 7
        %v938 = vsub.s32 %v935, %v937
        %v939 = vrot.slane %v925, %v938
        %v940 = vcombine.low %v932, %v939
        %v941 = vcombine.low %v537, %v544
        %v942 = vcombine.low %v552, %v560
        %v944 = vunpack.c.l.s4 1983009808
        %v945 = vunpack.c.0.s8 %v944
        %v946 = vlaneseq
        %v947 = vshrl.u32 %v946, 7
        %v948 = vsub.s32 %v945, %v947
        %v949 = vrot.slane %v941, %v948
        %v951 = vunpack.c.l.s4 1983009808
        %v952 = vunpack.c.0.s8 %v951
        %v953 = vlaneseq
        %v954 = vshrl.u32 %v953, 7
        %v955 = vsub.s32 %v952, %v954
        %v956 = vrot.slane %v942, %v955
        %v957 = vcombine.low %v949, %v956
        %v958 = vcombine.low %v559, %v561
        %v959 = vcombine.low %v569, %v577
        %v961 = vunpack.c.l.s4 1983009808
        %v962 = vunpack.c.0.s8 %v961
        %v963 = vlaneseq
        %v964 = vshrl.u32 %v963, 7
        %v965 = vsub.s32 %v962, %v964
        %v966 = vrot.slane %v958, %v965
        %v968 = vunpack.c.l.s4 1983009808
        %v969 = vunpack.c.0.s8 %v968
        %v970 = vlaneseq
        %v971 = vshrl.u32 %v970, 7
        %v972 = vsub.s32 %v969, %v971
        %v973 = vrot.slane %v959, %v972
        %v974 = vcombine.low %v966, %v973
        %v975 = vcombine.low %v576, %v578
        %v976 = vcombine.low %v585, %v593
        %v978 = vunpack.c.l.s4 1983009808
        %v979 = vunpack.c.0.s8 %v978
        %v980 = vlaneseq
        %v981 = vshrl.u32 %v980, 7
        %v982 = vsub.s32 %v979, %v981
        %v983 = vrot.slane %v975, %v982
        %v985 = vunpack.c.l.s4 1983009808
        %v986 = vunpack.c.0.s8 %v985
        %v987 = vlaneseq
        %v988 = vshrl.u32 %v987, 7
        %v989 = vsub.s32 %v986, %v988
        %v990 = vrot.slane %v976, %v989
        %v991 = vcombine.low %v983, %v990
        %v992 = vcombine.low %v601, %v600
        %v993 = vcombine.low %v602, %v610
        %v995 = vunpack.c.l.s4 1983009808
        %v996 = vunpack.c.0.s8 %v995
        %v997 = vlaneseq
        %v998 = vshrl.u32 %v997, 7
        %v999 = vsub.s32 %v996, %v998
        %v1000 = vrot.slane %v992, %v999
        %v1002 = vunpack.c.l.s4 1983009808
        %v1003 = vunpack.c.0.s8 %v1002
        %v1004 = vlaneseq
        %v1005 = vshrl.u32 %v1004, 7
        %v1006 = vsub.s32 %v1003, %v1005
        %v1007 = vrot.slane %v993, %v1006
        %v1008 = vcombine.low %v1000, %v1007
        %v1009 = vcombine.low %v618, %v617
        %v1010 = vcombine.low %v619, %v626
        %v1012 = vunpack.c.l.s4 1983009808
        %v1013 = vunpack.c.0.s8 %v1012
        %v1014 = vlaneseq
        %v1015 = vshrl.u32 %v1014, 7
        %v1016 = vsub.s32 %v1013, %v1015
        %v1017 = vrot.slane %v1009, %v1016
        %v1019 = vunpack.c.l.s4 1983009808
        %v1020 = vunpack.c.0.s8 %v1019
        %v1021 = vlaneseq
        %v1022 = vshrl.u32 %v1021, 7
        %v1023 = vsub.s32 %v1020, %v1022
        %v1024 = vrot.slane %v1010, %v1023
        %v1025 = vcombine.low %v1017, %v1024
        %v1026 = vcombine.low %v634, %v642
        %v1027 = vcombine.low %v641, %v643
        %v1029 = vunpack.c.l.s4 1983009808
        %v1030 = vunpack.c.0.s8 %v1029
        %v1031 = vlaneseq
        %v1032 = vshrl.u32 %v1031, 7
        %v1033 = vsub.s32 %v1030, %v1032
        %v1034 = vrot.slane %v1026, %v1033
        %v1036 = vunpack.c.l.s4 1983009808
        %v1037 = vunpack.c.0.s8 %v1036
        %v1038 = vlaneseq
        %v1039 = vshrl.u32 %v1038, 7
        %v1040 = vsub.s32 %v1037, %v1039
        %v1041 = vrot.slane %v1027, %v1040
        %v1042 = vcombine.low %v1034, %v1041
        %v1043 = vcombine.low %v651, %v659
        %v1044 = vcombine.low %v658, %v660
        %v1046 = vunpack.c.l.s4 1983009808
        %v1047 = vunpack.c.0.s8 %v1046
        %v1048 = vlaneseq
        %v1049 = vshrl.u32 %v1048, 7
        %v1050 = vsub.s32 %v1047, %v1049
        %v1051 = vrot.slane %v1043, %v1050
        %v1053 = vunpack.c.l.s4 1983009808
        %v1054 = vunpack.c.0.s8 %v1053
        %v1055 = vlaneseq
        %v1056 = vshrl.u32 %v1055, 7
        %v1057 = vsub.s32 %v1054, %v1056
        %v1058 = vrot.slane %v1044, %v1057
        %v1059 = vcombine.low %v1051, %v1058
        %v1060 = vcombine.low %v667, %v675
        %v1061 = vcombine.low %v683, %v682
        %v1063 = vunpack.c.l.s4 1983009808
        %v1064 = vunpack.c.0.s8 %v1063
        %v1065 = vlaneseq
        %v1066 = vshrl.u32 %v1065, 7
        %v1067 = vsub.s32 %v1064, %v1066
        %v1068 = vrot.slane %v1060, %v1067
        %v1070 = vunpack.c.l.s4 1983009808
        %v1071 = vunpack.c.0.s8 %v1070
        %v1072 = vlaneseq
        %v1073 = vshrl.u32 %v1072, 7
        %v1074 = vsub.s32 %v1071, %v1073
        %v1075 = vrot.slane %v1061, %v1074
        %v1076 = vcombine.low %v1068, %v1075
        %v1077 = vcombine.low %v684, %v692
        %v1078 = vcombine.low %v700, %v699
        %v1080 = vunpack.c.l.s4 1983009808
        %v1081 = vunpack.c.0.s8 %v1080
        %v1082 = vlaneseq
        %v1083 = vshrl.u32 %v1082, 7
        %v1084 = vsub.s32 %v1081, %v1083
        %v1085 = vrot.slane %v1077, %v1084
        %v1087 = vunpack.c.l.s4 1983009808
        %v1088 = vunpack.c.0.s8 %v1087
        %v1089 = vlaneseq
        %v1090 = vshrl.u32 %v1089, 7
        %v1091 = vsub.s32 %v1088, %v1090
        %v1092 = vrot.slane %v1078, %v1091
        %v1093 = vcombine.low %v1085, %v1092
        %v1094 = vcombine.low %v701, %v708
        %v1095 = vcombine.low %v716, %v724
        %v1097 = vunpack.c.l.s4 1983009808
        %v1098 = vunpack.c.0.s8 %v1097
        %v1099 = vlaneseq
        %v1100 = vshrl.u32 %v1099, 7
        %v1101 = vsub.s32 %v1098, %v1100
        %v1102 = vrot.slane %v1094, %v1101
        %v1104 = vunpack.c.l.s4 1983009808
        %v1105 = vunpack.c.0.s8 %v1104
        %v1106 = vlaneseq
        %v1107 = vshrl.u32 %v1106, 7
        %v1108 = vsub.s32 %v1105, %v1107
        %v1109 = vrot.slane %v1095, %v1108
        %v1110 = vcombine.low %v1102, %v1109
        %v1111 = vcombine.low %v723, %v725
        %v1112 = vcombine.low %v733, %v741
        %v1114 = vunpack.c.l.s4 1983009808
        %v1115 = vunpack.c.0.s8 %v1114
        %v1116 = vlaneseq
        %v1117 = vshrl.u32 %v1116, 7
        %v1118 = vsub.s32 %v1115, %v1117
        %v1119 = vrot.slane %v1111, %v1118
        %v1121 = vunpack.c.l.s4 1983009808
        %v1122 = vunpack.c.0.s8 %v1121
        %v1123 = vlaneseq
        %v1124 = vshrl.u32 %v1123, 7
        %v1125 = vsub.s32 %v1122, %v1124
        %v1126 = vrot.slane %v1112, %v1125
        %v1127 = vcombine.low %v1119, %v1126
        %v1128 = vcombine.low %v740, %v742
        %v1129 = vcombine.low %v749, %v757
        %v1131 = vunpack.c.l.s4 1983009808
        %v1132 = vunpack.c.0.s8 %v1131
        %v1133 = vlaneseq
        %v1134 = vshrl.u32 %v1133, 7
        %v1135 = vsub.s32 %v1132, %v1134
        %v1136 = vrot.slane %v1128, %v1135
        %v1138 = vunpack.c.l.s4 1983009808
        %v1139 = vunpack.c.0.s8 %v1138
        %v1140 = vlaneseq
        %v1141 = vshrl.u32 %v1140, 7
        %v1142 = vsub.s32 %v1139, %v1141
        %v1143 = vrot.slane %v1129, %v1142
        %v1144 = vcombine.low %v1136, %v1143
        %v1145 = vcombine.low %v765, %v764
        %v1146 = vcombine.low %v766, %v774
        %v1148 = vunpack.c.l.s4 1983009808
        %v1149 = vunpack.c.0.s8 %v1148
        %v1150 = vlaneseq
        %v1151 = vshrl.u32 %v1150, 7
        %v1152 = vsub.s32 %v1149, %v1151
        %v1153 = vrot.slane %v1145, %v1152
        %v1155 = vunpack.c.l.s4 1983009808
        %v1156 = vunpack.c.0.s8 %v1155
        %v1157 = vlaneseq
        %v1158 = vshrl.u32 %v1157, 7
        %v1159 = vsub.s32 %v1156, %v1158
        %v1160 = vrot.slane %v1146, %v1159
        %v1161 = vcombine.low %v1153, %v1160
        %v1162 = vcombine.low %v782, %v781
        %v1163 = vcombine.low %v783, %v790
        %v1165 = vunpack.c.l.s4 1983009808
        %v1166 = vunpack.c.0.s8 %v1165
        %v1167 = vlaneseq
        %v1168 = vshrl.u32 %v1167, 7
        %v1169 = vsub.s32 %v1166, %v1168
        %v1170 = vrot.slane %v1162, %v1169
        %v1172 = vunpack.c.l.s4 1983009808
        %v1173 = vunpack.c.0.s8 %v1172
        %v1174 = vlaneseq
        %v1175 = vshrl.u32 %v1174, 7
        %v1176 = vsub.s32 %v1173, %v1175
        %v1177 = vrot.slane %v1163, %v1176
        %v1178 = vcombine.low %v1170, %v1177
        %v1179 = vcombine.low %v798, %v806
        %v1180 = vcombine.low %v805, %v807
        %v1182 = vunpack.c.l.s4 1983009808
        %v1183 = vunpack.c.0.s8 %v1182
        %v1184 = vlaneseq
        %v1185 = vshrl.u32 %v1184, 7
        %v1186 = vsub.s32 %v1183, %v1185
        %v1187 = vrot.slane %v1179, %v1186
        %v1189 = vunpack.c.l.s4 1983009808
        %v1190 = vunpack.c.0.s8 %v1189
        %v1191 = vlaneseq
        %v1192 = vshrl.u32 %v1191, 7
        %v1193 = vsub.s32 %v1190, %v1192
        %v1194 = vrot.slane %v1180, %v1193
        %v1195 = vcombine.low %v1187, %v1194
        %v1196 = vcombine.low %v815, %v823
        %v1197 = vcombine.low %v822, %v824
        %v1199 = vunpack.c.l.s4 1983009808
        %v1200 = vunpack.c.0.s8 %v1199
        %v1201 = vlaneseq
        %v1202 = vshrl.u32 %v1201, 7
        %v1203 = vsub.s32 %v1200, %v1202
        %v1204 = vrot.slane %v1196, %v1203
        %v1206 = vunpack.c.l.s4 1983009808
        %v1207 = vunpack.c.0.s8 %v1206
        %v1208 = vlaneseq
        %v1209 = vshrl.u32 %v1208, 7
        %v1210 = vsub.s32 %v1207, %v1209
        %v1211 = vrot.slane %v1197, %v1210
        %v1212 = vcombine.low %v1204, %v1211
        %v1213 = vcombine.low %v831, %v839
        %v1214 = vcombine.low %v847, %v846
        %v1216 = vunpack.c.l.s4 1983009808
        %v1217 = vunpack.c.0.s8 %v1216
        %v1218 = vlaneseq
        %v1219 = vshrl.u32 %v1218, 7
        %v1220 = vsub.s32 %v1217, %v1219
        %v1221 = vrot.slane %v1213, %v1220
        %v1223 = vunpack.c.l.s4 1983009808
        %v1224 = vunpack.c.0.s8 %v1223
        %v1225 = vlaneseq
        %v1226 = vshrl.u32 %v1225, 7
        %v1227 = vsub.s32 %v1224, %v1226
        %v1228 = vrot.slane %v1214, %v1227
        %v1229 = vcombine.low %v1221, %v1228
        %v1230 = vcombine.low %v848, %v856
        %v1231 = vcombine.low %v864, %v863
        %v1233 = vunpack.c.l.s4 1983009808
        %v1234 = vunpack.c.0.s8 %v1233
        %v1235 = vlaneseq
        %v1236 = vshrl.u32 %v1235, 7
        %v1237 = vsub.s32 %v1234, %v1236
        %v1238 = vrot.slane %v1230, %v1237
        %v1240 = vunpack.c.l.s4 1983009808
        %v1241 = vunpack.c.0.s8 %v1240
        %v1242 = vlaneseq
        %v1243 = vshrl.u32 %v1242, 7
        %v1244 = vsub.s32 %v1241, %v1243
        %v1245 = vrot.slane %v1231, %v1244
        %v1246 = vcombine.low %v1238, %v1245
        %v1247 = vcombine.low %v865, %v872
        %v1249 = vunpack.c.l.s4 1983009808
        %v1250 = vunpack.c.0.s8 %v1249
        %v1251 = vlaneseq
        %v1252 = vshrl.u32 %v1251, 7
        %v1253 = vsub.s32 %v1250, %v1252
        %v1254 = vrot.slane %v1247, %v1253
        %v1278 = vpack.c.bf16 %v906, %v889
        %v1279 = vpack.c.bf16 %v940, %v923
        %v1280 = vpack.c.bf16 %v974, %v957
        %v1281 = vpack.c.bf16 %v1008, %v991
        %v1282 = vpack.c.bf16 %v1042, %v1025
        %v1283 = vpack.c.bf16 %v1076, %v1059
        %v1284 = vpack.c.bf16 %v1110, %v1093
        %v1285 = vpack.c.bf16 %v1144, %v1127
        %v1286 = vpack.c.bf16 %v1178, %v1161
        %v1287 = vpack.c.bf16 %v1212, %v1195
        %v1288 = vpack.c.bf16 %v1246, %v1229
        %v1289 = vpack.c.bf16 %v1254, %v1254
        %v1302 = vunpack.c.l.b16 %v1278
        %v1303 = vunpack.c.h.b16 %v1278
        %v1304 = vunpack.c.l.b16 %v1279
        %v1305 = vunpack.c.h.b16 %v1279
        %v1306 = vunpack.c.l.b16 %v1280
        %v1307 = vunpack.c.h.b16 %v1280
        %v1308 = vunpack.c.l.b16 %v1281
        %v1309 = vunpack.c.h.b16 %v1281
        %v1310 = vunpack.c.l.b16 %v1282
        %v1311 = vunpack.c.h.b16 %v1282
        %v1312 = vunpack.c.l.b16 %v1283
        %v1313 = vunpack.c.h.b16 %v1283
        %v1314 = vunpack.c.l.b16 %v1284
        %v1315 = vunpack.c.h.b16 %v1284
        %v1316 = vunpack.c.l.b16 %v1285
        %v1317 = vunpack.c.h.b16 %v1285
        %v1318 = vunpack.c.l.b16 %v1286
        %v1319 = vunpack.c.h.b16 %v1286
        %v1320 = vunpack.c.l.b16 %v1287
        %v1321 = vunpack.c.h.b16 %v1287
        %v1322 = vunpack.c.l.b16 %v1288
        %v1323 = vunpack.c.h.b16 %v1288
        %v1324 = vunpack.c.l.b16 %v1289
        %v1325 = vpack.c.b16 %v1302, %v1302
        %v1326 = vpack.c.b16 %v1303, %v1303
        %v1327 = vpack.c.b16 %v1304, %v1304
        %v1328 = vpack.c.b16 %v1305, %v1305
        %v1329 = vpack.c.b16 %v1306, %v1306
        %v1330 = vpack.c.b16 %v1307, %v1307
        %v1331 = vpack.c.b16 %v1308, %v1308
        %v1332 = vpack.c.b16 %v1309, %v1309
        %v1333 = vpack.c.b16 %v1310, %v1310
        %v1334 = vpack.c.b16 %v1311, %v1311
        %v1335 = vpack.c.b16 %v1312, %v1312
        %v1336 = vpack.c.b16 %v1313, %v1313
        %v1337 = vpack.c.b16 %v1314, %v1314
        %v1338 = vpack.c.b16 %v1315, %v1315
        %v1339 = vpack.c.b16 %v1316, %v1316
        %v1340 = vpack.c.b16 %v1317, %v1317
        %v1341 = vpack.c.b16 %v1318, %v1318
        %v1342 = vpack.c.b16 %v1319, %v1319
        %v1343 = vpack.c.b16 %v1320, %v1320
        %v1344 = vpack.c.b16 %v1321, %v1321
        %v1345 = vpack.c.b16 %v1322, %v1322
        %v1346 = vpack.c.b16 %v1323, %v1323
        %v1347 = vpack.c.b16 %v1324, %v1324
        %vm1371 = vcmask 60416
        %1372 = vst.msk [vmem:[#allocation4] sm:$0xf] %vm1371, %v1325
        %1373 = vst.msk [vmem:[#allocation4 + $0x4] sm:$0xf] %vm1371, %v1326
        %1374 = vst.msk [vmem:[#allocation4 + $0x8] sm:$0xf] %vm1371, %v1327
        %1375 = vst.msk [vmem:[#allocation4 + $0xc] sm:$0xf] %vm1371, %v1328
        %1376 = vst.msk [vmem:[#allocation4 + $0x10] sm:$0xf] %vm1371, %v1329
        %1377 = vst.msk [vmem:[#allocation4 + $0x14] sm:$0xf] %vm1371, %v1330
        %1378 = vst.msk [vmem:[#allocation4 + $0x18] sm:$0xf] %vm1371, %v1331
        %1379 = vst.msk [vmem:[#allocation4 + $0x1c] sm:$0xf] %vm1371, %v1332
        %1380 = vst.msk [vmem:[#allocation4 + $0x20] sm:$0xf] %vm1371, %v1333
        %1381 = vst.msk [vmem:[#allocation4 + $0x24] sm:$0xf] %vm1371, %v1334
        %1382 = vst.msk [vmem:[#allocation4 + $0x28] sm:$0xf] %vm1371, %v1335
        %1383 = vst.msk [vmem:[#allocation4 + $0x2c] sm:$0xf] %vm1371, %v1336
        %1384 = vst.msk [vmem:[#allocation4 + $0x30] sm:$0xf] %vm1371, %v1337
        %1385 = vst.msk [vmem:[#allocation4 + $0x34] sm:$0xf] %vm1371, %v1338
        %1386 = vst.msk [vmem:[#allocation4 + $0x38] sm:$0xf] %vm1371, %v1339
        %1387 = vst.msk [vmem:[#allocation4 + $0x3c] sm:$0xf] %vm1371, %v1340
        %1388 = vst.msk [vmem:[#allocation4 + $0x40] sm:$0xf] %vm1371, %v1341
        %1389 = vst.msk [vmem:[#allocation4 + $0x44] sm:$0xf] %vm1371, %v1342
        %1390 = vst.msk [vmem:[#allocation4 + $0x48] sm:$0xf] %vm1371, %v1343
        %1391 = vst.msk [vmem:[#allocation4 + $0x4c] sm:$0xf] %vm1371, %v1344
        %1392 = vst.msk [vmem:[#allocation4 + $0x50] sm:$0xf] %vm1371, %v1345
        %1393 = vst.msk [vmem:[#allocation4 + $0x54] sm:$0xf] %vm1371, %v1346
        %1394 = vst.msk [vmem:[#allocation4 + $0x58] sm:$0x3] %vm378, %v1347
        %v1395 = vld [vmem:[#allocation2 + $0x1] sm:$0xff]
        %v1396 = vld [vmem:[#allocation2 + $0x9] sm:$0xff]
        %v1397 = vld [vmem:[#allocation2 + $0x11] sm:$0x3]
        %v1398 = vld [vmem:[#allocation2 + $0x19] sm:$0xff]
        %v1399 = vld [vmem:[#allocation2 + $0x21] sm:$0xff]
        %v1400 = vld [vmem:[#allocation2 + $0x29] sm:$0x3]
        %v1401 = vld [vmem:[#allocation2 + $0x31] sm:$0xff]
        %v1402 = vld [vmem:[#allocation2 + $0x39] sm:$0xff]
        %v1403 = vld [vmem:[#allocation2 + $0x41] sm:$0x3]
        %v1404 = vld [vmem:[#allocation2 + $0x49] sm:$0xff]
        %v1405 = vld [vmem:[#allocation2 + $0x51] sm:$0xff]
        %v1406 = vld [vmem:[#allocation2 + $0x59] sm:$0x3]
        %v1407 = vld [vmem:[#allocation2 + $0x61] sm:$0xff]
        %v1408 = vld [vmem:[#allocation2 + $0x69] sm:$0xff]
        %v1409 = vld [vmem:[#allocation2 + $0x71] sm:$0x3]
        %v1410 = vld [vmem:[#allocation2 + $0x79] sm:$0xff]
        %v1411 = vld [vmem:[#allocation2 + $0x81] sm:$0xff]
        %v1412 = vld [vmem:[#allocation2 + $0x89] sm:$0x3]
        %v1413 = vld [vmem:[#allocation2 + $0x91] sm:$0xff]
        %v1414 = vld [vmem:[#allocation2 + $0x99] sm:$0xff]
        %v1415 = vld [vmem:[#allocation2 + $0xa1] sm:$0x3]
        %v1416 = vld [vmem:[#allocation2 + $0xa9] sm:$0xff]
        %v1417 = vld [vmem:[#allocation2 + $0xb1] sm:$0xff]
        %v1418 = vld [vmem:[#allocation2 + $0xb9] sm:$0x3]
        %v1419 = vld [vmem:[#allocation2 + $0xc1] sm:$0xff]
        %v1420 = vld [vmem:[#allocation2 + $0xc9] sm:$0xff]
        %v1421 = vld [vmem:[#allocation2 + $0xd1] sm:$0x3]
        %v1422 = vld [vmem:[#allocation2 + $0xd9] sm:$0xff]
        %v1423 = vld [vmem:[#allocation2 + $0xe1] sm:$0xff]
        %v1424 = vld [vmem:[#allocation2 + $0xe9] sm:$0x3]
        %v1455 = vcombine.high %v1395, %v1395
        %v1457 = vunpack.c.l.s4 1983009808
        %v1458 = vunpack.c.0.s8 %v1457
        %v1459 = vlaneseq
        %v1460 = vshrl.u32 %v1459, 7
        %v1461 = vsub.s32 %v1458, %v1460
        %v1462 = vrot.slane %v1395, %v1461
        %v1464 = vunpack.c.l.s4 1983009808
        %v1465 = vunpack.c.0.s8 %v1464
        %v1466 = vlaneseq
        %v1467 = vshrl.u32 %v1466, 7
        %v1468 = vsub.s32 %v1465, %v1467
        %v1469 = vrot.slane %v1455, %v1468
        %v1470 = vcombine.high %v1462, %v1462
        %v1471 = vcombine.high %v1469, %v1469
        %v1472 = vcombine.high %v1396, %v1396
        %v1474 = vunpack.c.l.s4 1983009808
        %v1475 = vunpack.c.0.s8 %v1474
        %v1476 = vlaneseq
        %v1477 = vshrl.u32 %v1476, 7
        %v1478 = vsub.s32 %v1475, %v1477
        %v1479 = vrot.slane %v1396, %v1478
        %v1481 = vunpack.c.l.s4 1983009808
        %v1482 = vunpack.c.0.s8 %v1481
        %v1483 = vlaneseq
        %v1484 = vshrl.u32 %v1483, 7
        %v1485 = vsub.s32 %v1482, %v1484
        %v1486 = vrot.slane %v1472, %v1485
        %v1487 = vcombine.high %v1479, %v1479
        %v1488 = vcombine.high %v1486, %v1486
        %v1490 = vunpack.c.l.s4 1983009808
        %v1491 = vunpack.c.0.s8 %v1490
        %v1492 = vlaneseq
        %v1493 = vshrl.u32 %v1492, 7
        %v1494 = vsub.s32 %v1491, %v1493
        %v1495 = vrot.slane %v1397, %v1494
        %v1496 = vcombine.high %v1398, %v1398
        %v1498 = vunpack.c.l.s4 1983009808
        %v1499 = vunpack.c.0.s8 %v1498
        %v1500 = vlaneseq
        %v1501 = vshrl.u32 %v1500, 7
        %v1502 = vsub.s32 %v1499, %v1501
        %v1503 = vrot.slane %v1398, %v1502
        %v1505 = vunpack.c.l.s4 1983009808
        %v1506 = vunpack.c.0.s8 %v1505
        %v1507 = vlaneseq
        %v1508 = vshrl.u32 %v1507, 7
        %v1509 = vsub.s32 %v1506, %v1508
        %v1510 = vrot.slane %v1496, %v1509
        %v1511 = vcombine.high %v1503, %v1503
        %v1512 = vcombine.high %v1510, %v1510
        %v1513 = vcombine.high %v1399, %v1399
        %v1515 = vunpack.c.l.s4 1983009808
        %v1516 = vunpack.c.0.s8 %v1515
        %v1517 = vlaneseq
        %v1518 = vshrl.u32 %v1517, 7
        %v1519 = vsub.s32 %v1516, %v1518
        %v1520 = vrot.slane %v1399, %v1519
        %v1522 = vunpack.c.l.s4 1983009808
        %v1523 = vunpack.c.0.s8 %v1522
        %v1524 = vlaneseq
        %v1525 = vshrl.u32 %v1524, 7
        %v1526 = vsub.s32 %v1523, %v1525
        %v1527 = vrot.slane %v1513, %v1526
        %v1528 = vcombine.high %v1520, %v1520
        %v1529 = vcombine.high %v1527, %v1527
        %v1531 = vunpack.c.l.s4 1983009808
        %v1532 = vunpack.c.0.s8 %v1531
        %v1533 = vlaneseq
        %v1534 = vshrl.u32 %v1533, 7
        %v1535 = vsub.s32 %v1532, %v1534
        %v1536 = vrot.slane %v1400, %v1535
        %v1537 = vcombine.high %v1401, %v1401
        %v1539 = vunpack.c.l.s4 1983009808
        %v1540 = vunpack.c.0.s8 %v1539
        %v1541 = vlaneseq
        %v1542 = vshrl.u32 %v1541, 7
        %v1543 = vsub.s32 %v1540, %v1542
        %v1544 = vrot.slane %v1401, %v1543
        %v1546 = vunpack.c.l.s4 1983009808
        %v1547 = vunpack.c.0.s8 %v1546
        %v1548 = vlaneseq
        %v1549 = vshrl.u32 %v1548, 7
        %v1550 = vsub.s32 %v1547, %v1549
        %v1551 = vrot.slane %v1537, %v1550
        %v1552 = vcombine.high %v1544, %v1544
        %v1553 = vcombine.high %v1551, %v1551
        %v1554 = vcombine.high %v1402, %v1402
        %v1556 = vunpack.c.l.s4 1983009808
        %v1557 = vunpack.c.0.s8 %v1556
        %v1558 = vlaneseq
        %v1559 = vshrl.u32 %v1558, 7
        %v1560 = vsub.s32 %v1557, %v1559
        %v1561 = vrot.slane %v1402, %v1560
        %v1563 = vunpack.c.l.s4 1983009808
        %v1564 = vunpack.c.0.s8 %v1563
        %v1565 = vlaneseq
        %v1566 = vshrl.u32 %v1565, 7
        %v1567 = vsub.s32 %v1564, %v1566
        %v1568 = vrot.slane %v1554, %v1567
        %v1569 = vcombine.high %v1561, %v1561
        %v1570 = vcombine.high %v1568, %v1568
        %v1572 = vunpack.c.l.s4 1983009808
        %v1573 = vunpack.c.0.s8 %v1572
        %v1574 = vlaneseq
        %v1575 = vshrl.u32 %v1574, 7
        %v1576 = vsub.s32 %v1573, %v1575
        %v1577 = vrot.slane %v1403, %v1576
        %v1578 = vcombine.high %v1404, %v1404
        %v1580 = vunpack.c.l.s4 1983009808
        %v1581 = vunpack.c.0.s8 %v1580
        %v1582 = vlaneseq
        %v1583 = vshrl.u32 %v1582, 7
        %v1584 = vsub.s32 %v1581, %v1583
        %v1585 = vrot.slane %v1404, %v1584
        %v1587 = vunpack.c.l.s4 1983009808
        %v1588 = vunpack.c.0.s8 %v1587
        %v1589 = vlaneseq
        %v1590 = vshrl.u32 %v1589, 7
        %v1591 = vsub.s32 %v1588, %v1590
        %v1592 = vrot.slane %v1578, %v1591
        %v1593 = vcombine.high %v1585, %v1585
        %v1594 = vcombine.high %v1592, %v1592
        %v1595 = vcombine.high %v1405, %v1405
        %v1597 = vunpack.c.l.s4 1983009808
        %v1598 = vunpack.c.0.s8 %v1597
        %v1599 = vlaneseq
        %v1600 = vshrl.u32 %v1599, 7
        %v1601 = vsub.s32 %v1598, %v1600
        %v1602 = vrot.slane %v1405, %v1601
        %v1604 = vunpack.c.l.s4 1983009808
        %v1605 = vunpack.c.0.s8 %v1604
        %v1606 = vlaneseq
        %v1607 = vshrl.u32 %v1606, 7
        %v1608 = vsub.s32 %v1605, %v1607
        %v1609 = vrot.slane %v1595, %v1608
        %v1610 = vcombine.high %v1602, %v1602
        %v1611 = vcombine.high %v1609, %v1609
        %v1613 = vunpack.c.l.s4 1983009808
        %v1614 = vunpack.c.0.s8 %v1613
        %v1615 = vlaneseq
        %v1616 = vshrl.u32 %v1615, 7
        %v1617 = vsub.s32 %v1614, %v1616
        %v1618 = vrot.slane %v1406, %v1617
        %v1619 = vcombine.high %v1407, %v1407
        %v1621 = vunpack.c.l.s4 1983009808
        %v1622 = vunpack.c.0.s8 %v1621
        %v1623 = vlaneseq
        %v1624 = vshrl.u32 %v1623, 7
        %v1625 = vsub.s32 %v1622, %v1624
        %v1626 = vrot.slane %v1407, %v1625
        %v1628 = vunpack.c.l.s4 1983009808
        %v1629 = vunpack.c.0.s8 %v1628
        %v1630 = vlaneseq
        %v1631 = vshrl.u32 %v1630, 7
        %v1632 = vsub.s32 %v1629, %v1631
        %v1633 = vrot.slane %v1619, %v1632
        %v1634 = vcombine.high %v1626, %v1626
        %v1635 = vcombine.high %v1633, %v1633
        %v1636 = vcombine.high %v1408, %v1408
        %v1638 = vunpack.c.l.s4 1983009808
        %v1639 = vunpack.c.0.s8 %v1638
        %v1640 = vlaneseq
        %v1641 = vshrl.u32 %v1640, 7
        %v1642 = vsub.s32 %v1639, %v1641
        %v1643 = vrot.slane %v1408, %v1642
        %v1645 = vunpack.c.l.s4 1983009808
        %v1646 = vunpack.c.0.s8 %v1645
        %v1647 = vlaneseq
        %v1648 = vshrl.u32 %v1647, 7
        %v1649 = vsub.s32 %v1646, %v1648
        %v1650 = vrot.slane %v1636, %v1649
        %v1651 = vcombine.high %v1643, %v1643
        %v1652 = vcombine.high %v1650, %v1650
        %v1654 = vunpack.c.l.s4 1983009808
        %v1655 = vunpack.c.0.s8 %v1654
        %v1656 = vlaneseq
        %v1657 = vshrl.u32 %v1656, 7
        %v1658 = vsub.s32 %v1655, %v1657
        %v1659 = vrot.slane %v1409, %v1658
        %v1660 = vcombine.high %v1410, %v1410
        %v1662 = vunpack.c.l.s4 1983009808
        %v1663 = vunpack.c.0.s8 %v1662
        %v1664 = vlaneseq
        %v1665 = vshrl.u32 %v1664, 7
        %v1666 = vsub.s32 %v1663, %v1665
        %v1667 = vrot.slane %v1410, %v1666
        %v1669 = vunpack.c.l.s4 1983009808
        %v1670 = vunpack.c.0.s8 %v1669
        %v1671 = vlaneseq
        %v1672 = vshrl.u32 %v1671, 7
        %v1673 = vsub.s32 %v1670, %v1672
        %v1674 = vrot.slane %v1660, %v1673
        %v1675 = vcombine.high %v1667, %v1667
        %v1676 = vcombine.high %v1674, %v1674
        %v1677 = vcombine.high %v1411, %v1411
        %v1679 = vunpack.c.l.s4 1983009808
        %v1680 = vunpack.c.0.s8 %v1679
        %v1681 = vlaneseq
        %v1682 = vshrl.u32 %v1681, 7
        %v1683 = vsub.s32 %v1680, %v1682
        %v1684 = vrot.slane %v1411, %v1683
        %v1686 = vunpack.c.l.s4 1983009808
        %v1687 = vunpack.c.0.s8 %v1686
        %v1688 = vlaneseq
        %v1689 = vshrl.u32 %v1688, 7
        %v1690 = vsub.s32 %v1687, %v1689
        %v1691 = vrot.slane %v1677, %v1690
        %v1692 = vcombine.high %v1684, %v1684
        %v1693 = vcombine.high %v1691, %v1691
        %v1695 = vunpack.c.l.s4 1983009808
        %v1696 = vunpack.c.0.s8 %v1695
        %v1697 = vlaneseq
        %v1698 = vshrl.u32 %v1697, 7
        %v1699 = vsub.s32 %v1696, %v1698
        %v1700 = vrot.slane %v1412, %v1699
        %v1701 = vcombine.high %v1413, %v1413
        %v1703 = vunpack.c.l.s4 1983009808
        %v1704 = vunpack.c.0.s8 %v1703
        %v1705 = vlaneseq
        %v1706 = vshrl.u32 %v1705, 7
        %v1707 = vsub.s32 %v1704, %v1706
        %v1708 = vrot.slane %v1413, %v1707
        %v1710 = vunpack.c.l.s4 1983009808
        %v1711 = vunpack.c.0.s8 %v1710
        %v1712 = vlaneseq
        %v1713 = vshrl.u32 %v1712, 7
        %v1714 = vsub.s32 %v1711, %v1713
        %v1715 = vrot.slane %v1701, %v1714
        %v1716 = vcombine.high %v1708, %v1708
        %v1717 = vcombine.high %v1715, %v1715
        %v1718 = vcombine.high %v1414, %v1414
        %v1720 = vunpack.c.l.s4 1983009808
        %v1721 = vunpack.c.0.s8 %v1720
        %v1722 = vlaneseq
        %v1723 = vshrl.u32 %v1722, 7
        %v1724 = vsub.s32 %v1721, %v1723
        %v1725 = vrot.slane %v1414, %v1724
        %v1727 = vunpack.c.l.s4 1983009808
        %v1728 = vunpack.c.0.s8 %v1727
        %v1729 = vlaneseq
        %v1730 = vshrl.u32 %v1729, 7
        %v1731 = vsub.s32 %v1728, %v1730
        %v1732 = vrot.slane %v1718, %v1731
        %v1733 = vcombine.high %v1725, %v1725
        %v1734 = vcombine.high %v1732, %v1732
        %v1736 = vunpack.c.l.s4 1983009808
        %v1737 = vunpack.c.0.s8 %v1736
        %v1738 = vlaneseq
        %v1739 = vshrl.u32 %v1738, 7
        %v1740 = vsub.s32 %v1737, %v1739
        %v1741 = vrot.slane %v1415, %v1740
        %v1742 = vcombine.high %v1416, %v1416
        %v1744 = vunpack.c.l.s4 1983009808
        %v1745 = vunpack.c.0.s8 %v1744
        %v1746 = vlaneseq
        %v1747 = vshrl.u32 %v1746, 7
        %v1748 = vsub.s32 %v1745, %v1747
        %v1749 = vrot.slane %v1416, %v1748
        %v1751 = vunpack.c.l.s4 1983009808
        %v1752 = vunpack.c.0.s8 %v1751
        %v1753 = vlaneseq
        %v1754 = vshrl.u32 %v1753, 7
        %v1755 = vsub.s32 %v1752, %v1754
        %v1756 = vrot.slane %v1742, %v1755
        %v1757 = vcombine.high %v1749, %v1749
        %v1758 = vcombine.high %v1756, %v1756
        %v1759 = vcombine.high %v1417, %v1417
        %v1761 = vunpack.c.l.s4 1983009808
        %v1762 = vunpack.c.0.s8 %v1761
        %v1763 = vlaneseq
        %v1764 = vshrl.u32 %v1763, 7
        %v1765 = vsub.s32 %v1762, %v1764
        %v1766 = vrot.slane %v1417, %v1765
        %v1768 = vunpack.c.l.s4 1983009808
        %v1769 = vunpack.c.0.s8 %v1768
        %v1770 = vlaneseq
        %v1771 = vshrl.u32 %v1770, 7
        %v1772 = vsub.s32 %v1769, %v1771
        %v1773 = vrot.slane %v1759, %v1772
        %v1774 = vcombine.high %v1766, %v1766
        %v1775 = vcombine.high %v1773, %v1773
        %v1777 = vunpack.c.l.s4 1983009808
        %v1778 = vunpack.c.0.s8 %v1777
        %v1779 = vlaneseq
        %v1780 = vshrl.u32 %v1779, 7
        %v1781 = vsub.s32 %v1778, %v1780
        %v1782 = vrot.slane %v1418, %v1781
        %v1783 = vcombine.high %v1419, %v1419
        %v1785 = vunpack.c.l.s4 1983009808
        %v1786 = vunpack.c.0.s8 %v1785
        %v1787 = vlaneseq
        %v1788 = vshrl.u32 %v1787, 7
        %v1789 = vsub.s32 %v1786, %v1788
        %v1790 = vrot.slane %v1419, %v1789
        %v1792 = vunpack.c.l.s4 1983009808
        %v1793 = vunpack.c.0.s8 %v1792
        %v1794 = vlaneseq
        %v1795 = vshrl.u32 %v1794, 7
        %v1796 = vsub.s32 %v1793, %v1795
        %v1797 = vrot.slane %v1783, %v1796
        %v1798 = vcombine.high %v1790, %v1790
        %v1799 = vcombine.high %v1797, %v1797
        %v1800 = vcombine.high %v1420, %v1420
        %v1802 = vunpack.c.l.s4 1983009808
        %v1803 = vunpack.c.0.s8 %v1802
        %v1804 = vlaneseq
        %v1805 = vshrl.u32 %v1804, 7
        %v1806 = vsub.s32 %v1803, %v1805
        %v1807 = vrot.slane %v1420, %v1806
        %v1809 = vunpack.c.l.s4 1983009808
        %v1810 = vunpack.c.0.s8 %v1809
        %v1811 = vlaneseq
        %v1812 = vshrl.u32 %v1811, 7
        %v1813 = vsub.s32 %v1810, %v1812
        %v1814 = vrot.slane %v1800, %v1813
        %v1815 = vcombine.high %v1807, %v1807
        %v1816 = vcombine.high %v1814, %v1814
        %v1818 = vunpack.c.l.s4 1983009808
        %v1819 = vunpack.c.0.s8 %v1818
        %v1820 = vlaneseq
        %v1821 = vshrl.u32 %v1820, 7
        %v1822 = vsub.s32 %v1819, %v1821
        %v1823 = vrot.slane %v1421, %v1822
        %v1824 = vcombine.high %v1422, %v1422
        %v1826 = vunpack.c.l.s4 1983009808
        %v1827 = vunpack.c.0.s8 %v1826
        %v1828 = vlaneseq
        %v1829 = vshrl.u32 %v1828, 7
        %v1830 = vsub.s32 %v1827, %v1829
        %v1831 = vrot.slane %v1422, %v1830
        %v1833 = vunpack.c.l.s4 1983009808
        %v1834 = vunpack.c.0.s8 %v1833
        %v1835 = vlaneseq
        %v1836 = vshrl.u32 %v1835, 7
        %v1837 = vsub.s32 %v1834, %v1836
        %v1838 = vrot.slane %v1824, %v1837
        %v1839 = vcombine.high %v1831, %v1831
        %v1840 = vcombine.high %v1838, %v1838
        %v1841 = vcombine.high %v1423, %v1423
        %v1843 = vunpack.c.l.s4 1983009808
        %v1844 = vunpack.c.0.s8 %v1843
        %v1845 = vlaneseq
        %v1846 = vshrl.u32 %v1845, 7
        %v1847 = vsub.s32 %v1844, %v1846
        %v1848 = vrot.slane %v1423, %v1847
        %v1850 = vunpack.c.l.s4 1983009808
        %v1851 = vunpack.c.0.s8 %v1850
        %v1852 = vlaneseq
        %v1853 = vshrl.u32 %v1852, 7
        %v1854 = vsub.s32 %v1851, %v1853
        %v1855 = vrot.slane %v1841, %v1854
        %v1856 = vcombine.high %v1848, %v1848
        %v1857 = vcombine.high %v1855, %v1855
        %v1859 = vunpack.c.l.s4 1983009808
        %v1860 = vunpack.c.0.s8 %v1859
        %v1861 = vlaneseq
        %v1862 = vshrl.u32 %v1861, 7
        %v1863 = vsub.s32 %v1860, %v1862
        %v1864 = vrot.slane %v1424, %v1863
        %v1865 = vcombine.low %v1462, %v1470
        %v1866 = vcombine.low %v1469, %v1471
        %v1868 = vunpack.c.l.s4 1983009808
        %v1869 = vunpack.c.0.s8 %v1868
        %v1870 = vlaneseq
        %v1871 = vshrl.u32 %v1870, 7
        %v1872 = vsub.s32 %v1869, %v1871
        %v1873 = vrot.slane %v1865, %v1872
        %v1875 = vunpack.c.l.s4 1983009808
        %v1876 = vunpack.c.0.s8 %v1875
        %v1877 = vlaneseq
        %v1878 = vshrl.u32 %v1877, 7
        %v1879 = vsub.s32 %v1876, %v1878
        %v1880 = vrot.slane %v1866, %v1879
        %v1881 = vcombine.low %v1873, %v1880
        %v1882 = vcombine.low %v1479, %v1487
        %v1883 = vcombine.low %v1486, %v1488
        %v1885 = vunpack.c.l.s4 1983009808
        %v1886 = vunpack.c.0.s8 %v1885
        %v1887 = vlaneseq
        %v1888 = vshrl.u32 %v1887, 7
        %v1889 = vsub.s32 %v1886, %v1888
        %v1890 = vrot.slane %v1882, %v1889
        %v1892 = vunpack.c.l.s4 1983009808
        %v1893 = vunpack.c.0.s8 %v1892
        %v1894 = vlaneseq
        %v1895 = vshrl.u32 %v1894, 7
        %v1896 = vsub.s32 %v1893, %v1895
        %v1897 = vrot.slane %v1883, %v1896
        %v1898 = vcombine.low %v1890, %v1897
        %v1899 = vcombine.low %v1495, %v1503
        %v1900 = vcombine.low %v1511, %v1510
        %v1902 = vunpack.c.l.s4 1983009808
        %v1903 = vunpack.c.0.s8 %v1902
        %v1904 = vlaneseq
        %v1905 = vshrl.u32 %v1904, 7
        %v1906 = vsub.s32 %v1903, %v1905
        %v1907 = vrot.slane %v1899, %v1906
        %v1909 = vunpack.c.l.s4 1983009808
        %v1910 = vunpack.c.0.s8 %v1909
        %v1911 = vlaneseq
        %v1912 = vshrl.u32 %v1911, 7
        %v1913 = vsub.s32 %v1910, %v1912
        %v1914 = vrot.slane %v1900, %v1913
        %v1915 = vcombine.low %v1907, %v1914
        %v1916 = vcombine.low %v1512, %v1520
        %v1917 = vcombine.low %v1528, %v1527
        %v1919 = vunpack.c.l.s4 1983009808
        %v1920 = vunpack.c.0.s8 %v1919
        %v1921 = vlaneseq
        %v1922 = vshrl.u32 %v1921, 7
        %v1923 = vsub.s32 %v1920, %v1922
        %v1924 = vrot.slane %v1916, %v1923
        %v1926 = vunpack.c.l.s4 1983009808
        %v1927 = vunpack.c.0.s8 %v1926
        %v1928 = vlaneseq
        %v1929 = vshrl.u32 %v1928, 7
        %v1930 = vsub.s32 %v1927, %v1929
        %v1931 = vrot.slane %v1917, %v1930
        %v1932 = vcombine.low %v1924, %v1931
        %v1933 = vcombine.low %v1529, %v1536
        %v1934 = vcombine.low %v1544, %v1552
        %v1936 = vunpack.c.l.s4 1983009808
        %v1937 = vunpack.c.0.s8 %v1936
        %v1938 = vlaneseq
        %v1939 = vshrl.u32 %v1938, 7
        %v1940 = vsub.s32 %v1937, %v1939
        %v1941 = vrot.slane %v1933, %v1940
        %v1943 = vunpack.c.l.s4 1983009808
        %v1944 = vunpack.c.0.s8 %v1943
        %v1945 = vlaneseq
        %v1946 = vshrl.u32 %v1945, 7
        %v1947 = vsub.s32 %v1944, %v1946
        %v1948 = vrot.slane %v1934, %v1947
        %v1949 = vcombine.low %v1941, %v1948
        %v1950 = vcombine.low %v1551, %v1553
        %v1951 = vcombine.low %v1561, %v1569
        %v1953 = vunpack.c.l.s4 1983009808
        %v1954 = vunpack.c.0.s8 %v1953
        %v1955 = vlaneseq
        %v1956 = vshrl.u32 %v1955, 7
        %v1957 = vsub.s32 %v1954, %v1956
        %v1958 = vrot.slane %v1950, %v1957
        %v1960 = vunpack.c.l.s4 1983009808
        %v1961 = vunpack.c.0.s8 %v1960
        %v1962 = vlaneseq
        %v1963 = vshrl.u32 %v1962, 7
        %v1964 = vsub.s32 %v1961, %v1963
        %v1965 = vrot.slane %v1951, %v1964
        %v1966 = vcombine.low %v1958, %v1965
        %v1967 = vcombine.low %v1568, %v1570
        %v1968 = vcombine.low %v1577, %v1585
        %v1970 = vunpack.c.l.s4 1983009808
        %v1971 = vunpack.c.0.s8 %v1970
        %v1972 = vlaneseq
        %v1973 = vshrl.u32 %v1972, 7
        %v1974 = vsub.s32 %v1971, %v1973
        %v1975 = vrot.slane %v1967, %v1974
        %v1977 = vunpack.c.l.s4 1983009808
        %v1978 = vunpack.c.0.s8 %v1977
        %v1979 = vlaneseq
        %v1980 = vshrl.u32 %v1979, 7
        %v1981 = vsub.s32 %v1978, %v1980
        %v1982 = vrot.slane %v1968, %v1981
        %v1983 = vcombine.low %v1975, %v1982
        %v1984 = vcombine.low %v1593, %v1592
        %v1985 = vcombine.low %v1594, %v1602
        %v1987 = vunpack.c.l.s4 1983009808
        %v1988 = vunpack.c.0.s8 %v1987
        %v1989 = vlaneseq
        %v1990 = vshrl.u32 %v1989, 7
        %v1991 = vsub.s32 %v1988, %v1990
        %v1992 = vrot.slane %v1984, %v1991
        %v1994 = vunpack.c.l.s4 1983009808
        %v1995 = vunpack.c.0.s8 %v1994
        %v1996 = vlaneseq
        %v1997 = vshrl.u32 %v1996, 7
        %v1998 = vsub.s32 %v1995, %v1997
        %v1999 = vrot.slane %v1985, %v1998
        %v2000 = vcombine.low %v1992, %v1999
        %v2001 = vcombine.low %v1610, %v1609
        %v2002 = vcombine.low %v1611, %v1618
        %v2004 = vunpack.c.l.s4 1983009808
        %v2005 = vunpack.c.0.s8 %v2004
        %v2006 = vlaneseq
        %v2007 = vshrl.u32 %v2006, 7
        %v2008 = vsub.s32 %v2005, %v2007
        %v2009 = vrot.slane %v2001, %v2008
        %v2011 = vunpack.c.l.s4 1983009808
        %v2012 = vunpack.c.0.s8 %v2011
        %v2013 = vlaneseq
        %v2014 = vshrl.u32 %v2013, 7
        %v2015 = vsub.s32 %v2012, %v2014
        %v2016 = vrot.slane %v2002, %v2015
        %v2017 = vcombine.low %v2009, %v2016
        %v2018 = vcombine.low %v1626, %v1634
        %v2019 = vcombine.low %v1633, %v1635
        %v2021 = vunpack.c.l.s4 1983009808
        %v2022 = vunpack.c.0.s8 %v2021
        %v2023 = vlaneseq
        %v2024 = vshrl.u32 %v2023, 7
        %v2025 = vsub.s32 %v2022, %v2024
        %v2026 = vrot.slane %v2018, %v2025
        %v2028 = vunpack.c.l.s4 1983009808
        %v2029 = vunpack.c.0.s8 %v2028
        %v2030 = vlaneseq
        %v2031 = vshrl.u32 %v2030, 7
        %v2032 = vsub.s32 %v2029, %v2031
        %v2033 = vrot.slane %v2019, %v2032
        %v2034 = vcombine.low %v2026, %v2033
        %v2035 = vcombine.low %v1643, %v1651
        %v2036 = vcombine.low %v1650, %v1652
        %v2038 = vunpack.c.l.s4 1983009808
        %v2039 = vunpack.c.0.s8 %v2038
        %v2040 = vlaneseq
        %v2041 = vshrl.u32 %v2040, 7
        %v2042 = vsub.s32 %v2039, %v2041
        %v2043 = vrot.slane %v2035, %v2042
        %v2045 = vunpack.c.l.s4 1983009808
        %v2046 = vunpack.c.0.s8 %v2045
        %v2047 = vlaneseq
        %v2048 = vshrl.u32 %v2047, 7
        %v2049 = vsub.s32 %v2046, %v2048
        %v2050 = vrot.slane %v2036, %v2049
        %v2051 = vcombine.low %v2043, %v2050
        %v2052 = vcombine.low %v1659, %v1667
        %v2053 = vcombine.low %v1675, %v1674
        %v2055 = vunpack.c.l.s4 1983009808
        %v2056 = vunpack.c.0.s8 %v2055
        %v2057 = vlaneseq
        %v2058 = vshrl.u32 %v2057, 7
        %v2059 = vsub.s32 %v2056, %v2058
        %v2060 = vrot.slane %v2052, %v2059
        %v2062 = vunpack.c.l.s4 1983009808
        %v2063 = vunpack.c.0.s8 %v2062
        %v2064 = vlaneseq
        %v2065 = vshrl.u32 %v2064, 7
        %v2066 = vsub.s32 %v2063, %v2065
        %v2067 = vrot.slane %v2053, %v2066
        %v2068 = vcombine.low %v2060, %v2067
        %v2069 = vcombine.low %v1676, %v1684
        %v2070 = vcombine.low %v1692, %v1691
        %v2072 = vunpack.c.l.s4 1983009808
        %v2073 = vunpack.c.0.s8 %v2072
        %v2074 = vlaneseq
        %v2075 = vshrl.u32 %v2074, 7
        %v2076 = vsub.s32 %v2073, %v2075
        %v2077 = vrot.slane %v2069, %v2076
        %v2079 = vunpack.c.l.s4 1983009808
        %v2080 = vunpack.c.0.s8 %v2079
        %v2081 = vlaneseq
        %v2082 = vshrl.u32 %v2081, 7
        %v2083 = vsub.s32 %v2080, %v2082
        %v2084 = vrot.slane %v2070, %v2083
        %v2085 = vcombine.low %v2077, %v2084
        %v2086 = vcombine.low %v1693, %v1700
        %v2087 = vcombine.low %v1708, %v1716
        %v2089 = vunpack.c.l.s4 1983009808
        %v2090 = vunpack.c.0.s8 %v2089
        %v2091 = vlaneseq
        %v2092 = vshrl.u32 %v2091, 7
        %v2093 = vsub.s32 %v2090, %v2092
        %v2094 = vrot.slane %v2086, %v2093
        %v2096 = vunpack.c.l.s4 1983009808
        %v2097 = vunpack.c.0.s8 %v2096
        %v2098 = vlaneseq
        %v2099 = vshrl.u32 %v2098, 7
        %v2100 = vsub.s32 %v2097, %v2099
        %v2101 = vrot.slane %v2087, %v2100
        %v2102 = vcombine.low %v2094, %v2101
        %v2103 = vcombine.low %v1715, %v1717
        %v2104 = vcombine.low %v1725, %v1733
        %v2106 = vunpack.c.l.s4 1983009808
        %v2107 = vunpack.c.0.s8 %v2106
        %v2108 = vlaneseq
        %v2109 = vshrl.u32 %v2108, 7
        %v2110 = vsub.s32 %v2107, %v2109
        %v2111 = vrot.slane %v2103, %v2110
        %v2113 = vunpack.c.l.s4 1983009808
        %v2114 = vunpack.c.0.s8 %v2113
        %v2115 = vlaneseq
        %v2116 = vshrl.u32 %v2115, 7
        %v2117 = vsub.s32 %v2114, %v2116
        %v2118 = vrot.slane %v2104, %v2117
        %v2119 = vcombine.low %v2111, %v2118
        %v2120 = vcombine.low %v1732, %v1734
        %v2121 = vcombine.low %v1741, %v1749
        %v2123 = vunpack.c.l.s4 1983009808
        %v2124 = vunpack.c.0.s8 %v2123
        %v2125 = vlaneseq
        %v2126 = vshrl.u32 %v2125, 7
        %v2127 = vsub.s32 %v2124, %v2126
        %v2128 = vrot.slane %v2120, %v2127
        %v2130 = vunpack.c.l.s4 1983009808
        %v2131 = vunpack.c.0.s8 %v2130
        %v2132 = vlaneseq
        %v2133 = vshrl.u32 %v2132, 7
        %v2134 = vsub.s32 %v2131, %v2133
        %v2135 = vrot.slane %v2121, %v2134
        %v2136 = vcombine.low %v2128, %v2135
        %v2137 = vcombine.low %v1757, %v1756
        %v2138 = vcombine.low %v1758, %v1766
        %v2140 = vunpack.c.l.s4 1983009808
        %v2141 = vunpack.c.0.s8 %v2140
        %v2142 = vlaneseq
        %v2143 = vshrl.u32 %v2142, 7
        %v2144 = vsub.s32 %v2141, %v2143
        %v2145 = vrot.slane %v2137, %v2144
        %v2147 = vunpack.c.l.s4 1983009808
        %v2148 = vunpack.c.0.s8 %v2147
        %v2149 = vlaneseq
        %v2150 = vshrl.u32 %v2149, 7
        %v2151 = vsub.s32 %v2148, %v2150
        %v2152 = vrot.slane %v2138, %v2151
        %v2153 = vcombine.low %v2145, %v2152
        %v2154 = vcombine.low %v1774, %v1773
        %v2155 = vcombine.low %v1775, %v1782
        %v2157 = vunpack.c.l.s4 1983009808
        %v2158 = vunpack.c.0.s8 %v2157
        %v2159 = vlaneseq
        %v2160 = vshrl.u32 %v2159, 7
        %v2161 = vsub.s32 %v2158, %v2160
        %v2162 = vrot.slane %v2154, %v2161
        %v2164 = vunpack.c.l.s4 1983009808
        %v2165 = vunpack.c.0.s8 %v2164
        %v2166 = vlaneseq
        %v2167 = vshrl.u32 %v2166, 7
        %v2168 = vsub.s32 %v2165, %v2167
        %v2169 = vrot.slane %v2155, %v2168
        %v2170 = vcombine.low %v2162, %v2169
        %v2171 = vcombine.low %v1790, %v1798
        %v2172 = vcombine.low %v1797, %v1799
        %v2174 = vunpack.c.l.s4 1983009808
        %v2175 = vunpack.c.0.s8 %v2174
        %v2176 = vlaneseq
        %v2177 = vshrl.u32 %v2176, 7
        %v2178 = vsub.s32 %v2175, %v2177
        %v2179 = vrot.slane %v2171, %v2178
        %v2181 = vunpack.c.l.s4 1983009808
        %v2182 = vunpack.c.0.s8 %v2181
        %v2183 = vlaneseq
        %v2184 = vshrl.u32 %v2183, 7
        %v2185 = vsub.s32 %v2182, %v2184
        %v2186 = vrot.slane %v2172, %v2185
        %v2187 = vcombine.low %v2179, %v2186
        %v2188 = vcombine.low %v1807, %v1815
        %v2189 = vcombine.low %v1814, %v1816
        %v2191 = vunpack.c.l.s4 1983009808
        %v2192 = vunpack.c.0.s8 %v2191
        %v2193 = vlaneseq
        %v2194 = vshrl.u32 %v2193, 7
        %v2195 = vsub.s32 %v2192, %v2194
        %v2196 = vrot.slane %v2188, %v2195
        %v2198 = vunpack.c.l.s4 1983009808
        %v2199 = vunpack.c.0.s8 %v2198
        %v2200 = vlaneseq
        %v2201 = vshrl.u32 %v2200, 7
        %v2202 = vsub.s32 %v2199, %v2201
        %v2203 = vrot.slane %v2189, %v2202
        %v2204 = vcombine.low %v2196, %v2203
        %v2205 = vcombine.low %v1823, %v1831
        %v2206 = vcombine.low %v1839, %v1838
        %v2208 = vunpack.c.l.s4 1983009808
        %v2209 = vunpack.c.0.s8 %v2208
        %v2210 = vlaneseq
        %v2211 = vshrl.u32 %v2210, 7
        %v2212 = vsub.s32 %v2209, %v2211
        %v2213 = vrot.slane %v2205, %v2212
        %v2215 = vunpack.c.l.s4 1983009808
        %v2216 = vunpack.c.0.s8 %v2215
        %v2217 = vlaneseq
        %v2218 = vshrl.u32 %v2217, 7
        %v2219 = vsub.s32 %v2216, %v2218
        %v2220 = vrot.slane %v2206, %v2219
        %v2221 = vcombine.low %v2213, %v2220
        %v2222 = vcombine.low %v1840, %v1848
        %v2223 = vcombine.low %v1856, %v1855
        %v2225 = vunpack.c.l.s4 1983009808
        %v2226 = vunpack.c.0.s8 %v2225
        %v2227 = vlaneseq
        %v2228 = vshrl.u32 %v2227, 7
        %v2229 = vsub.s32 %v2226, %v2228
        %v2230 = vrot.slane %v2222, %v2229
        %v2232 = vunpack.c.l.s4 1983009808
        %v2233 = vunpack.c.0.s8 %v2232
        %v2234 = vlaneseq
        %v2235 = vshrl.u32 %v2234, 7
        %v2236 = vsub.s32 %v2233, %v2235
        %v2237 = vrot.slane %v2223, %v2236
        %v2238 = vcombine.low %v2230, %v2237
        %v2239 = vcombine.low %v1857, %v1864
        %v2241 = vunpack.c.l.s4 1983009808
        %v2242 = vunpack.c.0.s8 %v2241
        %v2243 = vlaneseq
        %v2244 = vshrl.u32 %v2243, 7
        %v2245 = vsub.s32 %v2242, %v2244
        %v2246 = vrot.slane %v2239, %v2245
        %v2270 = vpack.c.bf16 %v1898, %v1881
        %v2271 = vpack.c.bf16 %v1932, %v1915
        %v2272 = vpack.c.bf16 %v1966, %v1949
        %v2273 = vpack.c.bf16 %v2000, %v1983
        %v2274 = vpack.c.bf16 %v2034, %v2017
        %v2275 = vpack.c.bf16 %v2068, %v2051
        %v2276 = vpack.c.bf16 %v2102, %v2085
        %v2277 = vpack.c.bf16 %v2136, %v2119
        %v2278 = vpack.c.bf16 %v2170, %v2153
        %v2279 = vpack.c.bf16 %v2204, %v2187
        %v2280 = vpack.c.bf16 %v2238, %v2221
        %v2281 = vpack.c.bf16 %v2246, %v2246
        %v2294 = vunpack.c.l.b16 %v2270
        %v2295 = vunpack.c.h.b16 %v2270
        %v2296 = vunpack.c.l.b16 %v2271
        %v2297 = vunpack.c.h.b16 %v2271
        %v2298 = vunpack.c.l.b16 %v2272
        %v2299 = vunpack.c.h.b16 %v2272
        %v2300 = vunpack.c.l.b16 %v2273
        %v2301 = vunpack.c.h.b16 %v2273
        %v2302 = vunpack.c.l.b16 %v2274
        %v2303 = vunpack.c.h.b16 %v2274
        %v2304 = vunpack.c.l.b16 %v2275
        %v2305 = vunpack.c.h.b16 %v2275
        %v2306 = vunpack.c.l.b16 %v2276
        %v2307 = vunpack.c.h.b16 %v2276
        %v2308 = vunpack.c.l.b16 %v2277
        %v2309 = vunpack.c.h.b16 %v2277
        %v2310 = vunpack.c.l.b16 %v2278
        %v2311 = vunpack.c.h.b16 %v2278
        %v2312 = vunpack.c.l.b16 %v2279
        %v2313 = vunpack.c.h.b16 %v2279
        %v2314 = vunpack.c.l.b16 %v2280
        %v2315 = vunpack.c.h.b16 %v2280
        %v2316 = vunpack.c.l.b16 %v2281
        %v2317 = vpack.c.b16 %v2294, %v2294
        %v2318 = vpack.c.b16 %v2295, %v2295
        %v2319 = vpack.c.b16 %v2296, %v2296
        %v2320 = vpack.c.b16 %v2297, %v2297
        %v2321 = vpack.c.b16 %v2298, %v2298
        %v2322 = vpack.c.b16 %v2299, %v2299
        %v2323 = vpack.c.b16 %v2300, %v2300
        %v2324 = vpack.c.b16 %v2301, %v2301
        %v2325 = vpack.c.b16 %v2302, %v2302
        %v2326 = vpack.c.b16 %v2303, %v2303
        %v2327 = vpack.c.b16 %v2304, %v2304
        %v2328 = vpack.c.b16 %v2305, %v2305
        %v2329 = vpack.c.b16 %v2306, %v2306
        %v2330 = vpack.c.b16 %v2307, %v2307
        %v2331 = vpack.c.b16 %v2308, %v2308
        %v2332 = vpack.c.b16 %v2309, %v2309
        %v2333 = vpack.c.b16 %v2310, %v2310
        %v2334 = vpack.c.b16 %v2311, %v2311
        %v2335 = vpack.c.b16 %v2312, %v2312
        %v2336 = vpack.c.b16 %v2313, %v2313
        %v2337 = vpack.c.b16 %v2314, %v2314
        %v2338 = vpack.c.b16 %v2315, %v2315
        %v2339 = vpack.c.b16 %v2316, %v2316
        %2340 = vrot.lane.b32.xlu0 %v2317, 8
        %v2341 = vpop.permute.xlu0 %2340
        %2342 = vrot.lane.b32.xlu0 %v2318, 8
        %v2343 = vpop.permute.xlu0 %2342
        %2344 = vrot.lane.b32.xlu0 %v2319, 8
        %v2345 = vpop.permute.xlu0 %2344
        %2346 = vrot.lane.b32.xlu0 %v2320, 8
        %v2347 = vpop.permute.xlu0 %2346
        %2348 = vrot.lane.b32.xlu0 %v2321, 8
        %v2349 = vpop.permute.xlu0 %2348
        %2350 = vrot.lane.b32.xlu0 %v2322, 8
        %v2351 = vpop.permute.xlu0 %2350
        %2352 = vrot.lane.b32.xlu0 %v2323, 8
        %v2353 = vpop.permute.xlu0 %2352
        %2354 = vrot.lane.b32.xlu0 %v2324, 8
        %v2355 = vpop.permute.xlu0 %2354
        %2356 = vrot.lane.b32.xlu0 %v2325, 8
        %v2357 = vpop.permute.xlu0 %2356
        %2358 = vrot.lane.b32.xlu0 %v2326, 8
        %v2359 = vpop.permute.xlu0 %2358
        %2360 = vrot.lane.b32.xlu0 %v2327, 8
        %v2361 = vpop.permute.xlu0 %2360
        %2362 = vrot.lane.b32.xlu0 %v2328, 8
        %v2363 = vpop.permute.xlu0 %2362
        %2364 = vrot.lane.b32.xlu0 %v2329, 8
        %v2365 = vpop.permute.xlu0 %2364
        %2366 = vrot.lane.b32.xlu0 %v2330, 8
        %v2367 = vpop.permute.xlu0 %2366
        %2368 = vrot.lane.b32.xlu0 %v2331, 8
        %v2369 = vpop.permute.xlu0 %2368
        %2370 = vrot.lane.b32.xlu0 %v2332, 8
        %v2371 = vpop.permute.xlu0 %2370
        %2372 = vrot.lane.b32.xlu0 %v2333, 8
        %v2373 = vpop.permute.xlu0 %2372
        %2374 = vrot.lane.b32.xlu0 %v2334, 8
        %v2375 = vpop.permute.xlu0 %2374
        %2376 = vrot.lane.b32.xlu0 %v2335, 8
        %v2377 = vpop.permute.xlu0 %2376
        %2378 = vrot.lane.b32.xlu0 %v2336, 8
        %v2379 = vpop.permute.xlu0 %2378
        %2380 = vrot.lane.b32.xlu0 %v2337, 8
        %v2381 = vpop.permute.xlu0 %2380
        %2382 = vrot.lane.b32.xlu0 %v2338, 8
        %v2383 = vpop.permute.xlu0 %2382
        %2384 = vrot.lane.b32.xlu0 %v2339, 8
        %v2385 = vpop.permute.xlu0 %2384
        %vm2409 = vcmask 126016
        %2410 = vst.msk [vmem:[#allocation4] sm:$0xf] %vm2409, %v2341
        %2411 = vst.msk [vmem:[#allocation4 + $0x4] sm:$0xf] %vm2409, %v2343
        %2412 = vst.msk [vmem:[#allocation4 + $0x8] sm:$0xf] %vm2409, %v2345
        %2413 = vst.msk [vmem:[#allocation4 + $0xc] sm:$0xf] %vm2409, %v2347
        %2414 = vst.msk [vmem:[#allocation4 + $0x10] sm:$0xf] %vm2409, %v2349
        %2415 = vst.msk [vmem:[#allocation4 + $0x14] sm:$0xf] %vm2409, %v2351
        %2416 = vst.msk [vmem:[#allocation4 + $0x18] sm:$0xf] %vm2409, %v2353
        %2417 = vst.msk [vmem:[#allocation4 + $0x1c] sm:$0xf] %vm2409, %v2355
        %2418 = vst.msk [vmem:[#allocation4 + $0x20] sm:$0xf] %vm2409, %v2357
        %2419 = vst.msk [vmem:[#allocation4 + $0x24] sm:$0xf] %vm2409, %v2359
        %2420 = vst.msk [vmem:[#allocation4 + $0x28] sm:$0xf] %vm2409, %v2361
        %2421 = vst.msk [vmem:[#allocation4 + $0x2c] sm:$0xf] %vm2409, %v2363
        %2422 = vst.msk [vmem:[#allocation4 + $0x30] sm:$0xf] %vm2409, %v2365
        %2423 = vst.msk [vmem:[#allocation4 + $0x34] sm:$0xf] %vm2409, %v2367
        %2424 = vst.msk [vmem:[#allocation4 + $0x38] sm:$0xf] %vm2409, %v2369
        %2425 = vst.msk [vmem:[#allocation4 + $0x3c] sm:$0xf] %vm2409, %v2371
        %2426 = vst.msk [vmem:[#allocation4 + $0x40] sm:$0xf] %vm2409, %v2373
        %2427 = vst.msk [vmem:[#allocation4 + $0x44] sm:$0xf] %vm2409, %v2375
        %2428 = vst.msk [vmem:[#allocation4 + $0x48] sm:$0xf] %vm2409, %v2377
        %2429 = vst.msk [vmem:[#allocation4 + $0x4c] sm:$0xf] %vm2409, %v2379
        %2430 = vst.msk [vmem:[#allocation4 + $0x50] sm:$0xf] %vm2409, %v2381
        %2431 = vst.msk [vmem:[#allocation4 + $0x54] sm:$0xf] %vm2409, %v2383
        %vm2432 = vcmask 123968
        %2433 = vst.msk [vmem:[#allocation4 + $0x58] sm:$0x3] %vm2432, %v2385
        %v2434 = vld [vmem:[#allocation2 + $0x2] sm:$0xff]
        %v2435 = vld [vmem:[#allocation2 + $0xa] sm:$0xff]
        %v2436 = vld [vmem:[#allocation2 + $0x12] sm:$0x3]
        %v2437 = vld [vmem:[#allocation2 + $0x1a] sm:$0xff]
        %v2438 = vld [vmem:[#allocation2 + $0x22] sm:$0xff]
        %v2439 = vld [vmem:[#allocation2 + $0x2a] sm:$0x3]
        %v2440 = vld [vmem:[#allocation2 + $0x32] sm:$0xff]
        %v2441 = vld [vmem:[#allocation2 + $0x3a] sm:$0xff]
        %v2442 = vld [vmem:[#allocation2 + $0x42] sm:$0x3]
        %v2443 = vld [vmem:[#allocation2 + $0x4a] sm:$0xff]
        %v2444 = vld [vmem:[#allocation2 + $0x52] sm:$0xff]
        %v2445 = vld [vmem:[#allocation2 + $0x5a] sm:$0x3]
        %v2446 = vld [vmem:[#allocation2 + $0x62] sm:$0xff]
        %v2447 = vld [vmem:[#allocation2 + $0x6a] sm:$0xff]
        %v2448 = vld [vmem:[#allocation2 + $0x72] sm:$0x3]
        %v2449 = vld [vmem:[#allocation2 + $0x7a] sm:$0xff]
        %v2450 = vld [vmem:[#allocation2 + $0x82] sm:$0xff]
        %v2451 = vld [vmem:[#allocation2 + $0x8a] sm:$0x3]
        %v2452 = vld [vmem:[#allocation2 + $0x92] sm:$0xff]
        %v2453 = vld [vmem:[#allocation2 + $0x9a] sm:$0xff]
        %v2454 = vld [vmem:[#allocation2 + $0xa2] sm:$0x3]
        %v2455 = vld [vmem:[#allocation2 + $0xaa] sm:$0xff]
        %v2456 = vld [vmem:[#allocation2 + $0xb2] sm:$0xff]
        %v2457 = vld [vmem:[#allocation2 + $0xba] sm:$0x3]
        %v2458 = vld [vmem:[#allocation2 + $0xc2] sm:$0xff]
        %v2459 = vld [vmem:[#allocation2 + $0xca] sm:$0xff]
        %v2460 = vld [vmem:[#allocation2 + $0xd2] sm:$0x3]
        %v2461 = vld [vmem:[#allocation2 + $0xda] sm:$0xff]
        %v2462 = vld [vmem:[#allocation2 + $0xe2] sm:$0xff]
        %v2463 = vld [vmem:[#allocation2 + $0xea] sm:$0x3]
        %v2494 = vcombine.high %v2434, %v2434
        %v2496 = vunpack.c.l.s4 1983009808
        %v2497 = vunpack.c.0.s8 %v2496
        %v2498 = vlaneseq
        %v2499 = vshrl.u32 %v2498, 7
        %v2500 = vsub.s32 %v2497, %v2499
        %v2501 = vrot.slane %v2434, %v2500
        %v2503 = vunpack.c.l.s4 1983009808
        %v2504 = vunpack.c.0.s8 %v2503
        %v2505 = vlaneseq
        %v2506 = vshrl.u32 %v2505, 7
        %v2507 = vsub.s32 %v2504, %v2506
        %v2508 = vrot.slane %v2494, %v2507
        %v2509 = vcombine.high %v2501, %v2501
        %v2510 = vcombine.high %v2508, %v2508
        %v2511 = vcombine.high %v2435, %v2435
        %v2513 = vunpack.c.l.s4 1983009808
        %v2514 = vunpack.c.0.s8 %v2513
        %v2515 = vlaneseq
        %v2516 = vshrl.u32 %v2515, 7
        %v2517 = vsub.s32 %v2514, %v2516
        %v2518 = vrot.slane %v2435, %v2517
        %v2520 = vunpack.c.l.s4 1983009808
        %v2521 = vunpack.c.0.s8 %v2520
        %v2522 = vlaneseq
        %v2523 = vshrl.u32 %v2522, 7
        %v2524 = vsub.s32 %v2521, %v2523
        %v2525 = vrot.slane %v2511, %v2524
        %v2526 = vcombine.high %v2518, %v2518
        %v2527 = vcombine.high %v2525, %v2525
        %v2529 = vunpack.c.l.s4 1983009808
        %v2530 = vunpack.c.0.s8 %v2529
        %v2531 = vlaneseq
        %v2532 = vshrl.u32 %v2531, 7
        %v2533 = vsub.s32 %v2530, %v2532
        %v2534 = vrot.slane %v2436, %v2533
        %v2535 = vcombine.high %v2437, %v2437
        %v2537 = vunpack.c.l.s4 1983009808
        %v2538 = vunpack.c.0.s8 %v2537
        %v2539 = vlaneseq
        %v2540 = vshrl.u32 %v2539, 7
        %v2541 = vsub.s32 %v2538, %v2540
        %v2542 = vrot.slane %v2437, %v2541
        %v2544 = vunpack.c.l.s4 1983009808
        %v2545 = vunpack.c.0.s8 %v2544
        %v2546 = vlaneseq
        %v2547 = vshrl.u32 %v2546, 7
        %v2548 = vsub.s32 %v2545, %v2547
        %v2549 = vrot.slane %v2535, %v2548
        %v2550 = vcombine.high %v2542, %v2542
        %v2551 = vcombine.high %v2549, %v2549
        %v2552 = vcombine.high %v2438, %v2438
        %v2554 = vunpack.c.l.s4 1983009808
        %v2555 = vunpack.c.0.s8 %v2554
        %v2556 = vlaneseq
        %v2557 = vshrl.u32 %v2556, 7
        %v2558 = vsub.s32 %v2555, %v2557
        %v2559 = vrot.slane %v2438, %v2558
        %v2561 = vunpack.c.l.s4 1983009808
        %v2562 = vunpack.c.0.s8 %v2561
        %v2563 = vlaneseq
        %v2564 = vshrl.u32 %v2563, 7
        %v2565 = vsub.s32 %v2562, %v2564
        %v2566 = vrot.slane %v2552, %v2565
        %v2567 = vcombine.high %v2559, %v2559
        %v2568 = vcombine.high %v2566, %v2566
        %v2570 = vunpack.c.l.s4 1983009808
        %v2571 = vunpack.c.0.s8 %v2570
        %v2572 = vlaneseq
        %v2573 = vshrl.u32 %v2572, 7
        %v2574 = vsub.s32 %v2571, %v2573
        %v2575 = vrot.slane %v2439, %v2574
        %v2576 = vcombine.high %v2440, %v2440
        %v2578 = vunpack.c.l.s4 1983009808
        %v2579 = vunpack.c.0.s8 %v2578
        %v2580 = vlaneseq
        %v2581 = vshrl.u32 %v2580, 7
        %v2582 = vsub.s32 %v2579, %v2581
        %v2583 = vrot.slane %v2440, %v2582
        %v2585 = vunpack.c.l.s4 1983009808
        %v2586 = vunpack.c.0.s8 %v2585
        %v2587 = vlaneseq
        %v2588 = vshrl.u32 %v2587, 7
        %v2589 = vsub.s32 %v2586, %v2588
        %v2590 = vrot.slane %v2576, %v2589
        %v2591 = vcombine.high %v2583, %v2583
        %v2592 = vcombine.high %v2590, %v2590
        %v2593 = vcombine.high %v2441, %v2441
        %v2595 = vunpack.c.l.s4 1983009808
        %v2596 = vunpack.c.0.s8 %v2595
        %v2597 = vlaneseq
        %v2598 = vshrl.u32 %v2597, 7
        %v2599 = vsub.s32 %v2596, %v2598
        %v2600 = vrot.slane %v2441, %v2599
        %v2602 = vunpack.c.l.s4 1983009808
        %v2603 = vunpack.c.0.s8 %v2602
        %v2604 = vlaneseq
        %v2605 = vshrl.u32 %v2604, 7
        %v2606 = vsub.s32 %v2603, %v2605
        %v2607 = vrot.slane %v2593, %v2606
        %v2608 = vcombine.high %v2600, %v2600
        %v2609 = vcombine.high %v2607, %v2607
        %v2611 = vunpack.c.l.s4 1983009808
        %v2612 = vunpack.c.0.s8 %v2611
        %v2613 = vlaneseq
        %v2614 = vshrl.u32 %v2613, 7
        %v2615 = vsub.s32 %v2612, %v2614
        %v2616 = vrot.slane %v2442, %v2615
        %v2617 = vcombine.high %v2443, %v2443
        %v2619 = vunpack.c.l.s4 1983009808
        %v2620 = vunpack.c.0.s8 %v2619
        %v2621 = vlaneseq
        %v2622 = vshrl.u32 %v2621, 7
        %v2623 = vsub.s32 %v2620, %v2622
        %v2624 = vrot.slane %v2443, %v2623
        %v2626 = vunpack.c.l.s4 1983009808
        %v2627 = vunpack.c.0.s8 %v2626
        %v2628 = vlaneseq
        %v2629 = vshrl.u32 %v2628, 7
        %v2630 = vsub.s32 %v2627, %v2629
        %v2631 = vrot.slane %v2617, %v2630
        %v2632 = vcombine.high %v2624, %v2624
        %v2633 = vcombine.high %v2631, %v2631
        %v2634 = vcombine.high %v2444, %v2444
        %v2636 = vunpack.c.l.s4 1983009808
        %v2637 = vunpack.c.0.s8 %v2636
        %v2638 = vlaneseq
        %v2639 = vshrl.u32 %v2638, 7
        %v2640 = vsub.s32 %v2637, %v2639
        %v2641 = vrot.slane %v2444, %v2640
        %v2643 = vunpack.c.l.s4 1983009808
        %v2644 = vunpack.c.0.s8 %v2643
        %v2645 = vlaneseq
        %v2646 = vshrl.u32 %v2645, 7
        %v2647 = vsub.s32 %v2644, %v2646
        %v2648 = vrot.slane %v2634, %v2647
        %v2649 = vcombine.high %v2641, %v2641
        %v2650 = vcombine.high %v2648, %v2648
        %v2652 = vunpack.c.l.s4 1983009808
        %v2653 = vunpack.c.0.s8 %v2652
        %v2654 = vlaneseq
        %v2655 = vshrl.u32 %v2654, 7
        %v2656 = vsub.s32 %v2653, %v2655
        %v2657 = vrot.slane %v2445, %v2656
        %v2658 = vcombine.high %v2446, %v2446
        %v2660 = vunpack.c.l.s4 1983009808
        %v2661 = vunpack.c.0.s8 %v2660
        %v2662 = vlaneseq
        %v2663 = vshrl.u32 %v2662, 7
        %v2664 = vsub.s32 %v2661, %v2663
        %v2665 = vrot.slane %v2446, %v2664
        %v2667 = vunpack.c.l.s4 1983009808
        %v2668 = vunpack.c.0.s8 %v2667
        %v2669 = vlaneseq
        %v2670 = vshrl.u32 %v2669, 7
        %v2671 = vsub.s32 %v2668, %v2670
        %v2672 = vrot.slane %v2658, %v2671
        %v2673 = vcombine.high %v2665, %v2665
        %v2674 = vcombine.high %v2672, %v2672
        %v2675 = vcombine.high %v2447, %v2447
        %v2677 = vunpack.c.l.s4 1983009808
        %v2678 = vunpack.c.0.s8 %v2677
        %v2679 = vlaneseq
        %v2680 = vshrl.u32 %v2679, 7
        %v2681 = vsub.s32 %v2678, %v2680
        %v2682 = vrot.slane %v2447, %v2681
        %v2684 = vunpack.c.l.s4 1983009808
        %v2685 = vunpack.c.0.s8 %v2684
        %v2686 = vlaneseq
        %v2687 = vshrl.u32 %v2686, 7
        %v2688 = vsub.s32 %v2685, %v2687
        %v2689 = vrot.slane %v2675, %v2688
        %v2690 = vcombine.high %v2682, %v2682
        %v2691 = vcombine.high %v2689, %v2689
        %v2693 = vunpack.c.l.s4 1983009808
        %v2694 = vunpack.c.0.s8 %v2693
        %v2695 = vlaneseq
        %v2696 = vshrl.u32 %v2695, 7
        %v2697 = vsub.s32 %v2694, %v2696
        %v2698 = vrot.slane %v2448, %v2697
        %v2699 = vcombine.high %v2449, %v2449
        %v2701 = vunpack.c.l.s4 1983009808
        %v2702 = vunpack.c.0.s8 %v2701
        %v2703 = vlaneseq
        %v2704 = vshrl.u32 %v2703, 7
        %v2705 = vsub.s32 %v2702, %v2704
        %v2706 = vrot.slane %v2449, %v2705
        %v2708 = vunpack.c.l.s4 1983009808
        %v2709 = vunpack.c.0.s8 %v2708
        %v2710 = vlaneseq
        %v2711 = vshrl.u32 %v2710, 7
        %v2712 = vsub.s32 %v2709, %v2711
        %v2713 = vrot.slane %v2699, %v2712
        %v2714 = vcombine.high %v2706, %v2706
        %v2715 = vcombine.high %v2713, %v2713
        %v2716 = vcombine.high %v2450, %v2450
        %v2718 = vunpack.c.l.s4 1983009808
        %v2719 = vunpack.c.0.s8 %v2718
        %v2720 = vlaneseq
        %v2721 = vshrl.u32 %v2720, 7
        %v2722 = vsub.s32 %v2719, %v2721
        %v2723 = vrot.slane %v2450, %v2722
        %v2725 = vunpack.c.l.s4 1983009808
        %v2726 = vunpack.c.0.s8 %v2725
        %v2727 = vlaneseq
        %v2728 = vshrl.u32 %v2727, 7
        %v2729 = vsub.s32 %v2726, %v2728
        %v2730 = vrot.slane %v2716, %v2729
        %v2731 = vcombine.high %v2723, %v2723
        %v2732 = vcombine.high %v2730, %v2730
        %v2734 = vunpack.c.l.s4 1983009808
        %v2735 = vunpack.c.0.s8 %v2734
        %v2736 = vlaneseq
        %v2737 = vshrl.u32 %v2736, 7
        %v2738 = vsub.s32 %v2735, %v2737
        %v2739 = vrot.slane %v2451, %v2738
        %v2740 = vcombine.high %v2452, %v2452
        %v2742 = vunpack.c.l.s4 1983009808
        %v2743 = vunpack.c.0.s8 %v2742
        %v2744 = vlaneseq
        %v2745 = vshrl.u32 %v2744, 7
        %v2746 = vsub.s32 %v2743, %v2745
        %v2747 = vrot.slane %v2452, %v2746
        %v2749 = vunpack.c.l.s4 1983009808
        %v2750 = vunpack.c.0.s8 %v2749
        %v2751 = vlaneseq
        %v2752 = vshrl.u32 %v2751, 7
        %v2753 = vsub.s32 %v2750, %v2752
        %v2754 = vrot.slane %v2740, %v2753
        %v2755 = vcombine.high %v2747, %v2747
        %v2756 = vcombine.high %v2754, %v2754
        %v2757 = vcombine.high %v2453, %v2453
        %v2759 = vunpack.c.l.s4 1983009808
        %v2760 = vunpack.c.0.s8 %v2759
        %v2761 = vlaneseq
        %v2762 = vshrl.u32 %v2761, 7
        %v2763 = vsub.s32 %v2760, %v2762
        %v2764 = vrot.slane %v2453, %v2763
        %v2766 = vunpack.c.l.s4 1983009808
        %v2767 = vunpack.c.0.s8 %v2766
        %v2768 = vlaneseq
        %v2769 = vshrl.u32 %v2768, 7
        %v2770 = vsub.s32 %v2767, %v2769
        %v2771 = vrot.slane %v2757, %v2770
        %v2772 = vcombine.high %v2764, %v2764
        %v2773 = vcombine.high %v2771, %v2771
        %v2775 = vunpack.c.l.s4 1983009808
        %v2776 = vunpack.c.0.s8 %v2775
        %v2777 = vlaneseq
        %v2778 = vshrl.u32 %v2777, 7
        %v2779 = vsub.s32 %v2776, %v2778
        %v2780 = vrot.slane %v2454, %v2779
        %v2781 = vcombine.high %v2455, %v2455
        %v2783 = vunpack.c.l.s4 1983009808
        %v2784 = vunpack.c.0.s8 %v2783
        %v2785 = vlaneseq
        %v2786 = vshrl.u32 %v2785, 7
        %v2787 = vsub.s32 %v2784, %v2786
        %v2788 = vrot.slane %v2455, %v2787
        %v2790 = vunpack.c.l.s4 1983009808
        %v2791 = vunpack.c.0.s8 %v2790
        %v2792 = vlaneseq
        %v2793 = vshrl.u32 %v2792, 7
        %v2794 = vsub.s32 %v2791, %v2793
        %v2795 = vrot.slane %v2781, %v2794
        %v2796 = vcombine.high %v2788, %v2788
        %v2797 = vcombine.high %v2795, %v2795
        %v2798 = vcombine.high %v2456, %v2456
        %v2800 = vunpack.c.l.s4 1983009808
        %v2801 = vunpack.c.0.s8 %v2800
        %v2802 = vlaneseq
        %v2803 = vshrl.u32 %v2802, 7
        %v2804 = vsub.s32 %v2801, %v2803
        %v2805 = vrot.slane %v2456, %v2804
        %v2807 = vunpack.c.l.s4 1983009808
        %v2808 = vunpack.c.0.s8 %v2807
        %v2809 = vlaneseq
        %v2810 = vshrl.u32 %v2809, 7
        %v2811 = vsub.s32 %v2808, %v2810
        %v2812 = vrot.slane %v2798, %v2811
        %v2813 = vcombine.high %v2805, %v2805
        %v2814 = vcombine.high %v2812, %v2812
        %v2816 = vunpack.c.l.s4 1983009808
        %v2817 = vunpack.c.0.s8 %v2816
        %v2818 = vlaneseq
        %v2819 = vshrl.u32 %v2818, 7
        %v2820 = vsub.s32 %v2817, %v2819
        %v2821 = vrot.slane %v2457, %v2820
        %v2822 = vcombine.high %v2458, %v2458
        %v2824 = vunpack.c.l.s4 1983009808
        %v2825 = vunpack.c.0.s8 %v2824
        %v2826 = vlaneseq
        %v2827 = vshrl.u32 %v2826, 7
        %v2828 = vsub.s32 %v2825, %v2827
        %v2829 = vrot.slane %v2458, %v2828
        %v2831 = vunpack.c.l.s4 1983009808
        %v2832 = vunpack.c.0.s8 %v2831
        %v2833 = vlaneseq
        %v2834 = vshrl.u32 %v2833, 7
        %v2835 = vsub.s32 %v2832, %v2834
        %v2836 = vrot.slane %v2822, %v2835
        %v2837 = vcombine.high %v2829, %v2829
        %v2838 = vcombine.high %v2836, %v2836
        %v2839 = vcombine.high %v2459, %v2459
        %v2841 = vunpack.c.l.s4 1983009808
        %v2842 = vunpack.c.0.s8 %v2841
        %v2843 = vlaneseq
        %v2844 = vshrl.u32 %v2843, 7
        %v2845 = vsub.s32 %v2842, %v2844
        %v2846 = vrot.slane %v2459, %v2845
        %v2848 = vunpack.c.l.s4 1983009808
        %v2849 = vunpack.c.0.s8 %v2848
        %v2850 = vlaneseq
        %v2851 = vshrl.u32 %v2850, 7
        %v2852 = vsub.s32 %v2849, %v2851
        %v2853 = vrot.slane %v2839, %v2852
        %v2854 = vcombine.high %v2846, %v2846
        %v2855 = vcombine.high %v2853, %v2853
        %v2857 = vunpack.c.l.s4 1983009808
        %v2858 = vunpack.c.0.s8 %v2857
        %v2859 = vlaneseq
        %v2860 = vshrl.u32 %v2859, 7
        %v2861 = vsub.s32 %v2858, %v2860
        %v2862 = vrot.slane %v2460, %v2861
        %v2863 = vcombine.high %v2461, %v2461
        %v2865 = vunpack.c.l.s4 1983009808
        %v2866 = vunpack.c.0.s8 %v2865
        %v2867 = vlaneseq
        %v2868 = vshrl.u32 %v2867, 7
        %v2869 = vsub.s32 %v2866, %v2868
        %v2870 = vrot.slane %v2461, %v2869
        %v2872 = vunpack.c.l.s4 1983009808
        %v2873 = vunpack.c.0.s8 %v2872
        %v2874 = vlaneseq
        %v2875 = vshrl.u32 %v2874, 7
        %v2876 = vsub.s32 %v2873, %v2875
        %v2877 = vrot.slane %v2863, %v2876
        %v2878 = vcombine.high %v2870, %v2870
        %v2879 = vcombine.high %v2877, %v2877
        %v2880 = vcombine.high %v2462, %v2462
        %v2882 = vunpack.c.l.s4 1983009808
        %v2883 = vunpack.c.0.s8 %v2882
        %v2884 = vlaneseq
        %v2885 = vshrl.u32 %v2884, 7
        %v2886 = vsub.s32 %v2883, %v2885
        %v2887 = vrot.slane %v2462, %v2886
        %v2889 = vunpack.c.l.s4 1983009808
        %v2890 = vunpack.c.0.s8 %v2889
        %v2891 = vlaneseq
        %v2892 = vshrl.u32 %v2891, 7
        %v2893 = vsub.s32 %v2890, %v2892
        %v2894 = vrot.slane %v2880, %v2893
        %v2895 = vcombine.high %v2887, %v2887
        %v2896 = vcombine.high %v2894, %v2894
        %v2898 = vunpack.c.l.s4 1983009808
        %v2899 = vunpack.c.0.s8 %v2898
        %v2900 = vlaneseq
        %v2901 = vshrl.u32 %v2900, 7
        %v2902 = vsub.s32 %v2899, %v2901
        %v2903 = vrot.slane %v2463, %v2902
        %v2904 = vcombine.low %v2501, %v2509
        %v2905 = vcombine.low %v2508, %v2510
        %v2907 = vunpack.c.l.s4 1983009808
        %v2908 = vunpack.c.0.s8 %v2907
        %v2909 = vlaneseq
        %v2910 = vshrl.u32 %v2909, 7
        %v2911 = vsub.s32 %v2908, %v2910
        %v2912 = vrot.slane %v2904, %v2911
        %v2914 = vunpack.c.l.s4 1983009808
        %v2915 = vunpack.c.0.s8 %v2914
        %v2916 = vlaneseq
        %v2917 = vshrl.u32 %v2916, 7
        %v2918 = vsub.s32 %v2915, %v2917
        %v2919 = vrot.slane %v2905, %v2918
        %v2920 = vcombine.low %v2912, %v2919
        %v2921 = vcombine.low %v2518, %v2526
        %v2922 = vcombine.low %v2525, %v2527
        %v2924 = vunpack.c.l.s4 1983009808
        %v2925 = vunpack.c.0.s8 %v2924
        %v2926 = vlaneseq
        %v2927 = vshrl.u32 %v2926, 7
        %v2928 = vsub.s32 %v2925, %v2927
        %v2929 = vrot.slane %v2921, %v2928
        %v2931 = vunpack.c.l.s4 1983009808
        %v2932 = vunpack.c.0.s8 %v2931
        %v2933 = vlaneseq
        %v2934 = vshrl.u32 %v2933, 7
        %v2935 = vsub.s32 %v2932, %v2934
        %v2936 = vrot.slane %v2922, %v2935
        %v2937 = vcombine.low %v2929, %v2936
        %v2938 = vcombine.low %v2534, %v2542
        %v2939 = vcombine.low %v2550, %v2549
        %v2941 = vunpack.c.l.s4 1983009808
        %v2942 = vunpack.c.0.s8 %v2941
        %v2943 = vlaneseq
        %v2944 = vshrl.u32 %v2943, 7
        %v2945 = vsub.s32 %v2942, %v2944
        %v2946 = vrot.slane %v2938, %v2945
        %v2948 = vunpack.c.l.s4 1983009808
        %v2949 = vunpack.c.0.s8 %v2948
        %v2950 = vlaneseq
        %v2951 = vshrl.u32 %v2950, 7
        %v2952 = vsub.s32 %v2949, %v2951
        %v2953 = vrot.slane %v2939, %v2952
        %v2954 = vcombine.low %v2946, %v2953
        %v2955 = vcombine.low %v2551, %v2559
        %v2956 = vcombine.low %v2567, %v2566
        %v2958 = vunpack.c.l.s4 1983009808
        %v2959 = vunpack.c.0.s8 %v2958
        %v2960 = vlaneseq
        %v2961 = vshrl.u32 %v2960, 7
        %v2962 = vsub.s32 %v2959, %v2961
        %v2963 = vrot.slane %v2955, %v2962
        %v2965 = vunpack.c.l.s4 1983009808
        %v2966 = vunpack.c.0.s8 %v2965
        %v2967 = vlaneseq
        %v2968 = vshrl.u32 %v2967, 7
        %v2969 = vsub.s32 %v2966, %v2968
        %v2970 = vrot.slane %v2956, %v2969
        %v2971 = vcombine.low %v2963, %v2970
        %v2972 = vcombine.low %v2568, %v2575
        %v2973 = vcombine.low %v2583, %v2591
        %v2975 = vunpack.c.l.s4 1983009808
        %v2976 = vunpack.c.0.s8 %v2975
        %v2977 = vlaneseq
        %v2978 = vshrl.u32 %v2977, 7
        %v2979 = vsub.s32 %v2976, %v2978
        %v2980 = vrot.slane %v2972, %v2979
        %v2982 = vunpack.c.l.s4 1983009808
        %v2983 = vunpack.c.0.s8 %v2982
        %v2984 = vlaneseq
        %v2985 = vshrl.u32 %v2984, 7
        %v2986 = vsub.s32 %v2983, %v2985
        %v2987 = vrot.slane %v2973, %v2986
        %v2988 = vcombine.low %v2980, %v2987
        %v2989 = vcombine.low %v2590, %v2592
        %v2990 = vcombine.low %v2600, %v2608
        %v2992 = vunpack.c.l.s4 1983009808
        %v2993 = vunpack.c.0.s8 %v2992
        %v2994 = vlaneseq
        %v2995 = vshrl.u32 %v2994, 7
        %v2996 = vsub.s32 %v2993, %v2995
        %v2997 = vrot.slane %v2989, %v2996
        %v2999 = vunpack.c.l.s4 1983009808
        %v3000 = vunpack.c.0.s8 %v2999
        %v3001 = vlaneseq
        %v3002 = vshrl.u32 %v3001, 7
        %v3003 = vsub.s32 %v3000, %v3002
        %v3004 = vrot.slane %v2990, %v3003
        %v3005 = vcombine.low %v2997, %v3004
        %v3006 = vcombine.low %v2607, %v2609
        %v3007 = vcombine.low %v2616, %v2624
        %v3009 = vunpack.c.l.s4 1983009808
        %v3010 = vunpack.c.0.s8 %v3009
        %v3011 = vlaneseq
        %v3012 = vshrl.u32 %v3011, 7
        %v3013 = vsub.s32 %v3010, %v3012
        %v3014 = vrot.slane %v3006, %v3013
        %v3016 = vunpack.c.l.s4 1983009808
        %v3017 = vunpack.c.0.s8 %v3016
        %v3018 = vlaneseq
        %v3019 = vshrl.u32 %v3018, 7
        %v3020 = vsub.s32 %v3017, %v3019
        %v3021 = vrot.slane %v3007, %v3020
        %v3022 = vcombine.low %v3014, %v3021
        %v3023 = vcombine.low %v2632, %v2631
        %v3024 = vcombine.low %v2633, %v2641
        %v3026 = vunpack.c.l.s4 1983009808
        %v3027 = vunpack.c.0.s8 %v3026
        %v3028 = vlaneseq
        %v3029 = vshrl.u32 %v3028, 7
        %v3030 = vsub.s32 %v3027, %v3029
        %v3031 = vrot.slane %v3023, %v3030
        %v3033 = vunpack.c.l.s4 1983009808
        %v3034 = vunpack.c.0.s8 %v3033
        %v3035 = vlaneseq
        %v3036 = vshrl.u32 %v3035, 7
        %v3037 = vsub.s32 %v3034, %v3036
        %v3038 = vrot.slane %v3024, %v3037
        %v3039 = vcombine.low %v3031, %v3038
        %v3040 = vcombine.low %v2649, %v2648
        %v3041 = vcombine.low %v2650, %v2657
        %v3043 = vunpack.c.l.s4 1983009808
        %v3044 = vunpack.c.0.s8 %v3043
        %v3045 = vlaneseq
        %v3046 = vshrl.u32 %v3045, 7
        %v3047 = vsub.s32 %v3044, %v3046
        %v3048 = vrot.slane %v3040, %v3047
        %v3050 = vunpack.c.l.s4 1983009808
        %v3051 = vunpack.c.0.s8 %v3050
        %v3052 = vlaneseq
        %v3053 = vshrl.u32 %v3052, 7
        %v3054 = vsub.s32 %v3051, %v3053
        %v3055 = vrot.slane %v3041, %v3054
        %v3056 = vcombine.low %v3048, %v3055
        %v3057 = vcombine.low %v2665, %v2673
        %v3058 = vcombine.low %v2672, %v2674
        %v3060 = vunpack.c.l.s4 1983009808
        %v3061 = vunpack.c.0.s8 %v3060
        %v3062 = vlaneseq
        %v3063 = vshrl.u32 %v3062, 7
        %v3064 = vsub.s32 %v3061, %v3063
        %v3065 = vrot.slane %v3057, %v3064
        %v3067 = vunpack.c.l.s4 1983009808
        %v3068 = vunpack.c.0.s8 %v3067
        %v3069 = vlaneseq
        %v3070 = vshrl.u32 %v3069, 7
        %v3071 = vsub.s32 %v3068, %v3070
        %v3072 = vrot.slane %v3058, %v3071
        %v3073 = vcombine.low %v3065, %v3072
        %v3074 = vcombine.low %v2682, %v2690
        %v3075 = vcombine.low %v2689, %v2691
        %v3077 = vunpack.c.l.s4 1983009808
        %v3078 = vunpack.c.0.s8 %v3077
        %v3079 = vlaneseq
        %v3080 = vshrl.u32 %v3079, 7
        %v3081 = vsub.s32 %v3078, %v3080
        %v3082 = vrot.slane %v3074, %v3081
        %v3084 = vunpack.c.l.s4 1983009808
        %v3085 = vunpack.c.0.s8 %v3084
        %v3086 = vlaneseq
        %v3087 = vshrl.u32 %v3086, 7
        %v3088 = vsub.s32 %v3085, %v3087
        %v3089 = vrot.slane %v3075, %v3088
        %v3090 = vcombine.low %v3082, %v3089
        %v3091 = vcombine.low %v2698, %v2706
        %v3092 = vcombine.low %v2714, %v2713
        %v3094 = vunpack.c.l.s4 1983009808
        %v3095 = vunpack.c.0.s8 %v3094
        %v3096 = vlaneseq
        %v3097 = vshrl.u32 %v3096, 7
        %v3098 = vsub.s32 %v3095, %v3097
        %v3099 = vrot.slane %v3091, %v3098
        %v3101 = vunpack.c.l.s4 1983009808
        %v3102 = vunpack.c.0.s8 %v3101
        %v3103 = vlaneseq
        %v3104 = vshrl.u32 %v3103, 7
        %v3105 = vsub.s32 %v3102, %v3104
        %v3106 = vrot.slane %v3092, %v3105
        %v3107 = vcombine.low %v3099, %v3106
        %v3108 = vcombine.low %v2715, %v2723
        %v3109 = vcombine.low %v2731, %v2730
        %v3111 = vunpack.c.l.s4 1983009808
        %v3112 = vunpack.c.0.s8 %v3111
        %v3113 = vlaneseq
        %v3114 = vshrl.u32 %v3113, 7
        %v3115 = vsub.s32 %v3112, %v3114
        %v3116 = vrot.slane %v3108, %v3115
        %v3118 = vunpack.c.l.s4 1983009808
        %v3119 = vunpack.c.0.s8 %v3118
        %v3120 = vlaneseq
        %v3121 = vshrl.u32 %v3120, 7
        %v3122 = vsub.s32 %v3119, %v3121
        %v3123 = vrot.slane %v3109, %v3122
        %v3124 = vcombine.low %v3116, %v3123
        %v3125 = vcombine.low %v2732, %v2739
        %v3126 = vcombine.low %v2747, %v2755
        %v3128 = vunpack.c.l.s4 1983009808
        %v3129 = vunpack.c.0.s8 %v3128
        %v3130 = vlaneseq
        %v3131 = vshrl.u32 %v3130, 7
        %v3132 = vsub.s32 %v3129, %v3131
        %v3133 = vrot.slane %v3125, %v3132
        %v3135 = vunpack.c.l.s4 1983009808
        %v3136 = vunpack.c.0.s8 %v3135
        %v3137 = vlaneseq
        %v3138 = vshrl.u32 %v3137, 7
        %v3139 = vsub.s32 %v3136, %v3138
        %v3140 = vrot.slane %v3126, %v3139
        %v3141 = vcombine.low %v3133, %v3140
        %v3142 = vcombine.low %v2754, %v2756
        %v3143 = vcombine.low %v2764, %v2772
        %v3145 = vunpack.c.l.s4 1983009808
        %v3146 = vunpack.c.0.s8 %v3145
        %v3147 = vlaneseq
        %v3148 = vshrl.u32 %v3147, 7
        %v3149 = vsub.s32 %v3146, %v3148
        %v3150 = vrot.slane %v3142, %v3149
        %v3152 = vunpack.c.l.s4 1983009808
        %v3153 = vunpack.c.0.s8 %v3152
        %v3154 = vlaneseq
        %v3155 = vshrl.u32 %v3154, 7
        %v3156 = vsub.s32 %v3153, %v3155
        %v3157 = vrot.slane %v3143, %v3156
        %v3158 = vcombine.low %v3150, %v3157
        %v3159 = vcombine.low %v2771, %v2773
        %v3160 = vcombine.low %v2780, %v2788
        %v3162 = vunpack.c.l.s4 1983009808
        %v3163 = vunpack.c.0.s8 %v3162
        %v3164 = vlaneseq
        %v3165 = vshrl.u32 %v3164, 7
        %v3166 = vsub.s32 %v3163, %v3165
        %v3167 = vrot.slane %v3159, %v3166
        %v3169 = vunpack.c.l.s4 1983009808
        %v3170 = vunpack.c.0.s8 %v3169
        %v3171 = vlaneseq
        %v3172 = vshrl.u32 %v3171, 7
        %v3173 = vsub.s32 %v3170, %v3172
        %v3174 = vrot.slane %v3160, %v3173
        %v3175 = vcombine.low %v3167, %v3174
        %v3176 = vcombine.low %v2796, %v2795
        %v3177 = vcombine.low %v2797, %v2805
        %v3179 = vunpack.c.l.s4 1983009808
        %v3180 = vunpack.c.0.s8 %v3179
        %v3181 = vlaneseq
        %v3182 = vshrl.u32 %v3181, 7
        %v3183 = vsub.s32 %v3180, %v3182
        %v3184 = vrot.slane %v3176, %v3183
        %v3186 = vunpack.c.l.s4 1983009808
        %v3187 = vunpack.c.0.s8 %v3186
        %v3188 = vlaneseq
        %v3189 = vshrl.u32 %v3188, 7
        %v3190 = vsub.s32 %v3187, %v3189
        %v3191 = vrot.slane %v3177, %v3190
        %v3192 = vcombine.low %v3184, %v3191
        %v3193 = vcombine.low %v2813, %v2812
        %v3194 = vcombine.low %v2814, %v2821
        %v3196 = vunpack.c.l.s4 1983009808
        %v3197 = vunpack.c.0.s8 %v3196
        %v3198 = vlaneseq
        %v3199 = vshrl.u32 %v3198, 7
        %v3200 = vsub.s32 %v3197, %v3199
        %v3201 = vrot.slane %v3193, %v3200
        %v3203 = vunpack.c.l.s4 1983009808
        %v3204 = vunpack.c.0.s8 %v3203
        %v3205 = vlaneseq
        %v3206 = vshrl.u32 %v3205, 7
        %v3207 = vsub.s32 %v3204, %v3206
        %v3208 = vrot.slane %v3194, %v3207
        %v3209 = vcombine.low %v3201, %v3208
        %v3210 = vcombine.low %v2829, %v2837
        %v3211 = vcombine.low %v2836, %v2838
        %v3213 = vunpack.c.l.s4 1983009808
        %v3214 = vunpack.c.0.s8 %v3213
        %v3215 = vlaneseq
        %v3216 = vshrl.u32 %v3215, 7
        %v3217 = vsub.s32 %v3214, %v3216
        %v3218 = vrot.slane %v3210, %v3217
        %v3220 = vunpack.c.l.s4 1983009808
        %v3221 = vunpack.c.0.s8 %v3220
        %v3222 = vlaneseq
        %v3223 = vshrl.u32 %v3222, 7
        %v3224 = vsub.s32 %v3221, %v3223
        %v3225 = vrot.slane %v3211, %v3224
        %v3226 = vcombine.low %v3218, %v3225
        %v3227 = vcombine.low %v2846, %v2854
        %v3228 = vcombine.low %v2853, %v2855
        %v3230 = vunpack.c.l.s4 1983009808
        %v3231 = vunpack.c.0.s8 %v3230
        %v3232 = vlaneseq
        %v3233 = vshrl.u32 %v3232, 7
        %v3234 = vsub.s32 %v3231, %v3233
        %v3235 = vrot.slane %v3227, %v3234
        %v3237 = vunpack.c.l.s4 1983009808
        %v3238 = vunpack.c.0.s8 %v3237
        %v3239 = vlaneseq
        %v3240 = vshrl.u32 %v3239, 7
        %v3241 = vsub.s32 %v3238, %v3240
        %v3242 = vrot.slane %v3228, %v3241
        %v3243 = vcombine.low %v3235, %v3242
        %v3244 = vcombine.low %v2862, %v2870
        %v3245 = vcombine.low %v2878, %v2877
        %v3247 = vunpack.c.l.s4 1983009808
        %v3248 = vunpack.c.0.s8 %v3247
        %v3249 = vlaneseq
        %v3250 = vshrl.u32 %v3249, 7
        %v3251 = vsub.s32 %v3248, %v3250
        %v3252 = vrot.slane %v3244, %v3251
        %v3254 = vunpack.c.l.s4 1983009808
        %v3255 = vunpack.c.0.s8 %v3254
        %v3256 = vlaneseq
        %v3257 = vshrl.u32 %v3256, 7
        %v3258 = vsub.s32 %v3255, %v3257
        %v3259 = vrot.slane %v3245, %v3258
        %v3260 = vcombine.low %v3252, %v3259
        %v3261 = vcombine.low %v2879, %v2887
        %v3262 = vcombine.low %v2895, %v2894
        %v3264 = vunpack.c.l.s4 1983009808
        %v3265 = vunpack.c.0.s8 %v3264
        %v3266 = vlaneseq
        %v3267 = vshrl.u32 %v3266, 7
        %v3268 = vsub.s32 %v3265, %v3267
        %v3269 = vrot.slane %v3261, %v3268
        %v3271 = vunpack.c.l.s4 1983009808
        %v3272 = vunpack.c.0.s8 %v3271
        %v3273 = vlaneseq
        %v3274 = vshrl.u32 %v3273, 7
        %v3275 = vsub.s32 %v3272, %v3274
        %v3276 = vrot.slane %v3262, %v3275
        %v3277 = vcombine.low %v3269, %v3276
        %v3278 = vcombine.low %v2896, %v2903
        %v3280 = vunpack.c.l.s4 1983009808
        %v3281 = vunpack.c.0.s8 %v3280
        %v3282 = vlaneseq
        %v3283 = vshrl.u32 %v3282, 7
        %v3284 = vsub.s32 %v3281, %v3283
        %v3285 = vrot.slane %v3278, %v3284
        %v3309 = vpack.c.bf16 %v2937, %v2920
        %v3310 = vpack.c.bf16 %v2971, %v2954
        %v3311 = vpack.c.bf16 %v3005, %v2988
        %v3312 = vpack.c.bf16 %v3039, %v3022
        %v3313 = vpack.c.bf16 %v3073, %v3056
        %v3314 = vpack.c.bf16 %v3107, %v3090
        %v3315 = vpack.c.bf16 %v3141, %v3124
        %v3316 = vpack.c.bf16 %v3175, %v3158
        %v3317 = vpack.c.bf16 %v3209, %v3192
        %v3318 = vpack.c.bf16 %v3243, %v3226
        %v3319 = vpack.c.bf16 %v3277, %v3260
        %v3320 = vpack.c.bf16 %v3285, %v3285
        %v3333 = vunpack.c.l.b16 %v3309
        %v3334 = vunpack.c.h.b16 %v3309
        %v3335 = vunpack.c.l.b16 %v3310
        %v3336 = vunpack.c.h.b16 %v3310
        %v3337 = vunpack.c.l.b16 %v3311
        %v3338 = vunpack.c.h.b16 %v3311
        %v3339 = vunpack.c.l.b16 %v3312
        %v3340 = vunpack.c.h.b16 %v3312
        %v3341 = vunpack.c.l.b16 %v3313
        %v3342 = vunpack.c.h.b16 %v3313
        %v3343 = vunpack.c.l.b16 %v3314
        %v3344 = vunpack.c.h.b16 %v3314
        %v3345 = vunpack.c.l.b16 %v3315
        %v3346 = vunpack.c.h.b16 %v3315
        %v3347 = vunpack.c.l.b16 %v3316
        %v3348 = vunpack.c.h.b16 %v3316
        %v3349 = vunpack.c.l.b16 %v3317
        %v3350 = vunpack.c.h.b16 %v3317
        %v3351 = vunpack.c.l.b16 %v3318
        %v3352 = vunpack.c.h.b16 %v3318
        %v3353 = vunpack.c.l.b16 %v3319
        %v3354 = vunpack.c.h.b16 %v3319
        %v3355 = vunpack.c.l.b16 %v3320
        %v3356 = vpack.c.b16 %v3333, %v3333
        %v3357 = vpack.c.b16 %v3334, %v3334
        %v3358 = vpack.c.b16 %v3335, %v3335
        %v3359 = vpack.c.b16 %v3336, %v3336
        %v3360 = vpack.c.b16 %v3337, %v3337
        %v3361 = vpack.c.b16 %v3338, %v3338
        %v3362 = vpack.c.b16 %v3339, %v3339
        %v3363 = vpack.c.b16 %v3340, %v3340
        %v3364 = vpack.c.b16 %v3341, %v3341
        %v3365 = vpack.c.b16 %v3342, %v3342
        %v3366 = vpack.c.b16 %v3343, %v3343
        %v3367 = vpack.c.b16 %v3344, %v3344
        %v3368 = vpack.c.b16 %v3345, %v3345
        %v3369 = vpack.c.b16 %v3346, %v3346
        %v3370 = vpack.c.b16 %v3347, %v3347
        %v3371 = vpack.c.b16 %v3348, %v3348
        %v3372 = vpack.c.b16 %v3349, %v3349
        %v3373 = vpack.c.b16 %v3350, %v3350
        %v3374 = vpack.c.b16 %v3351, %v3351
        %v3375 = vpack.c.b16 %v3352, %v3352
        %v3376 = vpack.c.b16 %v3353, %v3353
        %v3377 = vpack.c.b16 %v3354, %v3354
        %v3378 = vpack.c.b16 %v3355, %v3355
        %3379 = vrot.lane.b32.xlu0 %v3356, 16
        %v3380 = vpop.permute.xlu0 %3379
        %3381 = vrot.lane.b32.xlu0 %v3357, 16
        %v3382 = vpop.permute.xlu0 %3381
        %3383 = vrot.lane.b32.xlu0 %v3358, 16
        %v3384 = vpop.permute.xlu0 %3383
        %3385 = vrot.lane.b32.xlu0 %v3359, 16
        %v3386 = vpop.permute.xlu0 %3385
        %3387 = vrot.lane.b32.xlu0 %v3360, 16
        %v3388 = vpop.permute.xlu0 %3387
        %3389 = vrot.lane.b32.xlu0 %v3361, 16
        %v3390 = vpop.permute.xlu0 %3389
        %3391 = vrot.lane.b32.xlu0 %v3362, 16
        %v3392 = vpop.permute.xlu0 %3391
        %3393 = vrot.lane.b32.xlu0 %v3363, 16
        %v3394 = vpop.permute.xlu0 %3393
        %3395 = vrot.lane.b32.xlu0 %v3364, 16
        %v3396 = vpop.permute.xlu0 %3395
        %3397 = vrot.lane.b32.xlu0 %v3365, 16
        %v3398 = vpop.permute.xlu0 %3397
        %3399 = vrot.lane.b32.xlu0 %v3366, 16
        %v3400 = vpop.permute.xlu0 %3399
        %3401 = vrot.lane.b32.xlu0 %v3367, 16
        %v3402 = vpop.permute.xlu0 %3401
        %3403 = vrot.lane.b32.xlu0 %v3368, 16
        %v3404 = vpop.permute.xlu0 %3403
        %3405 = vrot.lane.b32.xlu0 %v3369, 16
        %v3406 = vpop.permute.xlu0 %3405
        %3407 = vrot.lane.b32.xlu0 %v3370, 16
        %v3408 = vpop.permute.xlu0 %3407
        %3409 = vrot.lane.b32.xlu0 %v3371, 16
        %v3410 = vpop.permute.xlu0 %3409
        %3411 = vrot.lane.b32.xlu0 %v3372, 16
        %v3412 = vpop.permute.xlu0 %3411
        %3413 = vrot.lane.b32.xlu0 %v3373, 16
        %v3414 = vpop.permute.xlu0 %3413
        %3415 = vrot.lane.b32.xlu0 %v3374, 16
        %v3416 = vpop.permute.xlu0 %3415
        %3417 = vrot.lane.b32.xlu0 %v3375, 16
        %v3418 = vpop.permute.xlu0 %3417
        %3419 = vrot.lane.b32.xlu0 %v3376, 16
        %v3420 = vpop.permute.xlu0 %3419
        %3421 = vrot.lane.b32.xlu0 %v3377, 16
        %v3422 = vpop.permute.xlu0 %3421
        %3423 = vrot.lane.b32.xlu0 %v3378, 16
        %v3424 = vpop.permute.xlu0 %3423
        %vm3448 = vcmask 191616
        %3449 = vst.msk [vmem:[#allocation4] sm:$0xf] %vm3448, %v3380
        %3450 = vst.msk [vmem:[#allocation4 + $0x4] sm:$0xf] %vm3448, %v3382
        %3451 = vst.msk [vmem:[#allocation4 + $0x8] sm:$0xf] %vm3448, %v3384
        %3452 = vst.msk [vmem:[#allocation4 + $0xc] sm:$0xf] %vm3448, %v3386
        %3453 = vst.msk [vmem:[#allocation4 + $0x10] sm:$0xf] %vm3448, %v3388
        %3454 = vst.msk [vmem:[#allocation4 + $0x14] sm:$0xf] %vm3448, %v3390
        %3455 = vst.msk [vmem:[#allocation4 + $0x18] sm:$0xf] %vm3448, %v3392
        %3456 = vst.msk [vmem:[#allocation4 + $0x1c] sm:$0xf] %vm3448, %v3394
        %3457 = vst.msk [vmem:[#allocation4 + $0x20] sm:$0xf] %vm3448, %v3396
        %3458 = vst.msk [vmem:[#allocation4 + $0x24] sm:$0xf] %vm3448, %v3398
        %3459 = vst.msk [vmem:[#allocation4 + $0x28] sm:$0xf] %vm3448, %v3400
        %3460 = vst.msk [vmem:[#allocation4 + $0x2c] sm:$0xf] %vm3448, %v3402
        %3461 = vst.msk [vmem:[#allocation4 + $0x30] sm:$0xf] %vm3448, %v3404
        %3462 = vst.msk [vmem:[#allocation4 + $0x34] sm:$0xf] %vm3448, %v3406
        %3463 = vst.msk [vmem:[#allocation4 + $0x38] sm:$0xf] %vm3448, %v3408
        %3464 = vst.msk [vmem:[#allocation4 + $0x3c] sm:$0xf] %vm3448, %v3410
        %3465 = vst.msk [vmem:[#allocation4 + $0x40] sm:$0xf] %vm3448, %v3412
        %3466 = vst.msk [vmem:[#allocation4 + $0x44] sm:$0xf] %vm3448, %v3414
        %3467 = vst.msk [vmem:[#allocation4 + $0x48] sm:$0xf] %vm3448, %v3416
        %3468 = vst.msk [vmem:[#allocation4 + $0x4c] sm:$0xf] %vm3448, %v3418
        %3469 = vst.msk [vmem:[#allocation4 + $0x50] sm:$0xf] %vm3448, %v3420
        %3470 = vst.msk [vmem:[#allocation4 + $0x54] sm:$0xf] %vm3448, %v3422
        %vm3471 = vcmask 189568
        %3472 = vst.msk [vmem:[#allocation4 + $0x58] sm:$0x3] %vm3471, %v3424
        %s3473 = scalar_lea.vmem [#allocation2], 24
        %v3474 = vld [vmem:[%s3473] sm:$0xff]
        %v3475 = vld [vmem:[%s3473 + $0x8] sm:$0xff]
        %v3476 = vld [vmem:[%s3473 + $0x10] sm:$0x3]
        %v3477 = vld [vmem:[%s3473 + $0x18] sm:$0xff]
        %v3478 = vld [vmem:[%s3473 + $0x20] sm:$0xff]
        %v3479 = vld [vmem:[%s3473 + $0x28] sm:$0x3]
        %v3480 = vld [vmem:[%s3473 + $0x30] sm:$0xff]
        %v3481 = vld [vmem:[%s3473 + $0x38] sm:$0xff]
        %v3482 = vld [vmem:[%s3473 + $0x40] sm:$0x3]
        %v3483 = vld [vmem:[%s3473 + $0x48] sm:$0xff]
        %v3484 = vld [vmem:[%s3473 + $0x50] sm:$0xff]
        %v3485 = vld [vmem:[%s3473 + $0x58] sm:$0x3]
        %v3486 = vld [vmem:[%s3473 + $0x60] sm:$0xff]
        %v3487 = vld [vmem:[%s3473 + $0x68] sm:$0xff]
        %v3488 = vld [vmem:[%s3473 + $0x70] sm:$0x3]
        %v3489 = vld [vmem:[%s3473 + $0x78] sm:$0xff]
        %v3490 = vld [vmem:[%s3473 + $0x80] sm:$0xff]
        %v3491 = vld [vmem:[%s3473 + $0x88] sm:$0x3]
        %v3492 = vld [vmem:[%s3473 + $0x90] sm:$0xff]
        %v3493 = vld [vmem:[%s3473 + $0x98] sm:$0xff]
        %v3494 = vld [vmem:[%s3473 + $0xa0] sm:$0x3]
        %v3495 = vld [vmem:[%s3473 + $0xa8] sm:$0xff]
        %v3496 = vld [vmem:[%s3473 + $0xb0] sm:$0xff]
        %v3497 = vld [vmem:[%s3473 + $0xb8] sm:$0x3]
        %v3498 = vld [vmem:[%s3473 + $0xc0] sm:$0xff]
        %v3499 = vld [vmem:[%s3473 + $0xc8] sm:$0xff]
        %v3500 = vld [vmem:[%s3473 + $0xd0] sm:$0x3]
        %v3501 = vld [vmem:[%s3473 + $0xd8] sm:$0xff]
        %v3502 = vld [vmem:[%s3473 + $0xe0] sm:$0xff]
        %v3503 = vld [vmem:[%s3473 + $0xe8] sm:$0x3]
        %v3534 = vcombine.high %v3474, %v3474
        %v3536 = vunpack.c.l.s4 1983009808
        %v3537 = vunpack.c.0.s8 %v3536
        %v3538 = vlaneseq
        %v3539 = vshrl.u32 %v3538, 7
        %v3540 = vsub.s32 %v3537, %v3539
        %v3541 = vrot.slane %v3474, %v3540
        %v3543 = vunpack.c.l.s4 1983009808
        %v3544 = vunpack.c.0.s8 %v3543
        %v3545 = vlaneseq
        %v3546 = vshrl.u32 %v3545, 7
        %v3547 = vsub.s32 %v3544, %v3546
        %v3548 = vrot.slane %v3534, %v3547
        %v3549 = vcombine.high %v3541, %v3541
        %v3550 = vcombine.high %v3548, %v3548
        %v3551 = vcombine.high %v3475, %v3475
        %v3553 = vunpack.c.l.s4 1983009808
        %v3554 = vunpack.c.0.s8 %v3553
        %v3555 = vlaneseq
        %v3556 = vshrl.u32 %v3555, 7
        %v3557 = vsub.s32 %v3554, %v3556
        %v3558 = vrot.slane %v3475, %v3557
        %v3560 = vunpack.c.l.s4 1983009808
        %v3561 = vunpack.c.0.s8 %v3560
        %v3562 = vlaneseq
        %v3563 = vshrl.u32 %v3562, 7
        %v3564 = vsub.s32 %v3561, %v3563
        %v3565 = vrot.slane %v3551, %v3564
        %v3566 = vcombine.high %v3558, %v3558
        %v3567 = vcombine.high %v3565, %v3565
        %v3569 = vunpack.c.l.s4 1983009808
        %v3570 = vunpack.c.0.s8 %v3569
        %v3571 = vlaneseq
        %v3572 = vshrl.u32 %v3571, 7
        %v3573 = vsub.s32 %v3570, %v3572
        %v3574 = vrot.slane %v3476, %v3573
        %v3575 = vcombine.high %v3477, %v3477
        %v3577 = vunpack.c.l.s4 1983009808
        %v3578 = vunpack.c.0.s8 %v3577
        %v3579 = vlaneseq
        %v3580 = vshrl.u32 %v3579, 7
        %v3581 = vsub.s32 %v3578, %v3580
        %v3582 = vrot.slane %v3477, %v3581
        %v3584 = vunpack.c.l.s4 1983009808
        %v3585 = vunpack.c.0.s8 %v3584
        %v3586 = vlaneseq
        %v3587 = vshrl.u32 %v3586, 7
        %v3588 = vsub.s32 %v3585, %v3587
        %v3589 = vrot.slane %v3575, %v3588
        %v3590 = vcombine.high %v3582, %v3582
        %v3591 = vcombine.high %v3589, %v3589
        %v3592 = vcombine.high %v3478, %v3478
        %v3594 = vunpack.c.l.s4 1983009808
        %v3595 = vunpack.c.0.s8 %v3594
        %v3596 = vlaneseq
        %v3597 = vshrl.u32 %v3596, 7
        %v3598 = vsub.s32 %v3595, %v3597
        %v3599 = vrot.slane %v3478, %v3598
        %v3601 = vunpack.c.l.s4 1983009808
        %v3602 = vunpack.c.0.s8 %v3601
        %v3603 = vlaneseq
        %v3604 = vshrl.u32 %v3603, 7
        %v3605 = vsub.s32 %v3602, %v3604
        %v3606 = vrot.slane %v3592, %v3605
        %v3607 = vcombine.high %v3599, %v3599
        %v3608 = vcombine.high %v3606, %v3606
        %v3610 = vunpack.c.l.s4 1983009808
        %v3611 = vunpack.c.0.s8 %v3610
        %v3612 = vlaneseq
        %v3613 = vshrl.u32 %v3612, 7
        %v3614 = vsub.s32 %v3611, %v3613
        %v3615 = vrot.slane %v3479, %v3614
        %v3616 = vcombine.high %v3480, %v3480
        %v3618 = vunpack.c.l.s4 1983009808
        %v3619 = vunpack.c.0.s8 %v3618
        %v3620 = vlaneseq
        %v3621 = vshrl.u32 %v3620, 7
        %v3622 = vsub.s32 %v3619, %v3621
        %v3623 = vrot.slane %v3480, %v3622
        %v3625 = vunpack.c.l.s4 1983009808
        %v3626 = vunpack.c.0.s8 %v3625
        %v3627 = vlaneseq
        %v3628 = vshrl.u32 %v3627, 7
        %v3629 = vsub.s32 %v3626, %v3628
        %v3630 = vrot.slane %v3616, %v3629
        %v3631 = vcombine.high %v3623, %v3623
        %v3632 = vcombine.high %v3630, %v3630
        %v3633 = vcombine.high %v3481, %v3481
        %v3635 = vunpack.c.l.s4 1983009808
        %v3636 = vunpack.c.0.s8 %v3635
        %v3637 = vlaneseq
        %v3638 = vshrl.u32 %v3637, 7
        %v3639 = vsub.s32 %v3636, %v3638
        %v3640 = vrot.slane %v3481, %v3639
        %v3642 = vunpack.c.l.s4 1983009808
        %v3643 = vunpack.c.0.s8 %v3642
        %v3644 = vlaneseq
        %v3645 = vshrl.u32 %v3644, 7
        %v3646 = vsub.s32 %v3643, %v3645
        %v3647 = vrot.slane %v3633, %v3646
        %v3648 = vcombine.high %v3640, %v3640
        %v3649 = vcombine.high %v3647, %v3647
        %v3651 = vunpack.c.l.s4 1983009808
        %v3652 = vunpack.c.0.s8 %v3651
        %v3653 = vlaneseq
        %v3654 = vshrl.u32 %v3653, 7
        %v3655 = vsub.s32 %v3652, %v3654
        %v3656 = vrot.slane %v3482, %v3655
        %v3657 = vcombine.high %v3483, %v3483
        %v3659 = vunpack.c.l.s4 1983009808
        %v3660 = vunpack.c.0.s8 %v3659
        %v3661 = vlaneseq
        %v3662 = vshrl.u32 %v3661, 7
        %v3663 = vsub.s32 %v3660, %v3662
        %v3664 = vrot.slane %v3483, %v3663
        %v3666 = vunpack.c.l.s4 1983009808
        %v3667 = vunpack.c.0.s8 %v3666
        %v3668 = vlaneseq
        %v3669 = vshrl.u32 %v3668, 7
        %v3670 = vsub.s32 %v3667, %v3669
        %v3671 = vrot.slane %v3657, %v3670
        %v3672 = vcombine.high %v3664, %v3664
        %v3673 = vcombine.high %v3671, %v3671
        %v3674 = vcombine.high %v3484, %v3484
        %v3676 = vunpack.c.l.s4 1983009808
        %v3677 = vunpack.c.0.s8 %v3676
        %v3678 = vlaneseq
        %v3679 = vshrl.u32 %v3678, 7
        %v3680 = vsub.s32 %v3677, %v3679
        %v3681 = vrot.slane %v3484, %v3680
        %v3683 = vunpack.c.l.s4 1983009808
        %v3684 = vunpack.c.0.s8 %v3683
        %v3685 = vlaneseq
        %v3686 = vshrl.u32 %v3685, 7
        %v3687 = vsub.s32 %v3684, %v3686
        %v3688 = vrot.slane %v3674, %v3687
        %v3689 = vcombine.high %v3681, %v3681
        %v3690 = vcombine.high %v3688, %v3688
        %v3692 = vunpack.c.l.s4 1983009808
        %v3693 = vunpack.c.0.s8 %v3692
        %v3694 = vlaneseq
        %v3695 = vshrl.u32 %v3694, 7
        %v3696 = vsub.s32 %v3693, %v3695
        %v3697 = vrot.slane %v3485, %v3696
        %v3698 = vcombine.high %v3486, %v3486
        %v3700 = vunpack.c.l.s4 1983009808
        %v3701 = vunpack.c.0.s8 %v3700
        %v3702 = vlaneseq
        %v3703 = vshrl.u32 %v3702, 7
        %v3704 = vsub.s32 %v3701, %v3703
        %v3705 = vrot.slane %v3486, %v3704
        %v3707 = vunpack.c.l.s4 1983009808
        %v3708 = vunpack.c.0.s8 %v3707
        %v3709 = vlaneseq
        %v3710 = vshrl.u32 %v3709, 7
        %v3711 = vsub.s32 %v3708, %v3710
        %v3712 = vrot.slane %v3698, %v3711
        %v3713 = vcombine.high %v3705, %v3705
        %v3714 = vcombine.high %v3712, %v3712
        %v3715 = vcombine.high %v3487, %v3487
        %v3717 = vunpack.c.l.s4 1983009808
        %v3718 = vunpack.c.0.s8 %v3717
        %v3719 = vlaneseq
        %v3720 = vshrl.u32 %v3719, 7
        %v3721 = vsub.s32 %v3718, %v3720
        %v3722 = vrot.slane %v3487, %v3721
        %v3724 = vunpack.c.l.s4 1983009808
        %v3725 = vunpack.c.0.s8 %v3724
        %v3726 = vlaneseq
        %v3727 = vshrl.u32 %v3726, 7
        %v3728 = vsub.s32 %v3725, %v3727
        %v3729 = vrot.slane %v3715, %v3728
        %v3730 = vcombine.high %v3722, %v3722
        %v3731 = vcombine.high %v3729, %v3729
        %v3733 = vunpack.c.l.s4 1983009808
        %v3734 = vunpack.c.0.s8 %v3733
        %v3735 = vlaneseq
        %v3736 = vshrl.u32 %v3735, 7
        %v3737 = vsub.s32 %v3734, %v3736
        %v3738 = vrot.slane %v3488, %v3737
        %v3739 = vcombine.high %v3489, %v3489
        %v3741 = vunpack.c.l.s4 1983009808
        %v3742 = vunpack.c.0.s8 %v3741
        %v3743 = vlaneseq
        %v3744 = vshrl.u32 %v3743, 7
        %v3745 = vsub.s32 %v3742, %v3744
        %v3746 = vrot.slane %v3489, %v3745
        %v3748 = vunpack.c.l.s4 1983009808
        %v3749 = vunpack.c.0.s8 %v3748
        %v3750 = vlaneseq
        %v3751 = vshrl.u32 %v3750, 7
        %v3752 = vsub.s32 %v3749, %v3751
        %v3753 = vrot.slane %v3739, %v3752
        %v3754 = vcombine.high %v3746, %v3746
        %v3755 = vcombine.high %v3753, %v3753
        %v3756 = vcombine.high %v3490, %v3490
        %v3758 = vunpack.c.l.s4 1983009808
        %v3759 = vunpack.c.0.s8 %v3758
        %v3760 = vlaneseq
        %v3761 = vshrl.u32 %v3760, 7
        %v3762 = vsub.s32 %v3759, %v3761
        %v3763 = vrot.slane %v3490, %v3762
        %v3765 = vunpack.c.l.s4 1983009808
        %v3766 = vunpack.c.0.s8 %v3765
        %v3767 = vlaneseq
        %v3768 = vshrl.u32 %v3767, 7
        %v3769 = vsub.s32 %v3766, %v3768
        %v3770 = vrot.slane %v3756, %v3769
        %v3771 = vcombine.high %v3763, %v3763
        %v3772 = vcombine.high %v3770, %v3770
        %v3774 = vunpack.c.l.s4 1983009808
        %v3775 = vunpack.c.0.s8 %v3774
        %v3776 = vlaneseq
        %v3777 = vshrl.u32 %v3776, 7
        %v3778 = vsub.s32 %v3775, %v3777
        %v3779 = vrot.slane %v3491, %v3778
        %v3780 = vcombine.high %v3492, %v3492
        %v3782 = vunpack.c.l.s4 1983009808
        %v3783 = vunpack.c.0.s8 %v3782
        %v3784 = vlaneseq
        %v3785 = vshrl.u32 %v3784, 7
        %v3786 = vsub.s32 %v3783, %v3785
        %v3787 = vrot.slane %v3492, %v3786
        %v3789 = vunpack.c.l.s4 1983009808
        %v3790 = vunpack.c.0.s8 %v3789
        %v3791 = vlaneseq
        %v3792 = vshrl.u32 %v3791, 7
        %v3793 = vsub.s32 %v3790, %v3792
        %v3794 = vrot.slane %v3780, %v3793
        %v3795 = vcombine.high %v3787, %v3787
        %v3796 = vcombine.high %v3794, %v3794
        %v3797 = vcombine.high %v3493, %v3493
        %v3799 = vunpack.c.l.s4 1983009808
        %v3800 = vunpack.c.0.s8 %v3799
        %v3801 = vlaneseq
        %v3802 = vshrl.u32 %v3801, 7
        %v3803 = vsub.s32 %v3800, %v3802
        %v3804 = vrot.slane %v3493, %v3803
        %v3806 = vunpack.c.l.s4 1983009808
        %v3807 = vunpack.c.0.s8 %v3806
        %v3808 = vlaneseq
        %v3809 = vshrl.u32 %v3808, 7
        %v3810 = vsub.s32 %v3807, %v3809
        %v3811 = vrot.slane %v3797, %v3810
        %v3812 = vcombine.high %v3804, %v3804
        %v3813 = vcombine.high %v3811, %v3811
        %v3815 = vunpack.c.l.s4 1983009808
        %v3816 = vunpack.c.0.s8 %v3815
        %v3817 = vlaneseq
        %v3818 = vshrl.u32 %v3817, 7
        %v3819 = vsub.s32 %v3816, %v3818
        %v3820 = vrot.slane %v3494, %v3819
        %v3821 = vcombine.high %v3495, %v3495
        %v3823 = vunpack.c.l.s4 1983009808
        %v3824 = vunpack.c.0.s8 %v3823
        %v3825 = vlaneseq
        %v3826 = vshrl.u32 %v3825, 7
        %v3827 = vsub.s32 %v3824, %v3826
        %v3828 = vrot.slane %v3495, %v3827
        %v3830 = vunpack.c.l.s4 1983009808
        %v3831 = vunpack.c.0.s8 %v3830
        %v3832 = vlaneseq
        %v3833 = vshrl.u32 %v3832, 7
        %v3834 = vsub.s32 %v3831, %v3833
        %v3835 = vrot.slane %v3821, %v3834
        %v3836 = vcombine.high %v3828, %v3828
        %v3837 = vcombine.high %v3835, %v3835
        %v3838 = vcombine.high %v3496, %v3496
        %v3840 = vunpack.c.l.s4 1983009808
        %v3841 = vunpack.c.0.s8 %v3840
        %v3842 = vlaneseq
        %v3843 = vshrl.u32 %v3842, 7
        %v3844 = vsub.s32 %v3841, %v3843
        %v3845 = vrot.slane %v3496, %v3844
        %v3847 = vunpack.c.l.s4 1983009808
        %v3848 = vunpack.c.0.s8 %v3847
        %v3849 = vlaneseq
        %v3850 = vshrl.u32 %v3849, 7
        %v3851 = vsub.s32 %v3848, %v3850
        %v3852 = vrot.slane %v3838, %v3851
        %v3853 = vcombine.high %v3845, %v3845
        %v3854 = vcombine.high %v3852, %v3852
        %v3856 = vunpack.c.l.s4 1983009808
        %v3857 = vunpack.c.0.s8 %v3856
        %v3858 = vlaneseq
        %v3859 = vshrl.u32 %v3858, 7
        %v3860 = vsub.s32 %v3857, %v3859
        %v3861 = vrot.slane %v3497, %v3860
        %v3862 = vcombine.high %v3498, %v3498
        %v3864 = vunpack.c.l.s4 1983009808
        %v3865 = vunpack.c.0.s8 %v3864
        %v3866 = vlaneseq
        %v3867 = vshrl.u32 %v3866, 7
        %v3868 = vsub.s32 %v3865, %v3867
        %v3869 = vrot.slane %v3498, %v3868
        %v3871 = vunpack.c.l.s4 1983009808
        %v3872 = vunpack.c.0.s8 %v3871
        %v3873 = vlaneseq
        %v3874 = vshrl.u32 %v3873, 7
        %v3875 = vsub.s32 %v3872, %v3874
        %v3876 = vrot.slane %v3862, %v3875
        %v3877 = vcombine.high %v3869, %v3869
        %v3878 = vcombine.high %v3876, %v3876
        %v3879 = vcombine.high %v3499, %v3499
        %v3881 = vunpack.c.l.s4 1983009808
        %v3882 = vunpack.c.0.s8 %v3881
        %v3883 = vlaneseq
        %v3884 = vshrl.u32 %v3883, 7
        %v3885 = vsub.s32 %v3882, %v3884
        %v3886 = vrot.slane %v3499, %v3885
        %v3888 = vunpack.c.l.s4 1983009808
        %v3889 = vunpack.c.0.s8 %v3888
        %v3890 = vlaneseq
        %v3891 = vshrl.u32 %v3890, 7
        %v3892 = vsub.s32 %v3889, %v3891
        %v3893 = vrot.slane %v3879, %v3892
        %v3894 = vcombine.high %v3886, %v3886
        %v3895 = vcombine.high %v3893, %v3893
        %v3897 = vunpack.c.l.s4 1983009808
        %v3898 = vunpack.c.0.s8 %v3897
        %v3899 = vlaneseq
        %v3900 = vshrl.u32 %v3899, 7
        %v3901 = vsub.s32 %v3898, %v3900
        %v3902 = vrot.slane %v3500, %v3901
        %v3903 = vcombine.high %v3501, %v3501
        %v3905 = vunpack.c.l.s4 1983009808
        %v3906 = vunpack.c.0.s8 %v3905
        %v3907 = vlaneseq
        %v3908 = vshrl.u32 %v3907, 7
        %v3909 = vsub.s32 %v3906, %v3908
        %v3910 = vrot.slane %v3501, %v3909
        %v3912 = vunpack.c.l.s4 1983009808
        %v3913 = vunpack.c.0.s8 %v3912
        %v3914 = vlaneseq
        %v3915 = vshrl.u32 %v3914, 7
        %v3916 = vsub.s32 %v3913, %v3915
        %v3917 = vrot.slane %v3903, %v3916
        %v3918 = vcombine.high %v3910, %v3910
        %v3919 = vcombine.high %v3917, %v3917
        %v3920 = vcombine.high %v3502, %v3502
        %v3922 = vunpack.c.l.s4 1983009808
        %v3923 = vunpack.c.0.s8 %v3922
        %v3924 = vlaneseq
        %v3925 = vshrl.u32 %v3924, 7
        %v3926 = vsub.s32 %v3923, %v3925
        %v3927 = vrot.slane %v3502, %v3926
        %v3929 = vunpack.c.l.s4 1983009808
        %v3930 = vunpack.c.0.s8 %v3929
        %v3931 = vlaneseq
        %v3932 = vshrl.u32 %v3931, 7
        %v3933 = vsub.s32 %v3930, %v3932
        %v3934 = vrot.slane %v3920, %v3933
        %v3935 = vcombine.high %v3927, %v3927
        %v3936 = vcombine.high %v3934, %v3934
        %v3938 = vunpack.c.l.s4 1983009808
        %v3939 = vunpack.c.0.s8 %v3938
        %v3940 = vlaneseq
        %v3941 = vshrl.u32 %v3940, 7
        %v3942 = vsub.s32 %v3939, %v3941
        %v3943 = vrot.slane %v3503, %v3942
        %v3944 = vcombine.low %v3541, %v3549
        %v3945 = vcombine.low %v3548, %v3550
        %v3947 = vunpack.c.l.s4 1983009808
        %v3948 = vunpack.c.0.s8 %v3947
        %v3949 = vlaneseq
        %v3950 = vshrl.u32 %v3949, 7
        %v3951 = vsub.s32 %v3948, %v3950
        %v3952 = vrot.slane %v3944, %v3951
        %v3954 = vunpack.c.l.s4 1983009808
        %v3955 = vunpack.c.0.s8 %v3954
        %v3956 = vlaneseq
        %v3957 = vshrl.u32 %v3956, 7
        %v3958 = vsub.s32 %v3955, %v3957
        %v3959 = vrot.slane %v3945, %v3958
        %v3960 = vcombine.low %v3952, %v3959
        %v3961 = vcombine.low %v3558, %v3566
        %v3962 = vcombine.low %v3565, %v3567
        %v3964 = vunpack.c.l.s4 1983009808
        %v3965 = vunpack.c.0.s8 %v3964
        %v3966 = vlaneseq
        %v3967 = vshrl.u32 %v3966, 7
        %v3968 = vsub.s32 %v3965, %v3967
        %v3969 = vrot.slane %v3961, %v3968
        %v3971 = vunpack.c.l.s4 1983009808
        %v3972 = vunpack.c.0.s8 %v3971
        %v3973 = vlaneseq
        %v3974 = vshrl.u32 %v3973, 7
        %v3975 = vsub.s32 %v3972, %v3974
        %v3976 = vrot.slane %v3962, %v3975
        %v3977 = vcombine.low %v3969, %v3976
        %v3978 = vcombine.low %v3574, %v3582
        %v3979 = vcombine.low %v3590, %v3589
        %v3981 = vunpack.c.l.s4 1983009808
        %v3982 = vunpack.c.0.s8 %v3981
        %v3983 = vlaneseq
        %v3984 = vshrl.u32 %v3983, 7
        %v3985 = vsub.s32 %v3982, %v3984
        %v3986 = vrot.slane %v3978, %v3985
        %v3988 = vunpack.c.l.s4 1983009808
        %v3989 = vunpack.c.0.s8 %v3988
        %v3990 = vlaneseq
        %v3991 = vshrl.u32 %v3990, 7
        %v3992 = vsub.s32 %v3989, %v3991
        %v3993 = vrot.slane %v3979, %v3992
        %v3994 = vcombine.low %v3986, %v3993
        %v3995 = vcombine.low %v3591, %v3599
        %v3996 = vcombine.low %v3607, %v3606
        %v3998 = vunpack.c.l.s4 1983009808
        %v3999 = vunpack.c.0.s8 %v3998
        %v4000 = vlaneseq
        %v4001 = vshrl.u32 %v4000, 7
        %v4002 = vsub.s32 %v3999, %v4001
        %v4003 = vrot.slane %v3995, %v4002
        %v4005 = vunpack.c.l.s4 1983009808
        %v4006 = vunpack.c.0.s8 %v4005
        %v4007 = vlaneseq
        %v4008 = vshrl.u32 %v4007, 7
        %v4009 = vsub.s32 %v4006, %v4008
        %v4010 = vrot.slane %v3996, %v4009
        %v4011 = vcombine.low %v4003, %v4010
        %v4012 = vcombine.low %v3608, %v3615
        %v4013 = vcombine.low %v3623, %v3631
        %v4015 = vunpack.c.l.s4 1983009808
        %v4016 = vunpack.c.0.s8 %v4015
        %v4017 = vlaneseq
        %v4018 = vshrl.u32 %v4017, 7
        %v4019 = vsub.s32 %v4016, %v4018
        %v4020 = vrot.slane %v4012, %v4019
        %v4022 = vunpack.c.l.s4 1983009808
        %v4023 = vunpack.c.0.s8 %v4022
        %v4024 = vlaneseq
        %v4025 = vshrl.u32 %v4024, 7
        %v4026 = vsub.s32 %v4023, %v4025
        %v4027 = vrot.slane %v4013, %v4026
        %v4028 = vcombine.low %v4020, %v4027
        %v4029 = vcombine.low %v3630, %v3632
        %v4030 = vcombine.low %v3640, %v3648
        %v4032 = vunpack.c.l.s4 1983009808
        %v4033 = vunpack.c.0.s8 %v4032
        %v4034 = vlaneseq
        %v4035 = vshrl.u32 %v4034, 7
        %v4036 = vsub.s32 %v4033, %v4035
        %v4037 = vrot.slane %v4029, %v4036
        %v4039 = vunpack.c.l.s4 1983009808
        %v4040 = vunpack.c.0.s8 %v4039
        %v4041 = vlaneseq
        %v4042 = vshrl.u32 %v4041, 7
        %v4043 = vsub.s32 %v4040, %v4042
        %v4044 = vrot.slane %v4030, %v4043
        %v4045 = vcombine.low %v4037, %v4044
        %v4046 = vcombine.low %v3647, %v3649
        %v4047 = vcombine.low %v3656, %v3664
        %v4049 = vunpack.c.l.s4 1983009808
        %v4050 = vunpack.c.0.s8 %v4049
        %v4051 = vlaneseq
        %v4052 = vshrl.u32 %v4051, 7
        %v4053 = vsub.s32 %v4050, %v4052
        %v4054 = vrot.slane %v4046, %v4053
        %v4056 = vunpack.c.l.s4 1983009808
        %v4057 = vunpack.c.0.s8 %v4056
        %v4058 = vlaneseq
        %v4059 = vshrl.u32 %v4058, 7
        %v4060 = vsub.s32 %v4057, %v4059
        %v4061 = vrot.slane %v4047, %v4060
        %v4062 = vcombine.low %v4054, %v4061
        %v4063 = vcombine.low %v3672, %v3671
        %v4064 = vcombine.low %v3673, %v3681
        %v4066 = vunpack.c.l.s4 1983009808
        %v4067 = vunpack.c.0.s8 %v4066
        %v4068 = vlaneseq
        %v4069 = vshrl.u32 %v4068, 7
        %v4070 = vsub.s32 %v4067, %v4069
        %v4071 = vrot.slane %v4063, %v4070
        %v4073 = vunpack.c.l.s4 1983009808
        %v4074 = vunpack.c.0.s8 %v4073
        %v4075 = vlaneseq
        %v4076 = vshrl.u32 %v4075, 7
        %v4077 = vsub.s32 %v4074, %v4076
        %v4078 = vrot.slane %v4064, %v4077
        %v4079 = vcombine.low %v4071, %v4078
        %v4080 = vcombine.low %v3689, %v3688
        %v4081 = vcombine.low %v3690, %v3697
        %v4083 = vunpack.c.l.s4 1983009808
        %v4084 = vunpack.c.0.s8 %v4083
        %v4085 = vlaneseq
        %v4086 = vshrl.u32 %v4085, 7
        %v4087 = vsub.s32 %v4084, %v4086
        %v4088 = vrot.slane %v4080, %v4087
        %v4090 = vunpack.c.l.s4 1983009808
        %v4091 = vunpack.c.0.s8 %v4090
        %v4092 = vlaneseq
        %v4093 = vshrl.u32 %v4092, 7
        %v4094 = vsub.s32 %v4091, %v4093
        %v4095 = vrot.slane %v4081, %v4094
        %v4096 = vcombine.low %v4088, %v4095
        %v4097 = vcombine.low %v3705, %v3713
        %v4098 = vcombine.low %v3712, %v3714
        %v4100 = vunpack.c.l.s4 1983009808
        %v4101 = vunpack.c.0.s8 %v4100
        %v4102 = vlaneseq
        %v4103 = vshrl.u32 %v4102, 7
        %v4104 = vsub.s32 %v4101, %v4103
        %v4105 = vrot.slane %v4097, %v4104
        %v4107 = vunpack.c.l.s4 1983009808
        %v4108 = vunpack.c.0.s8 %v4107
        %v4109 = vlaneseq
        %v4110 = vshrl.u32 %v4109, 7
        %v4111 = vsub.s32 %v4108, %v4110
        %v4112 = vrot.slane %v4098, %v4111
        %v4113 = vcombine.low %v4105, %v4112
        %v4114 = vcombine.low %v3722, %v3730
        %v4115 = vcombine.low %v3729, %v3731
        %v4117 = vunpack.c.l.s4 1983009808
        %v4118 = vunpack.c.0.s8 %v4117
        %v4119 = vlaneseq
        %v4120 = vshrl.u32 %v4119, 7
        %v4121 = vsub.s32 %v4118, %v4120
        %v4122 = vrot.slane %v4114, %v4121
        %v4124 = vunpack.c.l.s4 1983009808
        %v4125 = vunpack.c.0.s8 %v4124
        %v4126 = vlaneseq
        %v4127 = vshrl.u32 %v4126, 7
        %v4128 = vsub.s32 %v4125, %v4127
        %v4129 = vrot.slane %v4115, %v4128
        %v4130 = vcombine.low %v4122, %v4129
        %v4131 = vcombine.low %v3738, %v3746
        %v4132 = vcombine.low %v3754, %v3753
        %v4134 = vunpack.c.l.s4 1983009808
        %v4135 = vunpack.c.0.s8 %v4134
        %v4136 = vlaneseq
        %v4137 = vshrl.u32 %v4136, 7
        %v4138 = vsub.s32 %v4135, %v4137
        %v4139 = vrot.slane %v4131, %v4138
        %v4141 = vunpack.c.l.s4 1983009808
        %v4142 = vunpack.c.0.s8 %v4141
        %v4143 = vlaneseq
        %v4144 = vshrl.u32 %v4143, 7
        %v4145 = vsub.s32 %v4142, %v4144
        %v4146 = vrot.slane %v4132, %v4145
        %v4147 = vcombine.low %v4139, %v4146
        %v4148 = vcombine.low %v3755, %v3763
        %v4149 = vcombine.low %v3771, %v3770
        %v4151 = vunpack.c.l.s4 1983009808
        %v4152 = vunpack.c.0.s8 %v4151
        %v4153 = vlaneseq
        %v4154 = vshrl.u32 %v4153, 7
        %v4155 = vsub.s32 %v4152, %v4154
        %v4156 = vrot.slane %v4148, %v4155
        %v4158 = vunpack.c.l.s4 1983009808
        %v4159 = vunpack.c.0.s8 %v4158
        %v4160 = vlaneseq
        %v4161 = vshrl.u32 %v4160, 7
        %v4162 = vsub.s32 %v4159, %v4161
        %v4163 = vrot.slane %v4149, %v4162
        %v4164 = vcombine.low %v4156, %v4163
        %v4165 = vcombine.low %v3772, %v3779
        %v4166 = vcombine.low %v3787, %v3795
        %v4168 = vunpack.c.l.s4 1983009808
        %v4169 = vunpack.c.0.s8 %v4168
        %v4170 = vlaneseq
        %v4171 = vshrl.u32 %v4170, 7
        %v4172 = vsub.s32 %v4169, %v4171
        %v4173 = vrot.slane %v4165, %v4172
        %v4175 = vunpack.c.l.s4 1983009808
        %v4176 = vunpack.c.0.s8 %v4175
        %v4177 = vlaneseq
        %v4178 = vshrl.u32 %v4177, 7
        %v4179 = vsub.s32 %v4176, %v4178
        %v4180 = vrot.slane %v4166, %v4179
        %v4181 = vcombine.low %v4173, %v4180
        %v4182 = vcombine.low %v3794, %v3796
        %v4183 = vcombine.low %v3804, %v3812
        %v4185 = vunpack.c.l.s4 1983009808
        %v4186 = vunpack.c.0.s8 %v4185
        %v4187 = vlaneseq
        %v4188 = vshrl.u32 %v4187, 7
        %v4189 = vsub.s32 %v4186, %v4188
        %v4190 = vrot.slane %v4182, %v4189
        %v4192 = vunpack.c.l.s4 1983009808
        %v4193 = vunpack.c.0.s8 %v4192
        %v4194 = vlaneseq
        %v4195 = vshrl.u32 %v4194, 7
        %v4196 = vsub.s32 %v4193, %v4195
        %v4197 = vrot.slane %v4183, %v4196
        %v4198 = vcombine.low %v4190, %v4197
        %v4199 = vcombine.low %v3811, %v3813
        %v4200 = vcombine.low %v3820, %v3828
        %v4202 = vunpack.c.l.s4 1983009808
        %v4203 = vunpack.c.0.s8 %v4202
        %v4204 = vlaneseq
        %v4205 = vshrl.u32 %v4204, 7
        %v4206 = vsub.s32 %v4203, %v4205
        %v4207 = vrot.slane %v4199, %v4206
        %v4209 = vunpack.c.l.s4 1983009808
        %v4210 = vunpack.c.0.s8 %v4209
        %v4211 = vlaneseq
        %v4212 = vshrl.u32 %v4211, 7
        %v4213 = vsub.s32 %v4210, %v4212
        %v4214 = vrot.slane %v4200, %v4213
        %v4215 = vcombine.low %v4207, %v4214
        %v4216 = vcombine.low %v3836, %v3835
        %v4217 = vcombine.low %v3837, %v3845
        %v4219 = vunpack.c.l.s4 1983009808
        %v4220 = vunpack.c.0.s8 %v4219
        %v4221 = vlaneseq
        %v4222 = vshrl.u32 %v4221, 7
        %v4223 = vsub.s32 %v4220, %v4222
        %v4224 = vrot.slane %v4216, %v4223
        %v4226 = vunpack.c.l.s4 1983009808
        %v4227 = vunpack.c.0.s8 %v4226
        %v4228 = vlaneseq
        %v4229 = vshrl.u32 %v4228, 7
        %v4230 = vsub.s32 %v4227, %v4229
        %v4231 = vrot.slane %v4217, %v4230
        %v4232 = vcombine.low %v4224, %v4231
        %v4233 = vcombine.low %v3853, %v3852
        %v4234 = vcombine.low %v3854, %v3861
        %v4236 = vunpack.c.l.s4 1983009808
        %v4237 = vunpack.c.0.s8 %v4236
        %v4238 = vlaneseq
        %v4239 = vshrl.u32 %v4238, 7
        %v4240 = vsub.s32 %v4237, %v4239
        %v4241 = vrot.slane %v4233, %v4240
        %v4243 = vunpack.c.l.s4 1983009808
        %v4244 = vunpack.c.0.s8 %v4243
        %v4245 = vlaneseq
        %v4246 = vshrl.u32 %v4245, 7
        %v4247 = vsub.s32 %v4244, %v4246
        %v4248 = vrot.slane %v4234, %v4247
        %v4249 = vcombine.low %v4241, %v4248
        %v4250 = vcombine.low %v3869, %v3877
        %v4251 = vcombine.low %v3876, %v3878
        %v4253 = vunpack.c.l.s4 1983009808
        %v4254 = vunpack.c.0.s8 %v4253
        %v4255 = vlaneseq
        %v4256 = vshrl.u32 %v4255, 7
        %v4257 = vsub.s32 %v4254, %v4256
        %v4258 = vrot.slane %v4250, %v4257
        %v4260 = vunpack.c.l.s4 1983009808
        %v4261 = vunpack.c.0.s8 %v4260
        %v4262 = vlaneseq
        %v4263 = vshrl.u32 %v4262, 7
        %v4264 = vsub.s32 %v4261, %v4263
        %v4265 = vrot.slane %v4251, %v4264
        %v4266 = vcombine.low %v4258, %v4265
        %v4267 = vcombine.low %v3886, %v3894
        %v4268 = vcombine.low %v3893, %v3895
        %v4270 = vunpack.c.l.s4 1983009808
        %v4271 = vunpack.c.0.s8 %v4270
        %v4272 = vlaneseq
        %v4273 = vshrl.u32 %v4272, 7
        %v4274 = vsub.s32 %v4271, %v4273
        %v4275 = vrot.slane %v4267, %v4274
        %v4277 = vunpack.c.l.s4 1983009808
        %v4278 = vunpack.c.0.s8 %v4277
        %v4279 = vlaneseq
        %v4280 = vshrl.u32 %v4279, 7
        %v4281 = vsub.s32 %v4278, %v4280
        %v4282 = vrot.slane %v4268, %v4281
        %v4283 = vcombine.low %v4275, %v4282
        %v4284 = vcombine.low %v3902, %v3910
        %v4285 = vcombine.low %v3918, %v3917
        %v4287 = vunpack.c.l.s4 1983009808
        %v4288 = vunpack.c.0.s8 %v4287
        %v4289 = vlaneseq
        %v4290 = vshrl.u32 %v4289, 7
        %v4291 = vsub.s32 %v4288, %v4290
        %v4292 = vrot.slane %v4284, %v4291
        %v4294 = vunpack.c.l.s4 1983009808
        %v4295 = vunpack.c.0.s8 %v4294
        %v4296 = vlaneseq
        %v4297 = vshrl.u32 %v4296, 7
        %v4298 = vsub.s32 %v4295, %v4297
        %v4299 = vrot.slane %v4285, %v4298
        %v4300 = vcombine.low %v4292, %v4299
        %v4301 = vcombine.low %v3919, %v3927
        %v4302 = vcombine.low %v3935, %v3934
        %v4304 = vunpack.c.l.s4 1983009808
        %v4305 = vunpack.c.0.s8 %v4304
        %v4306 = vlaneseq
        %v4307 = vshrl.u32 %v4306, 7
        %v4308 = vsub.s32 %v4305, %v4307
        %v4309 = vrot.slane %v4301, %v4308
        %v4311 = vunpack.c.l.s4 1983009808
        %v4312 = vunpack.c.0.s8 %v4311
        %v4313 = vlaneseq
        %v4314 = vshrl.u32 %v4313, 7
        %v4315 = vsub.s32 %v4312, %v4314
        %v4316 = vrot.slane %v4302, %v4315
        %v4317 = vcombine.low %v4309, %v4316
        %v4318 = vcombine.low %v3936, %v3943
        %v4320 = vunpack.c.l.s4 1983009808
        %v4321 = vunpack.c.0.s8 %v4320
        %v4322 = vlaneseq
        %v4323 = vshrl.u32 %v4322, 7
        %v4324 = vsub.s32 %v4321, %v4323
        %v4325 = vrot.slane %v4318, %v4324
        %v4349 = vpack.c.bf16 %v3977, %v3960
        %v4350 = vpack.c.bf16 %v4011, %v3994
        %v4351 = vpack.c.bf16 %v4045, %v4028
        %v4352 = vpack.c.bf16 %v4079, %v4062
        %v4353 = vpack.c.bf16 %v4113, %v4096
        %v4354 = vpack.c.bf16 %v4147, %v4130
        %v4355 = vpack.c.bf16 %v4181, %v4164
        %v4356 = vpack.c.bf16 %v4215, %v4198
        %v4357 = vpack.c.bf16 %v4249, %v4232
        %v4358 = vpack.c.bf16 %v4283, %v4266
        %v4359 = vpack.c.bf16 %v4317, %v4300
        %v4360 = vpack.c.bf16 %v4325, %v4325
        %v4373 = vunpack.c.l.b16 %v4349
        %v4374 = vunpack.c.h.b16 %v4349
        %v4375 = vunpack.c.l.b16 %v4350
        %v4376 = vunpack.c.h.b16 %v4350
        %v4377 = vunpack.c.l.b16 %v4351
        %v4378 = vunpack.c.h.b16 %v4351
        %v4379 = vunpack.c.l.b16 %v4352
        %v4380 = vunpack.c.h.b16 %v4352
        %v4381 = vunpack.c.l.b16 %v4353
        %v4382 = vunpack.c.h.b16 %v4353
        %v4383 = vunpack.c.l.b16 %v4354
        %v4384 = vunpack.c.h.b16 %v4354
        %v4385 = vunpack.c.l.b16 %v4355
        %v4386 = vunpack.c.h.b16 %v4355
        %v4387 = vunpack.c.l.b16 %v4356
        %v4388 = vunpack.c.h.b16 %v4356
        %v4389 = vunpack.c.l.b16 %v4357
        %v4390 = vunpack.c.h.b16 %v4357
        %v4391 = vunpack.c.l.b16 %v4358
        %v4392 = vunpack.c.h.b16 %v4358
        %v4393 = vunpack.c.l.b16 %v4359
        %v4394 = vunpack.c.h.b16 %v4359
        %v4395 = vunpack.c.l.b16 %v4360
        %v4396 = vpack.c.b16 %v4373, %v4373
        %v4397 = vpack.c.b16 %v4374, %v4374
        %v4398 = vpack.c.b16 %v4375, %v4375
        %v4399 = vpack.c.b16 %v4376, %v4376
        %v4400 = vpack.c.b16 %v4377, %v4377
        %v4401 = vpack.c.b16 %v4378, %v4378
        %v4402 = vpack.c.b16 %v4379, %v4379
        %v4403 = vpack.c.b16 %v4380, %v4380
        %v4404 = vpack.c.b16 %v4381, %v4381
        %v4405 = vpack.c.b16 %v4382, %v4382
        %v4406 = vpack.c.b16 %v4383, %v4383
        %v4407 = vpack.c.b16 %v4384, %v4384
        %v4408 = vpack.c.b16 %v4385, %v4385
        %v4409 = vpack.c.b16 %v4386, %v4386
        %v4410 = vpack.c.b16 %v4387, %v4387
        %v4411 = vpack.c.b16 %v4388, %v4388
        %v4412 = vpack.c.b16 %v4389, %v4389
        %v4413 = vpack.c.b16 %v4390, %v4390
        %v4414 = vpack.c.b16 %v4391, %v4391
        %v4415 = vpack.c.b16 %v4392, %v4392
        %v4416 = vpack.c.b16 %v4393, %v4393
        %v4417 = vpack.c.b16 %v4394, %v4394
        %v4418 = vpack.c.b16 %v4395, %v4395
        %4419 = vrot.lane.b32.xlu0 %v4396, 24
        %v4420 = vpop.permute.xlu0 %4419
        %4421 = vrot.lane.b32.xlu0 %v4397, 24
        %v4422 = vpop.permute.xlu0 %4421
        %4423 = vrot.lane.b32.xlu0 %v4398, 24
        %v4424 = vpop.permute.xlu0 %4423
        %4425 = vrot.lane.b32.xlu0 %v4399, 24
        %v4426 = vpop.permute.xlu0 %4425
        %4427 = vrot.lane.b32.xlu0 %v4400, 24
        %v4428 = vpop.permute.xlu0 %4427
        %4429 = vrot.lane.b32.xlu0 %v4401, 24
        %v4430 = vpop.permute.xlu0 %4429
        %4431 = vrot.lane.b32.xlu0 %v4402, 24
        %v4432 = vpop.permute.xlu0 %4431
        %4433 = vrot.lane.b32.xlu0 %v4403, 24
        %v4434 = vpop.permute.xlu0 %4433
        %4435 = vrot.lane.b32.xlu0 %v4404, 24
        %v4436 = vpop.permute.xlu0 %4435
        %4437 = vrot.lane.b32.xlu0 %v4405, 24
        %v4438 = vpop.permute.xlu0 %4437
        %4439 = vrot.lane.b32.xlu0 %v4406, 24
        %v4440 = vpop.permute.xlu0 %4439
        %4441 = vrot.lane.b32.xlu0 %v4407, 24
        %v4442 = vpop.permute.xlu0 %4441
        %4443 = vrot.lane.b32.xlu0 %v4408, 24
        %v4444 = vpop.permute.xlu0 %4443
        %4445 = vrot.lane.b32.xlu0 %v4409, 24
        %v4446 = vpop.permute.xlu0 %4445
        %4447 = vrot.lane.b32.xlu0 %v4410, 24
        %v4448 = vpop.permute.xlu0 %4447
        %4449 = vrot.lane.b32.xlu0 %v4411, 24
        %v4450 = vpop.permute.xlu0 %4449
        %4451 = vrot.lane.b32.xlu0 %v4412, 24
        %v4452 = vpop.permute.xlu0 %4451
        %4453 = vrot.lane.b32.xlu0 %v4413, 24
        %v4454 = vpop.permute.xlu0 %4453
        %4455 = vrot.lane.b32.xlu0 %v4414, 24
        %v4456 = vpop.permute.xlu0 %4455
        %4457 = vrot.lane.b32.xlu0 %v4415, 24
        %v4458 = vpop.permute.xlu0 %4457
        %4459 = vrot.lane.b32.xlu0 %v4416, 24
        %v4460 = vpop.permute.xlu0 %4459
        %4461 = vrot.lane.b32.xlu0 %v4417, 24
        %v4462 = vpop.permute.xlu0 %4461
        %4463 = vrot.lane.b32.xlu0 %v4418, 24
        %v4464 = vpop.permute.xlu0 %4463
        %vm4488 = vcmask 257216
        %4489 = vst.msk [vmem:[#allocation4] sm:$0xf] %vm4488, %v4420
        %4490 = vst.msk [vmem:[#allocation4 + $0x4] sm:$0xf] %vm4488, %v4422
        %4491 = vst.msk [vmem:[#allocation4 + $0x8] sm:$0xf] %vm4488, %v4424
        %4492 = vst.msk [vmem:[#allocation4 + $0xc] sm:$0xf] %vm4488, %v4426
        %4493 = vst.msk [vmem:[#allocation4 + $0x10] sm:$0xf] %vm4488, %v4428
        %4494 = vst.msk [vmem:[#allocation4 + $0x14] sm:$0xf] %vm4488, %v4430
        %4495 = vst.msk [vmem:[#allocation4 + $0x18] sm:$0xf] %vm4488, %v4432
        %4496 = vst.msk [vmem:[#allocation4 + $0x1c] sm:$0xf] %vm4488, %v4434
        %4497 = vst.msk [vmem:[#allocation4 + $0x20] sm:$0xf] %vm4488, %v4436
        %4498 = vst.msk [vmem:[#allocation4 + $0x24] sm:$0xf] %vm4488, %v4438
        %4499 = vst.msk [vmem:[#allocation4 + $0x28] sm:$0xf] %vm4488, %v4440
        %4500 = vst.msk [vmem:[#allocation4 + $0x2c] sm:$0xf] %vm4488, %v4442
        %4501 = vst.msk [vmem:[#allocation4 + $0x30] sm:$0xf] %vm4488, %v4444
        %4502 = vst.msk [vmem:[#allocation4 + $0x34] sm:$0xf] %vm4488, %v4446
        %4503 = vst.msk [vmem:[#allocation4 + $0x38] sm:$0xf] %vm4488, %v4448
        %4504 = vst.msk [vmem:[#allocation4 + $0x3c] sm:$0xf] %vm4488, %v4450
        %4505 = vst.msk [vmem:[#allocation4 + $0x40] sm:$0xf] %vm4488, %v4452
        %4506 = vst.msk [vmem:[#allocation4 + $0x44] sm:$0xf] %vm4488, %v4454
        %4507 = vst.msk [vmem:[#allocation4 + $0x48] sm:$0xf] %vm4488, %v4456
        %4508 = vst.msk [vmem:[#allocation4 + $0x4c] sm:$0xf] %vm4488, %v4458
        %4509 = vst.msk [vmem:[#allocation4 + $0x50] sm:$0xf] %vm4488, %v4460
        %4510 = vst.msk [vmem:[#allocation4 + $0x54] sm:$0xf] %vm4488, %v4462
        %vm4511 = vcmask 255168
        %4512 = vst.msk [vmem:[#allocation4 + $0x58] sm:$0x3] %vm4511, %v4464
        %v4513 = vld [vmem:[%s3473 + $0x1] sm:$0xff]
        %v4514 = vld [vmem:[%s3473 + $0x9] sm:$0xff]
        %v4515 = vld [vmem:[%s3473 + $0x11] sm:$0x3]
        %v4516 = vld [vmem:[%s3473 + $0x19] sm:$0xff]
        %v4517 = vld [vmem:[%s3473 + $0x21] sm:$0xff]
        %v4518 = vld [vmem:[%s3473 + $0x29] sm:$0x3]
        %v4519 = vld [vmem:[%s3473 + $0x31] sm:$0xff]
        %v4520 = vld [vmem:[%s3473 + $0x39] sm:$0xff]
        %v4521 = vld [vmem:[%s3473 + $0x41] sm:$0x3]
        %v4522 = vld [vmem:[%s3473 + $0x49] sm:$0xff]
        %v4523 = vld [vmem:[%s3473 + $0x51] sm:$0xff]
        %v4524 = vld [vmem:[%s3473 + $0x59] sm:$0x3]
        %v4525 = vld [vmem:[%s3473 + $0x61] sm:$0xff]
        %v4526 = vld [vmem:[%s3473 + $0x69] sm:$0xff]
        %v4527 = vld [vmem:[%s3473 + $0x71] sm:$0x3]
        %v4528 = vld [vmem:[%s3473 + $0x79] sm:$0xff]
        %v4529 = vld [vmem:[%s3473 + $0x81] sm:$0xff]
        %v4530 = vld [vmem:[%s3473 + $0x89] sm:$0x3]
        %v4531 = vld [vmem:[%s3473 + $0x91] sm:$0xff]
        %v4532 = vld [vmem:[%s3473 + $0x99] sm:$0xff]
        %v4533 = vld [vmem:[%s3473 + $0xa1] sm:$0x3]
        %v4534 = vld [vmem:[%s3473 + $0xa9] sm:$0xff]
        %v4535 = vld [vmem:[%s3473 + $0xb1] sm:$0xff]
        %v4536 = vld [vmem:[%s3473 + $0xb9] sm:$0x3]
        %v4537 = vld [vmem:[%s3473 + $0xc1] sm:$0xff]
        %v4538 = vld [vmem:[%s3473 + $0xc9] sm:$0xff]
        %v4539 = vld [vmem:[%s3473 + $0xd1] sm:$0x3]
        %v4540 = vld [vmem:[%s3473 + $0xd9] sm:$0xff]
        %v4541 = vld [vmem:[%s3473 + $0xe1] sm:$0xff]
        %v4542 = vld [vmem:[%s3473 + $0xe9] sm:$0x3]
        %v4573 = vcombine.high %v4513, %v4513
        %v4575 = vunpack.c.l.s4 1983009808
        %v4576 = vunpack.c.0.s8 %v4575
        %v4577 = vlaneseq
        %v4578 = vshrl.u32 %v4577, 7
        %v4579 = vsub.s32 %v4576, %v4578
        %v4580 = vrot.slane %v4513, %v4579
        %v4582 = vunpack.c.l.s4 1983009808
        %v4583 = vunpack.c.0.s8 %v4582
        %v4584 = vlaneseq
        %v4585 = vshrl.u32 %v4584, 7
        %v4586 = vsub.s32 %v4583, %v4585
        %v4587 = vrot.slane %v4573, %v4586
        %v4588 = vcombine.high %v4580, %v4580
        %v4589 = vcombine.high %v4587, %v4587
        %v4590 = vcombine.high %v4514, %v4514
        %v4592 = vunpack.c.l.s4 1983009808
        %v4593 = vunpack.c.0.s8 %v4592
        %v4594 = vlaneseq
        %v4595 = vshrl.u32 %v4594, 7
        %v4596 = vsub.s32 %v4593, %v4595
        %v4597 = vrot.slane %v4514, %v4596
        %v4599 = vunpack.c.l.s4 1983009808
        %v4600 = vunpack.c.0.s8 %v4599
        %v4601 = vlaneseq
        %v4602 = vshrl.u32 %v4601, 7
        %v4603 = vsub.s32 %v4600, %v4602
        %v4604 = vrot.slane %v4590, %v4603
        %v4605 = vcombine.high %v4597, %v4597
        %v4606 = vcombine.high %v4604, %v4604
        %v4608 = vunpack.c.l.s4 1983009808
        %v4609 = vunpack.c.0.s8 %v4608
        %v4610 = vlaneseq
        %v4611 = vshrl.u32 %v4610, 7
        %v4612 = vsub.s32 %v4609, %v4611
        %v4613 = vrot.slane %v4515, %v4612
        %v4614 = vcombine.high %v4516, %v4516
        %v4616 = vunpack.c.l.s4 1983009808
        %v4617 = vunpack.c.0.s8 %v4616
        %v4618 = vlaneseq
        %v4619 = vshrl.u32 %v4618, 7
        %v4620 = vsub.s32 %v4617, %v4619
        %v4621 = vrot.slane %v4516, %v4620
        %v4623 = vunpack.c.l.s4 1983009808
        %v4624 = vunpack.c.0.s8 %v4623
        %v4625 = vlaneseq
        %v4626 = vshrl.u32 %v4625, 7
        %v4627 = vsub.s32 %v4624, %v4626
        %v4628 = vrot.slane %v4614, %v4627
        %v4629 = vcombine.high %v4621, %v4621
        %v4630 = vcombine.high %v4628, %v4628
        %v4631 = vcombine.high %v4517, %v4517
        %v4633 = vunpack.c.l.s4 1983009808
        %v4634 = vunpack.c.0.s8 %v4633
        %v4635 = vlaneseq
        %v4636 = vshrl.u32 %v4635, 7
        %v4637 = vsub.s32 %v4634, %v4636
        %v4638 = vrot.slane %v4517, %v4637
        %v4640 = vunpack.c.l.s4 1983009808
        %v4641 = vunpack.c.0.s8 %v4640
        %v4642 = vlaneseq
        %v4643 = vshrl.u32 %v4642, 7
        %v4644 = vsub.s32 %v4641, %v4643
        %v4645 = vrot.slane %v4631, %v4644
        %v4646 = vcombine.high %v4638, %v4638
        %v4647 = vcombine.high %v4645, %v4645
        %v4649 = vunpack.c.l.s4 1983009808
        %v4650 = vunpack.c.0.s8 %v4649
        %v4651 = vlaneseq
        %v4652 = vshrl.u32 %v4651, 7
        %v4653 = vsub.s32 %v4650, %v4652
        %v4654 = vrot.slane %v4518, %v4653
        %v4655 = vcombine.high %v4519, %v4519
        %v4657 = vunpack.c.l.s4 1983009808
        %v4658 = vunpack.c.0.s8 %v4657
        %v4659 = vlaneseq
        %v4660 = vshrl.u32 %v4659, 7
        %v4661 = vsub.s32 %v4658, %v4660
        %v4662 = vrot.slane %v4519, %v4661
        %v4664 = vunpack.c.l.s4 1983009808
        %v4665 = vunpack.c.0.s8 %v4664
        %v4666 = vlaneseq
        %v4667 = vshrl.u32 %v4666, 7
        %v4668 = vsub.s32 %v4665, %v4667
        %v4669 = vrot.slane %v4655, %v4668
        %v4670 = vcombine.high %v4662, %v4662
        %v4671 = vcombine.high %v4669, %v4669
        %v4672 = vcombine.high %v4520, %v4520
        %v4674 = vunpack.c.l.s4 1983009808
        %v4675 = vunpack.c.0.s8 %v4674
        %v4676 = vlaneseq
        %v4677 = vshrl.u32 %v4676, 7
        %v4678 = vsub.s32 %v4675, %v4677
        %v4679 = vrot.slane %v4520, %v4678
        %v4681 = vunpack.c.l.s4 1983009808
        %v4682 = vunpack.c.0.s8 %v4681
        %v4683 = vlaneseq
        %v4684 = vshrl.u32 %v4683, 7
        %v4685 = vsub.s32 %v4682, %v4684
        %v4686 = vrot.slane %v4672, %v4685
        %v4687 = vcombine.high %v4679, %v4679
        %v4688 = vcombine.high %v4686, %v4686
        %v4690 = vunpack.c.l.s4 1983009808
        %v4691 = vunpack.c.0.s8 %v4690
        %v4692 = vlaneseq
        %v4693 = vshrl.u32 %v4692, 7
        %v4694 = vsub.s32 %v4691, %v4693
        %v4695 = vrot.slane %v4521, %v4694
        %v4696 = vcombine.high %v4522, %v4522
        %v4698 = vunpack.c.l.s4 1983009808
        %v4699 = vunpack.c.0.s8 %v4698
        %v4700 = vlaneseq
        %v4701 = vshrl.u32 %v4700, 7
        %v4702 = vsub.s32 %v4699, %v4701
        %v4703 = vrot.slane %v4522, %v4702
        %v4705 = vunpack.c.l.s4 1983009808
        %v4706 = vunpack.c.0.s8 %v4705
        %v4707 = vlaneseq
        %v4708 = vshrl.u32 %v4707, 7
        %v4709 = vsub.s32 %v4706, %v4708
        %v4710 = vrot.slane %v4696, %v4709
        %v4711 = vcombine.high %v4703, %v4703
        %v4712 = vcombine.high %v4710, %v4710
        %v4713 = vcombine.high %v4523, %v4523
        %v4715 = vunpack.c.l.s4 1983009808
        %v4716 = vunpack.c.0.s8 %v4715
        %v4717 = vlaneseq
        %v4718 = vshrl.u32 %v4717, 7
        %v4719 = vsub.s32 %v4716, %v4718
        %v4720 = vrot.slane %v4523, %v4719
        %v4722 = vunpack.c.l.s4 1983009808
        %v4723 = vunpack.c.0.s8 %v4722
        %v4724 = vlaneseq
        %v4725 = vshrl.u32 %v4724, 7
        %v4726 = vsub.s32 %v4723, %v4725
        %v4727 = vrot.slane %v4713, %v4726
        %v4728 = vcombine.high %v4720, %v4720
        %v4729 = vcombine.high %v4727, %v4727
        %v4731 = vunpack.c.l.s4 1983009808
        %v4732 = vunpack.c.0.s8 %v4731
        %v4733 = vlaneseq
        %v4734 = vshrl.u32 %v4733, 7
        %v4735 = vsub.s32 %v4732, %v4734
        %v4736 = vrot.slane %v4524, %v4735
        %v4737 = vcombine.high %v4525, %v4525
        %v4739 = vunpack.c.l.s4 1983009808
        %v4740 = vunpack.c.0.s8 %v4739
        %v4741 = vlaneseq
        %v4742 = vshrl.u32 %v4741, 7
        %v4743 = vsub.s32 %v4740, %v4742
        %v4744 = vrot.slane %v4525, %v4743
        %v4746 = vunpack.c.l.s4 1983009808
        %v4747 = vunpack.c.0.s8 %v4746
        %v4748 = vlaneseq
        %v4749 = vshrl.u32 %v4748, 7
        %v4750 = vsub.s32 %v4747, %v4749
        %v4751 = vrot.slane %v4737, %v4750
        %v4752 = vcombine.high %v4744, %v4744
        %v4753 = vcombine.high %v4751, %v4751
        %v4754 = vcombine.high %v4526, %v4526
        %v4756 = vunpack.c.l.s4 1983009808
        %v4757 = vunpack.c.0.s8 %v4756
        %v4758 = vlaneseq
        %v4759 = vshrl.u32 %v4758, 7
        %v4760 = vsub.s32 %v4757, %v4759
        %v4761 = vrot.slane %v4526, %v4760
        %v4763 = vunpack.c.l.s4 1983009808
        %v4764 = vunpack.c.0.s8 %v4763
        %v4765 = vlaneseq
        %v4766 = vshrl.u32 %v4765, 7
        %v4767 = vsub.s32 %v4764, %v4766
        %v4768 = vrot.slane %v4754, %v4767
        %v4769 = vcombine.high %v4761, %v4761
        %v4770 = vcombine.high %v4768, %v4768
        %v4772 = vunpack.c.l.s4 1983009808
        %v4773 = vunpack.c.0.s8 %v4772
        %v4774 = vlaneseq
        %v4775 = vshrl.u32 %v4774, 7
        %v4776 = vsub.s32 %v4773, %v4775
        %v4777 = vrot.slane %v4527, %v4776
        %v4778 = vcombine.high %v4528, %v4528
        %v4780 = vunpack.c.l.s4 1983009808
        %v4781 = vunpack.c.0.s8 %v4780
        %v4782 = vlaneseq
        %v4783 = vshrl.u32 %v4782, 7
        %v4784 = vsub.s32 %v4781, %v4783
        %v4785 = vrot.slane %v4528, %v4784
        %v4787 = vunpack.c.l.s4 1983009808
        %v4788 = vunpack.c.0.s8 %v4787
        %v4789 = vlaneseq
        %v4790 = vshrl.u32 %v4789, 7
        %v4791 = vsub.s32 %v4788, %v4790
        %v4792 = vrot.slane %v4778, %v4791
        %v4793 = vcombine.high %v4785, %v4785
        %v4794 = vcombine.high %v4792, %v4792
        %v4795 = vcombine.high %v4529, %v4529
        %v4797 = vunpack.c.l.s4 1983009808
        %v4798 = vunpack.c.0.s8 %v4797
        %v4799 = vlaneseq
        %v4800 = vshrl.u32 %v4799, 7
        %v4801 = vsub.s32 %v4798, %v4800
        %v4802 = vrot.slane %v4529, %v4801
        %v4804 = vunpack.c.l.s4 1983009808
        %v4805 = vunpack.c.0.s8 %v4804
        %v4806 = vlaneseq
        %v4807 = vshrl.u32 %v4806, 7
        %v4808 = vsub.s32 %v4805, %v4807
        %v4809 = vrot.slane %v4795, %v4808
        %v4810 = vcombine.high %v4802, %v4802
        %v4811 = vcombine.high %v4809, %v4809
        %v4813 = vunpack.c.l.s4 1983009808
        %v4814 = vunpack.c.0.s8 %v4813
        %v4815 = vlaneseq
        %v4816 = vshrl.u32 %v4815, 7
        %v4817 = vsub.s32 %v4814, %v4816
        %v4818 = vrot.slane %v4530, %v4817
        %v4819 = vcombine.high %v4531, %v4531
        %v4821 = vunpack.c.l.s4 1983009808
        %v4822 = vunpack.c.0.s8 %v4821
        %v4823 = vlaneseq
        %v4824 = vshrl.u32 %v4823, 7
        %v4825 = vsub.s32 %v4822, %v4824
        %v4826 = vrot.slane %v4531, %v4825
        %v4828 = vunpack.c.l.s4 1983009808
        %v4829 = vunpack.c.0.s8 %v4828
        %v4830 = vlaneseq
        %v4831 = vshrl.u32 %v4830, 7
        %v4832 = vsub.s32 %v4829, %v4831
        %v4833 = vrot.slane %v4819, %v4832
        %v4834 = vcombine.high %v4826, %v4826
        %v4835 = vcombine.high %v4833, %v4833
        %v4836 = vcombine.high %v4532, %v4532
        %v4838 = vunpack.c.l.s4 1983009808
        %v4839 = vunpack.c.0.s8 %v4838
        %v4840 = vlaneseq
        %v4841 = vshrl.u32 %v4840, 7
        %v4842 = vsub.s32 %v4839, %v4841
        %v4843 = vrot.slane %v4532, %v4842
        %v4845 = vunpack.c.l.s4 1983009808
        %v4846 = vunpack.c.0.s8 %v4845
        %v4847 = vlaneseq
        %v4848 = vshrl.u32 %v4847, 7
        %v4849 = vsub.s32 %v4846, %v4848
        %v4850 = vrot.slane %v4836, %v4849
        %v4851 = vcombine.high %v4843, %v4843
        %v4852 = vcombine.high %v4850, %v4850
        %v4854 = vunpack.c.l.s4 1983009808
        %v4855 = vunpack.c.0.s8 %v4854
        %v4856 = vlaneseq
        %v4857 = vshrl.u32 %v4856, 7
        %v4858 = vsub.s32 %v4855, %v4857
        %v4859 = vrot.slane %v4533, %v4858
        %v4860 = vcombine.high %v4534, %v4534
        %v4862 = vunpack.c.l.s4 1983009808
        %v4863 = vunpack.c.0.s8 %v4862
        %v4864 = vlaneseq
        %v4865 = vshrl.u32 %v4864, 7
        %v4866 = vsub.s32 %v4863, %v4865
        %v4867 = vrot.slane %v4534, %v4866
        %v4869 = vunpack.c.l.s4 1983009808
        %v4870 = vunpack.c.0.s8 %v4869
        %v4871 = vlaneseq
        %v4872 = vshrl.u32 %v4871, 7
        %v4873 = vsub.s32 %v4870, %v4872
        %v4874 = vrot.slane %v4860, %v4873
        %v4875 = vcombine.high %v4867, %v4867
        %v4876 = vcombine.high %v4874, %v4874
        %v4877 = vcombine.high %v4535, %v4535
        %v4879 = vunpack.c.l.s4 1983009808
        %v4880 = vunpack.c.0.s8 %v4879
        %v4881 = vlaneseq
        %v4882 = vshrl.u32 %v4881, 7
        %v4883 = vsub.s32 %v4880, %v4882
        %v4884 = vrot.slane %v4535, %v4883
        %v4886 = vunpack.c.l.s4 1983009808
        %v4887 = vunpack.c.0.s8 %v4886
        %v4888 = vlaneseq
        %v4889 = vshrl.u32 %v4888, 7
        %v4890 = vsub.s32 %v4887, %v4889
        %v4891 = vrot.slane %v4877, %v4890
        %v4892 = vcombine.high %v4884, %v4884
        %v4893 = vcombine.high %v4891, %v4891
        %v4895 = vunpack.c.l.s4 1983009808
        %v4896 = vunpack.c.0.s8 %v4895
        %v4897 = vlaneseq
        %v4898 = vshrl.u32 %v4897, 7
        %v4899 = vsub.s32 %v4896, %v4898
        %v4900 = vrot.slane %v4536, %v4899
        %v4901 = vcombine.high %v4537, %v4537
        %v4903 = vunpack.c.l.s4 1983009808
        %v4904 = vunpack.c.0.s8 %v4903
        %v4905 = vlaneseq
        %v4906 = vshrl.u32 %v4905, 7
        %v4907 = vsub.s32 %v4904, %v4906
        %v4908 = vrot.slane %v4537, %v4907
        %v4910 = vunpack.c.l.s4 1983009808
        %v4911 = vunpack.c.0.s8 %v4910
        %v4912 = vlaneseq
        %v4913 = vshrl.u32 %v4912, 7
        %v4914 = vsub.s32 %v4911, %v4913
        %v4915 = vrot.slane %v4901, %v4914
        %v4916 = vcombine.high %v4908, %v4908
        %v4917 = vcombine.high %v4915, %v4915
        %v4918 = vcombine.high %v4538, %v4538
        %v4920 = vunpack.c.l.s4 1983009808
        %v4921 = vunpack.c.0.s8 %v4920
        %v4922 = vlaneseq
        %v4923 = vshrl.u32 %v4922, 7
        %v4924 = vsub.s32 %v4921, %v4923
        %v4925 = vrot.slane %v4538, %v4924
        %v4927 = vunpack.c.l.s4 1983009808
        %v4928 = vunpack.c.0.s8 %v4927
        %v4929 = vlaneseq
        %v4930 = vshrl.u32 %v4929, 7
        %v4931 = vsub.s32 %v4928, %v4930
        %v4932 = vrot.slane %v4918, %v4931
        %v4933 = vcombine.high %v4925, %v4925
        %v4934 = vcombine.high %v4932, %v4932
        %v4936 = vunpack.c.l.s4 1983009808
        %v4937 = vunpack.c.0.s8 %v4936
        %v4938 = vlaneseq
        %v4939 = vshrl.u32 %v4938, 7
        %v4940 = vsub.s32 %v4937, %v4939
        %v4941 = vrot.slane %v4539, %v4940
        %v4942 = vcombine.high %v4540, %v4540
        %v4944 = vunpack.c.l.s4 1983009808
        %v4945 = vunpack.c.0.s8 %v4944
        %v4946 = vlaneseq
        %v4947 = vshrl.u32 %v4946, 7
        %v4948 = vsub.s32 %v4945, %v4947
        %v4949 = vrot.slane %v4540, %v4948
        %v4951 = vunpack.c.l.s4 1983009808
        %v4952 = vunpack.c.0.s8 %v4951
        %v4953 = vlaneseq
        %v4954 = vshrl.u32 %v4953, 7
        %v4955 = vsub.s32 %v4952, %v4954
        %v4956 = vrot.slane %v4942, %v4955
        %v4957 = vcombine.high %v4949, %v4949
        %v4958 = vcombine.high %v4956, %v4956
        %v4959 = vcombine.high %v4541, %v4541
        %v4961 = vunpack.c.l.s4 1983009808
        %v4962 = vunpack.c.0.s8 %v4961
        %v4963 = vlaneseq
        %v4964 = vshrl.u32 %v4963, 7
        %v4965 = vsub.s32 %v4962, %v4964
        %v4966 = vrot.slane %v4541, %v4965
        %v4968 = vunpack.c.l.s4 1983009808
        %v4969 = vunpack.c.0.s8 %v4968
        %v4970 = vlaneseq
        %v4971 = vshrl.u32 %v4970, 7
        %v4972 = vsub.s32 %v4969, %v4971
        %v4973 = vrot.slane %v4959, %v4972
        %v4974 = vcombine.high %v4966, %v4966
        %v4975 = vcombine.high %v4973, %v4973
        %v4977 = vunpack.c.l.s4 1983009808
        %v4978 = vunpack.c.0.s8 %v4977
        %v4979 = vlaneseq
        %v4980 = vshrl.u32 %v4979, 7
        %v4981 = vsub.s32 %v4978, %v4980
        %v4982 = vrot.slane %v4542, %v4981
        %v4983 = vcombine.low %v4580, %v4588
        %v4984 = vcombine.low %v4587, %v4589
        %v4986 = vunpack.c.l.s4 1983009808
        %v4987 = vunpack.c.0.s8 %v4986
        %v4988 = vlaneseq
        %v4989 = vshrl.u32 %v4988, 7
        %v4990 = vsub.s32 %v4987, %v4989
        %v4991 = vrot.slane %v4983, %v4990
        %v4993 = vunpack.c.l.s4 1983009808
        %v4994 = vunpack.c.0.s8 %v4993
        %v4995 = vlaneseq
        %v4996 = vshrl.u32 %v4995, 7
        %v4997 = vsub.s32 %v4994, %v4996
        %v4998 = vrot.slane %v4984, %v4997
        %v4999 = vcombine.low %v4991, %v4998
        %v5000 = vcombine.low %v4597, %v4605
        %v5001 = vcombine.low %v4604, %v4606
        %v5003 = vunpack.c.l.s4 1983009808
        %v5004 = vunpack.c.0.s8 %v5003
        %v5005 = vlaneseq
        %v5006 = vshrl.u32 %v5005, 7
        %v5007 = vsub.s32 %v5004, %v5006
        %v5008 = vrot.slane %v5000, %v5007
        %v5010 = vunpack.c.l.s4 1983009808
        %v5011 = vunpack.c.0.s8 %v5010
        %v5012 = vlaneseq
        %v5013 = vshrl.u32 %v5012, 7
        %v5014 = vsub.s32 %v5011, %v5013
        %v5015 = vrot.slane %v5001, %v5014
        %v5016 = vcombine.low %v5008, %v5015
        %v5017 = vcombine.low %v4613, %v4621
        %v5018 = vcombine.low %v4629, %v4628
        %v5020 = vunpack.c.l.s4 1983009808
        %v5021 = vunpack.c.0.s8 %v5020
        %v5022 = vlaneseq
        %v5023 = vshrl.u32 %v5022, 7
        %v5024 = vsub.s32 %v5021, %v5023
        %v5025 = vrot.slane %v5017, %v5024
        %v5027 = vunpack.c.l.s4 1983009808
        %v5028 = vunpack.c.0.s8 %v5027
        %v5029 = vlaneseq
        %v5030 = vshrl.u32 %v5029, 7
        %v5031 = vsub.s32 %v5028, %v5030
        %v5032 = vrot.slane %v5018, %v5031
        %v5033 = vcombine.low %v5025, %v5032
        %v5034 = vcombine.low %v4630, %v4638
        %v5035 = vcombine.low %v4646, %v4645
        %v5037 = vunpack.c.l.s4 1983009808
        %v5038 = vunpack.c.0.s8 %v5037
        %v5039 = vlaneseq
        %v5040 = vshrl.u32 %v5039, 7
        %v5041 = vsub.s32 %v5038, %v5040
        %v5042 = vrot.slane %v5034, %v5041
        %v5044 = vunpack.c.l.s4 1983009808
        %v5045 = vunpack.c.0.s8 %v5044
        %v5046 = vlaneseq
        %v5047 = vshrl.u32 %v5046, 7
        %v5048 = vsub.s32 %v5045, %v5047
        %v5049 = vrot.slane %v5035, %v5048
        %v5050 = vcombine.low %v5042, %v5049
        %v5051 = vcombine.low %v4647, %v4654
        %v5052 = vcombine.low %v4662, %v4670
        %v5054 = vunpack.c.l.s4 1983009808
        %v5055 = vunpack.c.0.s8 %v5054
        %v5056 = vlaneseq
        %v5057 = vshrl.u32 %v5056, 7
        %v5058 = vsub.s32 %v5055, %v5057
        %v5059 = vrot.slane %v5051, %v5058
        %v5061 = vunpack.c.l.s4 1983009808
        %v5062 = vunpack.c.0.s8 %v5061
        %v5063 = vlaneseq
        %v5064 = vshrl.u32 %v5063, 7
        %v5065 = vsub.s32 %v5062, %v5064
        %v5066 = vrot.slane %v5052, %v5065
        %v5067 = vcombine.low %v5059, %v5066
        %v5068 = vcombine.low %v4669, %v4671
        %v5069 = vcombine.low %v4679, %v4687
        %v5071 = vunpack.c.l.s4 1983009808
        %v5072 = vunpack.c.0.s8 %v5071
        %v5073 = vlaneseq
        %v5074 = vshrl.u32 %v5073, 7
        %v5075 = vsub.s32 %v5072, %v5074
        %v5076 = vrot.slane %v5068, %v5075
        %v5078 = vunpack.c.l.s4 1983009808
        %v5079 = vunpack.c.0.s8 %v5078
        %v5080 = vlaneseq
        %v5081 = vshrl.u32 %v5080, 7
        %v5082 = vsub.s32 %v5079, %v5081
        %v5083 = vrot.slane %v5069, %v5082
        %v5084 = vcombine.low %v5076, %v5083
        %v5085 = vcombine.low %v4686, %v4688
        %v5086 = vcombine.low %v4695, %v4703
        %v5088 = vunpack.c.l.s4 1983009808
        %v5089 = vunpack.c.0.s8 %v5088
        %v5090 = vlaneseq
        %v5091 = vshrl.u32 %v5090, 7
        %v5092 = vsub.s32 %v5089, %v5091
        %v5093 = vrot.slane %v5085, %v5092
        %v5095 = vunpack.c.l.s4 1983009808
        %v5096 = vunpack.c.0.s8 %v5095
        %v5097 = vlaneseq
        %v5098 = vshrl.u32 %v5097, 7
        %v5099 = vsub.s32 %v5096, %v5098
        %v5100 = vrot.slane %v5086, %v5099
        %v5101 = vcombine.low %v5093, %v5100
        %v5102 = vcombine.low %v4711, %v4710
        %v5103 = vcombine.low %v4712, %v4720
        %v5105 = vunpack.c.l.s4 1983009808
        %v5106 = vunpack.c.0.s8 %v5105
        %v5107 = vlaneseq
        %v5108 = vshrl.u32 %v5107, 7
        %v5109 = vsub.s32 %v5106, %v5108
        %v5110 = vrot.slane %v5102, %v5109
        %v5112 = vunpack.c.l.s4 1983009808
        %v5113 = vunpack.c.0.s8 %v5112
        %v5114 = vlaneseq
        %v5115 = vshrl.u32 %v5114, 7
        %v5116 = vsub.s32 %v5113, %v5115
        %v5117 = vrot.slane %v5103, %v5116
        %v5118 = vcombine.low %v5110, %v5117
        %v5119 = vcombine.low %v4728, %v4727
        %v5120 = vcombine.low %v4729, %v4736
        %v5122 = vunpack.c.l.s4 1983009808
        %v5123 = vunpack.c.0.s8 %v5122
        %v5124 = vlaneseq
        %v5125 = vshrl.u32 %v5124, 7
        %v5126 = vsub.s32 %v5123, %v5125
        %v5127 = vrot.slane %v5119, %v5126
        %v5129 = vunpack.c.l.s4 1983009808
        %v5130 = vunpack.c.0.s8 %v5129
        %v5131 = vlaneseq
        %v5132 = vshrl.u32 %v5131, 7
        %v5133 = vsub.s32 %v5130, %v5132
        %v5134 = vrot.slane %v5120, %v5133
        %v5135 = vcombine.low %v5127, %v5134
        %v5136 = vcombine.low %v4744, %v4752
        %v5137 = vcombine.low %v4751, %v4753
        %v5139 = vunpack.c.l.s4 1983009808
        %v5140 = vunpack.c.0.s8 %v5139
        %v5141 = vlaneseq
        %v5142 = vshrl.u32 %v5141, 7
        %v5143 = vsub.s32 %v5140, %v5142
        %v5144 = vrot.slane %v5136, %v5143
        %v5146 = vunpack.c.l.s4 1983009808
        %v5147 = vunpack.c.0.s8 %v5146
        %v5148 = vlaneseq
        %v5149 = vshrl.u32 %v5148, 7
        %v5150 = vsub.s32 %v5147, %v5149
        %v5151 = vrot.slane %v5137, %v5150
        %v5152 = vcombine.low %v5144, %v5151
        %v5153 = vcombine.low %v4761, %v4769
        %v5154 = vcombine.low %v4768, %v4770
        %v5156 = vunpack.c.l.s4 1983009808
        %v5157 = vunpack.c.0.s8 %v5156
        %v5158 = vlaneseq
        %v5159 = vshrl.u32 %v5158, 7
        %v5160 = vsub.s32 %v5157, %v5159
        %v5161 = vrot.slane %v5153, %v5160
        %v5163 = vunpack.c.l.s4 1983009808
        %v5164 = vunpack.c.0.s8 %v5163
        %v5165 = vlaneseq
        %v5166 = vshrl.u32 %v5165, 7
        %v5167 = vsub.s32 %v5164, %v5166
        %v5168 = vrot.slane %v5154, %v5167
        %v5169 = vcombine.low %v5161, %v5168
        %v5170 = vcombine.low %v4777, %v4785
        %v5171 = vcombine.low %v4793, %v4792
        %v5173 = vunpack.c.l.s4 1983009808
        %v5174 = vunpack.c.0.s8 %v5173
        %v5175 = vlaneseq
        %v5176 = vshrl.u32 %v5175, 7
        %v5177 = vsub.s32 %v5174, %v5176
        %v5178 = vrot.slane %v5170, %v5177
        %v5180 = vunpack.c.l.s4 1983009808
        %v5181 = vunpack.c.0.s8 %v5180
        %v5182 = vlaneseq
        %v5183 = vshrl.u32 %v5182, 7
        %v5184 = vsub.s32 %v5181, %v5183
        %v5185 = vrot.slane %v5171, %v5184
        %v5186 = vcombine.low %v5178, %v5185
        %v5187 = vcombine.low %v4794, %v4802
        %v5188 = vcombine.low %v4810, %v4809
        %v5190 = vunpack.c.l.s4 1983009808
        %v5191 = vunpack.c.0.s8 %v5190
        %v5192 = vlaneseq
        %v5193 = vshrl.u32 %v5192, 7
        %v5194 = vsub.s32 %v5191, %v5193
        %v5195 = vrot.slane %v5187, %v5194
        %v5197 = vunpack.c.l.s4 1983009808
        %v5198 = vunpack.c.0.s8 %v5197
        %v5199 = vlaneseq
        %v5200 = vshrl.u32 %v5199, 7
        %v5201 = vsub.s32 %v5198, %v5200
        %v5202 = vrot.slane %v5188, %v5201
        %v5203 = vcombine.low %v5195, %v5202
        %v5204 = vcombine.low %v4811, %v4818
        %v5205 = vcombine.low %v4826, %v4834
        %v5207 = vunpack.c.l.s4 1983009808
        %v5208 = vunpack.c.0.s8 %v5207
        %v5209 = vlaneseq
        %v5210 = vshrl.u32 %v5209, 7
        %v5211 = vsub.s32 %v5208, %v5210
        %v5212 = vrot.slane %v5204, %v5211
        %v5214 = vunpack.c.l.s4 1983009808
        %v5215 = vunpack.c.0.s8 %v5214
        %v5216 = vlaneseq
        %v5217 = vshrl.u32 %v5216, 7
        %v5218 = vsub.s32 %v5215, %v5217
        %v5219 = vrot.slane %v5205, %v5218
        %v5220 = vcombine.low %v5212, %v5219
        %v5221 = vcombine.low %v4833, %v4835
        %v5222 = vcombine.low %v4843, %v4851
        %v5224 = vunpack.c.l.s4 1983009808
        %v5225 = vunpack.c.0.s8 %v5224
        %v5226 = vlaneseq
        %v5227 = vshrl.u32 %v5226, 7
        %v5228 = vsub.s32 %v5225, %v5227
        %v5229 = vrot.slane %v5221, %v5228
        %v5231 = vunpack.c.l.s4 1983009808
        %v5232 = vunpack.c.0.s8 %v5231
        %v5233 = vlaneseq
        %v5234 = vshrl.u32 %v5233, 7
        %v5235 = vsub.s32 %v5232, %v5234
        %v5236 = vrot.slane %v5222, %v5235
        %v5237 = vcombine.low %v5229, %v5236
        %v5238 = vcombine.low %v4850, %v4852
        %v5239 = vcombine.low %v4859, %v4867
        %v5241 = vunpack.c.l.s4 1983009808
        %v5242 = vunpack.c.0.s8 %v5241
        %v5243 = vlaneseq
        %v5244 = vshrl.u32 %v5243, 7
        %v5245 = vsub.s32 %v5242, %v5244
        %v5246 = vrot.slane %v5238, %v5245
        %v5248 = vunpack.c.l.s4 1983009808
        %v5249 = vunpack.c.0.s8 %v5248
        %v5250 = vlaneseq
        %v5251 = vshrl.u32 %v5250, 7
        %v5252 = vsub.s32 %v5249, %v5251
        %v5253 = vrot.slane %v5239, %v5252
        %v5254 = vcombine.low %v5246, %v5253
        %v5255 = vcombine.low %v4875, %v4874
        %v5256 = vcombine.low %v4876, %v4884
        %v5258 = vunpack.c.l.s4 1983009808
        %v5259 = vunpack.c.0.s8 %v5258
        %v5260 = vlaneseq
        %v5261 = vshrl.u32 %v5260, 7
        %v5262 = vsub.s32 %v5259, %v5261
        %v5263 = vrot.slane %v5255, %v5262
        %v5265 = vunpack.c.l.s4 1983009808
        %v5266 = vunpack.c.0.s8 %v5265
        %v5267 = vlaneseq
        %v5268 = vshrl.u32 %v5267, 7
        %v5269 = vsub.s32 %v5266, %v5268
        %v5270 = vrot.slane %v5256, %v5269
        %v5271 = vcombine.low %v5263, %v5270
        %v5272 = vcombine.low %v4892, %v4891
        %v5273 = vcombine.low %v4893, %v4900
        %v5275 = vunpack.c.l.s4 1983009808
        %v5276 = vunpack.c.0.s8 %v5275
        %v5277 = vlaneseq
        %v5278 = vshrl.u32 %v5277, 7
        %v5279 = vsub.s32 %v5276, %v5278
        %v5280 = vrot.slane %v5272, %v5279
        %v5282 = vunpack.c.l.s4 1983009808
        %v5283 = vunpack.c.0.s8 %v5282
        %v5284 = vlaneseq
        %v5285 = vshrl.u32 %v5284, 7
        %v5286 = vsub.s32 %v5283, %v5285
        %v5287 = vrot.slane %v5273, %v5286
        %v5288 = vcombine.low %v5280, %v5287
        %v5289 = vcombine.low %v4908, %v4916
        %v5290 = vcombine.low %v4915, %v4917
        %v5292 = vunpack.c.l.s4 1983009808
        %v5293 = vunpack.c.0.s8 %v5292
        %v5294 = vlaneseq
        %v5295 = vshrl.u32 %v5294, 7
        %v5296 = vsub.s32 %v5293, %v5295
        %v5297 = vrot.slane %v5289, %v5296
        %v5299 = vunpack.c.l.s4 1983009808
        %v5300 = vunpack.c.0.s8 %v5299
        %v5301 = vlaneseq
        %v5302 = vshrl.u32 %v5301, 7
        %v5303 = vsub.s32 %v5300, %v5302
        %v5304 = vrot.slane %v5290, %v5303
        %v5305 = vcombine.low %v5297, %v5304
        %v5306 = vcombine.low %v4925, %v4933
        %v5307 = vcombine.low %v4932, %v4934
        %v5309 = vunpack.c.l.s4 1983009808
        %v5310 = vunpack.c.0.s8 %v5309
        %v5311 = vlaneseq
        %v5312 = vshrl.u32 %v5311, 7
        %v5313 = vsub.s32 %v5310, %v5312
        %v5314 = vrot.slane %v5306, %v5313
        %v5316 = vunpack.c.l.s4 1983009808
        %v5317 = vunpack.c.0.s8 %v5316
        %v5318 = vlaneseq
        %v5319 = vshrl.u32 %v5318, 7
        %v5320 = vsub.s32 %v5317, %v5319
        %v5321 = vrot.slane %v5307, %v5320
        %v5322 = vcombine.low %v5314, %v5321
        %v5323 = vcombine.low %v4941, %v4949
        %v5324 = vcombine.low %v4957, %v4956
        %v5326 = vunpack.c.l.s4 1983009808
        %v5327 = vunpack.c.0.s8 %v5326
        %v5328 = vlaneseq
        %v5329 = vshrl.u32 %v5328, 7
        %v5330 = vsub.s32 %v5327, %v5329
        %v5331 = vrot.slane %v5323, %v5330
        %v5333 = vunpack.c.l.s4 1983009808
        %v5334 = vunpack.c.0.s8 %v5333
        %v5335 = vlaneseq
        %v5336 = vshrl.u32 %v5335, 7
        %v5337 = vsub.s32 %v5334, %v5336
        %v5338 = vrot.slane %v5324, %v5337
        %v5339 = vcombine.low %v5331, %v5338
        %v5340 = vcombine.low %v4958, %v4966
        %v5341 = vcombine.low %v4974, %v4973
        %v5343 = vunpack.c.l.s4 1983009808
        %v5344 = vunpack.c.0.s8 %v5343
        %v5345 = vlaneseq
        %v5346 = vshrl.u32 %v5345, 7
        %v5347 = vsub.s32 %v5344, %v5346
        %v5348 = vrot.slane %v5340, %v5347
        %v5350 = vunpack.c.l.s4 1983009808
        %v5351 = vunpack.c.0.s8 %v5350
        %v5352 = vlaneseq
        %v5353 = vshrl.u32 %v5352, 7
        %v5354 = vsub.s32 %v5351, %v5353
        %v5355 = vrot.slane %v5341, %v5354
        %v5356 = vcombine.low %v5348, %v5355
        %v5357 = vcombine.low %v4975, %v4982
        %v5359 = vunpack.c.l.s4 1983009808
        %v5360 = vunpack.c.0.s8 %v5359
        %v5361 = vlaneseq
        %v5362 = vshrl.u32 %v5361, 7
        %v5363 = vsub.s32 %v5360, %v5362
        %v5364 = vrot.slane %v5357, %v5363
        %v5388 = vpack.c.bf16 %v5016, %v4999
        %v5389 = vpack.c.bf16 %v5050, %v5033
        %v5390 = vpack.c.bf16 %v5084, %v5067
        %v5391 = vpack.c.bf16 %v5118, %v5101
        %v5392 = vpack.c.bf16 %v5152, %v5135
        %v5393 = vpack.c.bf16 %v5186, %v5169
        %v5394 = vpack.c.bf16 %v5220, %v5203
        %v5395 = vpack.c.bf16 %v5254, %v5237
        %v5396 = vpack.c.bf16 %v5288, %v5271
        %v5397 = vpack.c.bf16 %v5322, %v5305
        %v5398 = vpack.c.bf16 %v5356, %v5339
        %v5399 = vpack.c.bf16 %v5364, %v5364
        %v5412 = vunpack.c.l.b16 %v5388
        %v5413 = vunpack.c.h.b16 %v5388
        %v5414 = vunpack.c.l.b16 %v5389
        %v5415 = vunpack.c.h.b16 %v5389
        %v5416 = vunpack.c.l.b16 %v5390
        %v5417 = vunpack.c.h.b16 %v5390
        %v5418 = vunpack.c.l.b16 %v5391
        %v5419 = vunpack.c.h.b16 %v5391
        %v5420 = vunpack.c.l.b16 %v5392
        %v5421 = vunpack.c.h.b16 %v5392
        %v5422 = vunpack.c.l.b16 %v5393
        %v5423 = vunpack.c.h.b16 %v5393
        %v5424 = vunpack.c.l.b16 %v5394
        %v5425 = vunpack.c.h.b16 %v5394
        %v5426 = vunpack.c.l.b16 %v5395
        %v5427 = vunpack.c.h.b16 %v5395
        %v5428 = vunpack.c.l.b16 %v5396
        %v5429 = vunpack.c.h.b16 %v5396
        %v5430 = vunpack.c.l.b16 %v5397
        %v5431 = vunpack.c.h.b16 %v5397
        %v5432 = vunpack.c.l.b16 %v5398
        %v5433 = vunpack.c.h.b16 %v5398
        %v5434 = vunpack.c.l.b16 %v5399
        %v5435 = vpack.c.b16 %v5412, %v5412
        %v5436 = vpack.c.b16 %v5413, %v5413
        %v5437 = vpack.c.b16 %v5414, %v5414
        %v5438 = vpack.c.b16 %v5415, %v5415
        %v5439 = vpack.c.b16 %v5416, %v5416
        %v5440 = vpack.c.b16 %v5417, %v5417
        %v5441 = vpack.c.b16 %v5418, %v5418
        %v5442 = vpack.c.b16 %v5419, %v5419
        %v5443 = vpack.c.b16 %v5420, %v5420
        %v5444 = vpack.c.b16 %v5421, %v5421
        %v5445 = vpack.c.b16 %v5422, %v5422
        %v5446 = vpack.c.b16 %v5423, %v5423
        %v5447 = vpack.c.b16 %v5424, %v5424
        %v5448 = vpack.c.b16 %v5425, %v5425
        %v5449 = vpack.c.b16 %v5426, %v5426
        %v5450 = vpack.c.b16 %v5427, %v5427
        %v5451 = vpack.c.b16 %v5428, %v5428
        %v5452 = vpack.c.b16 %v5429, %v5429
        %v5453 = vpack.c.b16 %v5430, %v5430
        %v5454 = vpack.c.b16 %v5431, %v5431
        %v5455 = vpack.c.b16 %v5432, %v5432
        %v5456 = vpack.c.b16 %v5433, %v5433
        %v5457 = vpack.c.b16 %v5434, %v5434
        %5458 = vrot.lane.b32.xlu0 %v5435, 32
        %v5459 = vpop.permute.xlu0 %5458
        %5460 = vrot.lane.b32.xlu0 %v5436, 32
        %v5461 = vpop.permute.xlu0 %5460
        %5462 = vrot.lane.b32.xlu0 %v5437, 32
        %v5463 = vpop.permute.xlu0 %5462
        %5464 = vrot.lane.b32.xlu0 %v5438, 32
        %v5465 = vpop.permute.xlu0 %5464
        %5466 = vrot.lane.b32.xlu0 %v5439, 32
        %v5467 = vpop.permute.xlu0 %5466
        %5468 = vrot.lane.b32.xlu0 %v5440, 32
        %v5469 = vpop.permute.xlu0 %5468
        %5470 = vrot.lane.b32.xlu0 %v5441, 32
        %v5471 = vpop.permute.xlu0 %5470
        %5472 = vrot.lane.b32.xlu0 %v5442, 32
        %v5473 = vpop.permute.xlu0 %5472
        %5474 = vrot.lane.b32.xlu0 %v5443, 32
        %v5475 = vpop.permute.xlu0 %5474
        %5476 = vrot.lane.b32.xlu0 %v5444, 32
        %v5477 = vpop.permute.xlu0 %5476
        %5478 = vrot.lane.b32.xlu0 %v5445, 32
        %v5479 = vpop.permute.xlu0 %5478
        %5480 = vrot.lane.b32.xlu0 %v5446, 32
        %v5481 = vpop.permute.xlu0 %5480
        %5482 = vrot.lane.b32.xlu0 %v5447, 32
        %v5483 = vpop.permute.xlu0 %5482
        %5484 = vrot.lane.b32.xlu0 %v5448, 32
        %v5485 = vpop.permute.xlu0 %5484
        %5486 = vrot.lane.b32.xlu0 %v5449, 32
        %v5487 = vpop.permute.xlu0 %5486
        %5488 = vrot.lane.b32.xlu0 %v5450, 32
        %v5489 = vpop.permute.xlu0 %5488
        %5490 = vrot.lane.b32.xlu0 %v5451, 32
        %v5491 = vpop.permute.xlu0 %5490
        %5492 = vrot.lane.b32.xlu0 %v5452, 32
        %v5493 = vpop.permute.xlu0 %5492
        %5494 = vrot.lane.b32.xlu0 %v5453, 32
        %v5495 = vpop.permute.xlu0 %5494
        %5496 = vrot.lane.b32.xlu0 %v5454, 32
        %v5497 = vpop.permute.xlu0 %5496
        %5498 = vrot.lane.b32.xlu0 %v5455, 32
        %v5499 = vpop.permute.xlu0 %5498
        %5500 = vrot.lane.b32.xlu0 %v5456, 32
        %v5501 = vpop.permute.xlu0 %5500
        %5502 = vrot.lane.b32.xlu0 %v5457, 32
        %v5503 = vpop.permute.xlu0 %5502
        %vm5527 = vcmask 322816
        %5528 = vst.msk [vmem:[#allocation4] sm:$0xf] %vm5527, %v5459
        %5529 = vst.msk [vmem:[#allocation4 + $0x4] sm:$0xf] %vm5527, %v5461
        %5530 = vst.msk [vmem:[#allocation4 + $0x8] sm:$0xf] %vm5527, %v5463
        %5531 = vst.msk [vmem:[#allocation4 + $0xc] sm:$0xf] %vm5527, %v5465
        %5532 = vst.msk [vmem:[#allocation4 + $0x10] sm:$0xf] %vm5527, %v5467
        %5533 = vst.msk [vmem:[#allocation4 + $0x14] sm:$0xf] %vm5527, %v5469
        %5534 = vst.msk [vmem:[#allocation4 + $0x18] sm:$0xf] %vm5527, %v5471
        %5535 = vst.msk [vmem:[#allocation4 + $0x1c] sm:$0xf] %vm5527, %v5473
        %5536 = vst.msk [vmem:[#allocation4 + $0x20] sm:$0xf] %vm5527, %v5475
        %5537 = vst.msk [vmem:[#allocation4 + $0x24] sm:$0xf] %vm5527, %v5477
        %5538 = vst.msk [vmem:[#allocation4 + $0x28] sm:$0xf] %vm5527, %v5479
        %5539 = vst.msk [vmem:[#allocation4 + $0x2c] sm:$0xf] %vm5527, %v5481
        %5540 = vst.msk [vmem:[#allocation4 + $0x30] sm:$0xf] %vm5527, %v5483
        %5541 = vst.msk [vmem:[#allocation4 + $0x34] sm:$0xf] %vm5527, %v5485
        %5542 = vst.msk [vmem:[#allocation4 + $0x38] sm:$0xf] %vm5527, %v5487
        %5543 = vst.msk [vmem:[#allocation4 + $0x3c] sm:$0xf] %vm5527, %v5489
        %5544 = vst.msk [vmem:[#allocation4 + $0x40] sm:$0xf] %vm5527, %v5491
        %5545 = vst.msk [vmem:[#allocation4 + $0x44] sm:$0xf] %vm5527, %v5493
        %5546 = vst.msk [vmem:[#allocation4 + $0x48] sm:$0xf] %vm5527, %v5495
        %5547 = vst.msk [vmem:[#allocation4 + $0x4c] sm:$0xf] %vm5527, %v5497
        %5548 = vst.msk [vmem:[#allocation4 + $0x50] sm:$0xf] %vm5527, %v5499
        %5549 = vst.msk [vmem:[#allocation4 + $0x54] sm:$0xf] %vm5527, %v5501
        %vm5550 = vcmask 320768
        %5551 = vst.msk [vmem:[#allocation4 + $0x58] sm:$0x3] %vm5550, %v5503
        %v5552 = vld [vmem:[%s3473 + $0x2] sm:$0xff]
        %v5553 = vld [vmem:[%s3473 + $0xa] sm:$0xff]
        %v5554 = vld [vmem:[%s3473 + $0x12] sm:$0x3]
        %v5555 = vld [vmem:[%s3473 + $0x1a] sm:$0xff]
        %v5556 = vld [vmem:[%s3473 + $0x22] sm:$0xff]
        %v5557 = vld [vmem:[%s3473 + $0x2a] sm:$0x3]
        %v5558 = vld [vmem:[%s3473 + $0x32] sm:$0xff]
        %v5559 = vld [vmem:[%s3473 + $0x3a] sm:$0xff]
        %v5560 = vld [vmem:[%s3473 + $0x42] sm:$0x3]
        %v5561 = vld [vmem:[%s3473 + $0x4a] sm:$0xff]
        %v5562 = vld [vmem:[%s3473 + $0x52] sm:$0xff]
        %v5563 = vld [vmem:[%s3473 + $0x5a] sm:$0x3]
        %v5564 = vld [vmem:[%s3473 + $0x62] sm:$0xff]
        %v5565 = vld [vmem:[%s3473 + $0x6a] sm:$0xff]
        %v5566 = vld [vmem:[%s3473 + $0x72] sm:$0x3]
        %v5567 = vld [vmem:[%s3473 + $0x7a] sm:$0xff]
        %v5568 = vld [vmem:[%s3473 + $0x82] sm:$0xff]
        %v5569 = vld [vmem:[%s3473 + $0x8a] sm:$0x3]
        %v5570 = vld [vmem:[%s3473 + $0x92] sm:$0xff]
        %v5571 = vld [vmem:[%s3473 + $0x9a] sm:$0xff]
        %v5572 = vld [vmem:[%s3473 + $0xa2] sm:$0x3]
        %v5573 = vld [vmem:[%s3473 + $0xaa] sm:$0xff]
        %v5574 = vld [vmem:[%s3473 + $0xb2] sm:$0xff]
        %v5575 = vld [vmem:[%s3473 + $0xba] sm:$0x3]
        %v5576 = vld [vmem:[%s3473 + $0xc2] sm:$0xff]
        %v5577 = vld [vmem:[%s3473 + $0xca] sm:$0xff]
        %v5578 = vld [vmem:[%s3473 + $0xd2] sm:$0x3]
        %v5579 = vld [vmem:[%s3473 + $0xda] sm:$0xff]
        %v5580 = vld [vmem:[%s3473 + $0xe2] sm:$0xff]
        %v5581 = vld [vmem:[%s3473 + $0xea] sm:$0x3]
        %v5612 = vcombine.high %v5552, %v5552
        %v5614 = vunpack.c.l.s4 1983009808
        %v5615 = vunpack.c.0.s8 %v5614
        %v5616 = vlaneseq
        %v5617 = vshrl.u32 %v5616, 7
        %v5618 = vsub.s32 %v5615, %v5617
        %v5619 = vrot.slane %v5552, %v5618
        %v5621 = vunpack.c.l.s4 1983009808
        %v5622 = vunpack.c.0.s8 %v5621
        %v5623 = vlaneseq
        %v5624 = vshrl.u32 %v5623, 7
        %v5625 = vsub.s32 %v5622, %v5624
        %v5626 = vrot.slane %v5612, %v5625
        %v5627 = vcombine.high %v5619, %v5619
        %v5628 = vcombine.high %v5626, %v5626
        %v5629 = vcombine.high %v5553, %v5553
        %v5631 = vunpack.c.l.s4 1983009808
        %v5632 = vunpack.c.0.s8 %v5631
        %v5633 = vlaneseq
        %v5634 = vshrl.u32 %v5633, 7
        %v5635 = vsub.s32 %v5632, %v5634
        %v5636 = vrot.slane %v5553, %v5635
        %v5638 = vunpack.c.l.s4 1983009808
        %v5639 = vunpack.c.0.s8 %v5638
        %v5640 = vlaneseq
        %v5641 = vshrl.u32 %v5640, 7
        %v5642 = vsub.s32 %v5639, %v5641
        %v5643 = vrot.slane %v5629, %v5642
        %v5644 = vcombine.high %v5636, %v5636
        %v5645 = vcombine.high %v5643, %v5643
        %v5647 = vunpack.c.l.s4 1983009808
        %v5648 = vunpack.c.0.s8 %v5647
        %v5649 = vlaneseq
        %v5650 = vshrl.u32 %v5649, 7
        %v5651 = vsub.s32 %v5648, %v5650
        %v5652 = vrot.slane %v5554, %v5651
        %v5653 = vcombine.high %v5555, %v5555
        %v5655 = vunpack.c.l.s4 1983009808
        %v5656 = vunpack.c.0.s8 %v5655
        %v5657 = vlaneseq
        %v5658 = vshrl.u32 %v5657, 7
        %v5659 = vsub.s32 %v5656, %v5658
        %v5660 = vrot.slane %v5555, %v5659
        %v5662 = vunpack.c.l.s4 1983009808
        %v5663 = vunpack.c.0.s8 %v5662
        %v5664 = vlaneseq
        %v5665 = vshrl.u32 %v5664, 7
        %v5666 = vsub.s32 %v5663, %v5665
        %v5667 = vrot.slane %v5653, %v5666
        %v5668 = vcombine.high %v5660, %v5660
        %v5669 = vcombine.high %v5667, %v5667
        %v5670 = vcombine.high %v5556, %v5556
        %v5672 = vunpack.c.l.s4 1983009808
        %v5673 = vunpack.c.0.s8 %v5672
        %v5674 = vlaneseq
        %v5675 = vshrl.u32 %v5674, 7
        %v5676 = vsub.s32 %v5673, %v5675
        %v5677 = vrot.slane %v5556, %v5676
        %v5679 = vunpack.c.l.s4 1983009808
        %v5680 = vunpack.c.0.s8 %v5679
        %v5681 = vlaneseq
        %v5682 = vshrl.u32 %v5681, 7
        %v5683 = vsub.s32 %v5680, %v5682
        %v5684 = vrot.slane %v5670, %v5683
        %v5685 = vcombine.high %v5677, %v5677
        %v5686 = vcombine.high %v5684, %v5684
        %v5688 = vunpack.c.l.s4 1983009808
        %v5689 = vunpack.c.0.s8 %v5688
        %v5690 = vlaneseq
        %v5691 = vshrl.u32 %v5690, 7
        %v5692 = vsub.s32 %v5689, %v5691
        %v5693 = vrot.slane %v5557, %v5692
        %v5694 = vcombine.high %v5558, %v5558
        %v5696 = vunpack.c.l.s4 1983009808
        %v5697 = vunpack.c.0.s8 %v5696
        %v5698 = vlaneseq
        %v5699 = vshrl.u32 %v5698, 7
        %v5700 = vsub.s32 %v5697, %v5699
        %v5701 = vrot.slane %v5558, %v5700
        %v5703 = vunpack.c.l.s4 1983009808
        %v5704 = vunpack.c.0.s8 %v5703
        %v5705 = vlaneseq
        %v5706 = vshrl.u32 %v5705, 7
        %v5707 = vsub.s32 %v5704, %v5706
        %v5708 = vrot.slane %v5694, %v5707
        %v5709 = vcombine.high %v5701, %v5701
        %v5710 = vcombine.high %v5708, %v5708
        %v5711 = vcombine.high %v5559, %v5559
        %v5713 = vunpack.c.l.s4 1983009808
        %v5714 = vunpack.c.0.s8 %v5713
        %v5715 = vlaneseq
        %v5716 = vshrl.u32 %v5715, 7
        %v5717 = vsub.s32 %v5714, %v5716
        %v5718 = vrot.slane %v5559, %v5717
        %v5720 = vunpack.c.l.s4 1983009808
        %v5721 = vunpack.c.0.s8 %v5720
        %v5722 = vlaneseq
        %v5723 = vshrl.u32 %v5722, 7
        %v5724 = vsub.s32 %v5721, %v5723
        %v5725 = vrot.slane %v5711, %v5724
        %v5726 = vcombine.high %v5718, %v5718
        %v5727 = vcombine.high %v5725, %v5725
        %v5729 = vunpack.c.l.s4 1983009808
        %v5730 = vunpack.c.0.s8 %v5729
        %v5731 = vlaneseq
        %v5732 = vshrl.u32 %v5731, 7
        %v5733 = vsub.s32 %v5730, %v5732
        %v5734 = vrot.slane %v5560, %v5733
        %v5735 = vcombine.high %v5561, %v5561
        %v5737 = vunpack.c.l.s4 1983009808
        %v5738 = vunpack.c.0.s8 %v5737
        %v5739 = vlaneseq
        %v5740 = vshrl.u32 %v5739, 7
        %v5741 = vsub.s32 %v5738, %v5740
        %v5742 = vrot.slane %v5561, %v5741
        %v5744 = vunpack.c.l.s4 1983009808
        %v5745 = vunpack.c.0.s8 %v5744
        %v5746 = vlaneseq
        %v5747 = vshrl.u32 %v5746, 7
        %v5748 = vsub.s32 %v5745, %v5747
        %v5749 = vrot.slane %v5735, %v5748
        %v5750 = vcombine.high %v5742, %v5742
        %v5751 = vcombine.high %v5749, %v5749
        %v5752 = vcombine.high %v5562, %v5562
        %v5754 = vunpack.c.l.s4 1983009808
        %v5755 = vunpack.c.0.s8 %v5754
        %v5756 = vlaneseq
        %v5757 = vshrl.u32 %v5756, 7
        %v5758 = vsub.s32 %v5755, %v5757
        %v5759 = vrot.slane %v5562, %v5758
        %v5761 = vunpack.c.l.s4 1983009808
        %v5762 = vunpack.c.0.s8 %v5761
        %v5763 = vlaneseq
        %v5764 = vshrl.u32 %v5763, 7
        %v5765 = vsub.s32 %v5762, %v5764
        %v5766 = vrot.slane %v5752, %v5765
        %v5767 = vcombine.high %v5759, %v5759
        %v5768 = vcombine.high %v5766, %v5766
        %v5770 = vunpack.c.l.s4 1983009808
        %v5771 = vunpack.c.0.s8 %v5770
        %v5772 = vlaneseq
        %v5773 = vshrl.u32 %v5772, 7
        %v5774 = vsub.s32 %v5771, %v5773
        %v5775 = vrot.slane %v5563, %v5774
        %v5776 = vcombine.high %v5564, %v5564
        %v5778 = vunpack.c.l.s4 1983009808
        %v5779 = vunpack.c.0.s8 %v5778
        %v5780 = vlaneseq
        %v5781 = vshrl.u32 %v5780, 7
        %v5782 = vsub.s32 %v5779, %v5781
        %v5783 = vrot.slane %v5564, %v5782
        %v5785 = vunpack.c.l.s4 1983009808
        %v5786 = vunpack.c.0.s8 %v5785
        %v5787 = vlaneseq
        %v5788 = vshrl.u32 %v5787, 7
        %v5789 = vsub.s32 %v5786, %v5788
        %v5790 = vrot.slane %v5776, %v5789
        %v5791 = vcombine.high %v5783, %v5783
        %v5792 = vcombine.high %v5790, %v5790
        %v5793 = vcombine.high %v5565, %v5565
        %v5795 = vunpack.c.l.s4 1983009808
        %v5796 = vunpack.c.0.s8 %v5795
        %v5797 = vlaneseq
        %v5798 = vshrl.u32 %v5797, 7
        %v5799 = vsub.s32 %v5796, %v5798
        %v5800 = vrot.slane %v5565, %v5799
        %v5802 = vunpack.c.l.s4 1983009808
        %v5803 = vunpack.c.0.s8 %v5802
        %v5804 = vlaneseq
        %v5805 = vshrl.u32 %v5804, 7
        %v5806 = vsub.s32 %v5803, %v5805
        %v5807 = vrot.slane %v5793, %v5806
        %v5808 = vcombine.high %v5800, %v5800
        %v5809 = vcombine.high %v5807, %v5807
        %v5811 = vunpack.c.l.s4 1983009808
        %v5812 = vunpack.c.0.s8 %v5811
        %v5813 = vlaneseq
        %v5814 = vshrl.u32 %v5813, 7
        %v5815 = vsub.s32 %v5812, %v5814
        %v5816 = vrot.slane %v5566, %v5815
        %v5817 = vcombine.high %v5567, %v5567
        %v5819 = vunpack.c.l.s4 1983009808
        %v5820 = vunpack.c.0.s8 %v5819
        %v5821 = vlaneseq
        %v5822 = vshrl.u32 %v5821, 7
        %v5823 = vsub.s32 %v5820, %v5822
        %v5824 = vrot.slane %v5567, %v5823
        %v5826 = vunpack.c.l.s4 1983009808
        %v5827 = vunpack.c.0.s8 %v5826
        %v5828 = vlaneseq
        %v5829 = vshrl.u32 %v5828, 7
        %v5830 = vsub.s32 %v5827, %v5829
        %v5831 = vrot.slane %v5817, %v5830
        %v5832 = vcombine.high %v5824, %v5824
        %v5833 = vcombine.high %v5831, %v5831
        %v5834 = vcombine.high %v5568, %v5568
        %v5836 = vunpack.c.l.s4 1983009808
        %v5837 = vunpack.c.0.s8 %v5836
        %v5838 = vlaneseq
        %v5839 = vshrl.u32 %v5838, 7
        %v5840 = vsub.s32 %v5837, %v5839
        %v5841 = vrot.slane %v5568, %v5840
        %v5843 = vunpack.c.l.s4 1983009808
        %v5844 = vunpack.c.0.s8 %v5843
        %v5845 = vlaneseq
        %v5846 = vshrl.u32 %v5845, 7
        %v5847 = vsub.s32 %v5844, %v5846
        %v5848 = vrot.slane %v5834, %v5847
        %v5849 = vcombine.high %v5841, %v5841
        %v5850 = vcombine.high %v5848, %v5848
        %v5852 = vunpack.c.l.s4 1983009808
        %v5853 = vunpack.c.0.s8 %v5852
        %v5854 = vlaneseq
        %v5855 = vshrl.u32 %v5854, 7
        %v5856 = vsub.s32 %v5853, %v5855
        %v5857 = vrot.slane %v5569, %v5856
        %v5858 = vcombine.high %v5570, %v5570
        %v5860 = vunpack.c.l.s4 1983009808
        %v5861 = vunpack.c.0.s8 %v5860
        %v5862 = vlaneseq
        %v5863 = vshrl.u32 %v5862, 7
        %v5864 = vsub.s32 %v5861, %v5863
        %v5865 = vrot.slane %v5570, %v5864
        %v5867 = vunpack.c.l.s4 1983009808
        %v5868 = vunpack.c.0.s8 %v5867
        %v5869 = vlaneseq
        %v5870 = vshrl.u32 %v5869, 7
        %v5871 = vsub.s32 %v5868, %v5870
        %v5872 = vrot.slane %v5858, %v5871
        %v5873 = vcombine.high %v5865, %v5865
        %v5874 = vcombine.high %v5872, %v5872
        %v5875 = vcombine.high %v5571, %v5571
        %v5877 = vunpack.c.l.s4 1983009808
        %v5878 = vunpack.c.0.s8 %v5877
        %v5879 = vlaneseq
        %v5880 = vshrl.u32 %v5879, 7
        %v5881 = vsub.s32 %v5878, %v5880
        %v5882 = vrot.slane %v5571, %v5881
        %v5884 = vunpack.c.l.s4 1983009808
        %v5885 = vunpack.c.0.s8 %v5884
        %v5886 = vlaneseq
        %v5887 = vshrl.u32 %v5886, 7
        %v5888 = vsub.s32 %v5885, %v5887
        %v5889 = vrot.slane %v5875, %v5888
        %v5890 = vcombine.high %v5882, %v5882
        %v5891 = vcombine.high %v5889, %v5889
        %v5893 = vunpack.c.l.s4 1983009808
        %v5894 = vunpack.c.0.s8 %v5893
        %v5895 = vlaneseq
        %v5896 = vshrl.u32 %v5895, 7
        %v5897 = vsub.s32 %v5894, %v5896
        %v5898 = vrot.slane %v5572, %v5897
        %v5899 = vcombine.high %v5573, %v5573
        %v5901 = vunpack.c.l.s4 1983009808
        %v5902 = vunpack.c.0.s8 %v5901
        %v5903 = vlaneseq
        %v5904 = vshrl.u32 %v5903, 7
        %v5905 = vsub.s32 %v5902, %v5904
        %v5906 = vrot.slane %v5573, %v5905
        %v5908 = vunpack.c.l.s4 1983009808
        %v5909 = vunpack.c.0.s8 %v5908
        %v5910 = vlaneseq
        %v5911 = vshrl.u32 %v5910, 7
        %v5912 = vsub.s32 %v5909, %v5911
        %v5913 = vrot.slane %v5899, %v5912
        %v5914 = vcombine.high %v5906, %v5906
        %v5915 = vcombine.high %v5913, %v5913
        %v5916 = vcombine.high %v5574, %v5574
        %v5918 = vunpack.c.l.s4 1983009808
        %v5919 = vunpack.c.0.s8 %v5918
        %v5920 = vlaneseq
        %v5921 = vshrl.u32 %v5920, 7
        %v5922 = vsub.s32 %v5919, %v5921
        %v5923 = vrot.slane %v5574, %v5922
        %v5925 = vunpack.c.l.s4 1983009808
        %v5926 = vunpack.c.0.s8 %v5925
        %v5927 = vlaneseq
        %v5928 = vshrl.u32 %v5927, 7
        %v5929 = vsub.s32 %v5926, %v5928
        %v5930 = vrot.slane %v5916, %v5929
        %v5931 = vcombine.high %v5923, %v5923
        %v5932 = vcombine.high %v5930, %v5930
        %v5934 = vunpack.c.l.s4 1983009808
        %v5935 = vunpack.c.0.s8 %v5934
        %v5936 = vlaneseq
        %v5937 = vshrl.u32 %v5936, 7
        %v5938 = vsub.s32 %v5935, %v5937
        %v5939 = vrot.slane %v5575, %v5938
        %v5940 = vcombine.high %v5576, %v5576
        %v5942 = vunpack.c.l.s4 1983009808
        %v5943 = vunpack.c.0.s8 %v5942
        %v5944 = vlaneseq
        %v5945 = vshrl.u32 %v5944, 7
        %v5946 = vsub.s32 %v5943, %v5945
        %v5947 = vrot.slane %v5576, %v5946
        %v5949 = vunpack.c.l.s4 1983009808
        %v5950 = vunpack.c.0.s8 %v5949
        %v5951 = vlaneseq
        %v5952 = vshrl.u32 %v5951, 7
        %v5953 = vsub.s32 %v5950, %v5952
        %v5954 = vrot.slane %v5940, %v5953
        %v5955 = vcombine.high %v5947, %v5947
        %v5956 = vcombine.high %v5954, %v5954
        %v5957 = vcombine.high %v5577, %v5577
        %v5959 = vunpack.c.l.s4 1983009808
        %v5960 = vunpack.c.0.s8 %v5959
        %v5961 = vlaneseq
        %v5962 = vshrl.u32 %v5961, 7
        %v5963 = vsub.s32 %v5960, %v5962
        %v5964 = vrot.slane %v5577, %v5963
        %v5966 = vunpack.c.l.s4 1983009808
        %v5967 = vunpack.c.0.s8 %v5966
        %v5968 = vlaneseq
        %v5969 = vshrl.u32 %v5968, 7
        %v5970 = vsub.s32 %v5967, %v5969
        %v5971 = vrot.slane %v5957, %v5970
        %v5972 = vcombine.high %v5964, %v5964
        %v5973 = vcombine.high %v5971, %v5971
        %v5975 = vunpack.c.l.s4 1983009808
        %v5976 = vunpack.c.0.s8 %v5975
        %v5977 = vlaneseq
        %v5978 = vshrl.u32 %v5977, 7
        %v5979 = vsub.s32 %v5976, %v5978
        %v5980 = vrot.slane %v5578, %v5979
        %v5981 = vcombine.high %v5579, %v5579
        %v5983 = vunpack.c.l.s4 1983009808
        %v5984 = vunpack.c.0.s8 %v5983
        %v5985 = vlaneseq
        %v5986 = vshrl.u32 %v5985, 7
        %v5987 = vsub.s32 %v5984, %v5986
        %v5988 = vrot.slane %v5579, %v5987
        %v5990 = vunpack.c.l.s4 1983009808
        %v5991 = vunpack.c.0.s8 %v5990
        %v5992 = vlaneseq
        %v5993 = vshrl.u32 %v5992, 7
        %v5994 = vsub.s32 %v5991, %v5993
        %v5995 = vrot.slane %v5981, %v5994
        %v5996 = vcombine.high %v5988, %v5988
        %v5997 = vcombine.high %v5995, %v5995
        %v5998 = vcombine.high %v5580, %v5580
        %v6000 = vunpack.c.l.s4 1983009808
        %v6001 = vunpack.c.0.s8 %v6000
        %v6002 = vlaneseq
        %v6003 = vshrl.u32 %v6002, 7
        %v6004 = vsub.s32 %v6001, %v6003
        %v6005 = vrot.slane %v5580, %v6004
        %v6007 = vunpack.c.l.s4 1983009808
        %v6008 = vunpack.c.0.s8 %v6007
        %v6009 = vlaneseq
        %v6010 = vshrl.u32 %v6009, 7
        %v6011 = vsub.s32 %v6008, %v6010
        %v6012 = vrot.slane %v5998, %v6011
        %v6013 = vcombine.high %v6005, %v6005
        %v6014 = vcombine.high %v6012, %v6012
        %v6016 = vunpack.c.l.s4 1983009808
        %v6017 = vunpack.c.0.s8 %v6016
        %v6018 = vlaneseq
        %v6019 = vshrl.u32 %v6018, 7
        %v6020 = vsub.s32 %v6017, %v6019
        %v6021 = vrot.slane %v5581, %v6020
        %v6022 = vcombine.low %v5619, %v5627
        %v6023 = vcombine.low %v5626, %v5628
        %v6025 = vunpack.c.l.s4 1983009808
        %v6026 = vunpack.c.0.s8 %v6025
        %v6027 = vlaneseq
        %v6028 = vshrl.u32 %v6027, 7
        %v6029 = vsub.s32 %v6026, %v6028
        %v6030 = vrot.slane %v6022, %v6029
        %v6032 = vunpack.c.l.s4 1983009808
        %v6033 = vunpack.c.0.s8 %v6032
        %v6034 = vlaneseq
        %v6035 = vshrl.u32 %v6034, 7
        %v6036 = vsub.s32 %v6033, %v6035
        %v6037 = vrot.slane %v6023, %v6036
        %v6038 = vcombine.low %v6030, %v6037
        %v6039 = vcombine.low %v5636, %v5644
        %v6040 = vcombine.low %v5643, %v5645
        %v6042 = vunpack.c.l.s4 1983009808
        %v6043 = vunpack.c.0.s8 %v6042
        %v6044 = vlaneseq
        %v6045 = vshrl.u32 %v6044, 7
        %v6046 = vsub.s32 %v6043, %v6045
        %v6047 = vrot.slane %v6039, %v6046
        %v6049 = vunpack.c.l.s4 1983009808
        %v6050 = vunpack.c.0.s8 %v6049
        %v6051 = vlaneseq
        %v6052 = vshrl.u32 %v6051, 7
        %v6053 = vsub.s32 %v6050, %v6052
        %v6054 = vrot.slane %v6040, %v6053
        %v6055 = vcombine.low %v6047, %v6054
        %v6056 = vcombine.low %v5652, %v5660
        %v6057 = vcombine.low %v5668, %v5667
        %v6059 = vunpack.c.l.s4 1983009808
        %v6060 = vunpack.c.0.s8 %v6059
        %v6061 = vlaneseq
        %v6062 = vshrl.u32 %v6061, 7
        %v6063 = vsub.s32 %v6060, %v6062
        %v6064 = vrot.slane %v6056, %v6063
        %v6066 = vunpack.c.l.s4 1983009808
        %v6067 = vunpack.c.0.s8 %v6066
        %v6068 = vlaneseq
        %v6069 = vshrl.u32 %v6068, 7
        %v6070 = vsub.s32 %v6067, %v6069
        %v6071 = vrot.slane %v6057, %v6070
        %v6072 = vcombine.low %v6064, %v6071
        %v6073 = vcombine.low %v5669, %v5677
        %v6074 = vcombine.low %v5685, %v5684
        %v6076 = vunpack.c.l.s4 1983009808
        %v6077 = vunpack.c.0.s8 %v6076
        %v6078 = vlaneseq
        %v6079 = vshrl.u32 %v6078, 7
        %v6080 = vsub.s32 %v6077, %v6079
        %v6081 = vrot.slane %v6073, %v6080
        %v6083 = vunpack.c.l.s4 1983009808
        %v6084 = vunpack.c.0.s8 %v6083
        %v6085 = vlaneseq
        %v6086 = vshrl.u32 %v6085, 7
        %v6087 = vsub.s32 %v6084, %v6086
        %v6088 = vrot.slane %v6074, %v6087
        %v6089 = vcombine.low %v6081, %v6088
        %v6090 = vcombine.low %v5686, %v5693
        %v6091 = vcombine.low %v5701, %v5709
        %v6093 = vunpack.c.l.s4 1983009808
        %v6094 = vunpack.c.0.s8 %v6093
        %v6095 = vlaneseq
        %v6096 = vshrl.u32 %v6095, 7
        %v6097 = vsub.s32 %v6094, %v6096
        %v6098 = vrot.slane %v6090, %v6097
        %v6100 = vunpack.c.l.s4 1983009808
        %v6101 = vunpack.c.0.s8 %v6100
        %v6102 = vlaneseq
        %v6103 = vshrl.u32 %v6102, 7
        %v6104 = vsub.s32 %v6101, %v6103
        %v6105 = vrot.slane %v6091, %v6104
        %v6106 = vcombine.low %v6098, %v6105
        %v6107 = vcombine.low %v5708, %v5710
        %v6108 = vcombine.low %v5718, %v5726
        %v6110 = vunpack.c.l.s4 1983009808
        %v6111 = vunpack.c.0.s8 %v6110
        %v6112 = vlaneseq
        %v6113 = vshrl.u32 %v6112, 7
        %v6114 = vsub.s32 %v6111, %v6113
        %v6115 = vrot.slane %v6107, %v6114
        %v6117 = vunpack.c.l.s4 1983009808
        %v6118 = vunpack.c.0.s8 %v6117
        %v6119 = vlaneseq
        %v6120 = vshrl.u32 %v6119, 7
        %v6121 = vsub.s32 %v6118, %v6120
        %v6122 = vrot.slane %v6108, %v6121
        %v6123 = vcombine.low %v6115, %v6122
        %v6124 = vcombine.low %v5725, %v5727
        %v6125 = vcombine.low %v5734, %v5742
        %v6127 = vunpack.c.l.s4 1983009808
        %v6128 = vunpack.c.0.s8 %v6127
        %v6129 = vlaneseq
        %v6130 = vshrl.u32 %v6129, 7
        %v6131 = vsub.s32 %v6128, %v6130
        %v6132 = vrot.slane %v6124, %v6131
        %v6134 = vunpack.c.l.s4 1983009808
        %v6135 = vunpack.c.0.s8 %v6134
        %v6136 = vlaneseq
        %v6137 = vshrl.u32 %v6136, 7
        %v6138 = vsub.s32 %v6135, %v6137
        %v6139 = vrot.slane %v6125, %v6138
        %v6140 = vcombine.low %v6132, %v6139
        %v6141 = vcombine.low %v5750, %v5749
        %v6142 = vcombine.low %v5751, %v5759
        %v6144 = vunpack.c.l.s4 1983009808
        %v6145 = vunpack.c.0.s8 %v6144
        %v6146 = vlaneseq
        %v6147 = vshrl.u32 %v6146, 7
        %v6148 = vsub.s32 %v6145, %v6147
        %v6149 = vrot.slane %v6141, %v6148
        %v6151 = vunpack.c.l.s4 1983009808
        %v6152 = vunpack.c.0.s8 %v6151
        %v6153 = vlaneseq
        %v6154 = vshrl.u32 %v6153, 7
        %v6155 = vsub.s32 %v6152, %v6154
        %v6156 = vrot.slane %v6142, %v6155
        %v6157 = vcombine.low %v6149, %v6156
        %v6158 = vcombine.low %v5767, %v5766
        %v6159 = vcombine.low %v5768, %v5775
        %v6161 = vunpack.c.l.s4 1983009808
        %v6162 = vunpack.c.0.s8 %v6161
        %v6163 = vlaneseq
        %v6164 = vshrl.u32 %v6163, 7
        %v6165 = vsub.s32 %v6162, %v6164
        %v6166 = vrot.slane %v6158, %v6165
        %v6168 = vunpack.c.l.s4 1983009808
        %v6169 = vunpack.c.0.s8 %v6168
        %v6170 = vlaneseq
        %v6171 = vshrl.u32 %v6170, 7
        %v6172 = vsub.s32 %v6169, %v6171
        %v6173 = vrot.slane %v6159, %v6172
        %v6174 = vcombine.low %v6166, %v6173
        %v6175 = vcombine.low %v5783, %v5791
        %v6176 = vcombine.low %v5790, %v5792
        %v6178 = vunpack.c.l.s4 1983009808
        %v6179 = vunpack.c.0.s8 %v6178
        %v6180 = vlaneseq
        %v6181 = vshrl.u32 %v6180, 7
        %v6182 = vsub.s32 %v6179, %v6181
        %v6183 = vrot.slane %v6175, %v6182
        %v6185 = vunpack.c.l.s4 1983009808
        %v6186 = vunpack.c.0.s8 %v6185
        %v6187 = vlaneseq
        %v6188 = vshrl.u32 %v6187, 7
        %v6189 = vsub.s32 %v6186, %v6188
        %v6190 = vrot.slane %v6176, %v6189
        %v6191 = vcombine.low %v6183, %v6190
        %v6192 = vcombine.low %v5800, %v5808
        %v6193 = vcombine.low %v5807, %v5809
        %v6195 = vunpack.c.l.s4 1983009808
        %v6196 = vunpack.c.0.s8 %v6195
        %v6197 = vlaneseq
        %v6198 = vshrl.u32 %v6197, 7
        %v6199 = vsub.s32 %v6196, %v6198
        %v6200 = vrot.slane %v6192, %v6199
        %v6202 = vunpack.c.l.s4 1983009808
        %v6203 = vunpack.c.0.s8 %v6202
        %v6204 = vlaneseq
        %v6205 = vshrl.u32 %v6204, 7
        %v6206 = vsub.s32 %v6203, %v6205
        %v6207 = vrot.slane %v6193, %v6206
        %v6208 = vcombine.low %v6200, %v6207
        %v6209 = vcombine.low %v5816, %v5824
        %v6210 = vcombine.low %v5832, %v5831
        %v6212 = vunpack.c.l.s4 1983009808
        %v6213 = vunpack.c.0.s8 %v6212
        %v6214 = vlaneseq
        %v6215 = vshrl.u32 %v6214, 7
        %v6216 = vsub.s32 %v6213, %v6215
        %v6217 = vrot.slane %v6209, %v6216
        %v6219 = vunpack.c.l.s4 1983009808
        %v6220 = vunpack.c.0.s8 %v6219
        %v6221 = vlaneseq
        %v6222 = vshrl.u32 %v6221, 7
        %v6223 = vsub.s32 %v6220, %v6222
        %v6224 = vrot.slane %v6210, %v6223
        %v6225 = vcombine.low %v6217, %v6224
        %v6226 = vcombine.low %v5833, %v5841
        %v6227 = vcombine.low %v5849, %v5848
        %v6229 = vunpack.c.l.s4 1983009808
        %v6230 = vunpack.c.0.s8 %v6229
        %v6231 = vlaneseq
        %v6232 = vshrl.u32 %v6231, 7
        %v6233 = vsub.s32 %v6230, %v6232
        %v6234 = vrot.slane %v6226, %v6233
        %v6236 = vunpack.c.l.s4 1983009808
        %v6237 = vunpack.c.0.s8 %v6236
        %v6238 = vlaneseq
        %v6239 = vshrl.u32 %v6238, 7
        %v6240 = vsub.s32 %v6237, %v6239
        %v6241 = vrot.slane %v6227, %v6240
        %v6242 = vcombine.low %v6234, %v6241
        %v6243 = vcombine.low %v5850, %v5857
        %v6244 = vcombine.low %v5865, %v5873
        %v6246 = vunpack.c.l.s4 1983009808
        %v6247 = vunpack.c.0.s8 %v6246
        %v6248 = vlaneseq
        %v6249 = vshrl.u32 %v6248, 7
        %v6250 = vsub.s32 %v6247, %v6249
        %v6251 = vrot.slane %v6243, %v6250
        %v6253 = vunpack.c.l.s4 1983009808
        %v6254 = vunpack.c.0.s8 %v6253
        %v6255 = vlaneseq
        %v6256 = vshrl.u32 %v6255, 7
        %v6257 = vsub.s32 %v6254, %v6256
        %v6258 = vrot.slane %v6244, %v6257
        %v6259 = vcombine.low %v6251, %v6258
        %v6260 = vcombine.low %v5872, %v5874
        %v6261 = vcombine.low %v5882, %v5890
        %v6263 = vunpack.c.l.s4 1983009808
        %v6264 = vunpack.c.0.s8 %v6263
        %v6265 = vlaneseq
        %v6266 = vshrl.u32 %v6265, 7
        %v6267 = vsub.s32 %v6264, %v6266
        %v6268 = vrot.slane %v6260, %v6267
        %v6270 = vunpack.c.l.s4 1983009808
        %v6271 = vunpack.c.0.s8 %v6270
        %v6272 = vlaneseq
        %v6273 = vshrl.u32 %v6272, 7
        %v6274 = vsub.s32 %v6271, %v6273
        %v6275 = vrot.slane %v6261, %v6274
        %v6276 = vcombine.low %v6268, %v6275
        %v6277 = vcombine.low %v5889, %v5891
        %v6278 = vcombine.low %v5898, %v5906
        %v6280 = vunpack.c.l.s4 1983009808
        %v6281 = vunpack.c.0.s8 %v6280
        %v6282 = vlaneseq
        %v6283 = vshrl.u32 %v6282, 7
        %v6284 = vsub.s32 %v6281, %v6283
        %v6285 = vrot.slane %v6277, %v6284
        %v6287 = vunpack.c.l.s4 1983009808
        %v6288 = vunpack.c.0.s8 %v6287
        %v6289 = vlaneseq
        %v6290 = vshrl.u32 %v6289, 7
        %v6291 = vsub.s32 %v6288, %v6290
        %v6292 = vrot.slane %v6278, %v6291
        %v6293 = vcombine.low %v6285, %v6292
        %v6294 = vcombine.low %v5914, %v5913
        %v6295 = vcombine.low %v5915, %v5923
        %v6297 = vunpack.c.l.s4 1983009808
        %v6298 = vunpack.c.0.s8 %v6297
        %v6299 = vlaneseq
        %v6300 = vshrl.u32 %v6299, 7
        %v6301 = vsub.s32 %v6298, %v6300
        %v6302 = vrot.slane %v6294, %v6301
        %v6304 = vunpack.c.l.s4 1983009808
        %v6305 = vunpack.c.0.s8 %v6304
        %v6306 = vlaneseq
        %v6307 = vshrl.u32 %v6306, 7
        %v6308 = vsub.s32 %v6305, %v6307
        %v6309 = vrot.slane %v6295, %v6308
        %v6310 = vcombine.low %v6302, %v6309
        %v6311 = vcombine.low %v5931, %v5930
        %v6312 = vcombine.low %v5932, %v5939
        %v6314 = vunpack.c.l.s4 1983009808
        %v6315 = vunpack.c.0.s8 %v6314
        %v6316 = vlaneseq
        %v6317 = vshrl.u32 %v6316, 7
        %v6318 = vsub.s32 %v6315, %v6317
        %v6319 = vrot.slane %v6311, %v6318
        %v6321 = vunpack.c.l.s4 1983009808
        %v6322 = vunpack.c.0.s8 %v6321
        %v6323 = vlaneseq
        %v6324 = vshrl.u32 %v6323, 7
        %v6325 = vsub.s32 %v6322, %v6324
        %v6326 = vrot.slane %v6312, %v6325
        %v6327 = vcombine.low %v6319, %v6326
        %v6328 = vcombine.low %v5947, %v5955
        %v6329 = vcombine.low %v5954, %v5956
        %v6331 = vunpack.c.l.s4 1983009808
        %v6332 = vunpack.c.0.s8 %v6331
        %v6333 = vlaneseq
        %v6334 = vshrl.u32 %v6333, 7
        %v6335 = vsub.s32 %v6332, %v6334
        %v6336 = vrot.slane %v6328, %v6335
        %v6338 = vunpack.c.l.s4 1983009808
        %v6339 = vunpack.c.0.s8 %v6338
        %v6340 = vlaneseq
        %v6341 = vshrl.u32 %v6340, 7
        %v6342 = vsub.s32 %v6339, %v6341
        %v6343 = vrot.slane %v6329, %v6342
        %v6344 = vcombine.low %v6336, %v6343
        %v6345 = vcombine.low %v5964, %v5972
        %v6346 = vcombine.low %v5971, %v5973
        %v6348 = vunpack.c.l.s4 1983009808
        %v6349 = vunpack.c.0.s8 %v6348
        %v6350 = vlaneseq
        %v6351 = vshrl.u32 %v6350, 7
        %v6352 = vsub.s32 %v6349, %v6351
        %v6353 = vrot.slane %v6345, %v6352
        %v6355 = vunpack.c.l.s4 1983009808
        %v6356 = vunpack.c.0.s8 %v6355
        %v6357 = vlaneseq
        %v6358 = vshrl.u32 %v6357, 7
        %v6359 = vsub.s32 %v6356, %v6358
        %v6360 = vrot.slane %v6346, %v6359
        %v6361 = vcombine.low %v6353, %v6360
        %v6362 = vcombine.low %v5980, %v5988
        %v6363 = vcombine.low %v5996, %v5995
        %v6365 = vunpack.c.l.s4 1983009808
        %v6366 = vunpack.c.0.s8 %v6365
        %v6367 = vlaneseq
        %v6368 = vshrl.u32 %v6367, 7
        %v6369 = vsub.s32 %v6366, %v6368
        %v6370 = vrot.slane %v6362, %v6369
        %v6372 = vunpack.c.l.s4 1983009808
        %v6373 = vunpack.c.0.s8 %v6372
        %v6374 = vlaneseq
        %v6375 = vshrl.u32 %v6374, 7
        %v6376 = vsub.s32 %v6373, %v6375
        %v6377 = vrot.slane %v6363, %v6376
        %v6378 = vcombine.low %v6370, %v6377
        %v6379 = vcombine.low %v5997, %v6005
        %v6380 = vcombine.low %v6013, %v6012
        %v6382 = vunpack.c.l.s4 1983009808
        %v6383 = vunpack.c.0.s8 %v6382
        %v6384 = vlaneseq
        %v6385 = vshrl.u32 %v6384, 7
        %v6386 = vsub.s32 %v6383, %v6385
        %v6387 = vrot.slane %v6379, %v6386
        %v6389 = vunpack.c.l.s4 1983009808
        %v6390 = vunpack.c.0.s8 %v6389
        %v6391 = vlaneseq
        %v6392 = vshrl.u32 %v6391, 7
        %v6393 = vsub.s32 %v6390, %v6392
        %v6394 = vrot.slane %v6380, %v6393
        %v6395 = vcombine.low %v6387, %v6394
        %v6396 = vcombine.low %v6014, %v6021
        %v6398 = vunpack.c.l.s4 1983009808
        %v6399 = vunpack.c.0.s8 %v6398
        %v6400 = vlaneseq
        %v6401 = vshrl.u32 %v6400, 7
        %v6402 = vsub.s32 %v6399, %v6401
        %v6403 = vrot.slane %v6396, %v6402
        %v6427 = vpack.c.bf16 %v6055, %v6038
        %v6428 = vpack.c.bf16 %v6089, %v6072
        %v6429 = vpack.c.bf16 %v6123, %v6106
        %v6430 = vpack.c.bf16 %v6157, %v6140
        %v6431 = vpack.c.bf16 %v6191, %v6174
        %v6432 = vpack.c.bf16 %v6225, %v6208
        %v6433 = vpack.c.bf16 %v6259, %v6242
        %v6434 = vpack.c.bf16 %v6293, %v6276
        %v6435 = vpack.c.bf16 %v6327, %v6310
        %v6436 = vpack.c.bf16 %v6361, %v6344
        %v6437 = vpack.c.bf16 %v6395, %v6378
        %v6438 = vpack.c.bf16 %v6403, %v6403
        %v6451 = vunpack.c.l.b16 %v6427
        %v6452 = vunpack.c.h.b16 %v6427
        %v6453 = vunpack.c.l.b16 %v6428
        %v6454 = vunpack.c.h.b16 %v6428
        %v6455 = vunpack.c.l.b16 %v6429
        %v6456 = vunpack.c.h.b16 %v6429
        %v6457 = vunpack.c.l.b16 %v6430
        %v6458 = vunpack.c.h.b16 %v6430
        %v6459 = vunpack.c.l.b16 %v6431
        %v6460 = vunpack.c.h.b16 %v6431
        %v6461 = vunpack.c.l.b16 %v6432
        %v6462 = vunpack.c.h.b16 %v6432
        %v6463 = vunpack.c.l.b16 %v6433
        %v6464 = vunpack.c.h.b16 %v6433
        %v6465 = vunpack.c.l.b16 %v6434
        %v6466 = vunpack.c.h.b16 %v6434
        %v6467 = vunpack.c.l.b16 %v6435
        %v6468 = vunpack.c.h.b16 %v6435
        %v6469 = vunpack.c.l.b16 %v6436
        %v6470 = vunpack.c.h.b16 %v6436
        %v6471 = vunpack.c.l.b16 %v6437
        %v6472 = vunpack.c.h.b16 %v6437
        %v6473 = vunpack.c.l.b16 %v6438
        %v6474 = vpack.c.b16 %v6451, %v6451
        %v6475 = vpack.c.b16 %v6452, %v6452
        %v6476 = vpack.c.b16 %v6453, %v6453
        %v6477 = vpack.c.b16 %v6454, %v6454
        %v6478 = vpack.c.b16 %v6455, %v6455
        %v6479 = vpack.c.b16 %v6456, %v6456
        %v6480 = vpack.c.b16 %v6457, %v6457
        %v6481 = vpack.c.b16 %v6458, %v6458
        %v6482 = vpack.c.b16 %v6459, %v6459
        %v6483 = vpack.c.b16 %v6460, %v6460
        %v6484 = vpack.c.b16 %v6461, %v6461
        %v6485 = vpack.c.b16 %v6462, %v6462
        %v6486 = vpack.c.b16 %v6463, %v6463
        %v6487 = vpack.c.b16 %v6464, %v6464
        %v6488 = vpack.c.b16 %v6465, %v6465
        %v6489 = vpack.c.b16 %v6466, %v6466
        %v6490 = vpack.c.b16 %v6467, %v6467
        %v6491 = vpack.c.b16 %v6468, %v6468
        %v6492 = vpack.c.b16 %v6469, %v6469
        %v6493 = vpack.c.b16 %v6470, %v6470
        %v6494 = vpack.c.b16 %v6471, %v6471
        %v6495 = vpack.c.b16 %v6472, %v6472
        %v6496 = vpack.c.b16 %v6473, %v6473
        %6497 = vrot.lane.b32.xlu0 %v6474, 40
        %v6498 = vpop.permute.xlu0 %6497
        %6499 = vrot.lane.b32.xlu0 %v6475, 40
        %v6500 = vpop.permute.xlu0 %6499
        %6501 = vrot.lane.b32.xlu0 %v6476, 40
        %v6502 = vpop.permute.xlu0 %6501
        %6503 = vrot.lane.b32.xlu0 %v6477, 40
        %v6504 = vpop.permute.xlu0 %6503
        %6505 = vrot.lane.b32.xlu0 %v6478, 40
        %v6506 = vpop.permute.xlu0 %6505
        %6507 = vrot.lane.b32.xlu0 %v6479, 40
        %v6508 = vpop.permute.xlu0 %6507
        %6509 = vrot.lane.b32.xlu0 %v6480, 40
        %v6510 = vpop.permute.xlu0 %6509
        %6511 = vrot.lane.b32.xlu0 %v6481, 40
        %v6512 = vpop.permute.xlu0 %6511
        %6513 = vrot.lane.b32.xlu0 %v6482, 40
        %v6514 = vpop.permute.xlu0 %6513
        %6515 = vrot.lane.b32.xlu0 %v6483, 40
        %v6516 = vpop.permute.xlu0 %6515
        %6517 = vrot.lane.b32.xlu0 %v6484, 40
        %v6518 = vpop.permute.xlu0 %6517
        %6519 = vrot.lane.b32.xlu0 %v6485, 40
        %v6520 = vpop.permute.xlu0 %6519
        %6521 = vrot.lane.b32.xlu0 %v6486, 40
        %v6522 = vpop.permute.xlu0 %6521
        %6523 = vrot.lane.b32.xlu0 %v6487, 40
        %v6524 = vpop.permute.xlu0 %6523
        %6525 = vrot.lane.b32.xlu0 %v6488, 40
        %v6526 = vpop.permute.xlu0 %6525
        %6527 = vrot.lane.b32.xlu0 %v6489, 40
        %v6528 = vpop.permute.xlu0 %6527
        %6529 = vrot.lane.b32.xlu0 %v6490, 40
        %v6530 = vpop.permute.xlu0 %6529
        %6531 = vrot.lane.b32.xlu0 %v6491, 40
        %v6532 = vpop.permute.xlu0 %6531
        %6533 = vrot.lane.b32.xlu0 %v6492, 40
        %v6534 = vpop.permute.xlu0 %6533
        %6535 = vrot.lane.b32.xlu0 %v6493, 40
        %v6536 = vpop.permute.xlu0 %6535
        %6537 = vrot.lane.b32.xlu0 %v6494, 40
        %v6538 = vpop.permute.xlu0 %6537
        %6539 = vrot.lane.b32.xlu0 %v6495, 40
        %v6540 = vpop.permute.xlu0 %6539
        %6541 = vrot.lane.b32.xlu0 %v6496, 40
        %v6542 = vpop.permute.xlu0 %6541
        %vm6566 = vcmask 388416
        %6567 = vst.msk [vmem:[#allocation4] sm:$0xf] %vm6566, %v6498
        %6568 = vst.msk [vmem:[#allocation4 + $0x4] sm:$0xf] %vm6566, %v6500
        %6569 = vst.msk [vmem:[#allocation4 + $0x8] sm:$0xf] %vm6566, %v6502
        %6570 = vst.msk [vmem:[#allocation4 + $0xc] sm:$0xf] %vm6566, %v6504
        %6571 = vst.msk [vmem:[#allocation4 + $0x10] sm:$0xf] %vm6566, %v6506
        %6572 = vst.msk [vmem:[#allocation4 + $0x14] sm:$0xf] %vm6566, %v6508
        %6573 = vst.msk [vmem:[#allocation4 + $0x18] sm:$0xf] %vm6566, %v6510
        %6574 = vst.msk [vmem:[#allocation4 + $0x1c] sm:$0xf] %vm6566, %v6512
        %6575 = vst.msk [vmem:[#allocation4 + $0x20] sm:$0xf] %vm6566, %v6514
        %6576 = vst.msk [vmem:[#allocation4 + $0x24] sm:$0xf] %vm6566, %v6516
        %6577 = vst.msk [vmem:[#allocation4 + $0x28] sm:$0xf] %vm6566, %v6518
        %6578 = vst.msk [vmem:[#allocation4 + $0x2c] sm:$0xf] %vm6566, %v6520
        %6579 = vst.msk [vmem:[#allocation4 + $0x30] sm:$0xf] %vm6566, %v6522
        %6580 = vst.msk [vmem:[#allocation4 + $0x34] sm:$0xf] %vm6566, %v6524
        %6581 = vst.msk [vmem:[#allocation4 + $0x38] sm:$0xf] %vm6566, %v6526
        %6582 = vst.msk [vmem:[#allocation4 + $0x3c] sm:$0xf] %vm6566, %v6528
        %6583 = vst.msk [vmem:[#allocation4 + $0x40] sm:$0xf] %vm6566, %v6530
        %6584 = vst.msk [vmem:[#allocation4 + $0x44] sm:$0xf] %vm6566, %v6532
        %6585 = vst.msk [vmem:[#allocation4 + $0x48] sm:$0xf] %vm6566, %v6534
        %6586 = vst.msk [vmem:[#allocation4 + $0x4c] sm:$0xf] %vm6566, %v6536
        %6587 = vst.msk [vmem:[#allocation4 + $0x50] sm:$0xf] %vm6566, %v6538
        %6588 = vst.msk [vmem:[#allocation4 + $0x54] sm:$0xf] %vm6566, %v6540
        %vm6589 = vcmask 386368
        %6590 = vst.msk [vmem:[#allocation4 + $0x58] sm:$0x3] %vm6589, %v6542
        %v6591 = vld [vmem:[%s343] sm:$0xff]
        %v6592 = vld [vmem:[%s343 + $0x8] sm:$0xff]
        %v6593 = vld [vmem:[%s343 + $0x10] sm:$0x3]
        %v6594 = vld [vmem:[%s343 + $0x18] sm:$0xff]
        %v6595 = vld [vmem:[%s343 + $0x20] sm:$0xff]
        %v6596 = vld [vmem:[%s343 + $0x28] sm:$0x3]
        %v6597 = vld [vmem:[%s343 + $0x30] sm:$0xff]
        %v6598 = vld [vmem:[%s343 + $0x38] sm:$0xff]
        %v6599 = vld [vmem:[%s343 + $0x40] sm:$0x3]
        %v6600 = vld [vmem:[%s343 + $0x48] sm:$0xff]
        %v6601 = vld [vmem:[%s343 + $0x50] sm:$0xff]
        %v6602 = vld [vmem:[%s343 + $0x58] sm:$0x3]
        %v6603 = vld [vmem:[%s343 + $0x60] sm:$0xff]
        %v6604 = vld [vmem:[%s343 + $0x68] sm:$0xff]
        %v6605 = vld [vmem:[%s343 + $0x70] sm:$0x3]
        %v6606 = vld [vmem:[%s343 + $0x78] sm:$0xff]
        %v6607 = vld [vmem:[%s343 + $0x80] sm:$0xff]
        %v6608 = vld [vmem:[%s343 + $0x88] sm:$0x3]
        %v6609 = vld [vmem:[%s343 + $0x90] sm:$0xff]
        %v6610 = vld [vmem:[%s343 + $0x98] sm:$0xff]
        %v6611 = vld [vmem:[%s343 + $0xa0] sm:$0x3]
        %v6612 = vld [vmem:[%s343 + $0xa8] sm:$0xff]
        %v6613 = vld [vmem:[%s343 + $0xb0] sm:$0xff]
        %v6614 = vld [vmem:[%s343 + $0xb8] sm:$0x3]
        %v6615 = vld [vmem:[%s343 + $0xc0] sm:$0xff]
        %v6616 = vld [vmem:[%s343 + $0xc8] sm:$0xff]
        %v6617 = vld [vmem:[%s343 + $0xd0] sm:$0x3]
        %v6618 = vld [vmem:[%s343 + $0xd8] sm:$0xff]
        %v6619 = vld [vmem:[%s343 + $0xe0] sm:$0xff]
        %v6620 = vld [vmem:[%s343 + $0xe8] sm:$0x3]
        %v6651 = vcombine.high %v6591, %v6591
        %v6653 = vunpack.c.l.s4 1983009808
        %v6654 = vunpack.c.0.s8 %v6653
        %v6655 = vlaneseq
        %v6656 = vshrl.u32 %v6655, 7
        %v6657 = vsub.s32 %v6654, %v6656
        %v6658 = vrot.slane %v6591, %v6657
        %v6660 = vunpack.c.l.s4 1983009808
        %v6661 = vunpack.c.0.s8 %v6660
        %v6662 = vlaneseq
        %v6663 = vshrl.u32 %v6662, 7
        %v6664 = vsub.s32 %v6661, %v6663
        %v6665 = vrot.slane %v6651, %v6664
        %v6666 = vcombine.high %v6658, %v6658
        %v6667 = vcombine.high %v6665, %v6665
        %v6668 = vcombine.high %v6592, %v6592
        %v6670 = vunpack.c.l.s4 1983009808
        %v6671 = vunpack.c.0.s8 %v6670
        %v6672 = vlaneseq
        %v6673 = vshrl.u32 %v6672, 7
        %v6674 = vsub.s32 %v6671, %v6673
        %v6675 = vrot.slane %v6592, %v6674
        %v6677 = vunpack.c.l.s4 1983009808
        %v6678 = vunpack.c.0.s8 %v6677
        %v6679 = vlaneseq
        %v6680 = vshrl.u32 %v6679, 7
        %v6681 = vsub.s32 %v6678, %v6680
        %v6682 = vrot.slane %v6668, %v6681
        %v6683 = vcombine.high %v6675, %v6675
        %v6684 = vcombine.high %v6682, %v6682
        %v6686 = vunpack.c.l.s4 1983009808
        %v6687 = vunpack.c.0.s8 %v6686
        %v6688 = vlaneseq
        %v6689 = vshrl.u32 %v6688, 7
        %v6690 = vsub.s32 %v6687, %v6689
        %v6691 = vrot.slane %v6593, %v6690
        %v6692 = vcombine.high %v6594, %v6594
        %v6694 = vunpack.c.l.s4 1983009808
        %v6695 = vunpack.c.0.s8 %v6694
        %v6696 = vlaneseq
        %v6697 = vshrl.u32 %v6696, 7
        %v6698 = vsub.s32 %v6695, %v6697
        %v6699 = vrot.slane %v6594, %v6698
        %v6701 = vunpack.c.l.s4 1983009808
        %v6702 = vunpack.c.0.s8 %v6701
        %v6703 = vlaneseq
        %v6704 = vshrl.u32 %v6703, 7
        %v6705 = vsub.s32 %v6702, %v6704
        %v6706 = vrot.slane %v6692, %v6705
        %v6707 = vcombine.high %v6699, %v6699
        %v6708 = vcombine.high %v6706, %v6706
        %v6709 = vcombine.high %v6595, %v6595
        %v6711 = vunpack.c.l.s4 1983009808
        %v6712 = vunpack.c.0.s8 %v6711
        %v6713 = vlaneseq
        %v6714 = vshrl.u32 %v6713, 7
        %v6715 = vsub.s32 %v6712, %v6714
        %v6716 = vrot.slane %v6595, %v6715
        %v6718 = vunpack.c.l.s4 1983009808
        %v6719 = vunpack.c.0.s8 %v6718
        %v6720 = vlaneseq
        %v6721 = vshrl.u32 %v6720, 7
        %v6722 = vsub.s32 %v6719, %v6721
        %v6723 = vrot.slane %v6709, %v6722
        %v6724 = vcombine.high %v6716, %v6716
        %v6725 = vcombine.high %v6723, %v6723
        %v6727 = vunpack.c.l.s4 1983009808
        %v6728 = vunpack.c.0.s8 %v6727
        %v6729 = vlaneseq
        %v6730 = vshrl.u32 %v6729, 7
        %v6731 = vsub.s32 %v6728, %v6730
        %v6732 = vrot.slane %v6596, %v6731
        %v6733 = vcombine.high %v6597, %v6597
        %v6735 = vunpack.c.l.s4 1983009808
        %v6736 = vunpack.c.0.s8 %v6735
        %v6737 = vlaneseq
        %v6738 = vshrl.u32 %v6737, 7
        %v6739 = vsub.s32 %v6736, %v6738
        %v6740 = vrot.slane %v6597, %v6739
        %v6742 = vunpack.c.l.s4 1983009808
        %v6743 = vunpack.c.0.s8 %v6742
        %v6744 = vlaneseq
        %v6745 = vshrl.u32 %v6744, 7
        %v6746 = vsub.s32 %v6743, %v6745
        %v6747 = vrot.slane %v6733, %v6746
        %v6748 = vcombine.high %v6740, %v6740
        %v6749 = vcombine.high %v6747, %v6747
        %v6750 = vcombine.high %v6598, %v6598
        %v6752 = vunpack.c.l.s4 1983009808
        %v6753 = vunpack.c.0.s8 %v6752
        %v6754 = vlaneseq
        %v6755 = vshrl.u32 %v6754, 7
        %v6756 = vsub.s32 %v6753, %v6755
        %v6757 = vrot.slane %v6598, %v6756
        %v6759 = vunpack.c.l.s4 1983009808
        %v6760 = vunpack.c.0.s8 %v6759
        %v6761 = vlaneseq
        %v6762 = vshrl.u32 %v6761, 7
        %v6763 = vsub.s32 %v6760, %v6762
        %v6764 = vrot.slane %v6750, %v6763
        %v6765 = vcombine.high %v6757, %v6757
        %v6766 = vcombine.high %v6764, %v6764
        %v6768 = vunpack.c.l.s4 1983009808
        %v6769 = vunpack.c.0.s8 %v6768
        %v6770 = vlaneseq
        %v6771 = vshrl.u32 %v6770, 7
        %v6772 = vsub.s32 %v6769, %v6771
        %v6773 = vrot.slane %v6599, %v6772
        %v6774 = vcombine.high %v6600, %v6600
        %v6776 = vunpack.c.l.s4 1983009808
        %v6777 = vunpack.c.0.s8 %v6776
        %v6778 = vlaneseq
        %v6779 = vshrl.u32 %v6778, 7
        %v6780 = vsub.s32 %v6777, %v6779
        %v6781 = vrot.slane %v6600, %v6780
        %v6783 = vunpack.c.l.s4 1983009808
        %v6784 = vunpack.c.0.s8 %v6783
        %v6785 = vlaneseq
        %v6786 = vshrl.u32 %v6785, 7
        %v6787 = vsub.s32 %v6784, %v6786
        %v6788 = vrot.slane %v6774, %v6787
        %v6789 = vcombine.high %v6781, %v6781
        %v6790 = vcombine.high %v6788, %v6788
        %v6791 = vcombine.high %v6601, %v6601
        %v6793 = vunpack.c.l.s4 1983009808
        %v6794 = vunpack.c.0.s8 %v6793
        %v6795 = vlaneseq
        %v6796 = vshrl.u32 %v6795, 7
        %v6797 = vsub.s32 %v6794, %v6796
        %v6798 = vrot.slane %v6601, %v6797
        %v6800 = vunpack.c.l.s4 1983009808
        %v6801 = vunpack.c.0.s8 %v6800
        %v6802 = vlaneseq
        %v6803 = vshrl.u32 %v6802, 7
        %v6804 = vsub.s32 %v6801, %v6803
        %v6805 = vrot.slane %v6791, %v6804
        %v6806 = vcombine.high %v6798, %v6798
        %v6807 = vcombine.high %v6805, %v6805
        %v6809 = vunpack.c.l.s4 1983009808
        %v6810 = vunpack.c.0.s8 %v6809
        %v6811 = vlaneseq
        %v6812 = vshrl.u32 %v6811, 7
        %v6813 = vsub.s32 %v6810, %v6812
        %v6814 = vrot.slane %v6602, %v6813
        %v6815 = vcombine.high %v6603, %v6603
        %v6817 = vunpack.c.l.s4 1983009808
        %v6818 = vunpack.c.0.s8 %v6817
        %v6819 = vlaneseq
        %v6820 = vshrl.u32 %v6819, 7
        %v6821 = vsub.s32 %v6818, %v6820
        %v6822 = vrot.slane %v6603, %v6821
        %v6824 = vunpack.c.l.s4 1983009808
        %v6825 = vunpack.c.0.s8 %v6824
        %v6826 = vlaneseq
        %v6827 = vshrl.u32 %v6826, 7
        %v6828 = vsub.s32 %v6825, %v6827
        %v6829 = vrot.slane %v6815, %v6828
        %v6830 = vcombine.high %v6822, %v6822
        %v6831 = vcombine.high %v6829, %v6829
        %v6832 = vcombine.high %v6604, %v6604
        %v6834 = vunpack.c.l.s4 1983009808
        %v6835 = vunpack.c.0.s8 %v6834
        %v6836 = vlaneseq
        %v6837 = vshrl.u32 %v6836, 7
        %v6838 = vsub.s32 %v6835, %v6837
        %v6839 = vrot.slane %v6604, %v6838
        %v6841 = vunpack.c.l.s4 1983009808
        %v6842 = vunpack.c.0.s8 %v6841
        %v6843 = vlaneseq
        %v6844 = vshrl.u32 %v6843, 7
        %v6845 = vsub.s32 %v6842, %v6844
        %v6846 = vrot.slane %v6832, %v6845
        %v6847 = vcombine.high %v6839, %v6839
        %v6848 = vcombine.high %v6846, %v6846
        %v6850 = vunpack.c.l.s4 1983009808
        %v6851 = vunpack.c.0.s8 %v6850
        %v6852 = vlaneseq
        %v6853 = vshrl.u32 %v6852, 7
        %v6854 = vsub.s32 %v6851, %v6853
        %v6855 = vrot.slane %v6605, %v6854
        %v6856 = vcombine.high %v6606, %v6606
        %v6858 = vunpack.c.l.s4 1983009808
        %v6859 = vunpack.c.0.s8 %v6858
        %v6860 = vlaneseq
        %v6861 = vshrl.u32 %v6860, 7
        %v6862 = vsub.s32 %v6859, %v6861
        %v6863 = vrot.slane %v6606, %v6862
        %v6865 = vunpack.c.l.s4 1983009808
        %v6866 = vunpack.c.0.s8 %v6865
        %v6867 = vlaneseq
        %v6868 = vshrl.u32 %v6867, 7
        %v6869 = vsub.s32 %v6866, %v6868
        %v6870 = vrot.slane %v6856, %v6869
        %v6871 = vcombine.high %v6863, %v6863
        %v6872 = vcombine.high %v6870, %v6870
        %v6873 = vcombine.high %v6607, %v6607
        %v6875 = vunpack.c.l.s4 1983009808
        %v6876 = vunpack.c.0.s8 %v6875
        %v6877 = vlaneseq
        %v6878 = vshrl.u32 %v6877, 7
        %v6879 = vsub.s32 %v6876, %v6878
        %v6880 = vrot.slane %v6607, %v6879
        %v6882 = vunpack.c.l.s4 1983009808
        %v6883 = vunpack.c.0.s8 %v6882
        %v6884 = vlaneseq
        %v6885 = vshrl.u32 %v6884, 7
        %v6886 = vsub.s32 %v6883, %v6885
        %v6887 = vrot.slane %v6873, %v6886
        %v6888 = vcombine.high %v6880, %v6880
        %v6889 = vcombine.high %v6887, %v6887
        %v6891 = vunpack.c.l.s4 1983009808
        %v6892 = vunpack.c.0.s8 %v6891
        %v6893 = vlaneseq
        %v6894 = vshrl.u32 %v6893, 7
        %v6895 = vsub.s32 %v6892, %v6894
        %v6896 = vrot.slane %v6608, %v6895
        %v6897 = vcombine.high %v6609, %v6609
        %v6899 = vunpack.c.l.s4 1983009808
        %v6900 = vunpack.c.0.s8 %v6899
        %v6901 = vlaneseq
        %v6902 = vshrl.u32 %v6901, 7
        %v6903 = vsub.s32 %v6900, %v6902
        %v6904 = vrot.slane %v6609, %v6903
        %v6906 = vunpack.c.l.s4 1983009808
        %v6907 = vunpack.c.0.s8 %v6906
        %v6908 = vlaneseq
        %v6909 = vshrl.u32 %v6908, 7
        %v6910 = vsub.s32 %v6907, %v6909
        %v6911 = vrot.slane %v6897, %v6910
        %v6912 = vcombine.high %v6904, %v6904
        %v6913 = vcombine.high %v6911, %v6911
        %v6914 = vcombine.high %v6610, %v6610
        %v6916 = vunpack.c.l.s4 1983009808
        %v6917 = vunpack.c.0.s8 %v6916
        %v6918 = vlaneseq
        %v6919 = vshrl.u32 %v6918, 7
        %v6920 = vsub.s32 %v6917, %v6919
        %v6921 = vrot.slane %v6610, %v6920
        %v6923 = vunpack.c.l.s4 1983009808
        %v6924 = vunpack.c.0.s8 %v6923
        %v6925 = vlaneseq
        %v6926 = vshrl.u32 %v6925, 7
        %v6927 = vsub.s32 %v6924, %v6926
        %v6928 = vrot.slane %v6914, %v6927
        %v6929 = vcombine.high %v6921, %v6921
        %v6930 = vcombine.high %v6928, %v6928
        %v6932 = vunpack.c.l.s4 1983009808
        %v6933 = vunpack.c.0.s8 %v6932
        %v6934 = vlaneseq
        %v6935 = vshrl.u32 %v6934, 7
        %v6936 = vsub.s32 %v6933, %v6935
        %v6937 = vrot.slane %v6611, %v6936
        %v6938 = vcombine.high %v6612, %v6612
        %v6940 = vunpack.c.l.s4 1983009808
        %v6941 = vunpack.c.0.s8 %v6940
        %v6942 = vlaneseq
        %v6943 = vshrl.u32 %v6942, 7
        %v6944 = vsub.s32 %v6941, %v6943
        %v6945 = vrot.slane %v6612, %v6944
        %v6947 = vunpack.c.l.s4 1983009808
        %v6948 = vunpack.c.0.s8 %v6947
        %v6949 = vlaneseq
        %v6950 = vshrl.u32 %v6949, 7
        %v6951 = vsub.s32 %v6948, %v6950
        %v6952 = vrot.slane %v6938, %v6951
        %v6953 = vcombine.high %v6945, %v6945
        %v6954 = vcombine.high %v6952, %v6952
        %v6955 = vcombine.high %v6613, %v6613
        %v6957 = vunpack.c.l.s4 1983009808
        %v6958 = vunpack.c.0.s8 %v6957
        %v6959 = vlaneseq
        %v6960 = vshrl.u32 %v6959, 7
        %v6961 = vsub.s32 %v6958, %v6960
        %v6962 = vrot.slane %v6613, %v6961
        %v6964 = vunpack.c.l.s4 1983009808
        %v6965 = vunpack.c.0.s8 %v6964
        %v6966 = vlaneseq
        %v6967 = vshrl.u32 %v6966, 7
        %v6968 = vsub.s32 %v6965, %v6967
        %v6969 = vrot.slane %v6955, %v6968
        %v6970 = vcombine.high %v6962, %v6962
        %v6971 = vcombine.high %v6969, %v6969
        %v6973 = vunpack.c.l.s4 1983009808
        %v6974 = vunpack.c.0.s8 %v6973
        %v6975 = vlaneseq
        %v6976 = vshrl.u32 %v6975, 7
        %v6977 = vsub.s32 %v6974, %v6976
        %v6978 = vrot.slane %v6614, %v6977
        %v6979 = vcombine.high %v6615, %v6615
        %v6981 = vunpack.c.l.s4 1983009808
        %v6982 = vunpack.c.0.s8 %v6981
        %v6983 = vlaneseq
        %v6984 = vshrl.u32 %v6983, 7
        %v6985 = vsub.s32 %v6982, %v6984
        %v6986 = vrot.slane %v6615, %v6985
        %v6988 = vunpack.c.l.s4 1983009808
        %v6989 = vunpack.c.0.s8 %v6988
        %v6990 = vlaneseq
        %v6991 = vshrl.u32 %v6990, 7
        %v6992 = vsub.s32 %v6989, %v6991
        %v6993 = vrot.slane %v6979, %v6992
        %v6994 = vcombine.high %v6986, %v6986
        %v6995 = vcombine.high %v6993, %v6993
        %v6996 = vcombine.high %v6616, %v6616
        %v6998 = vunpack.c.l.s4 1983009808
        %v6999 = vunpack.c.0.s8 %v6998
        %v7000 = vlaneseq
        %v7001 = vshrl.u32 %v7000, 7
        %v7002 = vsub.s32 %v6999, %v7001
        %v7003 = vrot.slane %v6616, %v7002
        %v7005 = vunpack.c.l.s4 1983009808
        %v7006 = vunpack.c.0.s8 %v7005
        %v7007 = vlaneseq
        %v7008 = vshrl.u32 %v7007, 7
        %v7009 = vsub.s32 %v7006, %v7008
        %v7010 = vrot.slane %v6996, %v7009
        %v7011 = vcombine.high %v7003, %v7003
        %v7012 = vcombine.high %v7010, %v7010
        %v7014 = vunpack.c.l.s4 1983009808
        %v7015 = vunpack.c.0.s8 %v7014
        %v7016 = vlaneseq
        %v7017 = vshrl.u32 %v7016, 7
        %v7018 = vsub.s32 %v7015, %v7017
        %v7019 = vrot.slane %v6617, %v7018
        %v7020 = vcombine.high %v6618, %v6618
        %v7022 = vunpack.c.l.s4 1983009808
        %v7023 = vunpack.c.0.s8 %v7022
        %v7024 = vlaneseq
        %v7025 = vshrl.u32 %v7024, 7
        %v7026 = vsub.s32 %v7023, %v7025
        %v7027 = vrot.slane %v6618, %v7026
        %v7029 = vunpack.c.l.s4 1983009808
        %v7030 = vunpack.c.0.s8 %v7029
        %v7031 = vlaneseq
        %v7032 = vshrl.u32 %v7031, 7
        %v7033 = vsub.s32 %v7030, %v7032
        %v7034 = vrot.slane %v7020, %v7033
        %v7035 = vcombine.high %v7027, %v7027
        %v7036 = vcombine.high %v7034, %v7034
        %v7037 = vcombine.high %v6619, %v6619
        %v7039 = vunpack.c.l.s4 1983009808
        %v7040 = vunpack.c.0.s8 %v7039
        %v7041 = vlaneseq
        %v7042 = vshrl.u32 %v7041, 7
        %v7043 = vsub.s32 %v7040, %v7042
        %v7044 = vrot.slane %v6619, %v7043
        %v7046 = vunpack.c.l.s4 1983009808
        %v7047 = vunpack.c.0.s8 %v7046
        %v7048 = vlaneseq
        %v7049 = vshrl.u32 %v7048, 7
        %v7050 = vsub.s32 %v7047, %v7049
        %v7051 = vrot.slane %v7037, %v7050
        %v7052 = vcombine.high %v7044, %v7044
        %v7053 = vcombine.high %v7051, %v7051
        %v7055 = vunpack.c.l.s4 1983009808
        %v7056 = vunpack.c.0.s8 %v7055
        %v7057 = vlaneseq
        %v7058 = vshrl.u32 %v7057, 7
        %v7059 = vsub.s32 %v7056, %v7058
        %v7060 = vrot.slane %v6620, %v7059
        %v7061 = vcombine.low %v6658, %v6666
        %v7062 = vcombine.low %v6665, %v6667
        %v7064 = vunpack.c.l.s4 1983009808
        %v7065 = vunpack.c.0.s8 %v7064
        %v7066 = vlaneseq
        %v7067 = vshrl.u32 %v7066, 7
        %v7068 = vsub.s32 %v7065, %v7067
        %v7069 = vrot.slane %v7061, %v7068
        %v7071 = vunpack.c.l.s4 1983009808
        %v7072 = vunpack.c.0.s8 %v7071
        %v7073 = vlaneseq
        %v7074 = vshrl.u32 %v7073, 7
        %v7075 = vsub.s32 %v7072, %v7074
        %v7076 = vrot.slane %v7062, %v7075
        %v7077 = vcombine.low %v7069, %v7076
        %v7078 = vcombine.low %v6675, %v6683
        %v7079 = vcombine.low %v6682, %v6684
        %v7081 = vunpack.c.l.s4 1983009808
        %v7082 = vunpack.c.0.s8 %v7081
        %v7083 = vlaneseq
        %v7084 = vshrl.u32 %v7083, 7
        %v7085 = vsub.s32 %v7082, %v7084
        %v7086 = vrot.slane %v7078, %v7085
        %v7088 = vunpack.c.l.s4 1983009808
        %v7089 = vunpack.c.0.s8 %v7088
        %v7090 = vlaneseq
        %v7091 = vshrl.u32 %v7090, 7
        %v7092 = vsub.s32 %v7089, %v7091
        %v7093 = vrot.slane %v7079, %v7092
        %v7094 = vcombine.low %v7086, %v7093
        %v7095 = vcombine.low %v6691, %v6699
        %v7096 = vcombine.low %v6707, %v6706
        %v7098 = vunpack.c.l.s4 1983009808
        %v7099 = vunpack.c.0.s8 %v7098
        %v7100 = vlaneseq
        %v7101 = vshrl.u32 %v7100, 7
        %v7102 = vsub.s32 %v7099, %v7101
        %v7103 = vrot.slane %v7095, %v7102
        %v7105 = vunpack.c.l.s4 1983009808
        %v7106 = vunpack.c.0.s8 %v7105
        %v7107 = vlaneseq
        %v7108 = vshrl.u32 %v7107, 7
        %v7109 = vsub.s32 %v7106, %v7108
        %v7110 = vrot.slane %v7096, %v7109
        %v7111 = vcombine.low %v7103, %v7110
        %v7112 = vcombine.low %v6708, %v6716
        %v7113 = vcombine.low %v6724, %v6723
        %v7115 = vunpack.c.l.s4 1983009808
        %v7116 = vunpack.c.0.s8 %v7115
        %v7117 = vlaneseq
        %v7118 = vshrl.u32 %v7117, 7
        %v7119 = vsub.s32 %v7116, %v7118
        %v7120 = vrot.slane %v7112, %v7119
        %v7122 = vunpack.c.l.s4 1983009808
        %v7123 = vunpack.c.0.s8 %v7122
        %v7124 = vlaneseq
        %v7125 = vshrl.u32 %v7124, 7
        %v7126 = vsub.s32 %v7123, %v7125
        %v7127 = vrot.slane %v7113, %v7126
        %v7128 = vcombine.low %v7120, %v7127
        %v7129 = vcombine.low %v6725, %v6732
        %v7130 = vcombine.low %v6740, %v6748
        %v7132 = vunpack.c.l.s4 1983009808
        %v7133 = vunpack.c.0.s8 %v7132
        %v7134 = vlaneseq
        %v7135 = vshrl.u32 %v7134, 7
        %v7136 = vsub.s32 %v7133, %v7135
        %v7137 = vrot.slane %v7129, %v7136
        %v7139 = vunpack.c.l.s4 1983009808
        %v7140 = vunpack.c.0.s8 %v7139
        %v7141 = vlaneseq
        %v7142 = vshrl.u32 %v7141, 7
        %v7143 = vsub.s32 %v7140, %v7142
        %v7144 = vrot.slane %v7130, %v7143
        %v7145 = vcombine.low %v7137, %v7144
        %v7146 = vcombine.low %v6747, %v6749
        %v7147 = vcombine.low %v6757, %v6765
        %v7149 = vunpack.c.l.s4 1983009808
        %v7150 = vunpack.c.0.s8 %v7149
        %v7151 = vlaneseq
        %v7152 = vshrl.u32 %v7151, 7
        %v7153 = vsub.s32 %v7150, %v7152
        %v7154 = vrot.slane %v7146, %v7153
        %v7156 = vunpack.c.l.s4 1983009808
        %v7157 = vunpack.c.0.s8 %v7156
        %v7158 = vlaneseq
        %v7159 = vshrl.u32 %v7158, 7
        %v7160 = vsub.s32 %v7157, %v7159
        %v7161 = vrot.slane %v7147, %v7160
        %v7162 = vcombine.low %v7154, %v7161
        %v7163 = vcombine.low %v6764, %v6766
        %v7164 = vcombine.low %v6773, %v6781
        %v7166 = vunpack.c.l.s4 1983009808
        %v7167 = vunpack.c.0.s8 %v7166
        %v7168 = vlaneseq
        %v7169 = vshrl.u32 %v7168, 7
        %v7170 = vsub.s32 %v7167, %v7169
        %v7171 = vrot.slane %v7163, %v7170
        %v7173 = vunpack.c.l.s4 1983009808
        %v7174 = vunpack.c.0.s8 %v7173
        %v7175 = vlaneseq
        %v7176 = vshrl.u32 %v7175, 7
        %v7177 = vsub.s32 %v7174, %v7176
        %v7178 = vrot.slane %v7164, %v7177
        %v7179 = vcombine.low %v7171, %v7178
        %v7180 = vcombine.low %v6789, %v6788
        %v7181 = vcombine.low %v6790, %v6798
        %v7183 = vunpack.c.l.s4 1983009808
        %v7184 = vunpack.c.0.s8 %v7183
        %v7185 = vlaneseq
        %v7186 = vshrl.u32 %v7185, 7
        %v7187 = vsub.s32 %v7184, %v7186
        %v7188 = vrot.slane %v7180, %v7187
        %v7190 = vunpack.c.l.s4 1983009808
        %v7191 = vunpack.c.0.s8 %v7190
        %v7192 = vlaneseq
        %v7193 = vshrl.u32 %v7192, 7
        %v7194 = vsub.s32 %v7191, %v7193
        %v7195 = vrot.slane %v7181, %v7194
        %v7196 = vcombine.low %v7188, %v7195
        %v7197 = vcombine.low %v6806, %v6805
        %v7198 = vcombine.low %v6807, %v6814
        %v7200 = vunpack.c.l.s4 1983009808
        %v7201 = vunpack.c.0.s8 %v7200
        %v7202 = vlaneseq
        %v7203 = vshrl.u32 %v7202, 7
        %v7204 = vsub.s32 %v7201, %v7203
        %v7205 = vrot.slane %v7197, %v7204
        %v7207 = vunpack.c.l.s4 1983009808
        %v7208 = vunpack.c.0.s8 %v7207
        %v7209 = vlaneseq
        %v7210 = vshrl.u32 %v7209, 7
        %v7211 = vsub.s32 %v7208, %v7210
        %v7212 = vrot.slane %v7198, %v7211
        %v7213 = vcombine.low %v7205, %v7212
        %v7214 = vcombine.low %v6822, %v6830
        %v7215 = vcombine.low %v6829, %v6831
        %v7217 = vunpack.c.l.s4 1983009808
        %v7218 = vunpack.c.0.s8 %v7217
        %v7219 = vlaneseq
        %v7220 = vshrl.u32 %v7219, 7
        %v7221 = vsub.s32 %v7218, %v7220
        %v7222 = vrot.slane %v7214, %v7221
        %v7224 = vunpack.c.l.s4 1983009808
        %v7225 = vunpack.c.0.s8 %v7224
        %v7226 = vlaneseq
        %v7227 = vshrl.u32 %v7226, 7
        %v7228 = vsub.s32 %v7225, %v7227
        %v7229 = vrot.slane %v7215, %v7228
        %v7230 = vcombine.low %v7222, %v7229
        %v7231 = vcombine.low %v6839, %v6847
        %v7232 = vcombine.low %v6846, %v6848
        %v7234 = vunpack.c.l.s4 1983009808
        %v7235 = vunpack.c.0.s8 %v7234
        %v7236 = vlaneseq
        %v7237 = vshrl.u32 %v7236, 7
        %v7238 = vsub.s32 %v7235, %v7237
        %v7239 = vrot.slane %v7231, %v7238
        %v7241 = vunpack.c.l.s4 1983009808
        %v7242 = vunpack.c.0.s8 %v7241
        %v7243 = vlaneseq
        %v7244 = vshrl.u32 %v7243, 7
        %v7245 = vsub.s32 %v7242, %v7244
        %v7246 = vrot.slane %v7232, %v7245
        %v7247 = vcombine.low %v7239, %v7246
        %v7248 = vcombine.low %v6855, %v6863
        %v7249 = vcombine.low %v6871, %v6870
        %v7251 = vunpack.c.l.s4 1983009808
        %v7252 = vunpack.c.0.s8 %v7251
        %v7253 = vlaneseq
        %v7254 = vshrl.u32 %v7253, 7
        %v7255 = vsub.s32 %v7252, %v7254
        %v7256 = vrot.slane %v7248, %v7255
        %v7258 = vunpack.c.l.s4 1983009808
        %v7259 = vunpack.c.0.s8 %v7258
        %v7260 = vlaneseq
        %v7261 = vshrl.u32 %v7260, 7
        %v7262 = vsub.s32 %v7259, %v7261
        %v7263 = vrot.slane %v7249, %v7262
        %v7264 = vcombine.low %v7256, %v7263
        %v7265 = vcombine.low %v6872, %v6880
        %v7266 = vcombine.low %v6888, %v6887
        %v7268 = vunpack.c.l.s4 1983009808
        %v7269 = vunpack.c.0.s8 %v7268
        %v7270 = vlaneseq
        %v7271 = vshrl.u32 %v7270, 7
        %v7272 = vsub.s32 %v7269, %v7271
        %v7273 = vrot.slane %v7265, %v7272
        %v7275 = vunpack.c.l.s4 1983009808
        %v7276 = vunpack.c.0.s8 %v7275
        %v7277 = vlaneseq
        %v7278 = vshrl.u32 %v7277, 7
        %v7279 = vsub.s32 %v7276, %v7278
        %v7280 = vrot.slane %v7266, %v7279
        %v7281 = vcombine.low %v7273, %v7280
        %v7282 = vcombine.low %v6889, %v6896
        %v7283 = vcombine.low %v6904, %v6912
        %v7285 = vunpack.c.l.s4 1983009808
        %v7286 = vunpack.c.0.s8 %v7285
        %v7287 = vlaneseq
        %v7288 = vshrl.u32 %v7287, 7
        %v7289 = vsub.s32 %v7286, %v7288
        %v7290 = vrot.slane %v7282, %v7289
        %v7292 = vunpack.c.l.s4 1983009808
        %v7293 = vunpack.c.0.s8 %v7292
        %v7294 = vlaneseq
        %v7295 = vshrl.u32 %v7294, 7
        %v7296 = vsub.s32 %v7293, %v7295
        %v7297 = vrot.slane %v7283, %v7296
        %v7298 = vcombine.low %v7290, %v7297
        %v7299 = vcombine.low %v6911, %v6913
        %v7300 = vcombine.low %v6921, %v6929
        %v7302 = vunpack.c.l.s4 1983009808
        %v7303 = vunpack.c.0.s8 %v7302
        %v7304 = vlaneseq
        %v7305 = vshrl.u32 %v7304, 7
        %v7306 = vsub.s32 %v7303, %v7305
        %v7307 = vrot.slane %v7299, %v7306
        %v7309 = vunpack.c.l.s4 1983009808
        %v7310 = vunpack.c.0.s8 %v7309
        %v7311 = vlaneseq
        %v7312 = vshrl.u32 %v7311, 7
        %v7313 = vsub.s32 %v7310, %v7312
        %v7314 = vrot.slane %v7300, %v7313
        %v7315 = vcombine.low %v7307, %v7314
        %v7316 = vcombine.low %v6928, %v6930
        %v7317 = vcombine.low %v6937, %v6945
        %v7319 = vunpack.c.l.s4 1983009808
        %v7320 = vunpack.c.0.s8 %v7319
        %v7321 = vlaneseq
        %v7322 = vshrl.u32 %v7321, 7
        %v7323 = vsub.s32 %v7320, %v7322
        %v7324 = vrot.slane %v7316, %v7323
        %v7326 = vunpack.c.l.s4 1983009808
        %v7327 = vunpack.c.0.s8 %v7326
        %v7328 = vlaneseq
        %v7329 = vshrl.u32 %v7328, 7
        %v7330 = vsub.s32 %v7327, %v7329
        %v7331 = vrot.slane %v7317, %v7330
        %v7332 = vcombine.low %v7324, %v7331
        %v7333 = vcombine.low %v6953, %v6952
        %v7334 = vcombine.low %v6954, %v6962
        %v7336 = vunpack.c.l.s4 1983009808
        %v7337 = vunpack.c.0.s8 %v7336
        %v7338 = vlaneseq
        %v7339 = vshrl.u32 %v7338, 7
        %v7340 = vsub.s32 %v7337, %v7339
        %v7341 = vrot.slane %v7333, %v7340
        %v7343 = vunpack.c.l.s4 1983009808
        %v7344 = vunpack.c.0.s8 %v7343
        %v7345 = vlaneseq
        %v7346 = vshrl.u32 %v7345, 7
        %v7347 = vsub.s32 %v7344, %v7346
        %v7348 = vrot.slane %v7334, %v7347
        %v7349 = vcombine.low %v7341, %v7348
        %v7350 = vcombine.low %v6970, %v6969
        %v7351 = vcombine.low %v6971, %v6978
        %v7353 = vunpack.c.l.s4 1983009808
        %v7354 = vunpack.c.0.s8 %v7353
        %v7355 = vlaneseq
        %v7356 = vshrl.u32 %v7355, 7
        %v7357 = vsub.s32 %v7354, %v7356
        %v7358 = vrot.slane %v7350, %v7357
        %v7360 = vunpack.c.l.s4 1983009808
        %v7361 = vunpack.c.0.s8 %v7360
        %v7362 = vlaneseq
        %v7363 = vshrl.u32 %v7362, 7
        %v7364 = vsub.s32 %v7361, %v7363
        %v7365 = vrot.slane %v7351, %v7364
        %v7366 = vcombine.low %v7358, %v7365
        %v7367 = vcombine.low %v6986, %v6994
        %v7368 = vcombine.low %v6993, %v6995
        %v7370 = vunpack.c.l.s4 1983009808
        %v7371 = vunpack.c.0.s8 %v7370
        %v7372 = vlaneseq
        %v7373 = vshrl.u32 %v7372, 7
        %v7374 = vsub.s32 %v7371, %v7373
        %v7375 = vrot.slane %v7367, %v7374
        %v7377 = vunpack.c.l.s4 1983009808
        %v7378 = vunpack.c.0.s8 %v7377
        %v7379 = vlaneseq
        %v7380 = vshrl.u32 %v7379, 7
        %v7381 = vsub.s32 %v7378, %v7380
        %v7382 = vrot.slane %v7368, %v7381
        %v7383 = vcombine.low %v7375, %v7382
        %v7384 = vcombine.low %v7003, %v7011
        %v7385 = vcombine.low %v7010, %v7012
        %v7387 = vunpack.c.l.s4 1983009808
        %v7388 = vunpack.c.0.s8 %v7387
        %v7389 = vlaneseq
        %v7390 = vshrl.u32 %v7389, 7
        %v7391 = vsub.s32 %v7388, %v7390
        %v7392 = vrot.slane %v7384, %v7391
        %v7394 = vunpack.c.l.s4 1983009808
        %v7395 = vunpack.c.0.s8 %v7394
        %v7396 = vlaneseq
        %v7397 = vshrl.u32 %v7396, 7
        %v7398 = vsub.s32 %v7395, %v7397
        %v7399 = vrot.slane %v7385, %v7398
        %v7400 = vcombine.low %v7392, %v7399
        %v7401 = vcombine.low %v7019, %v7027
        %v7402 = vcombine.low %v7035, %v7034
        %v7404 = vunpack.c.l.s4 1983009808
        %v7405 = vunpack.c.0.s8 %v7404
        %v7406 = vlaneseq
        %v7407 = vshrl.u32 %v7406, 7
        %v7408 = vsub.s32 %v7405, %v7407
        %v7409 = vrot.slane %v7401, %v7408
        %v7411 = vunpack.c.l.s4 1983009808
        %v7412 = vunpack.c.0.s8 %v7411
        %v7413 = vlaneseq
        %v7414 = vshrl.u32 %v7413, 7
        %v7415 = vsub.s32 %v7412, %v7414
        %v7416 = vrot.slane %v7402, %v7415
        %v7417 = vcombine.low %v7409, %v7416
        %v7418 = vcombine.low %v7036, %v7044
        %v7419 = vcombine.low %v7052, %v7051
        %v7421 = vunpack.c.l.s4 1983009808
        %v7422 = vunpack.c.0.s8 %v7421
        %v7423 = vlaneseq
        %v7424 = vshrl.u32 %v7423, 7
        %v7425 = vsub.s32 %v7422, %v7424
        %v7426 = vrot.slane %v7418, %v7425
        %v7428 = vunpack.c.l.s4 1983009808
        %v7429 = vunpack.c.0.s8 %v7428
        %v7430 = vlaneseq
        %v7431 = vshrl.u32 %v7430, 7
        %v7432 = vsub.s32 %v7429, %v7431
        %v7433 = vrot.slane %v7419, %v7432
        %v7434 = vcombine.low %v7426, %v7433
        %v7435 = vcombine.low %v7053, %v7060
        %v7437 = vunpack.c.l.s4 1983009808
        %v7438 = vunpack.c.0.s8 %v7437
        %v7439 = vlaneseq
        %v7440 = vshrl.u32 %v7439, 7
        %v7441 = vsub.s32 %v7438, %v7440
        %v7442 = vrot.slane %v7435, %v7441
        %v7466 = vpack.c.bf16 %v7094, %v7077
        %v7467 = vpack.c.bf16 %v7128, %v7111
        %v7468 = vpack.c.bf16 %v7162, %v7145
        %v7469 = vpack.c.bf16 %v7196, %v7179
        %v7470 = vpack.c.bf16 %v7230, %v7213
        %v7471 = vpack.c.bf16 %v7264, %v7247
        %v7472 = vpack.c.bf16 %v7298, %v7281
        %v7473 = vpack.c.bf16 %v7332, %v7315
        %v7474 = vpack.c.bf16 %v7366, %v7349
        %v7475 = vpack.c.bf16 %v7400, %v7383
        %v7476 = vpack.c.bf16 %v7434, %v7417
        %v7477 = vpack.c.bf16 %v7442, %v7442
        %v7490 = vunpack.c.l.b16 %v7466
        %v7491 = vunpack.c.h.b16 %v7466
        %v7492 = vunpack.c.l.b16 %v7467
        %v7493 = vunpack.c.h.b16 %v7467
        %v7494 = vunpack.c.l.b16 %v7468
        %v7495 = vunpack.c.h.b16 %v7468
        %v7496 = vunpack.c.l.b16 %v7469
        %v7497 = vunpack.c.h.b16 %v7469
        %v7498 = vunpack.c.l.b16 %v7470
        %v7499 = vunpack.c.h.b16 %v7470
        %v7500 = vunpack.c.l.b16 %v7471
        %v7501 = vunpack.c.h.b16 %v7471
        %v7502 = vunpack.c.l.b16 %v7472
        %v7503 = vunpack.c.h.b16 %v7472
        %v7504 = vunpack.c.l.b16 %v7473
        %v7505 = vunpack.c.h.b16 %v7473
        %v7506 = vunpack.c.l.b16 %v7474
        %v7507 = vunpack.c.h.b16 %v7474
        %v7508 = vunpack.c.l.b16 %v7475
        %v7509 = vunpack.c.h.b16 %v7475
        %v7510 = vunpack.c.l.b16 %v7476
        %v7511 = vunpack.c.h.b16 %v7476
        %v7512 = vunpack.c.l.b16 %v7477
        %v7513 = vpack.c.b16 %v7490, %v7490
        %v7514 = vpack.c.b16 %v7491, %v7491
        %v7515 = vpack.c.b16 %v7492, %v7492
        %v7516 = vpack.c.b16 %v7493, %v7493
        %v7517 = vpack.c.b16 %v7494, %v7494
        %v7518 = vpack.c.b16 %v7495, %v7495
        %v7519 = vpack.c.b16 %v7496, %v7496
        %v7520 = vpack.c.b16 %v7497, %v7497
        %v7521 = vpack.c.b16 %v7498, %v7498
        %v7522 = vpack.c.b16 %v7499, %v7499
        %v7523 = vpack.c.b16 %v7500, %v7500
        %v7524 = vpack.c.b16 %v7501, %v7501
        %v7525 = vpack.c.b16 %v7502, %v7502
        %v7526 = vpack.c.b16 %v7503, %v7503
        %v7527 = vpack.c.b16 %v7504, %v7504
        %v7528 = vpack.c.b16 %v7505, %v7505
        %v7529 = vpack.c.b16 %v7506, %v7506
        %v7530 = vpack.c.b16 %v7507, %v7507
        %v7531 = vpack.c.b16 %v7508, %v7508
        %v7532 = vpack.c.b16 %v7509, %v7509
        %v7533 = vpack.c.b16 %v7510, %v7510
        %v7534 = vpack.c.b16 %v7511, %v7511
        %v7535 = vpack.c.b16 %v7512, %v7512
        %7536 = vrot.lane.b32.xlu0 %v7513, 48
        %v7537 = vpop.permute.xlu0 %7536
        %7538 = vrot.lane.b32.xlu0 %v7514, 48
        %v7539 = vpop.permute.xlu0 %7538
        %7540 = vrot.lane.b32.xlu0 %v7515, 48
        %v7541 = vpop.permute.xlu0 %7540
        %7542 = vrot.lane.b32.xlu0 %v7516, 48
        %v7543 = vpop.permute.xlu0 %7542
        %7544 = vrot.lane.b32.xlu0 %v7517, 48
        %v7545 = vpop.permute.xlu0 %7544
        %7546 = vrot.lane.b32.xlu0 %v7518, 48
        %v7547 = vpop.permute.xlu0 %7546
        %7548 = vrot.lane.b32.xlu0 %v7519, 48
        %v7549 = vpop.permute.xlu0 %7548
        %7550 = vrot.lane.b32.xlu0 %v7520, 48
        %v7551 = vpop.permute.xlu0 %7550
        %7552 = vrot.lane.b32.xlu0 %v7521, 48
        %v7553 = vpop.permute.xlu0 %7552
        %7554 = vrot.lane.b32.xlu0 %v7522, 48
        %v7555 = vpop.permute.xlu0 %7554
        %7556 = vrot.lane.b32.xlu0 %v7523, 48
        %v7557 = vpop.permute.xlu0 %7556
        %7558 = vrot.lane.b32.xlu0 %v7524, 48
        %v7559 = vpop.permute.xlu0 %7558
        %7560 = vrot.lane.b32.xlu0 %v7525, 48
        %v7561 = vpop.permute.xlu0 %7560
        %7562 = vrot.lane.b32.xlu0 %v7526, 48
        %v7563 = vpop.permute.xlu0 %7562
        %7564 = vrot.lane.b32.xlu0 %v7527, 48
        %v7565 = vpop.permute.xlu0 %7564
        %7566 = vrot.lane.b32.xlu0 %v7528, 48
        %v7567 = vpop.permute.xlu0 %7566
        %7568 = vrot.lane.b32.xlu0 %v7529, 48
        %v7569 = vpop.permute.xlu0 %7568
        %7570 = vrot.lane.b32.xlu0 %v7530, 48
        %v7571 = vpop.permute.xlu0 %7570
        %7572 = vrot.lane.b32.xlu0 %v7531, 48
        %v7573 = vpop.permute.xlu0 %7572
        %7574 = vrot.lane.b32.xlu0 %v7532, 48
        %v7575 = vpop.permute.xlu0 %7574
        %7576 = vrot.lane.b32.xlu0 %v7533, 48
        %v7577 = vpop.permute.xlu0 %7576
        %7578 = vrot.lane.b32.xlu0 %v7534, 48
        %v7579 = vpop.permute.xlu0 %7578
        %7580 = vrot.lane.b32.xlu0 %v7535, 48
        %v7581 = vpop.permute.xlu0 %7580
        %vm7605 = vcmask 454016
        %7606 = vst.msk [vmem:[#allocation4] sm:$0xf] %vm7605, %v7537
        %7607 = vst.msk [vmem:[#allocation4 + $0x4] sm:$0xf] %vm7605, %v7539
        %7608 = vst.msk [vmem:[#allocation4 + $0x8] sm:$0xf] %vm7605, %v7541
        %7609 = vst.msk [vmem:[#allocation4 + $0xc] sm:$0xf] %vm7605, %v7543
        %7610 = vst.msk [vmem:[#allocation4 + $0x10] sm:$0xf] %vm7605, %v7545
        %7611 = vst.msk [vmem:[#allocation4 + $0x14] sm:$0xf] %vm7605, %v7547
        %7612 = vst.msk [vmem:[#allocation4 + $0x18] sm:$0xf] %vm7605, %v7549
        %7613 = vst.msk [vmem:[#allocation4 + $0x1c] sm:$0xf] %vm7605, %v7551
        %7614 = vst.msk [vmem:[#allocation4 + $0x20] sm:$0xf] %vm7605, %v7553
        %7615 = vst.msk [vmem:[#allocation4 + $0x24] sm:$0xf] %vm7605, %v7555
        %7616 = vst.msk [vmem:[#allocation4 + $0x28] sm:$0xf] %vm7605, %v7557
        %7617 = vst.msk [vmem:[#allocation4 + $0x2c] sm:$0xf] %vm7605, %v7559
        %7618 = vst.msk [vmem:[#allocation4 + $0x30] sm:$0xf] %vm7605, %v7561
        %7619 = vst.msk [vmem:[#allocation4 + $0x34] sm:$0xf] %vm7605, %v7563
        %7620 = vst.msk [vmem:[#allocation4 + $0x38] sm:$0xf] %vm7605, %v7565
        %7621 = vst.msk [vmem:[#allocation4 + $0x3c] sm:$0xf] %vm7605, %v7567
        %7622 = vst.msk [vmem:[#allocation4 + $0x40] sm:$0xf] %vm7605, %v7569
        %7623 = vst.msk [vmem:[#allocation4 + $0x44] sm:$0xf] %vm7605, %v7571
        %7624 = vst.msk [vmem:[#allocation4 + $0x48] sm:$0xf] %vm7605, %v7573
        %7625 = vst.msk [vmem:[#allocation4 + $0x4c] sm:$0xf] %vm7605, %v7575
        %7626 = vst.msk [vmem:[#allocation4 + $0x50] sm:$0xf] %vm7605, %v7577
        %7627 = vst.msk [vmem:[#allocation4 + $0x54] sm:$0xf] %vm7605, %v7579
        %vm7628 = vcmask 451968
        %7629 = vst.msk [vmem:[#allocation4 + $0x58] sm:$0x3] %vm7628, %v7581
        %v7630 = vld [vmem:[%s343 + $0x1] sm:$0xff]
        %v7631 = vld [vmem:[%s343 + $0x9] sm:$0xff]
        %v7632 = vld [vmem:[%s343 + $0x11] sm:$0x3]
        %v7633 = vld [vmem:[%s343 + $0x19] sm:$0xff]
        %v7634 = vld [vmem:[%s343 + $0x21] sm:$0xff]
        %v7635 = vld [vmem:[%s343 + $0x29] sm:$0x3]
        %v7636 = vld [vmem:[%s343 + $0x31] sm:$0xff]
        %v7637 = vld [vmem:[%s343 + $0x39] sm:$0xff]
        %v7638 = vld [vmem:[%s343 + $0x41] sm:$0x3]
        %v7639 = vld [vmem:[%s343 + $0x49] sm:$0xff]
        %v7640 = vld [vmem:[%s343 + $0x51] sm:$0xff]
        %v7641 = vld [vmem:[%s343 + $0x59] sm:$0x3]
        %v7642 = vld [vmem:[%s343 + $0x61] sm:$0xff]
        %v7643 = vld [vmem:[%s343 + $0x69] sm:$0xff]
        %v7644 = vld [vmem:[%s343 + $0x71] sm:$0x3]
        %v7645 = vld [vmem:[%s343 + $0x79] sm:$0xff]
        %v7646 = vld [vmem:[%s343 + $0x81] sm:$0xff]
        %v7647 = vld [vmem:[%s343 + $0x89] sm:$0x3]
        %v7648 = vld [vmem:[%s343 + $0x91] sm:$0xff]
        %v7649 = vld [vmem:[%s343 + $0x99] sm:$0xff]
        %v7650 = vld [vmem:[%s343 + $0xa1] sm:$0x3]
        %v7651 = vld [vmem:[%s343 + $0xa9] sm:$0xff]
        %v7652 = vld [vmem:[%s343 + $0xb1] sm:$0xff]
        %v7653 = vld [vmem:[%s343 + $0xb9] sm:$0x3]
        %v7654 = vld [vmem:[%s343 + $0xc1] sm:$0xff]
        %v7655 = vld [vmem:[%s343 + $0xc9] sm:$0xff]
        %v7656 = vld [vmem:[%s343 + $0xd1] sm:$0x3]
        %v7657 = vld [vmem:[%s343 + $0xd9] sm:$0xff]
        %v7658 = vld [vmem:[%s343 + $0xe1] sm:$0xff]
        %v7659 = vld [vmem:[%s343 + $0xe9] sm:$0x3]
        %v7690 = vcombine.high %v7630, %v7630
        %v7692 = vunpack.c.l.s4 1983009808
        %v7693 = vunpack.c.0.s8 %v7692
        %v7694 = vlaneseq
        %v7695 = vshrl.u32 %v7694, 7
        %v7696 = vsub.s32 %v7693, %v7695
        %v7697 = vrot.slane %v7630, %v7696
        %v7699 = vunpack.c.l.s4 1983009808
        %v7700 = vunpack.c.0.s8 %v7699
        %v7701 = vlaneseq
        %v7702 = vshrl.u32 %v7701, 7
        %v7703 = vsub.s32 %v7700, %v7702
        %v7704 = vrot.slane %v7690, %v7703
        %v7705 = vcombine.high %v7697, %v7697
        %v7706 = vcombine.high %v7704, %v7704
        %v7707 = vcombine.high %v7631, %v7631
        %v7709 = vunpack.c.l.s4 1983009808
        %v7710 = vunpack.c.0.s8 %v7709
        %v7711 = vlaneseq
        %v7712 = vshrl.u32 %v7711, 7
        %v7713 = vsub.s32 %v7710, %v7712
        %v7714 = vrot.slane %v7631, %v7713
        %v7716 = vunpack.c.l.s4 1983009808
        %v7717 = vunpack.c.0.s8 %v7716
        %v7718 = vlaneseq
        %v7719 = vshrl.u32 %v7718, 7
        %v7720 = vsub.s32 %v7717, %v7719
        %v7721 = vrot.slane %v7707, %v7720
        %v7722 = vcombine.high %v7714, %v7714
        %v7723 = vcombine.high %v7721, %v7721
        %v7725 = vunpack.c.l.s4 1983009808
        %v7726 = vunpack.c.0.s8 %v7725
        %v7727 = vlaneseq
        %v7728 = vshrl.u32 %v7727, 7
        %v7729 = vsub.s32 %v7726, %v7728
        %v7730 = vrot.slane %v7632, %v7729
        %v7731 = vcombine.high %v7633, %v7633
        %v7733 = vunpack.c.l.s4 1983009808
        %v7734 = vunpack.c.0.s8 %v7733
        %v7735 = vlaneseq
        %v7736 = vshrl.u32 %v7735, 7
        %v7737 = vsub.s32 %v7734, %v7736
        %v7738 = vrot.slane %v7633, %v7737
        %v7740 = vunpack.c.l.s4 1983009808
        %v7741 = vunpack.c.0.s8 %v7740
        %v7742 = vlaneseq
        %v7743 = vshrl.u32 %v7742, 7
        %v7744 = vsub.s32 %v7741, %v7743
        %v7745 = vrot.slane %v7731, %v7744
        %v7746 = vcombine.high %v7738, %v7738
        %v7747 = vcombine.high %v7745, %v7745
        %v7748 = vcombine.high %v7634, %v7634
        %v7750 = vunpack.c.l.s4 1983009808
        %v7751 = vunpack.c.0.s8 %v7750
        %v7752 = vlaneseq
        %v7753 = vshrl.u32 %v7752, 7
        %v7754 = vsub.s32 %v7751, %v7753
        %v7755 = vrot.slane %v7634, %v7754
        %v7757 = vunpack.c.l.s4 1983009808
        %v7758 = vunpack.c.0.s8 %v7757
        %v7759 = vlaneseq
        %v7760 = vshrl.u32 %v7759, 7
        %v7761 = vsub.s32 %v7758, %v7760
        %v7762 = vrot.slane %v7748, %v7761
        %v7763 = vcombine.high %v7755, %v7755
        %v7764 = vcombine.high %v7762, %v7762
        %v7766 = vunpack.c.l.s4 1983009808
        %v7767 = vunpack.c.0.s8 %v7766
        %v7768 = vlaneseq
        %v7769 = vshrl.u32 %v7768, 7
        %v7770 = vsub.s32 %v7767, %v7769
        %v7771 = vrot.slane %v7635, %v7770
        %v7772 = vcombine.high %v7636, %v7636
        %v7774 = vunpack.c.l.s4 1983009808
        %v7775 = vunpack.c.0.s8 %v7774
        %v7776 = vlaneseq
        %v7777 = vshrl.u32 %v7776, 7
        %v7778 = vsub.s32 %v7775, %v7777
        %v7779 = vrot.slane %v7636, %v7778
        %v7781 = vunpack.c.l.s4 1983009808
        %v7782 = vunpack.c.0.s8 %v7781
        %v7783 = vlaneseq
        %v7784 = vshrl.u32 %v7783, 7
        %v7785 = vsub.s32 %v7782, %v7784
        %v7786 = vrot.slane %v7772, %v7785
        %v7787 = vcombine.high %v7779, %v7779
        %v7788 = vcombine.high %v7786, %v7786
        %v7789 = vcombine.high %v7637, %v7637
        %v7791 = vunpack.c.l.s4 1983009808
        %v7792 = vunpack.c.0.s8 %v7791
        %v7793 = vlaneseq
        %v7794 = vshrl.u32 %v7793, 7
        %v7795 = vsub.s32 %v7792, %v7794
        %v7796 = vrot.slane %v7637, %v7795
        %v7798 = vunpack.c.l.s4 1983009808
        %v7799 = vunpack.c.0.s8 %v7798
        %v7800 = vlaneseq
        %v7801 = vshrl.u32 %v7800, 7
        %v7802 = vsub.s32 %v7799, %v7801
        %v7803 = vrot.slane %v7789, %v7802
        %v7804 = vcombine.high %v7796, %v7796
        %v7805 = vcombine.high %v7803, %v7803
        %v7807 = vunpack.c.l.s4 1983009808
        %v7808 = vunpack.c.0.s8 %v7807
        %v7809 = vlaneseq
        %v7810 = vshrl.u32 %v7809, 7
        %v7811 = vsub.s32 %v7808, %v7810
        %v7812 = vrot.slane %v7638, %v7811
        %v7813 = vcombine.high %v7639, %v7639
        %v7815 = vunpack.c.l.s4 1983009808
        %v7816 = vunpack.c.0.s8 %v7815
        %v7817 = vlaneseq
        %v7818 = vshrl.u32 %v7817, 7
        %v7819 = vsub.s32 %v7816, %v7818
        %v7820 = vrot.slane %v7639, %v7819
        %v7822 = vunpack.c.l.s4 1983009808
        %v7823 = vunpack.c.0.s8 %v7822
        %v7824 = vlaneseq
        %v7825 = vshrl.u32 %v7824, 7
        %v7826 = vsub.s32 %v7823, %v7825
        %v7827 = vrot.slane %v7813, %v7826
        %v7828 = vcombine.high %v7820, %v7820
        %v7829 = vcombine.high %v7827, %v7827
        %v7830 = vcombine.high %v7640, %v7640
        %v7832 = vunpack.c.l.s4 1983009808
        %v7833 = vunpack.c.0.s8 %v7832
        %v7834 = vlaneseq
        %v7835 = vshrl.u32 %v7834, 7
        %v7836 = vsub.s32 %v7833, %v7835
        %v7837 = vrot.slane %v7640, %v7836
        %v7839 = vunpack.c.l.s4 1983009808
        %v7840 = vunpack.c.0.s8 %v7839
        %v7841 = vlaneseq
        %v7842 = vshrl.u32 %v7841, 7
        %v7843 = vsub.s32 %v7840, %v7842
        %v7844 = vrot.slane %v7830, %v7843
        %v7845 = vcombine.high %v7837, %v7837
        %v7846 = vcombine.high %v7844, %v7844
        %v7848 = vunpack.c.l.s4 1983009808
        %v7849 = vunpack.c.0.s8 %v7848
        %v7850 = vlaneseq
        %v7851 = vshrl.u32 %v7850, 7
        %v7852 = vsub.s32 %v7849, %v7851
        %v7853 = vrot.slane %v7641, %v7852
        %v7854 = vcombine.high %v7642, %v7642
        %v7856 = vunpack.c.l.s4 1983009808
        %v7857 = vunpack.c.0.s8 %v7856
        %v7858 = vlaneseq
        %v7859 = vshrl.u32 %v7858, 7
        %v7860 = vsub.s32 %v7857, %v7859
        %v7861 = vrot.slane %v7642, %v7860
        %v7863 = vunpack.c.l.s4 1983009808
        %v7864 = vunpack.c.0.s8 %v7863
        %v7865 = vlaneseq
        %v7866 = vshrl.u32 %v7865, 7
        %v7867 = vsub.s32 %v7864, %v7866
        %v7868 = vrot.slane %v7854, %v7867
        %v7869 = vcombine.high %v7861, %v7861
        %v7870 = vcombine.high %v7868, %v7868
        %v7871 = vcombine.high %v7643, %v7643
        %v7873 = vunpack.c.l.s4 1983009808
        %v7874 = vunpack.c.0.s8 %v7873
        %v7875 = vlaneseq
        %v7876 = vshrl.u32 %v7875, 7
        %v7877 = vsub.s32 %v7874, %v7876
        %v7878 = vrot.slane %v7643, %v7877
        %v7880 = vunpack.c.l.s4 1983009808
        %v7881 = vunpack.c.0.s8 %v7880
        %v7882 = vlaneseq
        %v7883 = vshrl.u32 %v7882, 7
        %v7884 = vsub.s32 %v7881, %v7883
        %v7885 = vrot.slane %v7871, %v7884
        %v7886 = vcombine.high %v7878, %v7878
        %v7887 = vcombine.high %v7885, %v7885
        %v7889 = vunpack.c.l.s4 1983009808
        %v7890 = vunpack.c.0.s8 %v7889
        %v7891 = vlaneseq
        %v7892 = vshrl.u32 %v7891, 7
        %v7893 = vsub.s32 %v7890, %v7892
        %v7894 = vrot.slane %v7644, %v7893
        %v7895 = vcombine.high %v7645, %v7645
        %v7897 = vunpack.c.l.s4 1983009808
        %v7898 = vunpack.c.0.s8 %v7897
        %v7899 = vlaneseq
        %v7900 = vshrl.u32 %v7899, 7
        %v7901 = vsub.s32 %v7898, %v7900
        %v7902 = vrot.slane %v7645, %v7901
        %v7904 = vunpack.c.l.s4 1983009808
        %v7905 = vunpack.c.0.s8 %v7904
        %v7906 = vlaneseq
        %v7907 = vshrl.u32 %v7906, 7
        %v7908 = vsub.s32 %v7905, %v7907
        %v7909 = vrot.slane %v7895, %v7908
        %v7910 = vcombine.high %v7902, %v7902
        %v7911 = vcombine.high %v7909, %v7909
        %v7912 = vcombine.high %v7646, %v7646
        %v7914 = vunpack.c.l.s4 1983009808
        %v7915 = vunpack.c.0.s8 %v7914
        %v7916 = vlaneseq
        %v7917 = vshrl.u32 %v7916, 7
        %v7918 = vsub.s32 %v7915, %v7917
        %v7919 = vrot.slane %v7646, %v7918
        %v7921 = vunpack.c.l.s4 1983009808
        %v7922 = vunpack.c.0.s8 %v7921
        %v7923 = vlaneseq
        %v7924 = vshrl.u32 %v7923, 7
        %v7925 = vsub.s32 %v7922, %v7924
        %v7926 = vrot.slane %v7912, %v7925
        %v7927 = vcombine.high %v7919, %v7919
        %v7928 = vcombine.high %v7926, %v7926
        %v7930 = vunpack.c.l.s4 1983009808
        %v7931 = vunpack.c.0.s8 %v7930
        %v7932 = vlaneseq
        %v7933 = vshrl.u32 %v7932, 7
        %v7934 = vsub.s32 %v7931, %v7933
        %v7935 = vrot.slane %v7647, %v7934
        %v7936 = vcombine.high %v7648, %v7648
        %v7938 = vunpack.c.l.s4 1983009808
        %v7939 = vunpack.c.0.s8 %v7938
        %v7940 = vlaneseq
        %v7941 = vshrl.u32 %v7940, 7
        %v7942 = vsub.s32 %v7939, %v7941
        %v7943 = vrot.slane %v7648, %v7942
        %v7945 = vunpack.c.l.s4 1983009808
        %v7946 = vunpack.c.0.s8 %v7945
        %v7947 = vlaneseq
        %v7948 = vshrl.u32 %v7947, 7
        %v7949 = vsub.s32 %v7946, %v7948
        %v7950 = vrot.slane %v7936, %v7949
        %v7951 = vcombine.high %v7943, %v7943
        %v7952 = vcombine.high %v7950, %v7950
        %v7953 = vcombine.high %v7649, %v7649
        %v7955 = vunpack.c.l.s4 1983009808
        %v7956 = vunpack.c.0.s8 %v7955
        %v7957 = vlaneseq
        %v7958 = vshrl.u32 %v7957, 7
        %v7959 = vsub.s32 %v7956, %v7958
        %v7960 = vrot.slane %v7649, %v7959
        %v7962 = vunpack.c.l.s4 1983009808
        %v7963 = vunpack.c.0.s8 %v7962
        %v7964 = vlaneseq
        %v7965 = vshrl.u32 %v7964, 7
        %v7966 = vsub.s32 %v7963, %v7965
        %v7967 = vrot.slane %v7953, %v7966
        %v7968 = vcombine.high %v7960, %v7960
        %v7969 = vcombine.high %v7967, %v7967
        %v7971 = vunpack.c.l.s4 1983009808
        %v7972 = vunpack.c.0.s8 %v7971
        %v7973 = vlaneseq
        %v7974 = vshrl.u32 %v7973, 7
        %v7975 = vsub.s32 %v7972, %v7974
        %v7976 = vrot.slane %v7650, %v7975
        %v7977 = vcombine.high %v7651, %v7651
        %v7979 = vunpack.c.l.s4 1983009808
        %v7980 = vunpack.c.0.s8 %v7979
        %v7981 = vlaneseq
        %v7982 = vshrl.u32 %v7981, 7
        %v7983 = vsub.s32 %v7980, %v7982
        %v7984 = vrot.slane %v7651, %v7983
        %v7986 = vunpack.c.l.s4 1983009808
        %v7987 = vunpack.c.0.s8 %v7986
        %v7988 = vlaneseq
        %v7989 = vshrl.u32 %v7988, 7
        %v7990 = vsub.s32 %v7987, %v7989
        %v7991 = vrot.slane %v7977, %v7990
        %v7992 = vcombine.high %v7984, %v7984
        %v7993 = vcombine.high %v7991, %v7991
        %v7994 = vcombine.high %v7652, %v7652
        %v7996 = vunpack.c.l.s4 1983009808
        %v7997 = vunpack.c.0.s8 %v7996
        %v7998 = vlaneseq
        %v7999 = vshrl.u32 %v7998, 7
        %v8000 = vsub.s32 %v7997, %v7999
        %v8001 = vrot.slane %v7652, %v8000
        %v8003 = vunpack.c.l.s4 1983009808
        %v8004 = vunpack.c.0.s8 %v8003
        %v8005 = vlaneseq
        %v8006 = vshrl.u32 %v8005, 7
        %v8007 = vsub.s32 %v8004, %v8006
        %v8008 = vrot.slane %v7994, %v8007
        %v8009 = vcombine.high %v8001, %v8001
        %v8010 = vcombine.high %v8008, %v8008
        %v8012 = vunpack.c.l.s4 1983009808
        %v8013 = vunpack.c.0.s8 %v8012
        %v8014 = vlaneseq
        %v8015 = vshrl.u32 %v8014, 7
        %v8016 = vsub.s32 %v8013, %v8015
        %v8017 = vrot.slane %v7653, %v8016
        %v8018 = vcombine.high %v7654, %v7654
        %v8020 = vunpack.c.l.s4 1983009808
        %v8021 = vunpack.c.0.s8 %v8020
        %v8022 = vlaneseq
        %v8023 = vshrl.u32 %v8022, 7
        %v8024 = vsub.s32 %v8021, %v8023
        %v8025 = vrot.slane %v7654, %v8024
        %v8027 = vunpack.c.l.s4 1983009808
        %v8028 = vunpack.c.0.s8 %v8027
        %v8029 = vlaneseq
        %v8030 = vshrl.u32 %v8029, 7
        %v8031 = vsub.s32 %v8028, %v8030
        %v8032 = vrot.slane %v8018, %v8031
        %v8033 = vcombine.high %v8025, %v8025
        %v8034 = vcombine.high %v8032, %v8032
        %v8035 = vcombine.high %v7655, %v7655
        %v8037 = vunpack.c.l.s4 1983009808
        %v8038 = vunpack.c.0.s8 %v8037
        %v8039 = vlaneseq
        %v8040 = vshrl.u32 %v8039, 7
        %v8041 = vsub.s32 %v8038, %v8040
        %v8042 = vrot.slane %v7655, %v8041
        %v8044 = vunpack.c.l.s4 1983009808
        %v8045 = vunpack.c.0.s8 %v8044
        %v8046 = vlaneseq
        %v8047 = vshrl.u32 %v8046, 7
        %v8048 = vsub.s32 %v8045, %v8047
        %v8049 = vrot.slane %v8035, %v8048
        %v8050 = vcombine.high %v8042, %v8042
        %v8051 = vcombine.high %v8049, %v8049
        %v8053 = vunpack.c.l.s4 1983009808
        %v8054 = vunpack.c.0.s8 %v8053
        %v8055 = vlaneseq
        %v8056 = vshrl.u32 %v8055, 7
        %v8057 = vsub.s32 %v8054, %v8056
        %v8058 = vrot.slane %v7656, %v8057
        %v8059 = vcombine.high %v7657, %v7657
        %v8061 = vunpack.c.l.s4 1983009808
        %v8062 = vunpack.c.0.s8 %v8061
        %v8063 = vlaneseq
        %v8064 = vshrl.u32 %v8063, 7
        %v8065 = vsub.s32 %v8062, %v8064
        %v8066 = vrot.slane %v7657, %v8065
        %v8068 = vunpack.c.l.s4 1983009808
        %v8069 = vunpack.c.0.s8 %v8068
        %v8070 = vlaneseq
        %v8071 = vshrl.u32 %v8070, 7
        %v8072 = vsub.s32 %v8069, %v8071
        %v8073 = vrot.slane %v8059, %v8072
        %v8074 = vcombine.high %v8066, %v8066
        %v8075 = vcombine.high %v8073, %v8073
        %v8076 = vcombine.high %v7658, %v7658
        %v8078 = vunpack.c.l.s4 1983009808
        %v8079 = vunpack.c.0.s8 %v8078
        %v8080 = vlaneseq
        %v8081 = vshrl.u32 %v8080, 7
        %v8082 = vsub.s32 %v8079, %v8081
        %v8083 = vrot.slane %v7658, %v8082
        %v8085 = vunpack.c.l.s4 1983009808
        %v8086 = vunpack.c.0.s8 %v8085
        %v8087 = vlaneseq
        %v8088 = vshrl.u32 %v8087, 7
        %v8089 = vsub.s32 %v8086, %v8088
        %v8090 = vrot.slane %v8076, %v8089
        %v8091 = vcombine.high %v8083, %v8083
        %v8092 = vcombine.high %v8090, %v8090
        %v8094 = vunpack.c.l.s4 1983009808
        %v8095 = vunpack.c.0.s8 %v8094
        %v8096 = vlaneseq
        %v8097 = vshrl.u32 %v8096, 7
        %v8098 = vsub.s32 %v8095, %v8097
        %v8099 = vrot.slane %v7659, %v8098
        %v8100 = vcombine.low %v7697, %v7705
        %v8101 = vcombine.low %v7704, %v7706
        %v8103 = vunpack.c.l.s4 1983009808
        %v8104 = vunpack.c.0.s8 %v8103
        %v8105 = vlaneseq
        %v8106 = vshrl.u32 %v8105, 7
        %v8107 = vsub.s32 %v8104, %v8106
        %v8108 = vrot.slane %v8100, %v8107
        %v8110 = vunpack.c.l.s4 1983009808
        %v8111 = vunpack.c.0.s8 %v8110
        %v8112 = vlaneseq
        %v8113 = vshrl.u32 %v8112, 7
        %v8114 = vsub.s32 %v8111, %v8113
        %v8115 = vrot.slane %v8101, %v8114
        %v8116 = vcombine.low %v8108, %v8115
        %v8117 = vcombine.low %v7714, %v7722
        %v8118 = vcombine.low %v7721, %v7723
        %v8120 = vunpack.c.l.s4 1983009808
        %v8121 = vunpack.c.0.s8 %v8120
        %v8122 = vlaneseq
        %v8123 = vshrl.u32 %v8122, 7
        %v8124 = vsub.s32 %v8121, %v8123
        %v8125 = vrot.slane %v8117, %v8124
        %v8127 = vunpack.c.l.s4 1983009808
        %v8128 = vunpack.c.0.s8 %v8127
        %v8129 = vlaneseq
        %v8130 = vshrl.u32 %v8129, 7
        %v8131 = vsub.s32 %v8128, %v8130
        %v8132 = vrot.slane %v8118, %v8131
        %v8133 = vcombine.low %v8125, %v8132
        %v8134 = vcombine.low %v7730, %v7738
        %v8135 = vcombine.low %v7746, %v7745
        %v8137 = vunpack.c.l.s4 1983009808
        %v8138 = vunpack.c.0.s8 %v8137
        %v8139 = vlaneseq
        %v8140 = vshrl.u32 %v8139, 7
        %v8141 = vsub.s32 %v8138, %v8140
        %v8142 = vrot.slane %v8134, %v8141
        %v8144 = vunpack.c.l.s4 1983009808
        %v8145 = vunpack.c.0.s8 %v8144
        %v8146 = vlaneseq
        %v8147 = vshrl.u32 %v8146, 7
        %v8148 = vsub.s32 %v8145, %v8147
        %v8149 = vrot.slane %v8135, %v8148
        %v8150 = vcombine.low %v8142, %v8149
        %v8151 = vcombine.low %v7747, %v7755
        %v8152 = vcombine.low %v7763, %v7762
        %v8154 = vunpack.c.l.s4 1983009808
        %v8155 = vunpack.c.0.s8 %v8154
        %v8156 = vlaneseq
        %v8157 = vshrl.u32 %v8156, 7
        %v8158 = vsub.s32 %v8155, %v8157
        %v8159 = vrot.slane %v8151, %v8158
        %v8161 = vunpack.c.l.s4 1983009808
        %v8162 = vunpack.c.0.s8 %v8161
        %v8163 = vlaneseq
        %v8164 = vshrl.u32 %v8163, 7
        %v8165 = vsub.s32 %v8162, %v8164
        %v8166 = vrot.slane %v8152, %v8165
        %v8167 = vcombine.low %v8159, %v8166
        %v8168 = vcombine.low %v7764, %v7771
        %v8169 = vcombine.low %v7779, %v7787
        %v8171 = vunpack.c.l.s4 1983009808
        %v8172 = vunpack.c.0.s8 %v8171
        %v8173 = vlaneseq
        %v8174 = vshrl.u32 %v8173, 7
        %v8175 = vsub.s32 %v8172, %v8174
        %v8176 = vrot.slane %v8168, %v8175
        %v8178 = vunpack.c.l.s4 1983009808
        %v8179 = vunpack.c.0.s8 %v8178
        %v8180 = vlaneseq
        %v8181 = vshrl.u32 %v8180, 7
        %v8182 = vsub.s32 %v8179, %v8181
        %v8183 = vrot.slane %v8169, %v8182
        %v8184 = vcombine.low %v8176, %v8183
        %v8185 = vcombine.low %v7786, %v7788
        %v8186 = vcombine.low %v7796, %v7804
        %v8188 = vunpack.c.l.s4 1983009808
        %v8189 = vunpack.c.0.s8 %v8188
        %v8190 = vlaneseq
        %v8191 = vshrl.u32 %v8190, 7
        %v8192 = vsub.s32 %v8189, %v8191
        %v8193 = vrot.slane %v8185, %v8192
        %v8195 = vunpack.c.l.s4 1983009808
        %v8196 = vunpack.c.0.s8 %v8195
        %v8197 = vlaneseq
        %v8198 = vshrl.u32 %v8197, 7
        %v8199 = vsub.s32 %v8196, %v8198
        %v8200 = vrot.slane %v8186, %v8199
        %v8201 = vcombine.low %v8193, %v8200
        %v8202 = vcombine.low %v7803, %v7805
        %v8203 = vcombine.low %v7812, %v7820
        %v8205 = vunpack.c.l.s4 1983009808
        %v8206 = vunpack.c.0.s8 %v8205
        %v8207 = vlaneseq
        %v8208 = vshrl.u32 %v8207, 7
        %v8209 = vsub.s32 %v8206, %v8208
        %v8210 = vrot.slane %v8202, %v8209
        %v8212 = vunpack.c.l.s4 1983009808
        %v8213 = vunpack.c.0.s8 %v8212
        %v8214 = vlaneseq
        %v8215 = vshrl.u32 %v8214, 7
        %v8216 = vsub.s32 %v8213, %v8215
        %v8217 = vrot.slane %v8203, %v8216
        %v8218 = vcombine.low %v8210, %v8217
        %v8219 = vcombine.low %v7828, %v7827
        %v8220 = vcombine.low %v7829, %v7837
        %v8222 = vunpack.c.l.s4 1983009808
        %v8223 = vunpack.c.0.s8 %v8222
        %v8224 = vlaneseq
        %v8225 = vshrl.u32 %v8224, 7
        %v8226 = vsub.s32 %v8223, %v8225
        %v8227 = vrot.slane %v8219, %v8226
        %v8229 = vunpack.c.l.s4 1983009808
        %v8230 = vunpack.c.0.s8 %v8229
        %v8231 = vlaneseq
        %v8232 = vshrl.u32 %v8231, 7
        %v8233 = vsub.s32 %v8230, %v8232
        %v8234 = vrot.slane %v8220, %v8233
        %v8235 = vcombine.low %v8227, %v8234
        %v8236 = vcombine.low %v7845, %v7844
        %v8237 = vcombine.low %v7846, %v7853
        %v8239 = vunpack.c.l.s4 1983009808
        %v8240 = vunpack.c.0.s8 %v8239
        %v8241 = vlaneseq
        %v8242 = vshrl.u32 %v8241, 7
        %v8243 = vsub.s32 %v8240, %v8242
        %v8244 = vrot.slane %v8236, %v8243
        %v8246 = vunpack.c.l.s4 1983009808
        %v8247 = vunpack.c.0.s8 %v8246
        %v8248 = vlaneseq
        %v8249 = vshrl.u32 %v8248, 7
        %v8250 = vsub.s32 %v8247, %v8249
        %v8251 = vrot.slane %v8237, %v8250
        %v8252 = vcombine.low %v8244, %v8251
        %v8253 = vcombine.low %v7861, %v7869
        %v8254 = vcombine.low %v7868, %v7870
        %v8256 = vunpack.c.l.s4 1983009808
        %v8257 = vunpack.c.0.s8 %v8256
        %v8258 = vlaneseq
        %v8259 = vshrl.u32 %v8258, 7
        %v8260 = vsub.s32 %v8257, %v8259
        %v8261 = vrot.slane %v8253, %v8260
        %v8263 = vunpack.c.l.s4 1983009808
        %v8264 = vunpack.c.0.s8 %v8263
        %v8265 = vlaneseq
        %v8266 = vshrl.u32 %v8265, 7
        %v8267 = vsub.s32 %v8264, %v8266
        %v8268 = vrot.slane %v8254, %v8267
        %v8269 = vcombine.low %v8261, %v8268
        %v8270 = vcombine.low %v7878, %v7886
        %v8271 = vcombine.low %v7885, %v7887
        %v8273 = vunpack.c.l.s4 1983009808
        %v8274 = vunpack.c.0.s8 %v8273
        %v8275 = vlaneseq
        %v8276 = vshrl.u32 %v8275, 7
        %v8277 = vsub.s32 %v8274, %v8276
        %v8278 = vrot.slane %v8270, %v8277
        %v8280 = vunpack.c.l.s4 1983009808
        %v8281 = vunpack.c.0.s8 %v8280
        %v8282 = vlaneseq
        %v8283 = vshrl.u32 %v8282, 7
        %v8284 = vsub.s32 %v8281, %v8283
        %v8285 = vrot.slane %v8271, %v8284
        %v8286 = vcombine.low %v8278, %v8285
        %v8287 = vcombine.low %v7894, %v7902
        %v8288 = vcombine.low %v7910, %v7909
        %v8290 = vunpack.c.l.s4 1983009808
        %v8291 = vunpack.c.0.s8 %v8290
        %v8292 = vlaneseq
        %v8293 = vshrl.u32 %v8292, 7
        %v8294 = vsub.s32 %v8291, %v8293
        %v8295 = vrot.slane %v8287, %v8294
        %v8297 = vunpack.c.l.s4 1983009808
        %v8298 = vunpack.c.0.s8 %v8297
        %v8299 = vlaneseq
        %v8300 = vshrl.u32 %v8299, 7
        %v8301 = vsub.s32 %v8298, %v8300
        %v8302 = vrot.slane %v8288, %v8301
        %v8303 = vcombine.low %v8295, %v8302
        %v8304 = vcombine.low %v7911, %v7919
        %v8305 = vcombine.low %v7927, %v7926
        %v8307 = vunpack.c.l.s4 1983009808
        %v8308 = vunpack.c.0.s8 %v8307
        %v8309 = vlaneseq
        %v8310 = vshrl.u32 %v8309, 7
        %v8311 = vsub.s32 %v8308, %v8310
        %v8312 = vrot.slane %v8304, %v8311
        %v8314 = vunpack.c.l.s4 1983009808
        %v8315 = vunpack.c.0.s8 %v8314
        %v8316 = vlaneseq
        %v8317 = vshrl.u32 %v8316, 7
        %v8318 = vsub.s32 %v8315, %v8317
        %v8319 = vrot.slane %v8305, %v8318
        %v8320 = vcombine.low %v8312, %v8319
        %v8321 = vcombine.low %v7928, %v7935
        %v8322 = vcombine.low %v7943, %v7951
        %v8324 = vunpack.c.l.s4 1983009808
        %v8325 = vunpack.c.0.s8 %v8324
        %v8326 = vlaneseq
        %v8327 = vshrl.u32 %v8326, 7
        %v8328 = vsub.s32 %v8325, %v8327
        %v8329 = vrot.slane %v8321, %v8328
        %v8331 = vunpack.c.l.s4 1983009808
        %v8332 = vunpack.c.0.s8 %v8331
        %v8333 = vlaneseq
        %v8334 = vshrl.u32 %v8333, 7
        %v8335 = vsub.s32 %v8332, %v8334
        %v8336 = vrot.slane %v8322, %v8335
        %v8337 = vcombine.low %v8329, %v8336
        %v8338 = vcombine.low %v7950, %v7952
        %v8339 = vcombine.low %v7960, %v7968
        %v8341 = vunpack.c.l.s4 1983009808
        %v8342 = vunpack.c.0.s8 %v8341
        %v8343 = vlaneseq
        %v8344 = vshrl.u32 %v8343, 7
        %v8345 = vsub.s32 %v8342, %v8344
        %v8346 = vrot.slane %v8338, %v8345
        %v8348 = vunpack.c.l.s4 1983009808
        %v8349 = vunpack.c.0.s8 %v8348
        %v8350 = vlaneseq
        %v8351 = vshrl.u32 %v8350, 7
        %v8352 = vsub.s32 %v8349, %v8351
        %v8353 = vrot.slane %v8339, %v8352
        %v8354 = vcombine.low %v8346, %v8353
        %v8355 = vcombine.low %v7967, %v7969
        %v8356 = vcombine.low %v7976, %v7984
        %v8358 = vunpack.c.l.s4 1983009808
        %v8359 = vunpack.c.0.s8 %v8358
        %v8360 = vlaneseq
        %v8361 = vshrl.u32 %v8360, 7
        %v8362 = vsub.s32 %v8359, %v8361
        %v8363 = vrot.slane %v8355, %v8362
        %v8365 = vunpack.c.l.s4 1983009808
        %v8366 = vunpack.c.0.s8 %v8365
        %v8367 = vlaneseq
        %v8368 = vshrl.u32 %v8367, 7
        %v8369 = vsub.s32 %v8366, %v8368
        %v8370 = vrot.slane %v8356, %v8369
        %v8371 = vcombine.low %v8363, %v8370
        %v8372 = vcombine.low %v7992, %v7991
        %v8373 = vcombine.low %v7993, %v8001
        %v8375 = vunpack.c.l.s4 1983009808
        %v8376 = vunpack.c.0.s8 %v8375
        %v8377 = vlaneseq
        %v8378 = vshrl.u32 %v8377, 7
        %v8379 = vsub.s32 %v8376, %v8378
        %v8380 = vrot.slane %v8372, %v8379
        %v8382 = vunpack.c.l.s4 1983009808
        %v8383 = vunpack.c.0.s8 %v8382
        %v8384 = vlaneseq
        %v8385 = vshrl.u32 %v8384, 7
        %v8386 = vsub.s32 %v8383, %v8385
        %v8387 = vrot.slane %v8373, %v8386
        %v8388 = vcombine.low %v8380, %v8387
        %v8389 = vcombine.low %v8009, %v8008
        %v8390 = vcombine.low %v8010, %v8017
        %v8392 = vunpack.c.l.s4 1983009808
        %v8393 = vunpack.c.0.s8 %v8392
        %v8394 = vlaneseq
        %v8395 = vshrl.u32 %v8394, 7
        %v8396 = vsub.s32 %v8393, %v8395
        %v8397 = vrot.slane %v8389, %v8396
        %v8399 = vunpack.c.l.s4 1983009808
        %v8400 = vunpack.c.0.s8 %v8399
        %v8401 = vlaneseq
        %v8402 = vshrl.u32 %v8401, 7
        %v8403 = vsub.s32 %v8400, %v8402
        %v8404 = vrot.slane %v8390, %v8403
        %v8405 = vcombine.low %v8397, %v8404
        %v8406 = vcombine.low %v8025, %v8033
        %v8407 = vcombine.low %v8032, %v8034
        %v8409 = vunpack.c.l.s4 1983009808
        %v8410 = vunpack.c.0.s8 %v8409
        %v8411 = vlaneseq
        %v8412 = vshrl.u32 %v8411, 7
        %v8413 = vsub.s32 %v8410, %v8412
        %v8414 = vrot.slane %v8406, %v8413
        %v8416 = vunpack.c.l.s4 1983009808
        %v8417 = vunpack.c.0.s8 %v8416
        %v8418 = vlaneseq
        %v8419 = vshrl.u32 %v8418, 7
        %v8420 = vsub.s32 %v8417, %v8419
        %v8421 = vrot.slane %v8407, %v8420
        %v8422 = vcombine.low %v8414, %v8421
        %v8423 = vcombine.low %v8042, %v8050
        %v8424 = vcombine.low %v8049, %v8051
        %v8426 = vunpack.c.l.s4 1983009808
        %v8427 = vunpack.c.0.s8 %v8426
        %v8428 = vlaneseq
        %v8429 = vshrl.u32 %v8428, 7
        %v8430 = vsub.s32 %v8427, %v8429
        %v8431 = vrot.slane %v8423, %v8430
        %v8433 = vunpack.c.l.s4 1983009808
        %v8434 = vunpack.c.0.s8 %v8433
        %v8435 = vlaneseq
        %v8436 = vshrl.u32 %v8435, 7
        %v8437 = vsub.s32 %v8434, %v8436
        %v8438 = vrot.slane %v8424, %v8437
        %v8439 = vcombine.low %v8431, %v8438
        %v8440 = vcombine.low %v8058, %v8066
        %v8441 = vcombine.low %v8074, %v8073
        %v8443 = vunpack.c.l.s4 1983009808
        %v8444 = vunpack.c.0.s8 %v8443
        %v8445 = vlaneseq
        %v8446 = vshrl.u32 %v8445, 7
        %v8447 = vsub.s32 %v8444, %v8446
        %v8448 = vrot.slane %v8440, %v8447
        %v8450 = vunpack.c.l.s4 1983009808
        %v8451 = vunpack.c.0.s8 %v8450
        %v8452 = vlaneseq
        %v8453 = vshrl.u32 %v8452, 7
        %v8454 = vsub.s32 %v8451, %v8453
        %v8455 = vrot.slane %v8441, %v8454
        %v8456 = vcombine.low %v8448, %v8455
        %v8457 = vcombine.low %v8075, %v8083
        %v8458 = vcombine.low %v8091, %v8090
        %v8460 = vunpack.c.l.s4 1983009808
        %v8461 = vunpack.c.0.s8 %v8460
        %v8462 = vlaneseq
        %v8463 = vshrl.u32 %v8462, 7
        %v8464 = vsub.s32 %v8461, %v8463
        %v8465 = vrot.slane %v8457, %v8464
        %v8467 = vunpack.c.l.s4 1983009808
        %v8468 = vunpack.c.0.s8 %v8467
        %v8469 = vlaneseq
        %v8470 = vshrl.u32 %v8469, 7
        %v8471 = vsub.s32 %v8468, %v8470
        %v8472 = vrot.slane %v8458, %v8471
        %v8473 = vcombine.low %v8465, %v8472
        %v8474 = vcombine.low %v8092, %v8099
        %v8476 = vunpack.c.l.s4 1983009808
        %v8477 = vunpack.c.0.s8 %v8476
        %v8478 = vlaneseq
        %v8479 = vshrl.u32 %v8478, 7
        %v8480 = vsub.s32 %v8477, %v8479
        %v8481 = vrot.slane %v8474, %v8480
        %v8505 = vpack.c.bf16 %v8133, %v8116
        %v8506 = vpack.c.bf16 %v8167, %v8150
        %v8507 = vpack.c.bf16 %v8201, %v8184
        %v8508 = vpack.c.bf16 %v8235, %v8218
        %v8509 = vpack.c.bf16 %v8269, %v8252
        %v8510 = vpack.c.bf16 %v8303, %v8286
        %v8511 = vpack.c.bf16 %v8337, %v8320
        %v8512 = vpack.c.bf16 %v8371, %v8354
        %v8513 = vpack.c.bf16 %v8405, %v8388
        %v8514 = vpack.c.bf16 %v8439, %v8422
        %v8515 = vpack.c.bf16 %v8473, %v8456
        %v8516 = vpack.c.bf16 %v8481, %v8481
        %v8529 = vunpack.c.l.b16 %v8505
        %v8530 = vunpack.c.h.b16 %v8505
        %v8531 = vunpack.c.l.b16 %v8506
        %v8532 = vunpack.c.h.b16 %v8506
        %v8533 = vunpack.c.l.b16 %v8507
        %v8534 = vunpack.c.h.b16 %v8507
        %v8535 = vunpack.c.l.b16 %v8508
        %v8536 = vunpack.c.h.b16 %v8508
        %v8537 = vunpack.c.l.b16 %v8509
        %v8538 = vunpack.c.h.b16 %v8509
        %v8539 = vunpack.c.l.b16 %v8510
        %v8540 = vunpack.c.h.b16 %v8510
        %v8541 = vunpack.c.l.b16 %v8511
        %v8542 = vunpack.c.h.b16 %v8511
        %v8543 = vunpack.c.l.b16 %v8512
        %v8544 = vunpack.c.h.b16 %v8512
        %v8545 = vunpack.c.l.b16 %v8513
        %v8546 = vunpack.c.h.b16 %v8513
        %v8547 = vunpack.c.l.b16 %v8514
        %v8548 = vunpack.c.h.b16 %v8514
        %v8549 = vunpack.c.l.b16 %v8515
        %v8550 = vunpack.c.h.b16 %v8515
        %v8551 = vunpack.c.l.b16 %v8516
        %v8552 = vpack.c.b16 %v8529, %v8529
        %v8553 = vpack.c.b16 %v8530, %v8530
        %v8554 = vpack.c.b16 %v8531, %v8531
        %v8555 = vpack.c.b16 %v8532, %v8532
        %v8556 = vpack.c.b16 %v8533, %v8533
        %v8557 = vpack.c.b16 %v8534, %v8534
        %v8558 = vpack.c.b16 %v8535, %v8535
        %v8559 = vpack.c.b16 %v8536, %v8536
        %v8560 = vpack.c.b16 %v8537, %v8537
        %v8561 = vpack.c.b16 %v8538, %v8538
        %v8562 = vpack.c.b16 %v8539, %v8539
        %v8563 = vpack.c.b16 %v8540, %v8540
        %v8564 = vpack.c.b16 %v8541, %v8541
        %v8565 = vpack.c.b16 %v8542, %v8542
        %v8566 = vpack.c.b16 %v8543, %v8543
        %v8567 = vpack.c.b16 %v8544, %v8544
        %v8568 = vpack.c.b16 %v8545, %v8545
        %v8569 = vpack.c.b16 %v8546, %v8546
        %v8570 = vpack.c.b16 %v8547, %v8547
        %v8571 = vpack.c.b16 %v8548, %v8548
        %v8572 = vpack.c.b16 %v8549, %v8549
        %v8573 = vpack.c.b16 %v8550, %v8550
        %v8574 = vpack.c.b16 %v8551, %v8551
        %8575 = vrot.lane.b32.xlu0 %v8552, 56
        %v8576 = vpop.permute.xlu0 %8575
        %8577 = vrot.lane.b32.xlu0 %v8553, 56
        %v8578 = vpop.permute.xlu0 %8577
        %8579 = vrot.lane.b32.xlu0 %v8554, 56
        %v8580 = vpop.permute.xlu0 %8579
        %8581 = vrot.lane.b32.xlu0 %v8555, 56
        %v8582 = vpop.permute.xlu0 %8581
        %8583 = vrot.lane.b32.xlu0 %v8556, 56
        %v8584 = vpop.permute.xlu0 %8583
        %8585 = vrot.lane.b32.xlu0 %v8557, 56
        %v8586 = vpop.permute.xlu0 %8585
        %8587 = vrot.lane.b32.xlu0 %v8558, 56
        %v8588 = vpop.permute.xlu0 %8587
        %8589 = vrot.lane.b32.xlu0 %v8559, 56
        %v8590 = vpop.permute.xlu0 %8589
        %8591 = vrot.lane.b32.xlu0 %v8560, 56
        %v8592 = vpop.permute.xlu0 %8591
        %8593 = vrot.lane.b32.xlu0 %v8561, 56
        %v8594 = vpop.permute.xlu0 %8593
        %8595 = vrot.lane.b32.xlu0 %v8562, 56
        %v8596 = vpop.permute.xlu0 %8595
        %8597 = vrot.lane.b32.xlu0 %v8563, 56
        %v8598 = vpop.permute.xlu0 %8597
        %8599 = vrot.lane.b32.xlu0 %v8564, 56
        %v8600 = vpop.permute.xlu0 %8599
        %8601 = vrot.lane.b32.xlu0 %v8565, 56
        %v8602 = vpop.permute.xlu0 %8601
        %8603 = vrot.lane.b32.xlu0 %v8566, 56
        %v8604 = vpop.permute.xlu0 %8603
        %8605 = vrot.lane.b32.xlu0 %v8567, 56
        %v8606 = vpop.permute.xlu0 %8605
        %8607 = vrot.lane.b32.xlu0 %v8568, 56
        %v8608 = vpop.permute.xlu0 %8607
        %8609 = vrot.lane.b32.xlu0 %v8569, 56
        %v8610 = vpop.permute.xlu0 %8609
        %8611 = vrot.lane.b32.xlu0 %v8570, 56
        %v8612 = vpop.permute.xlu0 %8611
        %8613 = vrot.lane.b32.xlu0 %v8571, 56
        %v8614 = vpop.permute.xlu0 %8613
        %8615 = vrot.lane.b32.xlu0 %v8572, 56
        %v8616 = vpop.permute.xlu0 %8615
        %8617 = vrot.lane.b32.xlu0 %v8573, 56
        %v8618 = vpop.permute.xlu0 %8617
        %8619 = vrot.lane.b32.xlu0 %v8574, 56
        %v8620 = vpop.permute.xlu0 %8619
        %vm8644 = vcmask 519616
        %8645 = vst.msk [vmem:[#allocation4] sm:$0xf] %vm8644, %v8576
        %8646 = vst.msk [vmem:[#allocation4 + $0x4] sm:$0xf] %vm8644, %v8578
        %8647 = vst.msk [vmem:[#allocation4 + $0x8] sm:$0xf] %vm8644, %v8580
        %8648 = vst.msk [vmem:[#allocation4 + $0xc] sm:$0xf] %vm8644, %v8582
        %8649 = vst.msk [vmem:[#allocation4 + $0x10] sm:$0xf] %vm8644, %v8584
        %8650 = vst.msk [vmem:[#allocation4 + $0x14] sm:$0xf] %vm8644, %v8586
        %8651 = vst.msk [vmem:[#allocation4 + $0x18] sm:$0xf] %vm8644, %v8588
        %8652 = vst.msk [vmem:[#allocation4 + $0x1c] sm:$0xf] %vm8644, %v8590
        %8653 = vst.msk [vmem:[#allocation4 + $0x20] sm:$0xf] %vm8644, %v8592
        %8654 = vst.msk [vmem:[#allocation4 + $0x24] sm:$0xf] %vm8644, %v8594
        %8655 = vst.msk [vmem:[#allocation4 + $0x28] sm:$0xf] %vm8644, %v8596
        %8656 = vst.msk [vmem:[#allocation4 + $0x2c] sm:$0xf] %vm8644, %v8598
        %8657 = vst.msk [vmem:[#allocation4 + $0x30] sm:$0xf] %vm8644, %v8600
        %8658 = vst.msk [vmem:[#allocation4 + $0x34] sm:$0xf] %vm8644, %v8602
        %8659 = vst.msk [vmem:[#allocation4 + $0x38] sm:$0xf] %vm8644, %v8604
        %8660 = vst.msk [vmem:[#allocation4 + $0x3c] sm:$0xf] %vm8644, %v8606
        %8661 = vst.msk [vmem:[#allocation4 + $0x40] sm:$0xf] %vm8644, %v8608
        %8662 = vst.msk [vmem:[#allocation4 + $0x44] sm:$0xf] %vm8644, %v8610
        %8663 = vst.msk [vmem:[#allocation4 + $0x48] sm:$0xf] %vm8644, %v8612
        %8664 = vst.msk [vmem:[#allocation4 + $0x4c] sm:$0xf] %vm8644, %v8614
        %8665 = vst.msk [vmem:[#allocation4 + $0x50] sm:$0xf] %vm8644, %v8616
        %8666 = vst.msk [vmem:[#allocation4 + $0x54] sm:$0xf] %vm8644, %v8618
        %vm8667 = vcmask 517568
        %8668 = vst.msk [vmem:[#allocation4 + $0x58] sm:$0x3] %vm8667, %v8620
        %v8669 = vld [vmem:[%s343 + $0x2] sm:$0xff]
        %v8670 = vld [vmem:[%s343 + $0xa] sm:$0xff]
        %v8671 = vld [vmem:[%s343 + $0x12] sm:$0x3]
        %v8672 = vld [vmem:[%s343 + $0x1a] sm:$0xff]
        %v8673 = vld [vmem:[%s343 + $0x22] sm:$0xff]
        %v8674 = vld [vmem:[%s343 + $0x2a] sm:$0x3]
        %v8675 = vld [vmem:[%s343 + $0x32] sm:$0xff]
        %v8676 = vld [vmem:[%s343 + $0x3a] sm:$0xff]
        %v8677 = vld [vmem:[%s343 + $0x42] sm:$0x3]
        %v8678 = vld [vmem:[%s343 + $0x4a] sm:$0xff]
        %v8679 = vld [vmem:[%s343 + $0x52] sm:$0xff]
        %v8680 = vld [vmem:[%s343 + $0x5a] sm:$0x3]
        %v8681 = vld [vmem:[%s343 + $0x62] sm:$0xff]
        %v8682 = vld [vmem:[%s343 + $0x6a] sm:$0xff]
        %v8683 = vld [vmem:[%s343 + $0x72] sm:$0x3]
        %v8684 = vld [vmem:[%s343 + $0x7a] sm:$0xff]
        %v8685 = vld [vmem:[%s343 + $0x82] sm:$0xff]
        %v8686 = vld [vmem:[%s343 + $0x8a] sm:$0x3]
        %v8687 = vld [vmem:[%s343 + $0x92] sm:$0xff]
        %v8688 = vld [vmem:[%s343 + $0x9a] sm:$0xff]
        %v8689 = vld [vmem:[%s343 + $0xa2] sm:$0x3]
        %v8690 = vld [vmem:[%s343 + $0xaa] sm:$0xff]
        %v8691 = vld [vmem:[%s343 + $0xb2] sm:$0xff]
        %v8692 = vld [vmem:[%s343 + $0xba] sm:$0x3]
        %v8693 = vld [vmem:[%s343 + $0xc2] sm:$0xff]
        %v8694 = vld [vmem:[%s343 + $0xca] sm:$0xff]
        %v8695 = vld [vmem:[%s343 + $0xd2] sm:$0x3]
        %v8696 = vld [vmem:[%s343 + $0xda] sm:$0xff]
        %v8697 = vld [vmem:[%s343 + $0xe2] sm:$0xff]
        %v8698 = vld [vmem:[%s343 + $0xea] sm:$0x3]
        %v8729 = vcombine.high %v8669, %v8669
        %v8731 = vunpack.c.l.s4 1983009808
        %v8732 = vunpack.c.0.s8 %v8731
        %v8733 = vlaneseq
        %v8734 = vshrl.u32 %v8733, 7
        %v8735 = vsub.s32 %v8732, %v8734
        %v8736 = vrot.slane %v8669, %v8735
        %v8738 = vunpack.c.l.s4 1983009808
        %v8739 = vunpack.c.0.s8 %v8738
        %v8740 = vlaneseq
        %v8741 = vshrl.u32 %v8740, 7
        %v8742 = vsub.s32 %v8739, %v8741
        %v8743 = vrot.slane %v8729, %v8742
        %v8744 = vcombine.high %v8736, %v8736
        %v8745 = vcombine.high %v8743, %v8743
        %v8746 = vcombine.high %v8670, %v8670
        %v8748 = vunpack.c.l.s4 1983009808
        %v8749 = vunpack.c.0.s8 %v8748
        %v8750 = vlaneseq
        %v8751 = vshrl.u32 %v8750, 7
        %v8752 = vsub.s32 %v8749, %v8751
        %v8753 = vrot.slane %v8670, %v8752
        %v8755 = vunpack.c.l.s4 1983009808
        %v8756 = vunpack.c.0.s8 %v8755
        %v8757 = vlaneseq
        %v8758 = vshrl.u32 %v8757, 7
        %v8759 = vsub.s32 %v8756, %v8758
        %v8760 = vrot.slane %v8746, %v8759
        %v8761 = vcombine.high %v8753, %v8753
        %v8762 = vcombine.high %v8760, %v8760
        %v8764 = vunpack.c.l.s4 1983009808
        %v8765 = vunpack.c.0.s8 %v8764
        %v8766 = vlaneseq
        %v8767 = vshrl.u32 %v8766, 7
        %v8768 = vsub.s32 %v8765, %v8767
        %v8769 = vrot.slane %v8671, %v8768
        %v8770 = vcombine.high %v8672, %v8672
        %v8772 = vunpack.c.l.s4 1983009808
        %v8773 = vunpack.c.0.s8 %v8772
        %v8774 = vlaneseq
        %v8775 = vshrl.u32 %v8774, 7
        %v8776 = vsub.s32 %v8773, %v8775
        %v8777 = vrot.slane %v8672, %v8776
        %v8779 = vunpack.c.l.s4 1983009808
        %v8780 = vunpack.c.0.s8 %v8779
        %v8781 = vlaneseq
        %v8782 = vshrl.u32 %v8781, 7
        %v8783 = vsub.s32 %v8780, %v8782
        %v8784 = vrot.slane %v8770, %v8783
        %v8785 = vcombine.high %v8777, %v8777
        %v8786 = vcombine.high %v8784, %v8784
        %v8787 = vcombine.high %v8673, %v8673
        %v8789 = vunpack.c.l.s4 1983009808
        %v8790 = vunpack.c.0.s8 %v8789
        %v8791 = vlaneseq
        %v8792 = vshrl.u32 %v8791, 7
        %v8793 = vsub.s32 %v8790, %v8792
        %v8794 = vrot.slane %v8673, %v8793
        %v8796 = vunpack.c.l.s4 1983009808
        %v8797 = vunpack.c.0.s8 %v8796
        %v8798 = vlaneseq
        %v8799 = vshrl.u32 %v8798, 7
        %v8800 = vsub.s32 %v8797, %v8799
        %v8801 = vrot.slane %v8787, %v8800
        %v8802 = vcombine.high %v8794, %v8794
        %v8803 = vcombine.high %v8801, %v8801
        %v8805 = vunpack.c.l.s4 1983009808
        %v8806 = vunpack.c.0.s8 %v8805
        %v8807 = vlaneseq
        %v8808 = vshrl.u32 %v8807, 7
        %v8809 = vsub.s32 %v8806, %v8808
        %v8810 = vrot.slane %v8674, %v8809
        %v8811 = vcombine.high %v8675, %v8675
        %v8813 = vunpack.c.l.s4 1983009808
        %v8814 = vunpack.c.0.s8 %v8813
        %v8815 = vlaneseq
        %v8816 = vshrl.u32 %v8815, 7
        %v8817 = vsub.s32 %v8814, %v8816
        %v8818 = vrot.slane %v8675, %v8817
        %v8820 = vunpack.c.l.s4 1983009808
        %v8821 = vunpack.c.0.s8 %v8820
        %v8822 = vlaneseq
        %v8823 = vshrl.u32 %v8822, 7
        %v8824 = vsub.s32 %v8821, %v8823
        %v8825 = vrot.slane %v8811, %v8824
        %v8826 = vcombine.high %v8818, %v8818
        %v8827 = vcombine.high %v8825, %v8825
        %v8828 = vcombine.high %v8676, %v8676
        %v8830 = vunpack.c.l.s4 1983009808
        %v8831 = vunpack.c.0.s8 %v8830
        %v8832 = vlaneseq
        %v8833 = vshrl.u32 %v8832, 7
        %v8834 = vsub.s32 %v8831, %v8833
        %v8835 = vrot.slane %v8676, %v8834
        %v8837 = vunpack.c.l.s4 1983009808
        %v8838 = vunpack.c.0.s8 %v8837
        %v8839 = vlaneseq
        %v8840 = vshrl.u32 %v8839, 7
        %v8841 = vsub.s32 %v8838, %v8840
        %v8842 = vrot.slane %v8828, %v8841
        %v8843 = vcombine.high %v8835, %v8835
        %v8844 = vcombine.high %v8842, %v8842
        %v8846 = vunpack.c.l.s4 1983009808
        %v8847 = vunpack.c.0.s8 %v8846
        %v8848 = vlaneseq
        %v8849 = vshrl.u32 %v8848, 7
        %v8850 = vsub.s32 %v8847, %v8849
        %v8851 = vrot.slane %v8677, %v8850
        %v8852 = vcombine.high %v8678, %v8678
        %v8854 = vunpack.c.l.s4 1983009808
        %v8855 = vunpack.c.0.s8 %v8854
        %v8856 = vlaneseq
        %v8857 = vshrl.u32 %v8856, 7
        %v8858 = vsub.s32 %v8855, %v8857
        %v8859 = vrot.slane %v8678, %v8858
        %v8861 = vunpack.c.l.s4 1983009808
        %v8862 = vunpack.c.0.s8 %v8861
        %v8863 = vlaneseq
        %v8864 = vshrl.u32 %v8863, 7
        %v8865 = vsub.s32 %v8862, %v8864
        %v8866 = vrot.slane %v8852, %v8865
        %v8867 = vcombine.high %v8859, %v8859
        %v8868 = vcombine.high %v8866, %v8866
        %v8869 = vcombine.high %v8679, %v8679
        %v8871 = vunpack.c.l.s4 1983009808
        %v8872 = vunpack.c.0.s8 %v8871
        %v8873 = vlaneseq
        %v8874 = vshrl.u32 %v8873, 7
        %v8875 = vsub.s32 %v8872, %v8874
        %v8876 = vrot.slane %v8679, %v8875
        %v8878 = vunpack.c.l.s4 1983009808
        %v8879 = vunpack.c.0.s8 %v8878
        %v8880 = vlaneseq
        %v8881 = vshrl.u32 %v8880, 7
        %v8882 = vsub.s32 %v8879, %v8881
        %v8883 = vrot.slane %v8869, %v8882
        %v8884 = vcombine.high %v8876, %v8876
        %v8885 = vcombine.high %v8883, %v8883
        %v8887 = vunpack.c.l.s4 1983009808
        %v8888 = vunpack.c.0.s8 %v8887
        %v8889 = vlaneseq
        %v8890 = vshrl.u32 %v8889, 7
        %v8891 = vsub.s32 %v8888, %v8890
        %v8892 = vrot.slane %v8680, %v8891
        %v8893 = vcombine.high %v8681, %v8681
        %v8895 = vunpack.c.l.s4 1983009808
        %v8896 = vunpack.c.0.s8 %v8895
        %v8897 = vlaneseq
        %v8898 = vshrl.u32 %v8897, 7
        %v8899 = vsub.s32 %v8896, %v8898
        %v8900 = vrot.slane %v8681, %v8899
        %v8902 = vunpack.c.l.s4 1983009808
        %v8903 = vunpack.c.0.s8 %v8902
        %v8904 = vlaneseq
        %v8905 = vshrl.u32 %v8904, 7
        %v8906 = vsub.s32 %v8903, %v8905
        %v8907 = vrot.slane %v8893, %v8906
        %v8908 = vcombine.high %v8900, %v8900
        %v8909 = vcombine.high %v8907, %v8907
        %v8910 = vcombine.high %v8682, %v8682
        %v8912 = vunpack.c.l.s4 1983009808
        %v8913 = vunpack.c.0.s8 %v8912
        %v8914 = vlaneseq
        %v8915 = vshrl.u32 %v8914, 7
        %v8916 = vsub.s32 %v8913, %v8915
        %v8917 = vrot.slane %v8682, %v8916
        %v8919 = vunpack.c.l.s4 1983009808
        %v8920 = vunpack.c.0.s8 %v8919
        %v8921 = vlaneseq
        %v8922 = vshrl.u32 %v8921, 7
        %v8923 = vsub.s32 %v8920, %v8922
        %v8924 = vrot.slane %v8910, %v8923
        %v8925 = vcombine.high %v8917, %v8917
        %v8926 = vcombine.high %v8924, %v8924
        %v8928 = vunpack.c.l.s4 1983009808
        %v8929 = vunpack.c.0.s8 %v8928
        %v8930 = vlaneseq
        %v8931 = vshrl.u32 %v8930, 7
        %v8932 = vsub.s32 %v8929, %v8931
        %v8933 = vrot.slane %v8683, %v8932
        %v8934 = vcombine.high %v8684, %v8684
        %v8936 = vunpack.c.l.s4 1983009808
        %v8937 = vunpack.c.0.s8 %v8936
        %v8938 = vlaneseq
        %v8939 = vshrl.u32 %v8938, 7
        %v8940 = vsub.s32 %v8937, %v8939
        %v8941 = vrot.slane %v8684, %v8940
        %v8943 = vunpack.c.l.s4 1983009808
        %v8944 = vunpack.c.0.s8 %v8943
        %v8945 = vlaneseq
        %v8946 = vshrl.u32 %v8945, 7
        %v8947 = vsub.s32 %v8944, %v8946
        %v8948 = vrot.slane %v8934, %v8947
        %v8949 = vcombine.high %v8941, %v8941
        %v8950 = vcombine.high %v8948, %v8948
        %v8951 = vcombine.high %v8685, %v8685
        %v8953 = vunpack.c.l.s4 1983009808
        %v8954 = vunpack.c.0.s8 %v8953
        %v8955 = vlaneseq
        %v8956 = vshrl.u32 %v8955, 7
        %v8957 = vsub.s32 %v8954, %v8956
        %v8958 = vrot.slane %v8685, %v8957
        %v8960 = vunpack.c.l.s4 1983009808
        %v8961 = vunpack.c.0.s8 %v8960
        %v8962 = vlaneseq
        %v8963 = vshrl.u32 %v8962, 7
        %v8964 = vsub.s32 %v8961, %v8963
        %v8965 = vrot.slane %v8951, %v8964
        %v8966 = vcombine.high %v8958, %v8958
        %v8967 = vcombine.high %v8965, %v8965
        %v8969 = vunpack.c.l.s4 1983009808
        %v8970 = vunpack.c.0.s8 %v8969
        %v8971 = vlaneseq
        %v8972 = vshrl.u32 %v8971, 7
        %v8973 = vsub.s32 %v8970, %v8972
        %v8974 = vrot.slane %v8686, %v8973
        %v8975 = vcombine.high %v8687, %v8687
        %v8977 = vunpack.c.l.s4 1983009808
        %v8978 = vunpack.c.0.s8 %v8977
        %v8979 = vlaneseq
        %v8980 = vshrl.u32 %v8979, 7
        %v8981 = vsub.s32 %v8978, %v8980
        %v8982 = vrot.slane %v8687, %v8981
        %v8984 = vunpack.c.l.s4 1983009808
        %v8985 = vunpack.c.0.s8 %v8984
        %v8986 = vlaneseq
        %v8987 = vshrl.u32 %v8986, 7
        %v8988 = vsub.s32 %v8985, %v8987
        %v8989 = vrot.slane %v8975, %v8988
        %v8990 = vcombine.high %v8982, %v8982
        %v8991 = vcombine.high %v8989, %v8989
        %v8992 = vcombine.high %v8688, %v8688
        %v8994 = vunpack.c.l.s4 1983009808
        %v8995 = vunpack.c.0.s8 %v8994
        %v8996 = vlaneseq
        %v8997 = vshrl.u32 %v8996, 7
        %v8998 = vsub.s32 %v8995, %v8997
        %v8999 = vrot.slane %v8688, %v8998
        %v9001 = vunpack.c.l.s4 1983009808
        %v9002 = vunpack.c.0.s8 %v9001
        %v9003 = vlaneseq
        %v9004 = vshrl.u32 %v9003, 7
        %v9005 = vsub.s32 %v9002, %v9004
        %v9006 = vrot.slane %v8992, %v9005
        %v9007 = vcombine.high %v8999, %v8999
        %v9008 = vcombine.high %v9006, %v9006
        %v9010 = vunpack.c.l.s4 1983009808
        %v9011 = vunpack.c.0.s8 %v9010
        %v9012 = vlaneseq
        %v9013 = vshrl.u32 %v9012, 7
        %v9014 = vsub.s32 %v9011, %v9013
        %v9015 = vrot.slane %v8689, %v9014
        %v9016 = vcombine.high %v8690, %v8690
        %v9018 = vunpack.c.l.s4 1983009808
        %v9019 = vunpack.c.0.s8 %v9018
        %v9020 = vlaneseq
        %v9021 = vshrl.u32 %v9020, 7
        %v9022 = vsub.s32 %v9019, %v9021
        %v9023 = vrot.slane %v8690, %v9022
        %v9025 = vunpack.c.l.s4 1983009808
        %v9026 = vunpack.c.0.s8 %v9025
        %v9027 = vlaneseq
        %v9028 = vshrl.u32 %v9027, 7
        %v9029 = vsub.s32 %v9026, %v9028
        %v9030 = vrot.slane %v9016, %v9029
        %v9031 = vcombine.high %v9023, %v9023
        %v9032 = vcombine.high %v9030, %v9030
        %v9033 = vcombine.high %v8691, %v8691
        %v9035 = vunpack.c.l.s4 1983009808
        %v9036 = vunpack.c.0.s8 %v9035
        %v9037 = vlaneseq
        %v9038 = vshrl.u32 %v9037, 7
        %v9039 = vsub.s32 %v9036, %v9038
        %v9040 = vrot.slane %v8691, %v9039
        %v9042 = vunpack.c.l.s4 1983009808
        %v9043 = vunpack.c.0.s8 %v9042
        %v9044 = vlaneseq
        %v9045 = vshrl.u32 %v9044, 7
        %v9046 = vsub.s32 %v9043, %v9045
        %v9047 = vrot.slane %v9033, %v9046
        %v9048 = vcombine.high %v9040, %v9040
        %v9049 = vcombine.high %v9047, %v9047
        %v9051 = vunpack.c.l.s4 1983009808
        %v9052 = vunpack.c.0.s8 %v9051
        %v9053 = vlaneseq
        %v9054 = vshrl.u32 %v9053, 7
        %v9055 = vsub.s32 %v9052, %v9054
        %v9056 = vrot.slane %v8692, %v9055
        %v9057 = vcombine.high %v8693, %v8693
        %v9059 = vunpack.c.l.s4 1983009808
        %v9060 = vunpack.c.0.s8 %v9059
        %v9061 = vlaneseq
        %v9062 = vshrl.u32 %v9061, 7
        %v9063 = vsub.s32 %v9060, %v9062
        %v9064 = vrot.slane %v8693, %v9063
        %v9066 = vunpack.c.l.s4 1983009808
        %v9067 = vunpack.c.0.s8 %v9066
        %v9068 = vlaneseq
        %v9069 = vshrl.u32 %v9068, 7
        %v9070 = vsub.s32 %v9067, %v9069
        %v9071 = vrot.slane %v9057, %v9070
        %v9072 = vcombine.high %v9064, %v9064
        %v9073 = vcombine.high %v9071, %v9071
        %v9074 = vcombine.high %v8694, %v8694
        %v9076 = vunpack.c.l.s4 1983009808
        %v9077 = vunpack.c.0.s8 %v9076
        %v9078 = vlaneseq
        %v9079 = vshrl.u32 %v9078, 7
        %v9080 = vsub.s32 %v9077, %v9079
        %v9081 = vrot.slane %v8694, %v9080
        %v9083 = vunpack.c.l.s4 1983009808
        %v9084 = vunpack.c.0.s8 %v9083
        %v9085 = vlaneseq
        %v9086 = vshrl.u32 %v9085, 7
        %v9087 = vsub.s32 %v9084, %v9086
        %v9088 = vrot.slane %v9074, %v9087
        %v9089 = vcombine.high %v9081, %v9081
        %v9090 = vcombine.high %v9088, %v9088
        %v9092 = vunpack.c.l.s4 1983009808
        %v9093 = vunpack.c.0.s8 %v9092
        %v9094 = vlaneseq
        %v9095 = vshrl.u32 %v9094, 7
        %v9096 = vsub.s32 %v9093, %v9095
        %v9097 = vrot.slane %v8695, %v9096
        %v9098 = vcombine.high %v8696, %v8696
        %v9100 = vunpack.c.l.s4 1983009808
        %v9101 = vunpack.c.0.s8 %v9100
        %v9102 = vlaneseq
        %v9103 = vshrl.u32 %v9102, 7
        %v9104 = vsub.s32 %v9101, %v9103
        %v9105 = vrot.slane %v8696, %v9104
        %v9107 = vunpack.c.l.s4 1983009808
        %v9108 = vunpack.c.0.s8 %v9107
        %v9109 = vlaneseq
        %v9110 = vshrl.u32 %v9109, 7
        %v9111 = vsub.s32 %v9108, %v9110
        %v9112 = vrot.slane %v9098, %v9111
        %v9113 = vcombine.high %v9105, %v9105
        %v9114 = vcombine.high %v9112, %v9112
        %v9115 = vcombine.high %v8697, %v8697
        %v9117 = vunpack.c.l.s4 1983009808
        %v9118 = vunpack.c.0.s8 %v9117
        %v9119 = vlaneseq
        %v9120 = vshrl.u32 %v9119, 7
        %v9121 = vsub.s32 %v9118, %v9120
        %v9122 = vrot.slane %v8697, %v9121
        %v9124 = vunpack.c.l.s4 1983009808
        %v9125 = vunpack.c.0.s8 %v9124
        %v9126 = vlaneseq
        %v9127 = vshrl.u32 %v9126, 7
        %v9128 = vsub.s32 %v9125, %v9127
        %v9129 = vrot.slane %v9115, %v9128
        %v9130 = vcombine.high %v9122, %v9122
        %v9131 = vcombine.high %v9129, %v9129
        %v9133 = vunpack.c.l.s4 1983009808
        %v9134 = vunpack.c.0.s8 %v9133
        %v9135 = vlaneseq
        %v9136 = vshrl.u32 %v9135, 7
        %v9137 = vsub.s32 %v9134, %v9136
        %v9138 = vrot.slane %v8698, %v9137
        %v9139 = vcombine.low %v8736, %v8744
        %v9140 = vcombine.low %v8743, %v8745
        %v9142 = vunpack.c.l.s4 1983009808
        %v9143 = vunpack.c.0.s8 %v9142
        %v9144 = vlaneseq
        %v9145 = vshrl.u32 %v9144, 7
        %v9146 = vsub.s32 %v9143, %v9145
        %v9147 = vrot.slane %v9139, %v9146
        %v9149 = vunpack.c.l.s4 1983009808
        %v9150 = vunpack.c.0.s8 %v9149
        %v9151 = vlaneseq
        %v9152 = vshrl.u32 %v9151, 7
        %v9153 = vsub.s32 %v9150, %v9152
        %v9154 = vrot.slane %v9140, %v9153
        %v9155 = vcombine.low %v9147, %v9154
        %v9156 = vcombine.low %v8753, %v8761
        %v9157 = vcombine.low %v8760, %v8762
        %v9159 = vunpack.c.l.s4 1983009808
        %v9160 = vunpack.c.0.s8 %v9159
        %v9161 = vlaneseq
        %v9162 = vshrl.u32 %v9161, 7
        %v9163 = vsub.s32 %v9160, %v9162
        %v9164 = vrot.slane %v9156, %v9163
        %v9166 = vunpack.c.l.s4 1983009808
        %v9167 = vunpack.c.0.s8 %v9166
        %v9168 = vlaneseq
        %v9169 = vshrl.u32 %v9168, 7
        %v9170 = vsub.s32 %v9167, %v9169
        %v9171 = vrot.slane %v9157, %v9170
        %v9172 = vcombine.low %v9164, %v9171
        %v9173 = vcombine.low %v8769, %v8777
        %v9174 = vcombine.low %v8785, %v8784
        %v9176 = vunpack.c.l.s4 1983009808
        %v9177 = vunpack.c.0.s8 %v9176
        %v9178 = vlaneseq
        %v9179 = vshrl.u32 %v9178, 7
        %v9180 = vsub.s32 %v9177, %v9179
        %v9181 = vrot.slane %v9173, %v9180
        %v9183 = vunpack.c.l.s4 1983009808
        %v9184 = vunpack.c.0.s8 %v9183
        %v9185 = vlaneseq
        %v9186 = vshrl.u32 %v9185, 7
        %v9187 = vsub.s32 %v9184, %v9186
        %v9188 = vrot.slane %v9174, %v9187
        %v9189 = vcombine.low %v9181, %v9188
        %v9190 = vcombine.low %v8786, %v8794
        %v9191 = vcombine.low %v8802, %v8801
        %v9193 = vunpack.c.l.s4 1983009808
        %v9194 = vunpack.c.0.s8 %v9193
        %v9195 = vlaneseq
        %v9196 = vshrl.u32 %v9195, 7
        %v9197 = vsub.s32 %v9194, %v9196
        %v9198 = vrot.slane %v9190, %v9197
        %v9200 = vunpack.c.l.s4 1983009808
        %v9201 = vunpack.c.0.s8 %v9200
        %v9202 = vlaneseq
        %v9203 = vshrl.u32 %v9202, 7
        %v9204 = vsub.s32 %v9201, %v9203
        %v9205 = vrot.slane %v9191, %v9204
        %v9206 = vcombine.low %v9198, %v9205
        %v9207 = vcombine.low %v8803, %v8810
        %v9208 = vcombine.low %v8818, %v8826
        %v9210 = vunpack.c.l.s4 1983009808
        %v9211 = vunpack.c.0.s8 %v9210
        %v9212 = vlaneseq
        %v9213 = vshrl.u32 %v9212, 7
        %v9214 = vsub.s32 %v9211, %v9213
        %v9215 = vrot.slane %v9207, %v9214
        %v9217 = vunpack.c.l.s4 1983009808
        %v9218 = vunpack.c.0.s8 %v9217
        %v9219 = vlaneseq
        %v9220 = vshrl.u32 %v9219, 7
        %v9221 = vsub.s32 %v9218, %v9220
        %v9222 = vrot.slane %v9208, %v9221
        %v9223 = vcombine.low %v9215, %v9222
        %v9224 = vcombine.low %v8825, %v8827
        %v9225 = vcombine.low %v8835, %v8843
        %v9227 = vunpack.c.l.s4 1983009808
        %v9228 = vunpack.c.0.s8 %v9227
        %v9229 = vlaneseq
        %v9230 = vshrl.u32 %v9229, 7
        %v9231 = vsub.s32 %v9228, %v9230
        %v9232 = vrot.slane %v9224, %v9231
        %v9234 = vunpack.c.l.s4 1983009808
        %v9235 = vunpack.c.0.s8 %v9234
        %v9236 = vlaneseq
        %v9237 = vshrl.u32 %v9236, 7
        %v9238 = vsub.s32 %v9235, %v9237
        %v9239 = vrot.slane %v9225, %v9238
        %v9240 = vcombine.low %v9232, %v9239
        %v9241 = vcombine.low %v8842, %v8844
        %v9242 = vcombine.low %v8851, %v8859
        %v9244 = vunpack.c.l.s4 1983009808
        %v9245 = vunpack.c.0.s8 %v9244
        %v9246 = vlaneseq
        %v9247 = vshrl.u32 %v9246, 7
        %v9248 = vsub.s32 %v9245, %v9247
        %v9249 = vrot.slane %v9241, %v9248
        %v9251 = vunpack.c.l.s4 1983009808
        %v9252 = vunpack.c.0.s8 %v9251
        %v9253 = vlaneseq
        %v9254 = vshrl.u32 %v9253, 7
        %v9255 = vsub.s32 %v9252, %v9254
        %v9256 = vrot.slane %v9242, %v9255
        %v9257 = vcombine.low %v9249, %v9256
        %v9258 = vcombine.low %v8867, %v8866
        %v9259 = vcombine.low %v8868, %v8876
        %v9261 = vunpack.c.l.s4 1983009808
        %v9262 = vunpack.c.0.s8 %v9261
        %v9263 = vlaneseq
        %v9264 = vshrl.u32 %v9263, 7
        %v9265 = vsub.s32 %v9262, %v9264
        %v9266 = vrot.slane %v9258, %v9265
        %v9268 = vunpack.c.l.s4 1983009808
        %v9269 = vunpack.c.0.s8 %v9268
        %v9270 = vlaneseq
        %v9271 = vshrl.u32 %v9270, 7
        %v9272 = vsub.s32 %v9269, %v9271
        %v9273 = vrot.slane %v9259, %v9272
        %v9274 = vcombine.low %v9266, %v9273
        %v9275 = vcombine.low %v8884, %v8883
        %v9276 = vcombine.low %v8885, %v8892
        %v9278 = vunpack.c.l.s4 1983009808
        %v9279 = vunpack.c.0.s8 %v9278
        %v9280 = vlaneseq
        %v9281 = vshrl.u32 %v9280, 7
        %v9282 = vsub.s32 %v9279, %v9281
        %v9283 = vrot.slane %v9275, %v9282
        %v9285 = vunpack.c.l.s4 1983009808
        %v9286 = vunpack.c.0.s8 %v9285
        %v9287 = vlaneseq
        %v9288 = vshrl.u32 %v9287, 7
        %v9289 = vsub.s32 %v9286, %v9288
        %v9290 = vrot.slane %v9276, %v9289
        %v9291 = vcombine.low %v9283, %v9290
        %v9292 = vcombine.low %v8900, %v8908
        %v9293 = vcombine.low %v8907, %v8909
        %v9295 = vunpack.c.l.s4 1983009808
        %v9296 = vunpack.c.0.s8 %v9295
        %v9297 = vlaneseq
        %v9298 = vshrl.u32 %v9297, 7
        %v9299 = vsub.s32 %v9296, %v9298
        %v9300 = vrot.slane %v9292, %v9299
        %v9302 = vunpack.c.l.s4 1983009808
        %v9303 = vunpack.c.0.s8 %v9302
        %v9304 = vlaneseq
        %v9305 = vshrl.u32 %v9304, 7
        %v9306 = vsub.s32 %v9303, %v9305
        %v9307 = vrot.slane %v9293, %v9306
        %v9308 = vcombine.low %v9300, %v9307
        %v9309 = vcombine.low %v8917, %v8925
        %v9310 = vcombine.low %v8924, %v8926
        %v9312 = vunpack.c.l.s4 1983009808
        %v9313 = vunpack.c.0.s8 %v9312
        %v9314 = vlaneseq
        %v9315 = vshrl.u32 %v9314, 7
        %v9316 = vsub.s32 %v9313, %v9315
        %v9317 = vrot.slane %v9309, %v9316
        %v9319 = vunpack.c.l.s4 1983009808
        %v9320 = vunpack.c.0.s8 %v9319
        %v9321 = vlaneseq
        %v9322 = vshrl.u32 %v9321, 7
        %v9323 = vsub.s32 %v9320, %v9322
        %v9324 = vrot.slane %v9310, %v9323
        %v9325 = vcombine.low %v9317, %v9324
        %v9326 = vcombine.low %v8933, %v8941
        %v9327 = vcombine.low %v8949, %v8948
        %v9329 = vunpack.c.l.s4 1983009808
        %v9330 = vunpack.c.0.s8 %v9329
        %v9331 = vlaneseq
        %v9332 = vshrl.u32 %v9331, 7
        %v9333 = vsub.s32 %v9330, %v9332
        %v9334 = vrot.slane %v9326, %v9333
        %v9336 = vunpack.c.l.s4 1983009808
        %v9337 = vunpack.c.0.s8 %v9336
        %v9338 = vlaneseq
        %v9339 = vshrl.u32 %v9338, 7
        %v9340 = vsub.s32 %v9337, %v9339
        %v9341 = vrot.slane %v9327, %v9340
        %v9342 = vcombine.low %v9334, %v9341
        %v9343 = vcombine.low %v8950, %v8958
        %v9344 = vcombine.low %v8966, %v8965
        %v9346 = vunpack.c.l.s4 1983009808
        %v9347 = vunpack.c.0.s8 %v9346
        %v9348 = vlaneseq
        %v9349 = vshrl.u32 %v9348, 7
        %v9350 = vsub.s32 %v9347, %v9349
        %v9351 = vrot.slane %v9343, %v9350
        %v9353 = vunpack.c.l.s4 1983009808
        %v9354 = vunpack.c.0.s8 %v9353
        %v9355 = vlaneseq
        %v9356 = vshrl.u32 %v9355, 7
        %v9357 = vsub.s32 %v9354, %v9356
        %v9358 = vrot.slane %v9344, %v9357
        %v9359 = vcombine.low %v9351, %v9358
        %v9360 = vcombine.low %v8967, %v8974
        %v9361 = vcombine.low %v8982, %v8990
        %v9363 = vunpack.c.l.s4 1983009808
        %v9364 = vunpack.c.0.s8 %v9363
        %v9365 = vlaneseq
        %v9366 = vshrl.u32 %v9365, 7
        %v9367 = vsub.s32 %v9364, %v9366
        %v9368 = vrot.slane %v9360, %v9367
        %v9370 = vunpack.c.l.s4 1983009808
        %v9371 = vunpack.c.0.s8 %v9370
        %v9372 = vlaneseq
        %v9373 = vshrl.u32 %v9372, 7
        %v9374 = vsub.s32 %v9371, %v9373
        %v9375 = vrot.slane %v9361, %v9374
        %v9376 = vcombine.low %v9368, %v9375
        %v9377 = vcombine.low %v8989, %v8991
        %v9378 = vcombine.low %v8999, %v9007
        %v9380 = vunpack.c.l.s4 1983009808
        %v9381 = vunpack.c.0.s8 %v9380
        %v9382 = vlaneseq
        %v9383 = vshrl.u32 %v9382, 7
        %v9384 = vsub.s32 %v9381, %v9383
        %v9385 = vrot.slane %v9377, %v9384
        %v9387 = vunpack.c.l.s4 1983009808
        %v9388 = vunpack.c.0.s8 %v9387
        %v9389 = vlaneseq
        %v9390 = vshrl.u32 %v9389, 7
        %v9391 = vsub.s32 %v9388, %v9390
        %v9392 = vrot.slane %v9378, %v9391
        %v9393 = vcombine.low %v9385, %v9392
        %v9394 = vcombine.low %v9006, %v9008
        %v9395 = vcombine.low %v9015, %v9023
        %v9397 = vunpack.c.l.s4 1983009808
        %v9398 = vunpack.c.0.s8 %v9397
        %v9399 = vlaneseq
        %v9400 = vshrl.u32 %v9399, 7
        %v9401 = vsub.s32 %v9398, %v9400
        %v9402 = vrot.slane %v9394, %v9401
        %v9404 = vunpack.c.l.s4 1983009808
        %v9405 = vunpack.c.0.s8 %v9404
        %v9406 = vlaneseq
        %v9407 = vshrl.u32 %v9406, 7
        %v9408 = vsub.s32 %v9405, %v9407
        %v9409 = vrot.slane %v9395, %v9408
        %v9410 = vcombine.low %v9402, %v9409
        %v9411 = vcombine.low %v9031, %v9030
        %v9412 = vcombine.low %v9032, %v9040
        %v9414 = vunpack.c.l.s4 1983009808
        %v9415 = vunpack.c.0.s8 %v9414
        %v9416 = vlaneseq
        %v9417 = vshrl.u32 %v9416, 7
        %v9418 = vsub.s32 %v9415, %v9417
        %v9419 = vrot.slane %v9411, %v9418
        %v9421 = vunpack.c.l.s4 1983009808
        %v9422 = vunpack.c.0.s8 %v9421
        %v9423 = vlaneseq
        %v9424 = vshrl.u32 %v9423, 7
        %v9425 = vsub.s32 %v9422, %v9424
        %v9426 = vrot.slane %v9412, %v9425
        %v9427 = vcombine.low %v9419, %v9426
        %v9428 = vcombine.low %v9048, %v9047
        %v9429 = vcombine.low %v9049, %v9056
        %v9431 = vunpack.c.l.s4 1983009808
        %v9432 = vunpack.c.0.s8 %v9431
        %v9433 = vlaneseq
        %v9434 = vshrl.u32 %v9433, 7
        %v9435 = vsub.s32 %v9432, %v9434
        %v9436 = vrot.slane %v9428, %v9435
        %v9438 = vunpack.c.l.s4 1983009808
        %v9439 = vunpack.c.0.s8 %v9438
        %v9440 = vlaneseq
        %v9441 = vshrl.u32 %v9440, 7
        %v9442 = vsub.s32 %v9439, %v9441
        %v9443 = vrot.slane %v9429, %v9442
        %v9444 = vcombine.low %v9436, %v9443
        %v9445 = vcombine.low %v9064, %v9072
        %v9446 = vcombine.low %v9071, %v9073
        %v9448 = vunpack.c.l.s4 1983009808
        %v9449 = vunpack.c.0.s8 %v9448
        %v9450 = vlaneseq
        %v9451 = vshrl.u32 %v9450, 7
        %v9452 = vsub.s32 %v9449, %v9451
        %v9453 = vrot.slane %v9445, %v9452
        %v9455 = vunpack.c.l.s4 1983009808
        %v9456 = vunpack.c.0.s8 %v9455
        %v9457 = vlaneseq
        %v9458 = vshrl.u32 %v9457, 7
        %v9459 = vsub.s32 %v9456, %v9458
        %v9460 = vrot.slane %v9446, %v9459
        %v9461 = vcombine.low %v9453, %v9460
        %v9462 = vcombine.low %v9081, %v9089
        %v9463 = vcombine.low %v9088, %v9090
        %v9465 = vunpack.c.l.s4 1983009808
        %v9466 = vunpack.c.0.s8 %v9465
        %v9467 = vlaneseq
        %v9468 = vshrl.u32 %v9467, 7
        %v9469 = vsub.s32 %v9466, %v9468
        %v9470 = vrot.slane %v9462, %v9469
        %v9472 = vunpack.c.l.s4 1983009808
        %v9473 = vunpack.c.0.s8 %v9472
        %v9474 = vlaneseq
        %v9475 = vshrl.u32 %v9474, 7
        %v9476 = vsub.s32 %v9473, %v9475
        %v9477 = vrot.slane %v9463, %v9476
        %v9478 = vcombine.low %v9470, %v9477
        %v9479 = vcombine.low %v9097, %v9105
        %v9480 = vcombine.low %v9113, %v9112
        %v9482 = vunpack.c.l.s4 1983009808
        %v9483 = vunpack.c.0.s8 %v9482
        %v9484 = vlaneseq
        %v9485 = vshrl.u32 %v9484, 7
        %v9486 = vsub.s32 %v9483, %v9485
        %v9487 = vrot.slane %v9479, %v9486
        %v9489 = vunpack.c.l.s4 1983009808
        %v9490 = vunpack.c.0.s8 %v9489
        %v9491 = vlaneseq
        %v9492 = vshrl.u32 %v9491, 7
        %v9493 = vsub.s32 %v9490, %v9492
        %v9494 = vrot.slane %v9480, %v9493
        %v9495 = vcombine.low %v9487, %v9494
        %v9496 = vcombine.low %v9114, %v9122
        %v9497 = vcombine.low %v9130, %v9129
        %v9499 = vunpack.c.l.s4 1983009808
        %v9500 = vunpack.c.0.s8 %v9499
        %v9501 = vlaneseq
        %v9502 = vshrl.u32 %v9501, 7
        %v9503 = vsub.s32 %v9500, %v9502
        %v9504 = vrot.slane %v9496, %v9503
        %v9506 = vunpack.c.l.s4 1983009808
        %v9507 = vunpack.c.0.s8 %v9506
        %v9508 = vlaneseq
        %v9509 = vshrl.u32 %v9508, 7
        %v9510 = vsub.s32 %v9507, %v9509
        %v9511 = vrot.slane %v9497, %v9510
        %v9512 = vcombine.low %v9504, %v9511
        %v9513 = vcombine.low %v9131, %v9138
        %v9515 = vunpack.c.l.s4 1983009808
        %v9516 = vunpack.c.0.s8 %v9515
        %v9517 = vlaneseq
        %v9518 = vshrl.u32 %v9517, 7
        %v9519 = vsub.s32 %v9516, %v9518
        %v9520 = vrot.slane %v9513, %v9519
        %v9544 = vpack.c.bf16 %v9172, %v9155
        %v9545 = vpack.c.bf16 %v9206, %v9189
        %v9546 = vpack.c.bf16 %v9240, %v9223
        %v9547 = vpack.c.bf16 %v9274, %v9257
        %v9548 = vpack.c.bf16 %v9308, %v9291
        %v9549 = vpack.c.bf16 %v9342, %v9325
        %v9550 = vpack.c.bf16 %v9376, %v9359
        %v9551 = vpack.c.bf16 %v9410, %v9393
        %v9552 = vpack.c.bf16 %v9444, %v9427
        %v9553 = vpack.c.bf16 %v9478, %v9461
        %v9554 = vpack.c.bf16 %v9512, %v9495
        %v9555 = vpack.c.bf16 %v9520, %v9520
        %v9568 = vunpack.c.l.b16 %v9544
        %v9569 = vunpack.c.h.b16 %v9544
        %v9570 = vunpack.c.l.b16 %v9545
        %v9571 = vunpack.c.h.b16 %v9545
        %v9572 = vunpack.c.l.b16 %v9546
        %v9573 = vunpack.c.h.b16 %v9546
        %v9574 = vunpack.c.l.b16 %v9547
        %v9575 = vunpack.c.h.b16 %v9547
        %v9576 = vunpack.c.l.b16 %v9548
        %v9577 = vunpack.c.h.b16 %v9548
        %v9578 = vunpack.c.l.b16 %v9549
        %v9579 = vunpack.c.h.b16 %v9549
        %v9580 = vunpack.c.l.b16 %v9550
        %v9581 = vunpack.c.h.b16 %v9550
        %v9582 = vunpack.c.l.b16 %v9551
        %v9583 = vunpack.c.h.b16 %v9551
        %v9584 = vunpack.c.l.b16 %v9552
        %v9585 = vunpack.c.h.b16 %v9552
        %v9586 = vunpack.c.l.b16 %v9553
        %v9587 = vunpack.c.h.b16 %v9553
        %v9588 = vunpack.c.l.b16 %v9554
        %v9589 = vunpack.c.h.b16 %v9554
        %v9590 = vunpack.c.l.b16 %v9555
        %v9591 = vpack.c.b16 %v9568, %v9568
        %v9592 = vpack.c.b16 %v9569, %v9569
        %v9593 = vpack.c.b16 %v9570, %v9570
        %v9594 = vpack.c.b16 %v9571, %v9571
        %v9595 = vpack.c.b16 %v9572, %v9572
        %v9596 = vpack.c.b16 %v9573, %v9573
        %v9597 = vpack.c.b16 %v9574, %v9574
        %v9598 = vpack.c.b16 %v9575, %v9575
        %v9599 = vpack.c.b16 %v9576, %v9576
        %v9600 = vpack.c.b16 %v9577, %v9577
        %v9601 = vpack.c.b16 %v9578, %v9578
        %v9602 = vpack.c.b16 %v9579, %v9579
        %v9603 = vpack.c.b16 %v9580, %v9580
        %v9604 = vpack.c.b16 %v9581, %v9581
        %v9605 = vpack.c.b16 %v9582, %v9582
        %v9606 = vpack.c.b16 %v9583, %v9583
        %v9607 = vpack.c.b16 %v9584, %v9584
        %v9608 = vpack.c.b16 %v9585, %v9585
        %v9609 = vpack.c.b16 %v9586, %v9586
        %v9610 = vpack.c.b16 %v9587, %v9587
        %v9611 = vpack.c.b16 %v9588, %v9588
        %v9612 = vpack.c.b16 %v9589, %v9589
        %v9613 = vpack.c.b16 %v9590, %v9590
        %9614 = vrot.lane.b32.xlu0 %v9591, 64
        %v9615 = vpop.permute.xlu0 %9614
        %9616 = vrot.lane.b32.xlu0 %v9592, 64
        %v9617 = vpop.permute.xlu0 %9616
        %9618 = vrot.lane.b32.xlu0 %v9593, 64
        %v9619 = vpop.permute.xlu0 %9618
        %9620 = vrot.lane.b32.xlu0 %v9594, 64
        %v9621 = vpop.permute.xlu0 %9620
        %9622 = vrot.lane.b32.xlu0 %v9595, 64
        %v9623 = vpop.permute.xlu0 %9622
        %9624 = vrot.lane.b32.xlu0 %v9596, 64
        %v9625 = vpop.permute.xlu0 %9624
        %9626 = vrot.lane.b32.xlu0 %v9597, 64
        %v9627 = vpop.permute.xlu0 %9626
        %9628 = vrot.lane.b32.xlu0 %v9598, 64
        %v9629 = vpop.permute.xlu0 %9628
        %9630 = vrot.lane.b32.xlu0 %v9599, 64
        %v9631 = vpop.permute.xlu0 %9630
        %9632 = vrot.lane.b32.xlu0 %v9600, 64
        %v9633 = vpop.permute.xlu0 %9632
        %9634 = vrot.lane.b32.xlu0 %v9601, 64
        %v9635 = vpop.permute.xlu0 %9634
        %9636 = vrot.lane.b32.xlu0 %v9602, 64
        %v9637 = vpop.permute.xlu0 %9636
        %9638 = vrot.lane.b32.xlu0 %v9603, 64
        %v9639 = vpop.permute.xlu0 %9638
        %9640 = vrot.lane.b32.xlu0 %v9604, 64
        %v9641 = vpop.permute.xlu0 %9640
        %9642 = vrot.lane.b32.xlu0 %v9605, 64
        %v9643 = vpop.permute.xlu0 %9642
        %9644 = vrot.lane.b32.xlu0 %v9606, 64
        %v9645 = vpop.permute.xlu0 %9644
        %9646 = vrot.lane.b32.xlu0 %v9607, 64
        %v9647 = vpop.permute.xlu0 %9646
        %9648 = vrot.lane.b32.xlu0 %v9608, 64
        %v9649 = vpop.permute.xlu0 %9648
        %9650 = vrot.lane.b32.xlu0 %v9609, 64
        %v9651 = vpop.permute.xlu0 %9650
        %9652 = vrot.lane.b32.xlu0 %v9610, 64
        %v9653 = vpop.permute.xlu0 %9652
        %9654 = vrot.lane.b32.xlu0 %v9611, 64
        %v9655 = vpop.permute.xlu0 %9654
        %9656 = vrot.lane.b32.xlu0 %v9612, 64
        %v9657 = vpop.permute.xlu0 %9656
        %9658 = vrot.lane.b32.xlu0 %v9613, 64
        %v9659 = vpop.permute.xlu0 %9658
        %vm9683 = vcmask 585216
        %9684 = vst.msk [vmem:[#allocation4] sm:$0xf] %vm9683, %v9615
        %9685 = vst.msk [vmem:[#allocation4 + $0x4] sm:$0xf] %vm9683, %v9617
        %9686 = vst.msk [vmem:[#allocation4 + $0x8] sm:$0xf] %vm9683, %v9619
        %9687 = vst.msk [vmem:[#allocation4 + $0xc] sm:$0xf] %vm9683, %v9621
        %9688 = vst.msk [vmem:[#allocation4 + $0x10] sm:$0xf] %vm9683, %v9623
        %9689 = vst.msk [vmem:[#allocation4 + $0x14] sm:$0xf] %vm9683, %v9625
        %9690 = vst.msk [vmem:[#allocation4 + $0x18] sm:$0xf] %vm9683, %v9627
        %9691 = vst.msk [vmem:[#allocation4 + $0x1c] sm:$0xf] %vm9683, %v9629
        %9692 = vst.msk [vmem:[#allocation4 + $0x20] sm:$0xf] %vm9683, %v9631
        %9693 = vst.msk [vmem:[#allocation4 + $0x24] sm:$0xf] %vm9683, %v9633
        %9694 = vst.msk [vmem:[#allocation4 + $0x28] sm:$0xf] %vm9683, %v9635
        %9695 = vst.msk [vmem:[#allocation4 + $0x2c] sm:$0xf] %vm9683, %v9637
        %9696 = vst.msk [vmem:[#allocation4 + $0x30] sm:$0xf] %vm9683, %v9639
        %9697 = vst.msk [vmem:[#allocation4 + $0x34] sm:$0xf] %vm9683, %v9641
        %9698 = vst.msk [vmem:[#allocation4 + $0x38] sm:$0xf] %vm9683, %v9643
        %9699 = vst.msk [vmem:[#allocation4 + $0x3c] sm:$0xf] %vm9683, %v9645
        %9700 = vst.msk [vmem:[#allocation4 + $0x40] sm:$0xf] %vm9683, %v9647
        %9701 = vst.msk [vmem:[#allocation4 + $0x44] sm:$0xf] %vm9683, %v9649
        %9702 = vst.msk [vmem:[#allocation4 + $0x48] sm:$0xf] %vm9683, %v9651
        %9703 = vst.msk [vmem:[#allocation4 + $0x4c] sm:$0xf] %vm9683, %v9653
        %9704 = vst.msk [vmem:[#allocation4 + $0x50] sm:$0xf] %vm9683, %v9655
        %9705 = vst.msk [vmem:[#allocation4 + $0x54] sm:$0xf] %vm9683, %v9657
        %vm9706 = vcmask 583168
        %9707 = vst.msk [vmem:[#allocation4 + $0x58] sm:$0x3] %vm9706, %v9659
        %v9708 = vld [vmem:[#allocation4] sm:$0xf]
        %v9709 = vld [vmem:[#allocation4 + $0x4] sm:$0xf]
        %v9710 = vld [vmem:[#allocation4 + $0x8] sm:$0xf]
        %v9711 = vld [vmem:[#allocation4 + $0xc] sm:$0xf]
        %v9712 = vld [vmem:[#allocation4 + $0x10] sm:$0xf]
        %v9713 = vld [vmem:[#allocation4 + $0x14] sm:$0xf]
        %v9714 = vld [vmem:[#allocation4 + $0x18] sm:$0xf]
        %v9715 = vld [vmem:[#allocation4 + $0x1c] sm:$0xf]
        %v9716 = vld [vmem:[#allocation4 + $0x20] sm:$0xf]
        %v9717 = vld [vmem:[#allocation4 + $0x24] sm:$0xf]
        %v9718 = vld [vmem:[#allocation4 + $0x28] sm:$0xf]
        %v9719 = vld [vmem:[#allocation4 + $0x2c] sm:$0xf]
        %v9720 = vld [vmem:[#allocation4 + $0x30] sm:$0xf]
        %v9721 = vld [vmem:[#allocation4 + $0x34] sm:$0xf]
        %v9722 = vld [vmem:[#allocation4 + $0x38] sm:$0xf]
        %v9723 = vld [vmem:[#allocation4 + $0x3c] sm:$0xf]
        %v9724 = vld [vmem:[#allocation4 + $0x40] sm:$0xf]
        %v9725 = vld [vmem:[#allocation4 + $0x44] sm:$0xf]
        %v9726 = vld [vmem:[#allocation4 + $0x48] sm:$0xf]
        %v9727 = vld [vmem:[#allocation4 + $0x4c] sm:$0xf]
        %v9728 = vld [vmem:[#allocation4 + $0x50] sm:$0xf]
        %v9729 = vld [vmem:[#allocation4 + $0x54] sm:$0xf]
        %v9730 = vld [vmem:[#allocation4 + $0x58] sm:$0x3]
        %v9731 = vld [vmem:[%s2] sm:$0xf]
        %v9732 = vld [vmem:[%s2 + $0x4] sm:$0xf]
        %v9733 = vld [vmem:[%s2 + $0x8] sm:$0xf]
        %v9734 = vld [vmem:[%s2 + $0xc] sm:$0xf]
        %v9735 = vld [vmem:[%s2 + $0x10] sm:$0xf]
        %v9736 = vld [vmem:[%s2 + $0x14] sm:$0xf]
        %v9737 = vld [vmem:[%s2 + $0x18] sm:$0xf]
        %v9738 = vld [vmem:[%s2 + $0x1c] sm:$0xf]
        %v9739 = vld [vmem:[%s2 + $0x20] sm:$0xf]
        %v9740 = vld [vmem:[%s3] sm:$0x1]
        %v9742 = vlaneseq
        %v9743 = vshrl.u32 %v9742, 7
        %v9744 = vsub.s32 0, %v9743
        %v9745 = vrot.slane %v9740, %v9744
        %v9770 = vunpack.c.l.b16 %v9708
        %v9771 = vunpack.c.l.b16 %v9709
        %v9772 = vunpack.c.l.b16 %v9710
        %v9773 = vunpack.c.l.b16 %v9711
        %v9774 = vunpack.c.l.b16 %v9712
        %v9775 = vunpack.c.l.b16 %v9713
        %v9776 = vunpack.c.l.b16 %v9714
        %v9777 = vunpack.c.l.b16 %v9715
        %v9778 = vunpack.c.l.b16 %v9716
        %v9779 = vunpack.c.l.b16 %v9717
        %v9780 = vunpack.c.l.b16 %v9718
        %v9781 = vunpack.c.l.b16 %v9719
        %v9782 = vunpack.c.l.b16 %v9720
        %v9783 = vunpack.c.l.b16 %v9721
        %v9784 = vunpack.c.l.b16 %v9722
        %v9785 = vunpack.c.l.b16 %v9723
        %v9786 = vunpack.c.l.b16 %v9724
        %v9787 = vunpack.c.l.b16 %v9725
        %v9788 = vunpack.c.l.b16 %v9726
        %v9789 = vunpack.c.l.b16 %v9727
        %v9790 = vunpack.c.l.b16 %v9728
        %v9791 = vunpack.c.l.b16 %v9729
        %v9792 = vunpack.c.l.b16 %v9730
        %v9793 = vpack.c.b16 %v9771, %v9770
        %v9794 = vpack.c.b16 %v9773, %v9772
        %v9795 = vpack.c.b16 %v9775, %v9774
        %v9796 = vpack.c.b16 %v9777, %v9776
        %v9797 = vpack.c.b16 %v9779, %v9778
        %v9798 = vpack.c.b16 %v9781, %v9780
        %v9799 = vpack.c.b16 %v9783, %v9782
        %v9800 = vpack.c.b16 %v9785, %v9784
        %v9801 = vpack.c.b16 %v9787, %v9786
        %v9802 = vpack.c.b16 %v9789, %v9788
        %v9803 = vpack.c.b16 %v9791, %v9790
        %v9804 = vpack.c.b16 %v9792, %v9792
        %v9814 = vunpack.c.l.b16 %v9731
        %v9815 = vunpack.c.l.b16 %v9732
        %v9816 = vunpack.c.l.b16 %v9733
        %v9817 = vunpack.c.l.b16 %v9734
        %v9818 = vunpack.c.l.b16 %v9735
        %v9819 = vunpack.c.l.b16 %v9736
        %v9820 = vunpack.c.l.b16 %v9737
        %v9821 = vunpack.c.l.b16 %v9738
        %v9822 = vunpack.c.l.b16 %v9739
        %v9823 = vpack.c.b16 %v9815, %v9814
        %v9824 = vpack.c.b16 %v9817, %v9816
        %v9825 = vpack.c.b16 %v9819, %v9818
        %v9826 = vpack.c.b16 %v9821, %v9820
        %v9827 = vpack.c.b16 %v9822, %v9822
        %vm9832 = vcmask 588800
        %v9834 = vsel %vm9832, %v9793, 0
        %v9837 = vsel %vm9832, %v9794, 0
        %v9840 = vsel %vm9832, %v9795, 0
        %v9843 = vsel %vm9832, %v9796, 0
        %v9846 = vsel %vm9832, %v9797, 0
        %v9849 = vsel %vm9832, %v9798, 0
        %v9852 = vsel %vm9832, %v9799, 0
        %v9855 = vsel %vm9832, %v9800, 0
        %v9858 = vsel %vm9832, %v9801, 0
        %v9861 = vsel %vm9832, %v9802, 0
        %v9864 = vsel %vm9832, %v9803, 0
        %v9867 = vsel %vm9832, %v9804, 0
        %vm9869 = vcmask 1043456
        %v9871 = vsel %vm9869, %v9827, 0
        %9873 = vmatprep.subr.bf16.mxu0 0
        %9874 = vmatpush1.bf16.msra.mxu0 0
        %9875 = vmatprep.subr.bf16.mxu0 0
        %9876 = vmatpush1.bf16.msra.mxu0 0
        %9877 = vmatprep.subr.bf16.mxu0 0
        %9878 = vmatpush1.bf16.msra.mxu0 0
        %9879 = vmatprep.subr.bf16.mxu0 0
        %9880 = vmatpush1.bf16.msra.mxu0 %v9871
        %9881 = vmatprep.subr.bf16.mxu0 0
        %9882 = vmatpush1.bf16.msra.mxu0 %v9826
        %9883 = vmatprep.subr.bf16.mxu0 0
        %9884 = vmatpush1.bf16.msra.mxu0 %v9825
        %9885 = vmatprep.subr.bf16.mxu0 0
        %9886 = vmatpush1.bf16.msra.mxu0 %v9824
        %9887 = vmatprep.subr.bf16.mxu0 0
        %9888 = vmatpush1.bf16.msra.mxu0 %v9823
        %9889 = vmatprep.subr.bf16.mxu0 0
        %9890 = vmatpush2.bf16.msra.mxu0 0
        %9891 = vmatprep.subr.bf16.mxu0 0
        %9892 = vmatpush2.bf16.msra.mxu0 0
        %9893 = vmatprep.subr.bf16.mxu0 0
        %9894 = vmatpush2.bf16.msra.mxu0 0
        %9895 = vmatprep.subr.bf16.mxu0 0
        %9896 = vmatpush2.bf16.msra.mxu0 0
        %9897 = vmatprep.subr.bf16.mxu0 0
        %9898 = vmatpush2.bf16.msra.mxu0 0
        %9899 = vmatprep.subr.bf16.mxu0 0
        %9900 = vmatpush2.bf16.msra.mxu0 0
        %9901 = vmatprep.subr.bf16.mxu0 0
        %9902 = vmatpush2.bf16.msra.mxu0 0
        %9903 = vmatprep.subr.bf16.mxu0 0
        %9904 = vmatpush2.bf16.msra.mxu0 0
        %9905 = vmatprep.mubr.bf16.mxu0 0
        %9906 = vmatmul.mubr.bf16.gmra.mxu0 %v9834
        %v9907 = vpop.f32.mrf.mxu0
        %v9908 = vadd.f32 %v9745, %v9907
        %v9909 = vpop.f32.mrf.mxu0
        %v9910 = vpop.f32.mrf.mxu0
        %v9911 = vadd.f32 %v9745, %v9910
        %v9912 = vpop.f32.mrf.mxu0
        %9913 = vmatprep.mubr.bf16.mxu0 0
        %9914 = vmatmul.mubr.bf16.gmra.mxu0 %v9837
        %v9915 = vpop.f32.mrf.mxu0
        %v9916 = vadd.f32 %v9745, %v9915
        %v9917 = vpop.f32.mrf.mxu0
        %v9918 = vpop.f32.mrf.mxu0
        %v9919 = vadd.f32 %v9745, %v9918
        %v9920 = vpop.f32.mrf.mxu0
        %9921 = vmatprep.mubr.bf16.mxu0 0
        %9922 = vmatmul.mubr.bf16.gmra.mxu0 %v9840
        %v9923 = vpop.f32.mrf.mxu0
        %v9924 = vadd.f32 %v9745, %v9923
        %v9925 = vpop.f32.mrf.mxu0
        %v9926 = vpop.f32.mrf.mxu0
        %v9927 = vadd.f32 %v9745, %v9926
        %v9928 = vpop.f32.mrf.mxu0
        %9929 = vmatprep.mubr.bf16.mxu0 0
        %9930 = vmatmul.mubr.bf16.gmra.mxu0 %v9843
        %v9931 = vpop.f32.mrf.mxu0
        %v9932 = vadd.f32 %v9745, %v9931
        %v9933 = vpop.f32.mrf.mxu0
        %v9934 = vpop.f32.mrf.mxu0
        %v9935 = vadd.f32 %v9745, %v9934
        %v9936 = vpop.f32.mrf.mxu0
        %9937 = vmatprep.mubr.bf16.mxu0 0
        %9938 = vmatmul.mubr.bf16.gmra.mxu0 %v9846
        %v9939 = vpop.f32.mrf.mxu0
        %v9940 = vadd.f32 %v9745, %v9939
        %v9941 = vpop.f32.mrf.mxu0
        %v9942 = vpop.f32.mrf.mxu0
        %v9943 = vadd.f32 %v9745, %v9942
        %v9944 = vpop.f32.mrf.mxu0
        %9945 = vmatprep.mubr.bf16.mxu0 0
        %9946 = vmatmul.mubr.bf16.gmra.mxu0 %v9849
        %v9947 = vpop.f32.mrf.mxu0
        %v9948 = vadd.f32 %v9745, %v9947
        %v9949 = vpop.f32.mrf.mxu0
        %v9950 = vpop.f32.mrf.mxu0
        %v9951 = vadd.f32 %v9745, %v9950
        %v9952 = vpop.f32.mrf.mxu0
        %9953 = vmatprep.mubr.bf16.mxu0 0
        %9954 = vmatmul.mubr.bf16.gmra.mxu0 %v9852
        %v9955 = vpop.f32.mrf.mxu0
        %v9956 = vadd.f32 %v9745, %v9955
        %v9957 = vpop.f32.mrf.mxu0
        %v9958 = vpop.f32.mrf.mxu0
        %v9959 = vadd.f32 %v9745, %v9958
        %v9960 = vpop.f32.mrf.mxu0
        %9961 = vmatprep.mubr.bf16.mxu0 0
        %9962 = vmatmul.mubr.bf16.gmra.mxu0 %v9855
        %v9963 = vpop.f32.mrf.mxu0
        %v9964 = vadd.f32 %v9745, %v9963
        %v9965 = vpop.f32.mrf.mxu0
        %v9966 = vpop.f32.mrf.mxu0
        %v9967 = vadd.f32 %v9745, %v9966
        %v9968 = vpop.f32.mrf.mxu0
        %9969 = vmatprep.mubr.bf16.mxu0 0
        %9970 = vmatmul.mubr.bf16.gmra.mxu0 %v9858
        %v9971 = vpop.f32.mrf.mxu0
        %v9972 = vadd.f32 %v9745, %v9971
        %v9973 = vpop.f32.mrf.mxu0
        %v9974 = vpop.f32.mrf.mxu0
        %v9975 = vadd.f32 %v9745, %v9974
        %v9976 = vpop.f32.mrf.mxu0
        %9977 = vmatprep.mubr.bf16.mxu0 0
        %9978 = vmatmul.mubr.bf16.gmra.mxu0 %v9861
        %v9979 = vpop.f32.mrf.mxu0
        %v9980 = vadd.f32 %v9745, %v9979
        %v9981 = vpop.f32.mrf.mxu0
        %v9982 = vpop.f32.mrf.mxu0
        %v9983 = vadd.f32 %v9745, %v9982
        %v9984 = vpop.f32.mrf.mxu0
        %9985 = vmatprep.mubr.bf16.mxu0 0
        %9986 = vmatmul.mubr.bf16.gmra.mxu0 %v9864
        %v9987 = vpop.f32.mrf.mxu0
        %v9988 = vadd.f32 %v9745, %v9987
        %v9989 = vpop.f32.mrf.mxu0
        %v9990 = vpop.f32.mrf.mxu0
        %v9991 = vadd.f32 %v9745, %v9990
        %v9992 = vpop.f32.mrf.mxu0
        %9993 = vmatprep.mubr.bf16.mxu0 0
        %9994 = vmatmul.mubr.bf16.gmra.mxu0 %v9867
        %v9995 = vpop.f32.mrf.mxu0
        %v9996 = vadd.f32 %v9745, %v9995
        %v9997 = vpop.f32.mrf.mxu0
        %v9998 = vpop.f32.mrf.mxu0
        %v9999 = vpop.f32.mrf.mxu0
        %10000 = vdwg.mxu0
        %v10001 = vmax.f32 %v9908, 0.0
        %v10002 = vmax.f32 %v9911, 0.0
        %v10003 = vmax.f32 %v9916, 0.0
        %v10004 = vmax.f32 %v9919, 0.0
        %v10005 = vmax.f32 %v9924, 0.0
        %v10006 = vmax.f32 %v9927, 0.0
        %v10007 = vmax.f32 %v9932, 0.0
        %v10008 = vmax.f32 %v9935, 0.0
        %v10009 = vmax.f32 %v9940, 0.0
        %v10010 = vmax.f32 %v9943, 0.0
        %v10011 = vmax.f32 %v9948, 0.0
        %v10012 = vmax.f32 %v9951, 0.0
        %v10013 = vmax.f32 %v9956, 0.0
        %v10014 = vmax.f32 %v9959, 0.0
        %v10015 = vmax.f32 %v9964, 0.0
        %v10016 = vmax.f32 %v9967, 0.0
        %v10017 = vmax.f32 %v9972, 0.0
        %v10018 = vmax.f32 %v9975, 0.0
        %v10019 = vmax.f32 %v9980, 0.0
        %v10020 = vmax.f32 %v9983, 0.0
        %v10021 = vmax.f32 %v9988, 0.0
        %v10022 = vmax.f32 %v9991, 0.0
        %v10023 = vmax.f32 %v9996, 0.0
        %v10047 = vcombine.high %v10001, %v10001
        %v10049 = vunpack.c.l.s4 1983009808
        %v10050 = vunpack.c.0.s8 %v10049
        %v10051 = vlaneseq
        %v10052 = vshrl.u32 %v10051, 7
        %v10053 = vsub.s32 %v10050, %v10052
        %v10054 = vrot.slane %v10001, %v10053
        %v10056 = vunpack.c.l.s4 1983009808
        %v10057 = vunpack.c.0.s8 %v10056
        %v10058 = vlaneseq
        %v10059 = vshrl.u32 %v10058, 7
        %v10060 = vsub.s32 %v10057, %v10059
        %v10061 = vrot.slane %v10047, %v10060
        %v10062 = vcombine.high %v10054, %v10054
        %v10063 = vcombine.high %v10061, %v10061
        %v10064 = vcombine.high %v10002, %v10002
        %v10066 = vunpack.c.l.s4 1983009808
        %v10067 = vunpack.c.0.s8 %v10066
        %v10068 = vlaneseq
        %v10069 = vshrl.u32 %v10068, 7
        %v10070 = vsub.s32 %v10067, %v10069
        %v10071 = vrot.slane %v10002, %v10070
        %v10073 = vunpack.c.l.s4 1983009808
        %v10074 = vunpack.c.0.s8 %v10073
        %v10075 = vlaneseq
        %v10076 = vshrl.u32 %v10075, 7
        %v10077 = vsub.s32 %v10074, %v10076
        %v10078 = vrot.slane %v10064, %v10077
        %v10079 = vcombine.high %v10071, %v10071
        %v10080 = vcombine.high %v10078, %v10078
        %v10081 = vcombine.high %v10003, %v10003
        %v10083 = vunpack.c.l.s4 1983009808
        %v10084 = vunpack.c.0.s8 %v10083
        %v10085 = vlaneseq
        %v10086 = vshrl.u32 %v10085, 7
        %v10087 = vsub.s32 %v10084, %v10086
        %v10088 = vrot.slane %v10003, %v10087
        %v10090 = vunpack.c.l.s4 1983009808
        %v10091 = vunpack.c.0.s8 %v10090
        %v10092 = vlaneseq
        %v10093 = vshrl.u32 %v10092, 7
        %v10094 = vsub.s32 %v10091, %v10093
        %v10095 = vrot.slane %v10081, %v10094
        %v10096 = vcombine.high %v10088, %v10088
        %v10097 = vcombine.high %v10095, %v10095
        %v10098 = vcombine.high %v10004, %v10004
        %v10100 = vunpack.c.l.s4 1983009808
        %v10101 = vunpack.c.0.s8 %v10100
        %v10102 = vlaneseq
        %v10103 = vshrl.u32 %v10102, 7
        %v10104 = vsub.s32 %v10101, %v10103
        %v10105 = vrot.slane %v10004, %v10104
        %v10107 = vunpack.c.l.s4 1983009808
        %v10108 = vunpack.c.0.s8 %v10107
        %v10109 = vlaneseq
        %v10110 = vshrl.u32 %v10109, 7
        %v10111 = vsub.s32 %v10108, %v10110
        %v10112 = vrot.slane %v10098, %v10111
        %v10113 = vcombine.high %v10105, %v10105
        %v10114 = vcombine.high %v10112, %v10112
        %v10115 = vcombine.high %v10005, %v10005
        %v10117 = vunpack.c.l.s4 1983009808
        %v10118 = vunpack.c.0.s8 %v10117
        %v10119 = vlaneseq
        %v10120 = vshrl.u32 %v10119, 7
        %v10121 = vsub.s32 %v10118, %v10120
        %v10122 = vrot.slane %v10005, %v10121
        %v10124 = vunpack.c.l.s4 1983009808
        %v10125 = vunpack.c.0.s8 %v10124
        %v10126 = vlaneseq
        %v10127 = vshrl.u32 %v10126, 7
        %v10128 = vsub.s32 %v10125, %v10127
        %v10129 = vrot.slane %v10115, %v10128
        %v10130 = vcombine.high %v10122, %v10122
        %v10131 = vcombine.high %v10129, %v10129
        %v10132 = vcombine.high %v10006, %v10006
        %v10134 = vunpack.c.l.s4 1983009808
        %v10135 = vunpack.c.0.s8 %v10134
        %v10136 = vlaneseq
        %v10137 = vshrl.u32 %v10136, 7
        %v10138 = vsub.s32 %v10135, %v10137
        %v10139 = vrot.slane %v10006, %v10138
        %v10141 = vunpack.c.l.s4 1983009808
        %v10142 = vunpack.c.0.s8 %v10141
        %v10143 = vlaneseq
        %v10144 = vshrl.u32 %v10143, 7
        %v10145 = vsub.s32 %v10142, %v10144
        %v10146 = vrot.slane %v10132, %v10145
        %v10147 = vcombine.high %v10139, %v10139
        %v10148 = vcombine.high %v10146, %v10146
        %v10149 = vcombine.high %v10007, %v10007
        %v10151 = vunpack.c.l.s4 1983009808
        %v10152 = vunpack.c.0.s8 %v10151
        %v10153 = vlaneseq
        %v10154 = vshrl.u32 %v10153, 7
        %v10155 = vsub.s32 %v10152, %v10154
        %v10156 = vrot.slane %v10007, %v10155
        %v10158 = vunpack.c.l.s4 1983009808
        %v10159 = vunpack.c.0.s8 %v10158
        %v10160 = vlaneseq
        %v10161 = vshrl.u32 %v10160, 7
        %v10162 = vsub.s32 %v10159, %v10161
        %v10163 = vrot.slane %v10149, %v10162
        %v10164 = vcombine.high %v10156, %v10156
        %v10165 = vcombine.high %v10163, %v10163
        %v10166 = vcombine.high %v10008, %v10008
        %v10168 = vunpack.c.l.s4 1983009808
        %v10169 = vunpack.c.0.s8 %v10168
        %v10170 = vlaneseq
        %v10171 = vshrl.u32 %v10170, 7
        %v10172 = vsub.s32 %v10169, %v10171
        %v10173 = vrot.slane %v10008, %v10172
        %v10175 = vunpack.c.l.s4 1983009808
        %v10176 = vunpack.c.0.s8 %v10175
        %v10177 = vlaneseq
        %v10178 = vshrl.u32 %v10177, 7
        %v10179 = vsub.s32 %v10176, %v10178
        %v10180 = vrot.slane %v10166, %v10179
        %v10181 = vcombine.high %v10173, %v10173
        %v10182 = vcombine.high %v10180, %v10180
        %v10183 = vcombine.high %v10009, %v10009
        %v10185 = vunpack.c.l.s4 1983009808
        %v10186 = vunpack.c.0.s8 %v10185
        %v10187 = vlaneseq
        %v10188 = vshrl.u32 %v10187, 7
        %v10189 = vsub.s32 %v10186, %v10188
        %v10190 = vrot.slane %v10009, %v10189
        %v10192 = vunpack.c.l.s4 1983009808
        %v10193 = vunpack.c.0.s8 %v10192
        %v10194 = vlaneseq
        %v10195 = vshrl.u32 %v10194, 7
        %v10196 = vsub.s32 %v10193, %v10195
        %v10197 = vrot.slane %v10183, %v10196
        %v10198 = vcombine.high %v10190, %v10190
        %v10199 = vcombine.high %v10197, %v10197
        %v10200 = vcombine.high %v10010, %v10010
        %v10202 = vunpack.c.l.s4 1983009808
        %v10203 = vunpack.c.0.s8 %v10202
        %v10204 = vlaneseq
        %v10205 = vshrl.u32 %v10204, 7
        %v10206 = vsub.s32 %v10203, %v10205
        %v10207 = vrot.slane %v10010, %v10206
        %v10209 = vunpack.c.l.s4 1983009808
        %v10210 = vunpack.c.0.s8 %v10209
        %v10211 = vlaneseq
        %v10212 = vshrl.u32 %v10211, 7
        %v10213 = vsub.s32 %v10210, %v10212
        %v10214 = vrot.slane %v10200, %v10213
        %v10215 = vcombine.high %v10207, %v10207
        %v10216 = vcombine.high %v10214, %v10214
        %v10217 = vcombine.high %v10011, %v10011
        %v10219 = vunpack.c.l.s4 1983009808
        %v10220 = vunpack.c.0.s8 %v10219
        %v10221 = vlaneseq
        %v10222 = vshrl.u32 %v10221, 7
        %v10223 = vsub.s32 %v10220, %v10222
        %v10224 = vrot.slane %v10011, %v10223
        %v10226 = vunpack.c.l.s4 1983009808
        %v10227 = vunpack.c.0.s8 %v10226
        %v10228 = vlaneseq
        %v10229 = vshrl.u32 %v10228, 7
        %v10230 = vsub.s32 %v10227, %v10229
        %v10231 = vrot.slane %v10217, %v10230
        %v10232 = vcombine.high %v10224, %v10224
        %v10233 = vcombine.high %v10231, %v10231
        %v10234 = vcombine.high %v10012, %v10012
        %v10236 = vunpack.c.l.s4 1983009808
        %v10237 = vunpack.c.0.s8 %v10236
        %v10238 = vlaneseq
        %v10239 = vshrl.u32 %v10238, 7
        %v10240 = vsub.s32 %v10237, %v10239
        %v10241 = vrot.slane %v10012, %v10240
        %v10243 = vunpack.c.l.s4 1983009808
        %v10244 = vunpack.c.0.s8 %v10243
        %v10245 = vlaneseq
        %v10246 = vshrl.u32 %v10245, 7
        %v10247 = vsub.s32 %v10244, %v10246
        %v10248 = vrot.slane %v10234, %v10247
        %v10249 = vcombine.high %v10241, %v10241
        %v10250 = vcombine.high %v10248, %v10248
        %v10251 = vcombine.high %v10013, %v10013
        %v10253 = vunpack.c.l.s4 1983009808
        %v10254 = vunpack.c.0.s8 %v10253
        %v10255 = vlaneseq
        %v10256 = vshrl.u32 %v10255, 7
        %v10257 = vsub.s32 %v10254, %v10256
        %v10258 = vrot.slane %v10013, %v10257
        %v10260 = vunpack.c.l.s4 1983009808
        %v10261 = vunpack.c.0.s8 %v10260
        %v10262 = vlaneseq
        %v10263 = vshrl.u32 %v10262, 7
        %v10264 = vsub.s32 %v10261, %v10263
        %v10265 = vrot.slane %v10251, %v10264
        %v10266 = vcombine.high %v10258, %v10258
        %v10267 = vcombine.high %v10265, %v10265
        %v10268 = vcombine.high %v10014, %v10014
        %v10270 = vunpack.c.l.s4 1983009808
        %v10271 = vunpack.c.0.s8 %v10270
        %v10272 = vlaneseq
        %v10273 = vshrl.u32 %v10272, 7
        %v10274 = vsub.s32 %v10271, %v10273
        %v10275 = vrot.slane %v10014, %v10274
        %v10277 = vunpack.c.l.s4 1983009808
        %v10278 = vunpack.c.0.s8 %v10277
        %v10279 = vlaneseq
        %v10280 = vshrl.u32 %v10279, 7
        %v10281 = vsub.s32 %v10278, %v10280
        %v10282 = vrot.slane %v10268, %v10281
        %v10283 = vcombine.high %v10275, %v10275
        %v10284 = vcombine.high %v10282, %v10282
        %v10285 = vcombine.high %v10015, %v10015
        %v10287 = vunpack.c.l.s4 1983009808
        %v10288 = vunpack.c.0.s8 %v10287
        %v10289 = vlaneseq
        %v10290 = vshrl.u32 %v10289, 7
        %v10291 = vsub.s32 %v10288, %v10290
        %v10292 = vrot.slane %v10015, %v10291
        %v10294 = vunpack.c.l.s4 1983009808
        %v10295 = vunpack.c.0.s8 %v10294
        %v10296 = vlaneseq
        %v10297 = vshrl.u32 %v10296, 7
        %v10298 = vsub.s32 %v10295, %v10297
        %v10299 = vrot.slane %v10285, %v10298
        %v10300 = vcombine.high %v10292, %v10292
        %v10301 = vcombine.high %v10299, %v10299
        %v10302 = vcombine.high %v10016, %v10016
        %v10304 = vunpack.c.l.s4 1983009808
        %v10305 = vunpack.c.0.s8 %v10304
        %v10306 = vlaneseq
        %v10307 = vshrl.u32 %v10306, 7
        %v10308 = vsub.s32 %v10305, %v10307
        %v10309 = vrot.slane %v10016, %v10308
        %v10311 = vunpack.c.l.s4 1983009808
        %v10312 = vunpack.c.0.s8 %v10311
        %v10313 = vlaneseq
        %v10314 = vshrl.u32 %v10313, 7
        %v10315 = vsub.s32 %v10312, %v10314
        %v10316 = vrot.slane %v10302, %v10315
        %v10317 = vcombine.high %v10309, %v10309
        %v10318 = vcombine.high %v10316, %v10316
        %v10319 = vcombine.high %v10017, %v10017
        %v10321 = vunpack.c.l.s4 1983009808
        %v10322 = vunpack.c.0.s8 %v10321
        %v10323 = vlaneseq
        %v10324 = vshrl.u32 %v10323, 7
        %v10325 = vsub.s32 %v10322, %v10324
        %v10326 = vrot.slane %v10017, %v10325
        %v10328 = vunpack.c.l.s4 1983009808
        %v10329 = vunpack.c.0.s8 %v10328
        %v10330 = vlaneseq
        %v10331 = vshrl.u32 %v10330, 7
        %v10332 = vsub.s32 %v10329, %v10331
        %v10333 = vrot.slane %v10319, %v10332
        %v10334 = vcombine.high %v10326, %v10326
        %v10335 = vcombine.high %v10333, %v10333
        %v10336 = vcombine.high %v10018, %v10018
        %v10338 = vunpack.c.l.s4 1983009808
        %v10339 = vunpack.c.0.s8 %v10338
        %v10340 = vlaneseq
        %v10341 = vshrl.u32 %v10340, 7
        %v10342 = vsub.s32 %v10339, %v10341
        %v10343 = vrot.slane %v10018, %v10342
        %v10345 = vunpack.c.l.s4 1983009808
        %v10346 = vunpack.c.0.s8 %v10345
        %v10347 = vlaneseq
        %v10348 = vshrl.u32 %v10347, 7
        %v10349 = vsub.s32 %v10346, %v10348
        %v10350 = vrot.slane %v10336, %v10349
        %v10351 = vcombine.high %v10343, %v10343
        %v10352 = vcombine.high %v10350, %v10350
        %v10353 = vcombine.high %v10019, %v10019
        %v10355 = vunpack.c.l.s4 1983009808
        %v10356 = vunpack.c.0.s8 %v10355
        %v10357 = vlaneseq
        %v10358 = vshrl.u32 %v10357, 7
        %v10359 = vsub.s32 %v10356, %v10358
        %v10360 = vrot.slane %v10019, %v10359
        %v10362 = vunpack.c.l.s4 1983009808
        %v10363 = vunpack.c.0.s8 %v10362
        %v10364 = vlaneseq
        %v10365 = vshrl.u32 %v10364, 7
        %v10366 = vsub.s32 %v10363, %v10365
        %v10367 = vrot.slane %v10353, %v10366
        %v10368 = vcombine.high %v10360, %v10360
        %v10369 = vcombine.high %v10367, %v10367
        %v10370 = vcombine.high %v10020, %v10020
        %v10372 = vunpack.c.l.s4 1983009808
        %v10373 = vunpack.c.0.s8 %v10372
        %v10374 = vlaneseq
        %v10375 = vshrl.u32 %v10374, 7
        %v10376 = vsub.s32 %v10373, %v10375
        %v10377 = vrot.slane %v10020, %v10376
        %v10379 = vunpack.c.l.s4 1983009808
        %v10380 = vunpack.c.0.s8 %v10379
        %v10381 = vlaneseq
        %v10382 = vshrl.u32 %v10381, 7
        %v10383 = vsub.s32 %v10380, %v10382
        %v10384 = vrot.slane %v10370, %v10383
        %v10385 = vcombine.high %v10377, %v10377
        %v10386 = vcombine.high %v10384, %v10384
        %v10387 = vcombine.high %v10021, %v10021
        %v10389 = vunpack.c.l.s4 1983009808
        %v10390 = vunpack.c.0.s8 %v10389
        %v10391 = vlaneseq
        %v10392 = vshrl.u32 %v10391, 7
        %v10393 = vsub.s32 %v10390, %v10392
        %v10394 = vrot.slane %v10021, %v10393
        %v10396 = vunpack.c.l.s4 1983009808
        %v10397 = vunpack.c.0.s8 %v10396
        %v10398 = vlaneseq
        %v10399 = vshrl.u32 %v10398, 7
        %v10400 = vsub.s32 %v10397, %v10399
        %v10401 = vrot.slane %v10387, %v10400
        %v10402 = vcombine.high %v10394, %v10394
        %v10403 = vcombine.high %v10401, %v10401
        %v10404 = vcombine.high %v10022, %v10022
        %v10406 = vunpack.c.l.s4 1983009808
        %v10407 = vunpack.c.0.s8 %v10406
        %v10408 = vlaneseq
        %v10409 = vshrl.u32 %v10408, 7
        %v10410 = vsub.s32 %v10407, %v10409
        %v10411 = vrot.slane %v10022, %v10410
        %v10413 = vunpack.c.l.s4 1983009808
        %v10414 = vunpack.c.0.s8 %v10413
        %v10415 = vlaneseq
        %v10416 = vshrl.u32 %v10415, 7
        %v10417 = vsub.s32 %v10414, %v10416
        %v10418 = vrot.slane %v10404, %v10417
        %v10419 = vcombine.high %v10411, %v10411
        %v10420 = vcombine.high %v10418, %v10418
        %v10422 = vunpack.c.l.s4 1983009808
        %v10423 = vunpack.c.0.s8 %v10422
        %v10424 = vlaneseq
        %v10425 = vshrl.u32 %v10424, 7
        %v10426 = vsub.s32 %v10423, %v10425
        %v10427 = vrot.slane %v10023, %v10426
        %v10428 = vcombine.high %v10427, %v10427
        %v10429 = vcombine.low %v10054, %v10062
        %v10430 = vcombine.low %v10061, %v10063
        %v10432 = vunpack.c.l.s4 1983009808
        %v10433 = vunpack.c.0.s8 %v10432
        %v10434 = vlaneseq
        %v10435 = vshrl.u32 %v10434, 7
        %v10436 = vsub.s32 %v10433, %v10435
        %v10437 = vrot.slane %v10429, %v10436
        %v10439 = vunpack.c.l.s4 1983009808
        %v10440 = vunpack.c.0.s8 %v10439
        %v10441 = vlaneseq
        %v10442 = vshrl.u32 %v10441, 7
        %v10443 = vsub.s32 %v10440, %v10442
        %v10444 = vrot.slane %v10430, %v10443
        %v10445 = vcombine.low %v10437, %v10444
        %v10446 = vcombine.low %v10071, %v10079
        %v10447 = vcombine.low %v10078, %v10080
        %v10449 = vunpack.c.l.s4 1983009808
        %v10450 = vunpack.c.0.s8 %v10449
        %v10451 = vlaneseq
        %v10452 = vshrl.u32 %v10451, 7
        %v10453 = vsub.s32 %v10450, %v10452
        %v10454 = vrot.slane %v10446, %v10453
        %v10456 = vunpack.c.l.s4 1983009808
        %v10457 = vunpack.c.0.s8 %v10456
        %v10458 = vlaneseq
        %v10459 = vshrl.u32 %v10458, 7
        %v10460 = vsub.s32 %v10457, %v10459
        %v10461 = vrot.slane %v10447, %v10460
        %v10462 = vcombine.low %v10454, %v10461
        %v10464 = vunpack.c.l.s4 1983009808
        %v10465 = vunpack.c.0.s8 %v10464
        %v10466 = vlaneseq
        %v10467 = vshrl.u32 %v10466, 7
        %v10468 = vsub.s32 %v10465, %v10467
        %v10469 = vrot.slane %v10088, %v10468
        %v10470 = vcombine.low %v10096, %v10095
        %v10471 = vcombine.low %v10097, %v10105
        %v10473 = vunpack.c.l.s4 1983009808
        %v10474 = vunpack.c.0.s8 %v10473
        %v10475 = vlaneseq
        %v10476 = vshrl.u32 %v10475, 7
        %v10477 = vsub.s32 %v10474, %v10476
        %v10478 = vrot.slane %v10470, %v10477
        %v10480 = vunpack.c.l.s4 1983009808
        %v10481 = vunpack.c.0.s8 %v10480
        %v10482 = vlaneseq
        %v10483 = vshrl.u32 %v10482, 7
        %v10484 = vsub.s32 %v10481, %v10483
        %v10485 = vrot.slane %v10471, %v10484
        %v10486 = vcombine.low %v10478, %v10485
        %v10487 = vcombine.low %v10113, %v10112
        %v10488 = vcombine.low %v10114, %v10122
        %v10490 = vunpack.c.l.s4 1983009808
        %v10491 = vunpack.c.0.s8 %v10490
        %v10492 = vlaneseq
        %v10493 = vshrl.u32 %v10492, 7
        %v10494 = vsub.s32 %v10491, %v10493
        %v10495 = vrot.slane %v10487, %v10494
        %v10497 = vunpack.c.l.s4 1983009808
        %v10498 = vunpack.c.0.s8 %v10497
        %v10499 = vlaneseq
        %v10500 = vshrl.u32 %v10499, 7
        %v10501 = vsub.s32 %v10498, %v10500
        %v10502 = vrot.slane %v10488, %v10501
        %v10503 = vcombine.low %v10495, %v10502
        %v10505 = vunpack.c.l.s4 1983009808
        %v10506 = vunpack.c.0.s8 %v10505
        %v10507 = vlaneseq
        %v10508 = vshrl.u32 %v10507, 7
        %v10509 = vsub.s32 %v10506, %v10508
        %v10510 = vrot.slane %v10130, %v10509
        %v10511 = vcombine.low %v10129, %v10131
        %v10512 = vcombine.low %v10139, %v10147
        %v10514 = vunpack.c.l.s4 1983009808
        %v10515 = vunpack.c.0.s8 %v10514
        %v10516 = vlaneseq
        %v10517 = vshrl.u32 %v10516, 7
        %v10518 = vsub.s32 %v10515, %v10517
        %v10519 = vrot.slane %v10511, %v10518
        %v10521 = vunpack.c.l.s4 1983009808
        %v10522 = vunpack.c.0.s8 %v10521
        %v10523 = vlaneseq
        %v10524 = vshrl.u32 %v10523, 7
        %v10525 = vsub.s32 %v10522, %v10524
        %v10526 = vrot.slane %v10512, %v10525
        %v10527 = vcombine.low %v10519, %v10526
        %v10528 = vcombine.low %v10146, %v10148
        %v10529 = vcombine.low %v10156, %v10164
        %v10531 = vunpack.c.l.s4 1983009808
        %v10532 = vunpack.c.0.s8 %v10531
        %v10533 = vlaneseq
        %v10534 = vshrl.u32 %v10533, 7
        %v10535 = vsub.s32 %v10532, %v10534
        %v10536 = vrot.slane %v10528, %v10535
        %v10538 = vunpack.c.l.s4 1983009808
        %v10539 = vunpack.c.0.s8 %v10538
        %v10540 = vlaneseq
        %v10541 = vshrl.u32 %v10540, 7
        %v10542 = vsub.s32 %v10539, %v10541
        %v10543 = vrot.slane %v10529, %v10542
        %v10544 = vcombine.low %v10536, %v10543
        %v10546 = vunpack.c.l.s4 1983009808
        %v10547 = vunpack.c.0.s8 %v10546
        %v10548 = vlaneseq
        %v10549 = vshrl.u32 %v10548, 7
        %v10550 = vsub.s32 %v10547, %v10549
        %v10551 = vrot.slane %v10163, %v10550
        %v10552 = vcombine.low %v10165, %v10173
        %v10553 = vcombine.low %v10181, %v10180
        %v10555 = vunpack.c.l.s4 1983009808
        %v10556 = vunpack.c.0.s8 %v10555
        %v10557 = vlaneseq
        %v10558 = vshrl.u32 %v10557, 7
        %v10559 = vsub.s32 %v10556, %v10558
        %v10560 = vrot.slane %v10552, %v10559
        %v10562 = vunpack.c.l.s4 1983009808
        %v10563 = vunpack.c.0.s8 %v10562
        %v10564 = vlaneseq
        %v10565 = vshrl.u32 %v10564, 7
        %v10566 = vsub.s32 %v10563, %v10565
        %v10567 = vrot.slane %v10553, %v10566
        %v10568 = vcombine.low %v10560, %v10567
        %v10569 = vcombine.low %v10182, %v10190
        %v10570 = vcombine.low %v10198, %v10197
        %v10572 = vunpack.c.l.s4 1983009808
        %v10573 = vunpack.c.0.s8 %v10572
        %v10574 = vlaneseq
        %v10575 = vshrl.u32 %v10574, 7
        %v10576 = vsub.s32 %v10573, %v10575
        %v10577 = vrot.slane %v10569, %v10576
        %v10579 = vunpack.c.l.s4 1983009808
        %v10580 = vunpack.c.0.s8 %v10579
        %v10581 = vlaneseq
        %v10582 = vshrl.u32 %v10581, 7
        %v10583 = vsub.s32 %v10580, %v10582
        %v10584 = vrot.slane %v10570, %v10583
        %v10585 = vcombine.low %v10577, %v10584
        %v10587 = vunpack.c.l.s4 1983009808
        %v10588 = vunpack.c.0.s8 %v10587
        %v10589 = vlaneseq
        %v10590 = vshrl.u32 %v10589, 7
        %v10591 = vsub.s32 %v10588, %v10590
        %v10592 = vrot.slane %v10199, %v10591
        %v10593 = vcombine.low %v10207, %v10215
        %v10594 = vcombine.low %v10214, %v10216
        %v10596 = vunpack.c.l.s4 1983009808
        %v10597 = vunpack.c.0.s8 %v10596
        %v10598 = vlaneseq
        %v10599 = vshrl.u32 %v10598, 7
        %v10600 = vsub.s32 %v10597, %v10599
        %v10601 = vrot.slane %v10593, %v10600
        %v10603 = vunpack.c.l.s4 1983009808
        %v10604 = vunpack.c.0.s8 %v10603
        %v10605 = vlaneseq
        %v10606 = vshrl.u32 %v10605, 7
        %v10607 = vsub.s32 %v10604, %v10606
        %v10608 = vrot.slane %v10594, %v10607
        %v10609 = vcombine.low %v10601, %v10608
        %v10610 = vcombine.low %v10224, %v10232
        %v10611 = vcombine.low %v10231, %v10233
        %v10613 = vunpack.c.l.s4 1983009808
        %v10614 = vunpack.c.0.s8 %v10613
        %v10615 = vlaneseq
        %v10616 = vshrl.u32 %v10615, 7
        %v10617 = vsub.s32 %v10614, %v10616
        %v10618 = vrot.slane %v10610, %v10617
        %v10620 = vunpack.c.l.s4 1983009808
        %v10621 = vunpack.c.0.s8 %v10620
        %v10622 = vlaneseq
        %v10623 = vshrl.u32 %v10622, 7
        %v10624 = vsub.s32 %v10621, %v10623
        %v10625 = vrot.slane %v10611, %v10624
        %v10626 = vcombine.low %v10618, %v10625
        %v10628 = vunpack.c.l.s4 1983009808
        %v10629 = vunpack.c.0.s8 %v10628
        %v10630 = vlaneseq
        %v10631 = vshrl.u32 %v10630, 7
        %v10632 = vsub.s32 %v10629, %v10631
        %v10633 = vrot.slane %v10241, %v10632
        %v10634 = vcombine.low %v10249, %v10248
        %v10635 = vcombine.low %v10250, %v10258
        %v10637 = vunpack.c.l.s4 1983009808
        %v10638 = vunpack.c.0.s8 %v10637
        %v10639 = vlaneseq
        %v10640 = vshrl.u32 %v10639, 7
        %v10641 = vsub.s32 %v10638, %v10640
        %v10642 = vrot.slane %v10634, %v10641
        %v10644 = vunpack.c.l.s4 1983009808
        %v10645 = vunpack.c.0.s8 %v10644
        %v10646 = vlaneseq
        %v10647 = vshrl.u32 %v10646, 7
        %v10648 = vsub.s32 %v10645, %v10647
        %v10649 = vrot.slane %v10635, %v10648
        %v10650 = vcombine.low %v10642, %v10649
        %v10651 = vcombine.low %v10266, %v10265
        %v10652 = vcombine.low %v10267, %v10275
        %v10654 = vunpack.c.l.s4 1983009808
        %v10655 = vunpack.c.0.s8 %v10654
        %v10656 = vlaneseq
        %v10657 = vshrl.u32 %v10656, 7
        %v10658 = vsub.s32 %v10655, %v10657
        %v10659 = vrot.slane %v10651, %v10658
        %v10661 = vunpack.c.l.s4 1983009808
        %v10662 = vunpack.c.0.s8 %v10661
        %v10663 = vlaneseq
        %v10664 = vshrl.u32 %v10663, 7
        %v10665 = vsub.s32 %v10662, %v10664
        %v10666 = vrot.slane %v10652, %v10665
        %v10667 = vcombine.low %v10659, %v10666
        %v10669 = vunpack.c.l.s4 1983009808
        %v10670 = vunpack.c.0.s8 %v10669
        %v10671 = vlaneseq
        %v10672 = vshrl.u32 %v10671, 7
        %v10673 = vsub.s32 %v10670, %v10672
        %v10674 = vrot.slane %v10283, %v10673
        %v10675 = vcombine.low %v10282, %v10284
        %v10676 = vcombine.low %v10292, %v10300
        %v10678 = vunpack.c.l.s4 1983009808
        %v10679 = vunpack.c.0.s8 %v10678
        %v10680 = vlaneseq
        %v10681 = vshrl.u32 %v10680, 7
        %v10682 = vsub.s32 %v10679, %v10681
        %v10683 = vrot.slane %v10675, %v10682
        %v10685 = vunpack.c.l.s4 1983009808
        %v10686 = vunpack.c.0.s8 %v10685
        %v10687 = vlaneseq
        %v10688 = vshrl.u32 %v10687, 7
        %v10689 = vsub.s32 %v10686, %v10688
        %v10690 = vrot.slane %v10676, %v10689
        %v10691 = vcombine.low %v10683, %v10690
        %v10692 = vcombine.low %v10299, %v10301
        %v10693 = vcombine.low %v10309, %v10317
        %v10695 = vunpack.c.l.s4 1983009808
        %v10696 = vunpack.c.0.s8 %v10695
        %v10697 = vlaneseq
        %v10698 = vshrl.u32 %v10697, 7
        %v10699 = vsub.s32 %v10696, %v10698
        %v10700 = vrot.slane %v10692, %v10699
        %v10702 = vunpack.c.l.s4 1983009808
        %v10703 = vunpack.c.0.s8 %v10702
        %v10704 = vlaneseq
        %v10705 = vshrl.u32 %v10704, 7
        %v10706 = vsub.s32 %v10703, %v10705
        %v10707 = vrot.slane %v10693, %v10706
        %v10708 = vcombine.low %v10700, %v10707
        %v10710 = vunpack.c.l.s4 1983009808
        %v10711 = vunpack.c.0.s8 %v10710
        %v10712 = vlaneseq
        %v10713 = vshrl.u32 %v10712, 7
        %v10714 = vsub.s32 %v10711, %v10713
        %v10715 = vrot.slane %v10316, %v10714
        %v10716 = vcombine.low %v10318, %v10326
        %v10717 = vcombine.low %v10334, %v10333
        %v10719 = vunpack.c.l.s4 1983009808
        %v10720 = vunpack.c.0.s8 %v10719
        %v10721 = vlaneseq
        %v10722 = vshrl.u32 %v10721, 7
        %v10723 = vsub.s32 %v10720, %v10722
        %v10724 = vrot.slane %v10716, %v10723
        %v10726 = vunpack.c.l.s4 1983009808
        %v10727 = vunpack.c.0.s8 %v10726
        %v10728 = vlaneseq
        %v10729 = vshrl.u32 %v10728, 7
        %v10730 = vsub.s32 %v10727, %v10729
        %v10731 = vrot.slane %v10717, %v10730
        %v10732 = vcombine.low %v10724, %v10731
        %v10733 = vcombine.low %v10335, %v10343
        %v10734 = vcombine.low %v10351, %v10350
        %v10736 = vunpack.c.l.s4 1983009808
        %v10737 = vunpack.c.0.s8 %v10736
        %v10738 = vlaneseq
        %v10739 = vshrl.u32 %v10738, 7
        %v10740 = vsub.s32 %v10737, %v10739
        %v10741 = vrot.slane %v10733, %v10740
        %v10743 = vunpack.c.l.s4 1983009808
        %v10744 = vunpack.c.0.s8 %v10743
        %v10745 = vlaneseq
        %v10746 = vshrl.u32 %v10745, 7
        %v10747 = vsub.s32 %v10744, %v10746
        %v10748 = vrot.slane %v10734, %v10747
        %v10749 = vcombine.low %v10741, %v10748
        %v10751 = vunpack.c.l.s4 1983009808
        %v10752 = vunpack.c.0.s8 %v10751
        %v10753 = vlaneseq
        %v10754 = vshrl.u32 %v10753, 7
        %v10755 = vsub.s32 %v10752, %v10754
        %v10756 = vrot.slane %v10352, %v10755
        %v10757 = vcombine.low %v10360, %v10368
        %v10758 = vcombine.low %v10367, %v10369
        %v10760 = vunpack.c.l.s4 1983009808
        %v10761 = vunpack.c.0.s8 %v10760
        %v10762 = vlaneseq
        %v10763 = vshrl.u32 %v10762, 7
        %v10764 = vsub.s32 %v10761, %v10763
        %v10765 = vrot.slane %v10757, %v10764
        %v10767 = vunpack.c.l.s4 1983009808
        %v10768 = vunpack.c.0.s8 %v10767
        %v10769 = vlaneseq
        %v10770 = vshrl.u32 %v10769, 7
        %v10771 = vsub.s32 %v10768, %v10770
        %v10772 = vrot.slane %v10758, %v10771
        %v10773 = vcombine.low %v10765, %v10772
        %v10774 = vcombine.low %v10377, %v10385
        %v10775 = vcombine.low %v10384, %v10386
        %v10777 = vunpack.c.l.s4 1983009808
        %v10778 = vunpack.c.0.s8 %v10777
        %v10779 = vlaneseq
        %v10780 = vshrl.u32 %v10779, 7
        %v10781 = vsub.s32 %v10778, %v10780
        %v10782 = vrot.slane %v10774, %v10781
        %v10784 = vunpack.c.l.s4 1983009808
        %v10785 = vunpack.c.0.s8 %v10784
        %v10786 = vlaneseq
        %v10787 = vshrl.u32 %v10786, 7
        %v10788 = vsub.s32 %v10785, %v10787
        %v10789 = vrot.slane %v10775, %v10788
        %v10790 = vcombine.low %v10782, %v10789
        %v10792 = vunpack.c.l.s4 1983009808
        %v10793 = vunpack.c.0.s8 %v10792
        %v10794 = vlaneseq
        %v10795 = vshrl.u32 %v10794, 7
        %v10796 = vsub.s32 %v10793, %v10795
        %v10797 = vrot.slane %v10394, %v10796
        %v10798 = vcombine.low %v10402, %v10401
        %v10799 = vcombine.low %v10403, %v10411
        %v10801 = vunpack.c.l.s4 1983009808
        %v10802 = vunpack.c.0.s8 %v10801
        %v10803 = vlaneseq
        %v10804 = vshrl.u32 %v10803, 7
        %v10805 = vsub.s32 %v10802, %v10804
        %v10806 = vrot.slane %v10798, %v10805
        %v10808 = vunpack.c.l.s4 1983009808
        %v10809 = vunpack.c.0.s8 %v10808
        %v10810 = vlaneseq
        %v10811 = vshrl.u32 %v10810, 7
        %v10812 = vsub.s32 %v10809, %v10811
        %v10813 = vrot.slane %v10799, %v10812
        %v10814 = vcombine.low %v10806, %v10813
        %v10815 = vcombine.low %v10419, %v10418
        %v10816 = vcombine.low %v10420, %v10427
        %v10818 = vunpack.c.l.s4 1983009808
        %v10819 = vunpack.c.0.s8 %v10818
        %v10820 = vlaneseq
        %v10821 = vshrl.u32 %v10820, 7
        %v10822 = vsub.s32 %v10819, %v10821
        %v10823 = vrot.slane %v10815, %v10822
        %v10825 = vunpack.c.l.s4 1983009808
        %v10826 = vunpack.c.0.s8 %v10825
        %v10827 = vlaneseq
        %v10828 = vshrl.u32 %v10827, 7
        %v10829 = vsub.s32 %v10826, %v10828
        %v10830 = vrot.slane %v10816, %v10829
        %v10831 = vcombine.low %v10823, %v10830
        %v10833 = vunpack.c.l.s4 1983009808
        %v10834 = vunpack.c.0.s8 %v10833
        %v10835 = vlaneseq
        %v10836 = vshrl.u32 %v10835, 7
        %v10837 = vsub.s32 %v10834, %v10836
        %v10838 = vrot.slane %v10428, %v10837
        %10869 = vst.msk [vmem:[#allocation3] sm:$0xff] %vm344, %v10445
        %10870 = vst.msk [vmem:[#allocation3 + $0x8] sm:$0xff] %vm344, %v10462
        %10871 = vst.msk [vmem:[#allocation3 + $0x10] sm:$0x3] %vm378, %v10469
        %10872 = vst.msk [vmem:[#allocation3 + $0x18] sm:$0xff] %vm344, %v10486
        %10873 = vst.msk [vmem:[#allocation3 + $0x20] sm:$0xff] %vm344, %v10503
        %10874 = vst.msk [vmem:[#allocation3 + $0x28] sm:$0x3] %vm378, %v10510
        %10875 = vst.msk [vmem:[#allocation3 + $0x30] sm:$0xff] %vm344, %v10527
        %10876 = vst.msk [vmem:[#allocation3 + $0x38] sm:$0xff] %vm344, %v10544
        %10877 = vst.msk [vmem:[#allocation3 + $0x40] sm:$0x3] %vm378, %v10551
        %10878 = vst.msk [vmem:[#allocation3 + $0x48] sm:$0xff] %vm344, %v10568
        %10879 = vst.msk [vmem:[#allocation3 + $0x50] sm:$0xff] %vm344, %v10585
        %10880 = vst.msk [vmem:[#allocation3 + $0x58] sm:$0x3] %vm378, %v10592
        %10881 = vst.msk [vmem:[#allocation3 + $0x60] sm:$0xff] %vm344, %v10609
        %10882 = vst.msk [vmem:[#allocation3 + $0x68] sm:$0xff] %vm344, %v10626
        %10883 = vst.msk [vmem:[#allocation3 + $0x70] sm:$0x3] %vm378, %v10633
        %10884 = vst.msk [vmem:[#allocation3 + $0x78] sm:$0xff] %vm344, %v10650
        %10885 = vst.msk [vmem:[#allocation3 + $0x80] sm:$0xff] %vm344, %v10667
        %10886 = vst.msk [vmem:[#allocation3 + $0x88] sm:$0x3] %vm378, %v10674
        %10887 = vst.msk [vmem:[#allocation3 + $0x90] sm:$0xff] %vm344, %v10691
        %10888 = vst.msk [vmem:[#allocation3 + $0x98] sm:$0xff] %vm344, %v10708
        %10889 = vst.msk [vmem:[#allocation3 + $0xa0] sm:$0x3] %vm378, %v10715
        %10890 = vst.msk [vmem:[#allocation3 + $0xa8] sm:$0xff] %vm344, %v10732
        %10891 = vst.msk [vmem:[#allocation3 + $0xb0] sm:$0xff] %vm344, %v10749
        %10892 = vst.msk [vmem:[#allocation3 + $0xb8] sm:$0x3] %vm378, %v10756
        %10893 = vst.msk [vmem:[#allocation3 + $0xc0] sm:$0xff] %vm344, %v10773
        %10894 = vst.msk [vmem:[#allocation3 + $0xc8] sm:$0xff] %vm344, %v10790
        %10895 = vst.msk [vmem:[#allocation3 + $0xd0] sm:$0x3] %vm378, %v10797
        %10896 = vst.msk [vmem:[#allocation3 + $0xd8] sm:$0xff] %vm344, %v10814
        %10897 = vst.msk [vmem:[#allocation3 + $0xe0] sm:$0xff] %vm344, %v10831
        %10898 = vst.msk [vmem:[#allocation3 + $0xe8] sm:$0x3] %vm378, %v10838
        %vm10899 = vcmask 57344
        %10900 = vst.msk [vmem:[#allocation3] sm:$0x1] %vm10899, 0.0
        %10901 = vst.msk [vmem:[#allocation3 + $0x18] sm:$0x1] %vm10899, 0.0
        %10902 = vst.msk [vmem:[#allocation3 + $0x30] sm:$0x1] %vm10899, 0.0
        %10903 = vst.msk [vmem:[#allocation3 + $0x48] sm:$0x1] %vm10899, 0.0
        %10904 = vst.msk [vmem:[#allocation3 + $0x60] sm:$0x1] %vm10899, 0.0
        %10905 = vst.msk [vmem:[#allocation3 + $0x78] sm:$0x1] %vm10899, 0.0
        %10906 = vst.msk [vmem:[#allocation3 + $0x90] sm:$0x1] %vm10899, 0.0
        %10907 = vst.msk [vmem:[#allocation3 + $0xa8] sm:$0x1] %vm10899, 0.0
        %10908 = vst.msk [vmem:[#allocation3 + $0xc0] sm:$0x1] %vm10899, 0.0
        %10909 = vst.msk [vmem:[#allocation3 + $0xd8] sm:$0x1] %vm10899, 0.0
        %10910 = vst.msk [vmem:[#allocation3 + $0x11] sm:$0x1] %vm10899, 0.0
        %10911 = vst.msk [vmem:[#allocation3 + $0x29] sm:$0x1] %vm10899, 0.0
        %10912 = vst.msk [vmem:[#allocation3 + $0x41] sm:$0x1] %vm10899, 0.0
        %10913 = vst.msk [vmem:[#allocation3 + $0x59] sm:$0x1] %vm10899, 0.0
        %10914 = vst.msk [vmem:[#allocation3 + $0x71] sm:$0x1] %vm10899, 0.0
        %10915 = vst.msk [vmem:[#allocation3 + $0x89] sm:$0x1] %vm10899, 0.0
        %10916 = vst.msk [vmem:[#allocation3 + $0xa1] sm:$0x1] %vm10899, 0.0
        %10917 = vst.msk [vmem:[#allocation3 + $0xb9] sm:$0x1] %vm10899, 0.0
        %10918 = vst.msk [vmem:[#allocation3 + $0xd1] sm:$0x1] %vm10899, 0.0
        %10919 = vst.msk [vmem:[#allocation3 + $0xe9] sm:$0x1] %vm10899, 0.0
        %p10920 = scmp.eq.s32.totalorder %s25, 0
        // Predicated region
        $region45: #{tpu_custom_call.1} parent=43 // pred_check
          %p10921 = pneg %p10920
        $region46: #{tpu_custom_call.1} parent=43 // pred_check_branch
          %10923 = sbr.rel (%p10921) target = $region48
        $region47: #{tpu_custom_call.1} parent=43 // pred_region
          %10924 = vst.msk [vmem:[#allocation3] sm:$0xff] %vm344, 0.0
          %10925 = vst.msk [vmem:[#allocation3 + $0x8] sm:$0xff] %vm344, 0.0
          %10926 = vst.msk [vmem:[#allocation3 + $0x10] sm:$0x3] %vm378, 0.0
        $region48: #{tpu_custom_call.1} parent=43 // pred_fallthru
          _
        %p10927 = scmp.eq.s32.totalorder %s25, 1
        // Predicated region
        $region49: #{tpu_custom_call.1} parent=43 // pred_check
          %p10928 = pneg %p10927
        $region50: #{tpu_custom_call.1} parent=43 // pred_check_branch
          %10930 = sbr.rel (%p10928) target = $region52
        $region51: #{tpu_custom_call.1} parent=43 // pred_region
          %s10931 = scalar_lea.vmem [#allocation3], 216
          %10932 = vst.msk [vmem:[%s10931] sm:$0xff] %vm344, 0.0
          %10933 = vst.msk [vmem:[%s10931 + $0x8] sm:$0xff] %vm344, 0.0
          %10934 = vst.msk [vmem:[%s10931 + $0x10] sm:$0x3] %vm378, 0.0
        $region52: #{tpu_custom_call.1} parent=43 // pred_fallthru
          _
        %v10935 = vld [vmem:[#allocation3] sm:$0xff]
        %v10936 = vld [vmem:[#allocation3 + $0x8] sm:$0xff]
        %v10937 = vld [vmem:[#allocation3 + $0x18] sm:$0xff]
        %v10938 = vld [vmem:[#allocation3 + $0x20] sm:$0xff]
        %v10939 = vld [vmem:[#allocation3 + $0x30] sm:$0xff]
        %v10940 = vld [vmem:[#allocation3 + $0x38] sm:$0xff]
        %v10941 = vld [vmem:[#allocation3 + $0x48] sm:$0xff]
        %v10942 = vld [vmem:[#allocation3 + $0x50] sm:$0xff]
        %v10943 = vld [vmem:[#allocation3 + $0x60] sm:$0xff]
        %v10944 = vld [vmem:[#allocation3 + $0x68] sm:$0xff]
        %v10945 = vld [vmem:[#allocation3 + $0x78] sm:$0xff]
        %v10946 = vld [vmem:[#allocation3 + $0x80] sm:$0xff]
        %v10947 = vld [vmem:[#allocation3 + $0x90] sm:$0xff]
        %v10948 = vld [vmem:[#allocation3 + $0x98] sm:$0xff]
        %v10949 = vld [vmem:[#allocation3 + $0xa8] sm:$0xff]
        %v10950 = vld [vmem:[#allocation3 + $0xb0] sm:$0xff]
        %v10951 = vpack.c.bf16 %v10936, %v10935
        %v10952 = vpack.c.bf16 %v10938, %v10937
        %v10953 = vpack.c.bf16 %v10940, %v10939
        %v10954 = vpack.c.bf16 %v10942, %v10941
        %v10955 = vpack.c.bf16 %v10944, %v10943
        %v10956 = vpack.c.bf16 %v10946, %v10945
        %v10957 = vpack.c.bf16 %v10948, %v10947
        %v10958 = vpack.c.bf16 %v10950, %v10949
        %v10967 = vunpack.c.l.b16 %v10951
        %v10968 = vunpack.c.h.b16 %v10951
        %v10969 = vunpack.c.l.b16 %v10952
        %v10970 = vunpack.c.h.b16 %v10952
        %v10971 = vunpack.c.l.b16 %v10953
        %v10972 = vunpack.c.h.b16 %v10953
        %v10973 = vunpack.c.l.b16 %v10954
        %v10974 = vunpack.c.h.b16 %v10954
        %v10975 = vunpack.c.l.b16 %v10955
        %v10976 = vunpack.c.h.b16 %v10955
        %v10977 = vunpack.c.l.b16 %v10956
        %v10978 = vunpack.c.h.b16 %v10956
        %v10979 = vunpack.c.l.b16 %v10957
        %v10980 = vunpack.c.h.b16 %v10957
        %v10981 = vunpack.c.l.b16 %v10958
        %v10982 = vunpack.c.h.b16 %v10958
        %v10983 = vpack.c.b16 %v10967, %v10967
        %v10984 = vpack.c.b16 %v10968, %v10968
        %v10985 = vpack.c.b16 %v10969, %v10969
        %v10986 = vpack.c.b16 %v10970, %v10970
        %v10987 = vpack.c.b16 %v10971, %v10971
        %v10988 = vpack.c.b16 %v10972, %v10972
        %v10989 = vpack.c.b16 %v10973, %v10973
        %v10990 = vpack.c.b16 %v10974, %v10974
        %v10991 = vpack.c.b16 %v10975, %v10975
        %v10992 = vpack.c.b16 %v10976, %v10976
        %v10993 = vpack.c.b16 %v10977, %v10977
        %v10994 = vpack.c.b16 %v10978, %v10978
        %v10995 = vpack.c.b16 %v10979, %v10979
        %v10996 = vpack.c.b16 %v10980, %v10980
        %v10997 = vpack.c.b16 %v10981, %v10981
        %v10998 = vpack.c.b16 %v10982, %v10982
        %11015 = vst.msk [vmem:[#allocation4] sm:$0xf] %vm1371, %v10983
        %11016 = vst.msk [vmem:[#allocation4 + $0x4] sm:$0xf] %vm1371, %v10984
        %11017 = vst.msk [vmem:[#allocation4 + $0x8] sm:$0xf] %vm1371, %v10985
        %11018 = vst.msk [vmem:[#allocation4 + $0xc] sm:$0xf] %vm1371, %v10986
        %11019 = vst.msk [vmem:[#allocation4 + $0x10] sm:$0xf] %vm1371, %v10987
        %11020 = vst.msk [vmem:[#allocation4 + $0x14] sm:$0xf] %vm1371, %v10988
        %11021 = vst.msk [vmem:[#allocation4 + $0x18] sm:$0xf] %vm1371, %v10989
        %11022 = vst.msk [vmem:[#allocation4 + $0x1c] sm:$0xf] %vm1371, %v10990
        %11023 = vst.msk [vmem:[#allocation4 + $0x20] sm:$0xf] %vm1371, %v10991
        %11024 = vst.msk [vmem:[#allocation4 + $0x24] sm:$0xf] %vm1371, %v10992
        %11025 = vst.msk [vmem:[#allocation4 + $0x28] sm:$0xf] %vm1371, %v10993
        %11026 = vst.msk [vmem:[#allocation4 + $0x2c] sm:$0xf] %vm1371, %v10994
        %11027 = vst.msk [vmem:[#allocation4 + $0x30] sm:$0xf] %vm1371, %v10995
        %11028 = vst.msk [vmem:[#allocation4 + $0x34] sm:$0xf] %vm1371, %v10996
        %11029 = vst.msk [vmem:[#allocation4 + $0x38] sm:$0xf] %vm1371, %v10997
        %11030 = vst.msk [vmem:[#allocation4 + $0x3c] sm:$0xf] %vm1371, %v10998
        %v11031 = vld [vmem:[#allocation3 + $0x1] sm:$0xff]
        %v11032 = vld [vmem:[#allocation3 + $0x9] sm:$0xff]
        %v11033 = vld [vmem:[#allocation3 + $0x19] sm:$0xff]
        %v11034 = vld [vmem:[#allocation3 + $0x21] sm:$0xff]
        %v11035 = vld [vmem:[#allocation3 + $0x31] sm:$0xff]
        %v11036 = vld [vmem:[#allocation3 + $0x39] sm:$0xff]
        %v11037 = vld [vmem:[#allocation3 + $0x49] sm:$0xff]
        %v11038 = vld [vmem:[#allocation3 + $0x51] sm:$0xff]
        %v11039 = vld [vmem:[#allocation3 + $0x61] sm:$0xff]
        %v11040 = vld [vmem:[#allocation3 + $0x69] sm:$0xff]
        %v11041 = vld [vmem:[#allocation3 + $0x79] sm:$0xff]
        %v11042 = vld [vmem:[#allocation3 + $0x81] sm:$0xff]
        %v11043 = vld [vmem:[#allocation3 + $0x91] sm:$0xff]
        %v11044 = vld [vmem:[#allocation3 + $0x99] sm:$0xff]
        %v11045 = vld [vmem:[#allocation3 + $0xa9] sm:$0xff]
        %v11046 = vld [vmem:[#allocation3 + $0xb1] sm:$0xff]
        %v11047 = vpack.c.bf16 %v11032, %v11031
        %v11048 = vpack.c.bf16 %v11034, %v11033
        %v11049 = vpack.c.bf16 %v11036, %v11035
        %v11050 = vpack.c.bf16 %v11038, %v11037
        %v11051 = vpack.c.bf16 %v11040, %v11039
        %v11052 = vpack.c.bf16 %v11042, %v11041
        %v11053 = vpack.c.bf16 %v11044, %v11043
        %v11054 = vpack.c.bf16 %v11046, %v11045
        %v11063 = vunpack.c.l.b16 %v11047
        %v11064 = vunpack.c.h.b16 %v11047
        %v11065 = vunpack.c.l.b16 %v11048
        %v11066 = vunpack.c.h.b16 %v11048
        %v11067 = vunpack.c.l.b16 %v11049
        %v11068 = vunpack.c.h.b16 %v11049
        %v11069 = vunpack.c.l.b16 %v11050
        %v11070 = vunpack.c.h.b16 %v11050
        %v11071 = vunpack.c.l.b16 %v11051
        %v11072 = vunpack.c.h.b16 %v11051
        %v11073 = vunpack.c.l.b16 %v11052
        %v11074 = vunpack.c.h.b16 %v11052
        %v11075 = vunpack.c.l.b16 %v11053
        %v11076 = vunpack.c.h.b16 %v11053
        %v11077 = vunpack.c.l.b16 %v11054
        %v11078 = vunpack.c.h.b16 %v11054
        %v11079 = vpack.c.b16 %v11063, %v11063
        %v11080 = vpack.c.b16 %v11064, %v11064
        %v11081 = vpack.c.b16 %v11065, %v11065
        %v11082 = vpack.c.b16 %v11066, %v11066
        %v11083 = vpack.c.b16 %v11067, %v11067
        %v11084 = vpack.c.b16 %v11068, %v11068
        %v11085 = vpack.c.b16 %v11069, %v11069
        %v11086 = vpack.c.b16 %v11070, %v11070
        %v11087 = vpack.c.b16 %v11071, %v11071
        %v11088 = vpack.c.b16 %v11072, %v11072
        %v11089 = vpack.c.b16 %v11073, %v11073
        %v11090 = vpack.c.b16 %v11074, %v11074
        %v11091 = vpack.c.b16 %v11075, %v11075
        %v11092 = vpack.c.b16 %v11076, %v11076
        %v11093 = vpack.c.b16 %v11077, %v11077
        %v11094 = vpack.c.b16 %v11078, %v11078
        %11095 = vrot.lane.b32.xlu0 %v11079, 8
        %v11096 = vpop.permute.xlu0 %11095
        %11097 = vrot.lane.b32.xlu0 %v11080, 8
        %v11098 = vpop.permute.xlu0 %11097
        %11099 = vrot.lane.b32.xlu0 %v11081, 8
        %v11100 = vpop.permute.xlu0 %11099
        %11101 = vrot.lane.b32.xlu0 %v11082, 8
        %v11102 = vpop.permute.xlu0 %11101
        %11103 = vrot.lane.b32.xlu0 %v11083, 8
        %v11104 = vpop.permute.xlu0 %11103
        %11105 = vrot.lane.b32.xlu0 %v11084, 8
        %v11106 = vpop.permute.xlu0 %11105
        %11107 = vrot.lane.b32.xlu0 %v11085, 8
        %v11108 = vpop.permute.xlu0 %11107
        %11109 = vrot.lane.b32.xlu0 %v11086, 8
        %v11110 = vpop.permute.xlu0 %11109
        %11111 = vrot.lane.b32.xlu0 %v11087, 8
        %v11112 = vpop.permute.xlu0 %11111
        %11113 = vrot.lane.b32.xlu0 %v11088, 8
        %v11114 = vpop.permute.xlu0 %11113
        %11115 = vrot.lane.b32.xlu0 %v11089, 8
        %v11116 = vpop.permute.xlu0 %11115
        %11117 = vrot.lane.b32.xlu0 %v11090, 8
        %v11118 = vpop.permute.xlu0 %11117
        %11119 = vrot.lane.b32.xlu0 %v11091, 8
        %v11120 = vpop.permute.xlu0 %11119
        %11121 = vrot.lane.b32.xlu0 %v11092, 8
        %v11122 = vpop.permute.xlu0 %11121
        %11123 = vrot.lane.b32.xlu0 %v11093, 8
        %v11124 = vpop.permute.xlu0 %11123
        %11125 = vrot.lane.b32.xlu0 %v11094, 8
        %v11126 = vpop.permute.xlu0 %11125
        %11143 = vst.msk [vmem:[#allocation4] sm:$0xf] %vm2409, %v11096
        %11144 = vst.msk [vmem:[#allocation4 + $0x4] sm:$0xf] %vm2409, %v11098
        %11145 = vst.msk [vmem:[#allocation4 + $0x8] sm:$0xf] %vm2409, %v11100
        %11146 = vst.msk [vmem:[#allocation4 + $0xc] sm:$0xf] %vm2409, %v11102
        %11147 = vst.msk [vmem:[#allocation4 + $0x10] sm:$0xf] %vm2409, %v11104
        %11148 = vst.msk [vmem:[#allocation4 + $0x14] sm:$0xf] %vm2409, %v11106
        %11149 = vst.msk [vmem:[#allocation4 + $0x18] sm:$0xf] %vm2409, %v11108
        %11150 = vst.msk [vmem:[#allocation4 + $0x1c] sm:$0xf] %vm2409, %v11110
        %11151 = vst.msk [vmem:[#allocation4 + $0x20] sm:$0xf] %vm2409, %v11112
        %11152 = vst.msk [vmem:[#allocation4 + $0x24] sm:$0xf] %vm2409, %v11114
        %11153 = vst.msk [vmem:[#allocation4 + $0x28] sm:$0xf] %vm2409, %v11116
        %11154 = vst.msk [vmem:[#allocation4 + $0x2c] sm:$0xf] %vm2409, %v11118
        %11155 = vst.msk [vmem:[#allocation4 + $0x30] sm:$0xf] %vm2409, %v11120
        %11156 = vst.msk [vmem:[#allocation4 + $0x34] sm:$0xf] %vm2409, %v11122
        %11157 = vst.msk [vmem:[#allocation4 + $0x38] sm:$0xf] %vm2409, %v11124
        %11158 = vst.msk [vmem:[#allocation4 + $0x3c] sm:$0xf] %vm2409, %v11126
        %v11159 = vld [vmem:[#allocation3 + $0x2] sm:$0xff]
        %v11160 = vld [vmem:[#allocation3 + $0xa] sm:$0xff]
        %v11161 = vld [vmem:[#allocation3 + $0x1a] sm:$0xff]
        %v11162 = vld [vmem:[#allocation3 + $0x22] sm:$0xff]
        %v11163 = vld [vmem:[#allocation3 + $0x32] sm:$0xff]
        %v11164 = vld [vmem:[#allocation3 + $0x3a] sm:$0xff]
        %v11165 = vld [vmem:[#allocation3 + $0x4a] sm:$0xff]
        %v11166 = vld [vmem:[#allocation3 + $0x52] sm:$0xff]
        %v11167 = vld [vmem:[#allocation3 + $0x62] sm:$0xff]
        %v11168 = vld [vmem:[#allocation3 + $0x6a] sm:$0xff]
        %v11169 = vld [vmem:[#allocation3 + $0x7a] sm:$0xff]
        %v11170 = vld [vmem:[#allocation3 + $0x82] sm:$0xff]
        %v11171 = vld [vmem:[#allocation3 + $0x92] sm:$0xff]
        %v11172 = vld [vmem:[#allocation3 + $0x9a] sm:$0xff]
        %v11173 = vld [vmem:[#allocation3 + $0xaa] sm:$0xff]
        %v11174 = vld [vmem:[#allocation3 + $0xb2] sm:$0xff]
        %v11175 = vpack.c.bf16 %v11160, %v11159
        %v11176 = vpack.c.bf16 %v11162, %v11161
        %v11177 = vpack.c.bf16 %v11164, %v11163
        %v11178 = vpack.c.bf16 %v11166, %v11165
        %v11179 = vpack.c.bf16 %v11168, %v11167
        %v11180 = vpack.c.bf16 %v11170, %v11169
        %v11181 = vpack.c.bf16 %v11172, %v11171
        %v11182 = vpack.c.bf16 %v11174, %v11173
        %v11191 = vunpack.c.l.b16 %v11175
        %v11192 = vunpack.c.h.b16 %v11175
        %v11193 = vunpack.c.l.b16 %v11176
        %v11194 = vunpack.c.h.b16 %v11176
        %v11195 = vunpack.c.l.b16 %v11177
        %v11196 = vunpack.c.h.b16 %v11177
        %v11197 = vunpack.c.l.b16 %v11178
        %v11198 = vunpack.c.h.b16 %v11178
        %v11199 = vunpack.c.l.b16 %v11179
        %v11200 = vunpack.c.h.b16 %v11179
        %v11201 = vunpack.c.l.b16 %v11180
        %v11202 = vunpack.c.h.b16 %v11180
        %v11203 = vunpack.c.l.b16 %v11181
        %v11204 = vunpack.c.h.b16 %v11181
        %v11205 = vunpack.c.l.b16 %v11182
        %v11206 = vunpack.c.h.b16 %v11182
        %v11207 = vpack.c.b16 %v11191, %v11191
        %v11208 = vpack.c.b16 %v11192, %v11192
        %v11209 = vpack.c.b16 %v11193, %v11193
        %v11210 = vpack.c.b16 %v11194, %v11194
        %v11211 = vpack.c.b16 %v11195, %v11195
        %v11212 = vpack.c.b16 %v11196, %v11196
        %v11213 = vpack.c.b16 %v11197, %v11197
        %v11214 = vpack.c.b16 %v11198, %v11198
        %v11215 = vpack.c.b16 %v11199, %v11199
        %v11216 = vpack.c.b16 %v11200, %v11200
        %v11217 = vpack.c.b16 %v11201, %v11201
        %v11218 = vpack.c.b16 %v11202, %v11202
        %v11219 = vpack.c.b16 %v11203, %v11203
        %v11220 = vpack.c.b16 %v11204, %v11204
        %v11221 = vpack.c.b16 %v11205, %v11205
        %v11222 = vpack.c.b16 %v11206, %v11206
        %11223 = vrot.lane.b32.xlu0 %v11207, 16
        %v11224 = vpop.permute.xlu0 %11223
        %11225 = vrot.lane.b32.xlu0 %v11208, 16
        %v11226 = vpop.permute.xlu0 %11225
        %11227 = vrot.lane.b32.xlu0 %v11209, 16
        %v11228 = vpop.permute.xlu0 %11227
        %11229 = vrot.lane.b32.xlu0 %v11210, 16
        %v11230 = vpop.permute.xlu0 %11229
        %11231 = vrot.lane.b32.xlu0 %v11211, 16
        %v11232 = vpop.permute.xlu0 %11231
        %11233 = vrot.lane.b32.xlu0 %v11212, 16
        %v11234 = vpop.permute.xlu0 %11233
        %11235 = vrot.lane.b32.xlu0 %v11213, 16
        %v11236 = vpop.permute.xlu0 %11235
        %11237 = vrot.lane.b32.xlu0 %v11214, 16
        %v11238 = vpop.permute.xlu0 %11237
        %11239 = vrot.lane.b32.xlu0 %v11215, 16
        %v11240 = vpop.permute.xlu0 %11239
        %11241 = vrot.lane.b32.xlu0 %v11216, 16
        %v11242 = vpop.permute.xlu0 %11241
        %11243 = vrot.lane.b32.xlu0 %v11217, 16
        %v11244 = vpop.permute.xlu0 %11243
        %11245 = vrot.lane.b32.xlu0 %v11218, 16
        %v11246 = vpop.permute.xlu0 %11245
        %11247 = vrot.lane.b32.xlu0 %v11219, 16
        %v11248 = vpop.permute.xlu0 %11247
        %11249 = vrot.lane.b32.xlu0 %v11220, 16
        %v11250 = vpop.permute.xlu0 %11249
        %11251 = vrot.lane.b32.xlu0 %v11221, 16
        %v11252 = vpop.permute.xlu0 %11251
        %11253 = vrot.lane.b32.xlu0 %v11222, 16
        %v11254 = vpop.permute.xlu0 %11253
        %11271 = vst.msk [vmem:[#allocation4] sm:$0xf] %vm3448, %v11224
        %11272 = vst.msk [vmem:[#allocation4 + $0x4] sm:$0xf] %vm3448, %v11226
        %11273 = vst.msk [vmem:[#allocation4 + $0x8] sm:$0xf] %vm3448, %v11228
        %11274 = vst.msk [vmem:[#allocation4 + $0xc] sm:$0xf] %vm3448, %v11230
        %11275 = vst.msk [vmem:[#allocation4 + $0x10] sm:$0xf] %vm3448, %v11232
        %11276 = vst.msk [vmem:[#allocation4 + $0x14] sm:$0xf] %vm3448, %v11234
        %11277 = vst.msk [vmem:[#allocation4 + $0x18] sm:$0xf] %vm3448, %v11236
        %11278 = vst.msk [vmem:[#allocation4 + $0x1c] sm:$0xf] %vm3448, %v11238
        %11279 = vst.msk [vmem:[#allocation4 + $0x20] sm:$0xf] %vm3448, %v11240
        %11280 = vst.msk [vmem:[#allocation4 + $0x24] sm:$0xf] %vm3448, %v11242
        %11281 = vst.msk [vmem:[#allocation4 + $0x28] sm:$0xf] %vm3448, %v11244
        %11282 = vst.msk [vmem:[#allocation4 + $0x2c] sm:$0xf] %vm3448, %v11246
        %11283 = vst.msk [vmem:[#allocation4 + $0x30] sm:$0xf] %vm3448, %v11248
        %11284 = vst.msk [vmem:[#allocation4 + $0x34] sm:$0xf] %vm3448, %v11250
        %11285 = vst.msk [vmem:[#allocation4 + $0x38] sm:$0xf] %vm3448, %v11252
        %11286 = vst.msk [vmem:[#allocation4 + $0x3c] sm:$0xf] %vm3448, %v11254
        %s11287 = scalar_lea.vmem [#allocation3], 24
        %v11288 = vld [vmem:[%s11287] sm:$0xff]
        %v11289 = vld [vmem:[%s11287 + $0x8] sm:$0xff]
        %v11290 = vld [vmem:[%s11287 + $0x18] sm:$0xff]
        %v11291 = vld [vmem:[%s11287 + $0x20] sm:$0xff]
        %v11292 = vld [vmem:[%s11287 + $0x30] sm:$0xff]
        %v11293 = vld [vmem:[%s11287 + $0x38] sm:$0xff]
        %v11294 = vld [vmem:[%s11287 + $0x48] sm:$0xff]
        %v11295 = vld [vmem:[%s11287 + $0x50] sm:$0xff]
        %v11296 = vld [vmem:[%s11287 + $0x60] sm:$0xff]
        %v11297 = vld [vmem:[%s11287 + $0x68] sm:$0xff]
        %v11298 = vld [vmem:[%s11287 + $0x78] sm:$0xff]
        %v11299 = vld [vmem:[%s11287 + $0x80] sm:$0xff]
        %v11300 = vld [vmem:[%s11287 + $0x90] sm:$0xff]
        %v11301 = vld [vmem:[%s11287 + $0x98] sm:$0xff]
        %v11302 = vld [vmem:[%s11287 + $0xa8] sm:$0xff]
        %v11303 = vld [vmem:[%s11287 + $0xb0] sm:$0xff]
        %v11304 = vpack.c.bf16 %v11289, %v11288
        %v11305 = vpack.c.bf16 %v11291, %v11290
        %v11306 = vpack.c.bf16 %v11293, %v11292
        %v11307 = vpack.c.bf16 %v11295, %v11294
        %v11308 = vpack.c.bf16 %v11297, %v11296
        %v11309 = vpack.c.bf16 %v11299, %v11298
        %v11310 = vpack.c.bf16 %v11301, %v11300
        %v11311 = vpack.c.bf16 %v11303, %v11302
        %v11320 = vunpack.c.l.b16 %v11304
        %v11321 = vunpack.c.h.b16 %v11304
        %v11322 = vunpack.c.l.b16 %v11305
        %v11323 = vunpack.c.h.b16 %v11305
        %v11324 = vunpack.c.l.b16 %v11306
        %v11325 = vunpack.c.h.b16 %v11306
        %v11326 = vunpack.c.l.b16 %v11307
        %v11327 = vunpack.c.h.b16 %v11307
        %v11328 = vunpack.c.l.b16 %v11308
        %v11329 = vunpack.c.h.b16 %v11308
        %v11330 = vunpack.c.l.b16 %v11309
        %v11331 = vunpack.c.h.b16 %v11309
        %v11332 = vunpack.c.l.b16 %v11310
        %v11333 = vunpack.c.h.b16 %v11310
        %v11334 = vunpack.c.l.b16 %v11311
        %v11335 = vunpack.c.h.b16 %v11311
        %v11336 = vpack.c.b16 %v11320, %v11320
        %v11337 = vpack.c.b16 %v11321, %v11321
        %v11338 = vpack.c.b16 %v11322, %v11322
        %v11339 = vpack.c.b16 %v11323, %v11323
        %v11340 = vpack.c.b16 %v11324, %v11324
        %v11341 = vpack.c.b16 %v11325, %v11325
        %v11342 = vpack.c.b16 %v11326, %v11326
        %v11343 = vpack.c.b16 %v11327, %v11327
        %v11344 = vpack.c.b16 %v11328, %v11328
        %v11345 = vpack.c.b16 %v11329, %v11329
        %v11346 = vpack.c.b16 %v11330, %v11330
        %v11347 = vpack.c.b16 %v11331, %v11331
        %v11348 = vpack.c.b16 %v11332, %v11332
        %v11349 = vpack.c.b16 %v11333, %v11333
        %v11350 = vpack.c.b16 %v11334, %v11334
        %v11351 = vpack.c.b16 %v11335, %v11335
        %11352 = vrot.lane.b32.xlu0 %v11336, 24
        %v11353 = vpop.permute.xlu0 %11352
        %11354 = vrot.lane.b32.xlu0 %v11337, 24
        %v11355 = vpop.permute.xlu0 %11354
        %11356 = vrot.lane.b32.xlu0 %v11338, 24
        %v11357 = vpop.permute.xlu0 %11356
        %11358 = vrot.lane.b32.xlu0 %v11339, 24
        %v11359 = vpop.permute.xlu0 %11358
        %11360 = vrot.lane.b32.xlu0 %v11340, 24
        %v11361 = vpop.permute.xlu0 %11360
        %11362 = vrot.lane.b32.xlu0 %v11341, 24
        %v11363 = vpop.permute.xlu0 %11362
        %11364 = vrot.lane.b32.xlu0 %v11342, 24
        %v11365 = vpop.permute.xlu0 %11364
        %11366 = vrot.lane.b32.xlu0 %v11343, 24
        %v11367 = vpop.permute.xlu0 %11366
        %11368 = vrot.lane.b32.xlu0 %v11344, 24
        %v11369 = vpop.permute.xlu0 %11368
        %11370 = vrot.lane.b32.xlu0 %v11345, 24
        %v11371 = vpop.permute.xlu0 %11370
        %11372 = vrot.lane.b32.xlu0 %v11346, 24
        %v11373 = vpop.permute.xlu0 %11372
        %11374 = vrot.lane.b32.xlu0 %v11347, 24
        %v11375 = vpop.permute.xlu0 %11374
        %11376 = vrot.lane.b32.xlu0 %v11348, 24
        %v11377 = vpop.permute.xlu0 %11376
        %11378 = vrot.lane.b32.xlu0 %v11349, 24
        %v11379 = vpop.permute.xlu0 %11378
        %11380 = vrot.lane.b32.xlu0 %v11350, 24
        %v11381 = vpop.permute.xlu0 %11380
        %11382 = vrot.lane.b32.xlu0 %v11351, 24
        %v11383 = vpop.permute.xlu0 %11382
        %11400 = vst.msk [vmem:[#allocation4] sm:$0xf] %vm4488, %v11353
        %11401 = vst.msk [vmem:[#allocation4 + $0x4] sm:$0xf] %vm4488, %v11355
        %11402 = vst.msk [vmem:[#allocation4 + $0x8] sm:$0xf] %vm4488, %v11357
        %11403 = vst.msk [vmem:[#allocation4 + $0xc] sm:$0xf] %vm4488, %v11359
        %11404 = vst.msk [vmem:[#allocation4 + $0x10] sm:$0xf] %vm4488, %v11361
        %11405 = vst.msk [vmem:[#allocation4 + $0x14] sm:$0xf] %vm4488, %v11363
        %11406 = vst.msk [vmem:[#allocation4 + $0x18] sm:$0xf] %vm4488, %v11365
        %11407 = vst.msk [vmem:[#allocation4 + $0x1c] sm:$0xf] %vm4488, %v11367
        %11408 = vst.msk [vmem:[#allocation4 + $0x20] sm:$0xf] %vm4488, %v11369
        %11409 = vst.msk [vmem:[#allocation4 + $0x24] sm:$0xf] %vm4488, %v11371
        %11410 = vst.msk [vmem:[#allocation4 + $0x28] sm:$0xf] %vm4488, %v11373
        %11411 = vst.msk [vmem:[#allocation4 + $0x2c] sm:$0xf] %vm4488, %v11375
        %11412 = vst.msk [vmem:[#allocation4 + $0x30] sm:$0xf] %vm4488, %v11377
        %11413 = vst.msk [vmem:[#allocation4 + $0x34] sm:$0xf] %vm4488, %v11379
        %11414 = vst.msk [vmem:[#allocation4 + $0x38] sm:$0xf] %vm4488, %v11381
        %11415 = vst.msk [vmem:[#allocation4 + $0x3c] sm:$0xf] %vm4488, %v11383
        %v11416 = vld [vmem:[%s11287 + $0x1] sm:$0xff]
        %v11417 = vld [vmem:[%s11287 + $0x9] sm:$0xff]
        %v11418 = vld [vmem:[%s11287 + $0x19] sm:$0xff]
        %v11419 = vld [vmem:[%s11287 + $0x21] sm:$0xff]
        %v11420 = vld [vmem:[%s11287 + $0x31] sm:$0xff]
        %v11421 = vld [vmem:[%s11287 + $0x39] sm:$0xff]
        %v11422 = vld [vmem:[%s11287 + $0x49] sm:$0xff]
        %v11423 = vld [vmem:[%s11287 + $0x51] sm:$0xff]
        %v11424 = vld [vmem:[%s11287 + $0x61] sm:$0xff]
        %v11425 = vld [vmem:[%s11287 + $0x69] sm:$0xff]
        %v11426 = vld [vmem:[%s11287 + $0x79] sm:$0xff]
        %v11427 = vld [vmem:[%s11287 + $0x81] sm:$0xff]
        %v11428 = vld [vmem:[%s11287 + $0x91] sm:$0xff]
        %v11429 = vld [vmem:[%s11287 + $0x99] sm:$0xff]
        %v11430 = vld [vmem:[%s11287 + $0xa9] sm:$0xff]
        %v11431 = vld [vmem:[%s11287 + $0xb1] sm:$0xff]
        %v11432 = vpack.c.bf16 %v11417, %v11416
        %v11433 = vpack.c.bf16 %v11419, %v11418
        %v11434 = vpack.c.bf16 %v11421, %v11420
        %v11435 = vpack.c.bf16 %v11423, %v11422
        %v11436 = vpack.c.bf16 %v11425, %v11424
        %v11437 = vpack.c.bf16 %v11427, %v11426
        %v11438 = vpack.c.bf16 %v11429, %v11428
        %v11439 = vpack.c.bf16 %v11431, %v11430
        %v11448 = vunpack.c.l.b16 %v11432
        %v11449 = vunpack.c.h.b16 %v11432
        %v11450 = vunpack.c.l.b16 %v11433
        %v11451 = vunpack.c.h.b16 %v11433
        %v11452 = vunpack.c.l.b16 %v11434
        %v11453 = vunpack.c.h.b16 %v11434
        %v11454 = vunpack.c.l.b16 %v11435
        %v11455 = vunpack.c.h.b16 %v11435
        %v11456 = vunpack.c.l.b16 %v11436
        %v11457 = vunpack.c.h.b16 %v11436
        %v11458 = vunpack.c.l.b16 %v11437
        %v11459 = vunpack.c.h.b16 %v11437
        %v11460 = vunpack.c.l.b16 %v11438
        %v11461 = vunpack.c.h.b16 %v11438
        %v11462 = vunpack.c.l.b16 %v11439
        %v11463 = vunpack.c.h.b16 %v11439
        %v11464 = vpack.c.b16 %v11448, %v11448
        %v11465 = vpack.c.b16 %v11449, %v11449
        %v11466 = vpack.c.b16 %v11450, %v11450
        %v11467 = vpack.c.b16 %v11451, %v11451
        %v11468 = vpack.c.b16 %v11452, %v11452
        %v11469 = vpack.c.b16 %v11453, %v11453
        %v11470 = vpack.c.b16 %v11454, %v11454
        %v11471 = vpack.c.b16 %v11455, %v11455
        %v11472 = vpack.c.b16 %v11456, %v11456
        %v11473 = vpack.c.b16 %v11457, %v11457
        %v11474 = vpack.c.b16 %v11458, %v11458
        %v11475 = vpack.c.b16 %v11459, %v11459
        %v11476 = vpack.c.b16 %v11460, %v11460
        %v11477 = vpack.c.b16 %v11461, %v11461
        %v11478 = vpack.c.b16 %v11462, %v11462
        %v11479 = vpack.c.b16 %v11463, %v11463
        %11480 = vrot.lane.b32.xlu0 %v11464, 32
        %v11481 = vpop.permute.xlu0 %11480
        %11482 = vrot.lane.b32.xlu0 %v11465, 32
        %v11483 = vpop.permute.xlu0 %11482
        %11484 = vrot.lane.b32.xlu0 %v11466, 32
        %v11485 = vpop.permute.xlu0 %11484
        %11486 = vrot.lane.b32.xlu0 %v11467, 32
        %v11487 = vpop.permute.xlu0 %11486
        %11488 = vrot.lane.b32.xlu0 %v11468, 32
        %v11489 = vpop.permute.xlu0 %11488
        %11490 = vrot.lane.b32.xlu0 %v11469, 32
        %v11491 = vpop.permute.xlu0 %11490
        %11492 = vrot.lane.b32.xlu0 %v11470, 32
        %v11493 = vpop.permute.xlu0 %11492
        %11494 = vrot.lane.b32.xlu0 %v11471, 32
        %v11495 = vpop.permute.xlu0 %11494
        %11496 = vrot.lane.b32.xlu0 %v11472, 32
        %v11497 = vpop.permute.xlu0 %11496
        %11498 = vrot.lane.b32.xlu0 %v11473, 32
        %v11499 = vpop.permute.xlu0 %11498
        %11500 = vrot.lane.b32.xlu0 %v11474, 32
        %v11501 = vpop.permute.xlu0 %11500
        %11502 = vrot.lane.b32.xlu0 %v11475, 32
        %v11503 = vpop.permute.xlu0 %11502
        %11504 = vrot.lane.b32.xlu0 %v11476, 32
        %v11505 = vpop.permute.xlu0 %11504
        %11506 = vrot.lane.b32.xlu0 %v11477, 32
        %v11507 = vpop.permute.xlu0 %11506
        %11508 = vrot.lane.b32.xlu0 %v11478, 32
        %v11509 = vpop.permute.xlu0 %11508
        %11510 = vrot.lane.b32.xlu0 %v11479, 32
        %v11511 = vpop.permute.xlu0 %11510
        %11528 = vst.msk [vmem:[#allocation4] sm:$0xf] %vm5527, %v11481
        %11529 = vst.msk [vmem:[#allocation4 + $0x4] sm:$0xf] %vm5527, %v11483
        %11530 = vst.msk [vmem:[#allocation4 + $0x8] sm:$0xf] %vm5527, %v11485
        %11531 = vst.msk [vmem:[#allocation4 + $0xc] sm:$0xf] %vm5527, %v11487
        %11532 = vst.msk [vmem:[#allocation4 + $0x10] sm:$0xf] %vm5527, %v11489
        %11533 = vst.msk [vmem:[#allocation4 + $0x14] sm:$0xf] %vm5527, %v11491
        %11534 = vst.msk [vmem:[#allocation4 + $0x18] sm:$0xf] %vm5527, %v11493
        %11535 = vst.msk [vmem:[#allocation4 + $0x1c] sm:$0xf] %vm5527, %v11495
        %11536 = vst.msk [vmem:[#allocation4 + $0x20] sm:$0xf] %vm5527, %v11497
        %11537 = vst.msk [vmem:[#allocation4 + $0x24] sm:$0xf] %vm5527, %v11499
        %11538 = vst.msk [vmem:[#allocation4 + $0x28] sm:$0xf] %vm5527, %v11501
        %11539 = vst.msk [vmem:[#allocation4 + $0x2c] sm:$0xf] %vm5527, %v11503
        %11540 = vst.msk [vmem:[#allocation4 + $0x30] sm:$0xf] %vm5527, %v11505
        %11541 = vst.msk [vmem:[#allocation4 + $0x34] sm:$0xf] %vm5527, %v11507
        %11542 = vst.msk [vmem:[#allocation4 + $0x38] sm:$0xf] %vm5527, %v11509
        %11543 = vst.msk [vmem:[#allocation4 + $0x3c] sm:$0xf] %vm5527, %v11511
        %v11544 = vld [vmem:[%s11287 + $0x2] sm:$0xff]
        %v11545 = vld [vmem:[%s11287 + $0xa] sm:$0xff]
        %v11546 = vld [vmem:[%s11287 + $0x1a] sm:$0xff]
        %v11547 = vld [vmem:[%s11287 + $0x22] sm:$0xff]
        %v11548 = vld [vmem:[%s11287 + $0x32] sm:$0xff]
        %v11549 = vld [vmem:[%s11287 + $0x3a] sm:$0xff]
        %v11550 = vld [vmem:[%s11287 + $0x4a] sm:$0xff]
        %v11551 = vld [vmem:[%s11287 + $0x52] sm:$0xff]
        %v11552 = vld [vmem:[%s11287 + $0x62] sm:$0xff]
        %v11553 = vld [vmem:[%s11287 + $0x6a] sm:$0xff]
        %v11554 = vld [vmem:[%s11287 + $0x7a] sm:$0xff]
        %v11555 = vld [vmem:[%s11287 + $0x82] sm:$0xff]
        %v11556 = vld [vmem:[%s11287 + $0x92] sm:$0xff]
        %v11557 = vld [vmem:[%s11287 + $0x9a] sm:$0xff]
        %v11558 = vld [vmem:[%s11287 + $0xaa] sm:$0xff]
        %v11559 = vld [vmem:[%s11287 + $0xb2] sm:$0xff]
        %v11560 = vpack.c.bf16 %v11545, %v11544
        %v11561 = vpack.c.bf16 %v11547, %v11546
        %v11562 = vpack.c.bf16 %v11549, %v11548
        %v11563 = vpack.c.bf16 %v11551, %v11550
        %v11564 = vpack.c.bf16 %v11553, %v11552
        %v11565 = vpack.c.bf16 %v11555, %v11554
        %v11566 = vpack.c.bf16 %v11557, %v11556
        %v11567 = vpack.c.bf16 %v11559, %v11558
        %v11576 = vunpack.c.l.b16 %v11560
        %v11577 = vunpack.c.h.b16 %v11560
        %v11578 = vunpack.c.l.b16 %v11561
        %v11579 = vunpack.c.h.b16 %v11561
        %v11580 = vunpack.c.l.b16 %v11562
        %v11581 = vunpack.c.h.b16 %v11562
        %v11582 = vunpack.c.l.b16 %v11563
        %v11583 = vunpack.c.h.b16 %v11563
        %v11584 = vunpack.c.l.b16 %v11564
        %v11585 = vunpack.c.h.b16 %v11564
        %v11586 = vunpack.c.l.b16 %v11565
        %v11587 = vunpack.c.h.b16 %v11565
        %v11588 = vunpack.c.l.b16 %v11566
        %v11589 = vunpack.c.h.b16 %v11566
        %v11590 = vunpack.c.l.b16 %v11567
        %v11591 = vunpack.c.h.b16 %v11567
        %v11592 = vpack.c.b16 %v11576, %v11576
        %v11593 = vpack.c.b16 %v11577, %v11577
        %v11594 = vpack.c.b16 %v11578, %v11578
        %v11595 = vpack.c.b16 %v11579, %v11579
        %v11596 = vpack.c.b16 %v11580, %v11580
        %v11597 = vpack.c.b16 %v11581, %v11581
        %v11598 = vpack.c.b16 %v11582, %v11582
        %v11599 = vpack.c.b16 %v11583, %v11583
        %v11600 = vpack.c.b16 %v11584, %v11584
        %v11601 = vpack.c.b16 %v11585, %v11585
        %v11602 = vpack.c.b16 %v11586, %v11586
        %v11603 = vpack.c.b16 %v11587, %v11587
        %v11604 = vpack.c.b16 %v11588, %v11588
        %v11605 = vpack.c.b16 %v11589, %v11589
        %v11606 = vpack.c.b16 %v11590, %v11590
        %v11607 = vpack.c.b16 %v11591, %v11591
        %11608 = vrot.lane.b32.xlu0 %v11592, 40
        %v11609 = vpop.permute.xlu0 %11608
        %11610 = vrot.lane.b32.xlu0 %v11593, 40
        %v11611 = vpop.permute.xlu0 %11610
        %11612 = vrot.lane.b32.xlu0 %v11594, 40
        %v11613 = vpop.permute.xlu0 %11612
        %11614 = vrot.lane.b32.xlu0 %v11595, 40
        %v11615 = vpop.permute.xlu0 %11614
        %11616 = vrot.lane.b32.xlu0 %v11596, 40
        %v11617 = vpop.permute.xlu0 %11616
        %11618 = vrot.lane.b32.xlu0 %v11597, 40
        %v11619 = vpop.permute.xlu0 %11618
        %11620 = vrot.lane.b32.xlu0 %v11598, 40
        %v11621 = vpop.permute.xlu0 %11620
        %11622 = vrot.lane.b32.xlu0 %v11599, 40
        %v11623 = vpop.permute.xlu0 %11622
        %11624 = vrot.lane.b32.xlu0 %v11600, 40
        %v11625 = vpop.permute.xlu0 %11624
        %11626 = vrot.lane.b32.xlu0 %v11601, 40
        %v11627 = vpop.permute.xlu0 %11626
        %11628 = vrot.lane.b32.xlu0 %v11602, 40
        %v11629 = vpop.permute.xlu0 %11628
        %11630 = vrot.lane.b32.xlu0 %v11603, 40
        %v11631 = vpop.permute.xlu0 %11630
        %11632 = vrot.lane.b32.xlu0 %v11604, 40
        %v11633 = vpop.permute.xlu0 %11632
        %11634 = vrot.lane.b32.xlu0 %v11605, 40
        %v11635 = vpop.permute.xlu0 %11634
        %11636 = vrot.lane.b32.xlu0 %v11606, 40
        %v11637 = vpop.permute.xlu0 %11636
        %11638 = vrot.lane.b32.xlu0 %v11607, 40
        %v11639 = vpop.permute.xlu0 %11638
        %11656 = vst.msk [vmem:[#allocation4] sm:$0xf] %vm6566, %v11609
        %11657 = vst.msk [vmem:[#allocation4 + $0x4] sm:$0xf] %vm6566, %v11611
        %11658 = vst.msk [vmem:[#allocation4 + $0x8] sm:$0xf] %vm6566, %v11613
        %11659 = vst.msk [vmem:[#allocation4 + $0xc] sm:$0xf] %vm6566, %v11615
        %11660 = vst.msk [vmem:[#allocation4 + $0x10] sm:$0xf] %vm6566, %v11617
        %11661 = vst.msk [vmem:[#allocation4 + $0x14] sm:$0xf] %vm6566, %v11619
        %11662 = vst.msk [vmem:[#allocation4 + $0x18] sm:$0xf] %vm6566, %v11621
        %11663 = vst.msk [vmem:[#allocation4 + $0x1c] sm:$0xf] %vm6566, %v11623
        %11664 = vst.msk [vmem:[#allocation4 + $0x20] sm:$0xf] %vm6566, %v11625
        %11665 = vst.msk [vmem:[#allocation4 + $0x24] sm:$0xf] %vm6566, %v11627
        %11666 = vst.msk [vmem:[#allocation4 + $0x28] sm:$0xf] %vm6566, %v11629
        %11667 = vst.msk [vmem:[#allocation4 + $0x2c] sm:$0xf] %vm6566, %v11631
        %11668 = vst.msk [vmem:[#allocation4 + $0x30] sm:$0xf] %vm6566, %v11633
        %11669 = vst.msk [vmem:[#allocation4 + $0x34] sm:$0xf] %vm6566, %v11635
        %11670 = vst.msk [vmem:[#allocation4 + $0x38] sm:$0xf] %vm6566, %v11637
        %11671 = vst.msk [vmem:[#allocation4 + $0x3c] sm:$0xf] %vm6566, %v11639
        %s11672 = scalar_lea.vmem [#allocation3], 48
        %v11673 = vld [vmem:[%s11672] sm:$0xff]
        %v11674 = vld [vmem:[%s11672 + $0x8] sm:$0xff]
        %v11675 = vld [vmem:[%s11672 + $0x18] sm:$0xff]
        %v11676 = vld [vmem:[%s11672 + $0x20] sm:$0xff]
        %v11677 = vld [vmem:[%s11672 + $0x30] sm:$0xff]
        %v11678 = vld [vmem:[%s11672 + $0x38] sm:$0xff]
        %v11679 = vld [vmem:[%s11672 + $0x48] sm:$0xff]
        %v11680 = vld [vmem:[%s11672 + $0x50] sm:$0xff]
        %v11681 = vld [vmem:[%s11672 + $0x60] sm:$0xff]
        %v11682 = vld [vmem:[%s11672 + $0x68] sm:$0xff]
        %v11683 = vld [vmem:[%s11672 + $0x78] sm:$0xff]
        %v11684 = vld [vmem:[%s11672 + $0x80] sm:$0xff]
        %v11685 = vld [vmem:[%s11672 + $0x90] sm:$0xff]
        %v11686 = vld [vmem:[%s11672 + $0x98] sm:$0xff]
        %v11687 = vld [vmem:[%s11672 + $0xa8] sm:$0xff]
        %v11688 = vld [vmem:[%s11672 + $0xb0] sm:$0xff]
        %v11689 = vpack.c.bf16 %v11674, %v11673
        %v11690 = vpack.c.bf16 %v11676, %v11675
        %v11691 = vpack.c.bf16 %v11678, %v11677
        %v11692 = vpack.c.bf16 %v11680, %v11679
        %v11693 = vpack.c.bf16 %v11682, %v11681
        %v11694 = vpack.c.bf16 %v11684, %v11683
        %v11695 = vpack.c.bf16 %v11686, %v11685
        %v11696 = vpack.c.bf16 %v11688, %v11687
        %v11705 = vunpack.c.l.b16 %v11689
        %v11706 = vunpack.c.h.b16 %v11689
        %v11707 = vunpack.c.l.b16 %v11690
        %v11708 = vunpack.c.h.b16 %v11690
        %v11709 = vunpack.c.l.b16 %v11691
        %v11710 = vunpack.c.h.b16 %v11691
        %v11711 = vunpack.c.l.b16 %v11692
        %v11712 = vunpack.c.h.b16 %v11692
        %v11713 = vunpack.c.l.b16 %v11693
        %v11714 = vunpack.c.h.b16 %v11693
        %v11715 = vunpack.c.l.b16 %v11694
        %v11716 = vunpack.c.h.b16 %v11694
        %v11717 = vunpack.c.l.b16 %v11695
        %v11718 = vunpack.c.h.b16 %v11695
        %v11719 = vunpack.c.l.b16 %v11696
        %v11720 = vunpack.c.h.b16 %v11696
        %v11721 = vpack.c.b16 %v11705, %v11705
        %v11722 = vpack.c.b16 %v11706, %v11706
        %v11723 = vpack.c.b16 %v11707, %v11707
        %v11724 = vpack.c.b16 %v11708, %v11708
        %v11725 = vpack.c.b16 %v11709, %v11709
        %v11726 = vpack.c.b16 %v11710, %v11710
        %v11727 = vpack.c.b16 %v11711, %v11711
        %v11728 = vpack.c.b16 %v11712, %v11712
        %v11729 = vpack.c.b16 %v11713, %v11713
        %v11730 = vpack.c.b16 %v11714, %v11714
        %v11731 = vpack.c.b16 %v11715, %v11715
        %v11732 = vpack.c.b16 %v11716, %v11716
        %v11733 = vpack.c.b16 %v11717, %v11717
        %v11734 = vpack.c.b16 %v11718, %v11718
        %v11735 = vpack.c.b16 %v11719, %v11719
        %v11736 = vpack.c.b16 %v11720, %v11720
        %11737 = vrot.lane.b32.xlu0 %v11721, 48
        %v11738 = vpop.permute.xlu0 %11737
        %11739 = vrot.lane.b32.xlu0 %v11722, 48
        %v11740 = vpop.permute.xlu0 %11739
        %11741 = vrot.lane.b32.xlu0 %v11723, 48
        %v11742 = vpop.permute.xlu0 %11741
        %11743 = vrot.lane.b32.xlu0 %v11724, 48
        %v11744 = vpop.permute.xlu0 %11743
        %11745 = vrot.lane.b32.xlu0 %v11725, 48
        %v11746 = vpop.permute.xlu0 %11745
        %11747 = vrot.lane.b32.xlu0 %v11726, 48
        %v11748 = vpop.permute.xlu0 %11747
        %11749 = vrot.lane.b32.xlu0 %v11727, 48
        %v11750 = vpop.permute.xlu0 %11749
        %11751 = vrot.lane.b32.xlu0 %v11728, 48
        %v11752 = vpop.permute.xlu0 %11751
        %11753 = vrot.lane.b32.xlu0 %v11729, 48
        %v11754 = vpop.permute.xlu0 %11753
        %11755 = vrot.lane.b32.xlu0 %v11730, 48
        %v11756 = vpop.permute.xlu0 %11755
        %11757 = vrot.lane.b32.xlu0 %v11731, 48
        %v11758 = vpop.permute.xlu0 %11757
        %11759 = vrot.lane.b32.xlu0 %v11732, 48
        %v11760 = vpop.permute.xlu0 %11759
        %11761 = vrot.lane.b32.xlu0 %v11733, 48
        %v11762 = vpop.permute.xlu0 %11761
        %11763 = vrot.lane.b32.xlu0 %v11734, 48
        %v11764 = vpop.permute.xlu0 %11763
        %11765 = vrot.lane.b32.xlu0 %v11735, 48
        %v11766 = vpop.permute.xlu0 %11765
        %11767 = vrot.lane.b32.xlu0 %v11736, 48
        %v11768 = vpop.permute.xlu0 %11767
        %11785 = vst.msk [vmem:[#allocation4] sm:$0xf] %vm7605, %v11738
        %11786 = vst.msk [vmem:[#allocation4 + $0x4] sm:$0xf] %vm7605, %v11740
        %11787 = vst.msk [vmem:[#allocation4 + $0x8] sm:$0xf] %vm7605, %v11742
        %11788 = vst.msk [vmem:[#allocation4 + $0xc] sm:$0xf] %vm7605, %v11744
        %11789 = vst.msk [vmem:[#allocation4 + $0x10] sm:$0xf] %vm7605, %v11746
        %11790 = vst.msk [vmem:[#allocation4 + $0x14] sm:$0xf] %vm7605, %v11748
        %11791 = vst.msk [vmem:[#allocation4 + $0x18] sm:$0xf] %vm7605, %v11750
        %11792 = vst.msk [vmem:[#allocation4 + $0x1c] sm:$0xf] %vm7605, %v11752
        %11793 = vst.msk [vmem:[#allocation4 + $0x20] sm:$0xf] %vm7605, %v11754
        %11794 = vst.msk [vmem:[#allocation4 + $0x24] sm:$0xf] %vm7605, %v11756
        %11795 = vst.msk [vmem:[#allocation4 + $0x28] sm:$0xf] %vm7605, %v11758
        %11796 = vst.msk [vmem:[#allocation4 + $0x2c] sm:$0xf] %vm7605, %v11760
        %11797 = vst.msk [vmem:[#allocation4 + $0x30] sm:$0xf] %vm7605, %v11762
        %11798 = vst.msk [vmem:[#allocation4 + $0x34] sm:$0xf] %vm7605, %v11764
        %11799 = vst.msk [vmem:[#allocation4 + $0x38] sm:$0xf] %vm7605, %v11766
        %11800 = vst.msk [vmem:[#allocation4 + $0x3c] sm:$0xf] %vm7605, %v11768
        %v11801 = vld [vmem:[%s11672 + $0x1] sm:$0xff]
        %v11802 = vld [vmem:[%s11672 + $0x9] sm:$0xff]
        %v11803 = vld [vmem:[%s11672 + $0x19] sm:$0xff]
        %v11804 = vld [vmem:[%s11672 + $0x21] sm:$0xff]
        %v11805 = vld [vmem:[%s11672 + $0x31] sm:$0xff]
        %v11806 = vld [vmem:[%s11672 + $0x39] sm:$0xff]
        %v11807 = vld [vmem:[%s11672 + $0x49] sm:$0xff]
        %v11808 = vld [vmem:[%s11672 + $0x51] sm:$0xff]
        %v11809 = vld [vmem:[%s11672 + $0x61] sm:$0xff]
        %v11810 = vld [vmem:[%s11672 + $0x69] sm:$0xff]
        %v11811 = vld [vmem:[%s11672 + $0x79] sm:$0xff]
        %v11812 = vld [vmem:[%s11672 + $0x81] sm:$0xff]
        %v11813 = vld [vmem:[%s11672 + $0x91] sm:$0xff]
        %v11814 = vld [vmem:[%s11672 + $0x99] sm:$0xff]
        %v11815 = vld [vmem:[%s11672 + $0xa9] sm:$0xff]
        %v11816 = vld [vmem:[%s11672 + $0xb1] sm:$0xff]
        %v11817 = vpack.c.bf16 %v11802, %v11801
        %v11818 = vpack.c.bf16 %v11804, %v11803
        %v11819 = vpack.c.bf16 %v11806, %v11805
        %v11820 = vpack.c.bf16 %v11808, %v11807
        %v11821 = vpack.c.bf16 %v11810, %v11809
        %v11822 = vpack.c.bf16 %v11812, %v11811
        %v11823 = vpack.c.bf16 %v11814, %v11813
        %v11824 = vpack.c.bf16 %v11816, %v11815
        %v11833 = vunpack.c.l.b16 %v11817
        %v11834 = vunpack.c.h.b16 %v11817
        %v11835 = vunpack.c.l.b16 %v11818
        %v11836 = vunpack.c.h.b16 %v11818
        %v11837 = vunpack.c.l.b16 %v11819
        %v11838 = vunpack.c.h.b16 %v11819
        %v11839 = vunpack.c.l.b16 %v11820
        %v11840 = vunpack.c.h.b16 %v11820
        %v11841 = vunpack.c.l.b16 %v11821
        %v11842 = vunpack.c.h.b16 %v11821
        %v11843 = vunpack.c.l.b16 %v11822
        %v11844 = vunpack.c.h.b16 %v11822
        %v11845 = vunpack.c.l.b16 %v11823
        %v11846 = vunpack.c.h.b16 %v11823
        %v11847 = vunpack.c.l.b16 %v11824
        %v11848 = vunpack.c.h.b16 %v11824
        %v11849 = vpack.c.b16 %v11833, %v11833
        %v11850 = vpack.c.b16 %v11834, %v11834
        %v11851 = vpack.c.b16 %v11835, %v11835
        %v11852 = vpack.c.b16 %v11836, %v11836
        %v11853 = vpack.c.b16 %v11837, %v11837
        %v11854 = vpack.c.b16 %v11838, %v11838
        %v11855 = vpack.c.b16 %v11839, %v11839
        %v11856 = vpack.c.b16 %v11840, %v11840
        %v11857 = vpack.c.b16 %v11841, %v11841
        %v11858 = vpack.c.b16 %v11842, %v11842
        %v11859 = vpack.c.b16 %v11843, %v11843
        %v11860 = vpack.c.b16 %v11844, %v11844
        %v11861 = vpack.c.b16 %v11845, %v11845
        %v11862 = vpack.c.b16 %v11846, %v11846
        %v11863 = vpack.c.b16 %v11847, %v11847
        %v11864 = vpack.c.b16 %v11848, %v11848
        %11865 = vrot.lane.b32.xlu0 %v11849, 56
        %v11866 = vpop.permute.xlu0 %11865
        %11867 = vrot.lane.b32.xlu0 %v11850, 56
        %v11868 = vpop.permute.xlu0 %11867
        %11869 = vrot.lane.b32.xlu0 %v11851, 56
        %v11870 = vpop.permute.xlu0 %11869
        %11871 = vrot.lane.b32.xlu0 %v11852, 56
        %v11872 = vpop.permute.xlu0 %11871
        %11873 = vrot.lane.b32.xlu0 %v11853, 56
        %v11874 = vpop.permute.xlu0 %11873
        %11875 = vrot.lane.b32.xlu0 %v11854, 56
        %v11876 = vpop.permute.xlu0 %11875
        %11877 = vrot.lane.b32.xlu0 %v11855, 56
        %v11878 = vpop.permute.xlu0 %11877
        %11879 = vrot.lane.b32.xlu0 %v11856, 56
        %v11880 = vpop.permute.xlu0 %11879
        %11881 = vrot.lane.b32.xlu0 %v11857, 56
        %v11882 = vpop.permute.xlu0 %11881
        %11883 = vrot.lane.b32.xlu0 %v11858, 56
        %v11884 = vpop.permute.xlu0 %11883
        %11885 = vrot.lane.b32.xlu0 %v11859, 56
        %v11886 = vpop.permute.xlu0 %11885
        %11887 = vrot.lane.b32.xlu0 %v11860, 56
        %v11888 = vpop.permute.xlu0 %11887
        %11889 = vrot.lane.b32.xlu0 %v11861, 56
        %v11890 = vpop.permute.xlu0 %11889
        %11891 = vrot.lane.b32.xlu0 %v11862, 56
        %v11892 = vpop.permute.xlu0 %11891
        %11893 = vrot.lane.b32.xlu0 %v11863, 56
        %v11894 = vpop.permute.xlu0 %11893
        %11895 = vrot.lane.b32.xlu0 %v11864, 56
        %v11896 = vpop.permute.xlu0 %11895
        %11913 = vst.msk [vmem:[#allocation4] sm:$0xf] %vm8644, %v11866
        %11914 = vst.msk [vmem:[#allocation4 + $0x4] sm:$0xf] %vm8644, %v11868
        %11915 = vst.msk [vmem:[#allocation4 + $0x8] sm:$0xf] %vm8644, %v11870
        %11916 = vst.msk [vmem:[#allocation4 + $0xc] sm:$0xf] %vm8644, %v11872
        %11917 = vst.msk [vmem:[#allocation4 + $0x10] sm:$0xf] %vm8644, %v11874
        %11918 = vst.msk [vmem:[#allocation4 + $0x14] sm:$0xf] %vm8644, %v11876
        %11919 = vst.msk [vmem:[#allocation4 + $0x18] sm:$0xf] %vm8644, %v11878
        %11920 = vst.msk [vmem:[#allocation4 + $0x1c] sm:$0xf] %vm8644, %v11880
        %11921 = vst.msk [vmem:[#allocation4 + $0x20] sm:$0xf] %vm8644, %v11882
        %11922 = vst.msk [vmem:[#allocation4 + $0x24] sm:$0xf] %vm8644, %v11884
        %11923 = vst.msk [vmem:[#allocation4 + $0x28] sm:$0xf] %vm8644, %v11886
        %11924 = vst.msk [vmem:[#allocation4 + $0x2c] sm:$0xf] %vm8644, %v11888
        %11925 = vst.msk [vmem:[#allocation4 + $0x30] sm:$0xf] %vm8644, %v11890
        %11926 = vst.msk [vmem:[#allocation4 + $0x34] sm:$0xf] %vm8644, %v11892
        %11927 = vst.msk [vmem:[#allocation4 + $0x38] sm:$0xf] %vm8644, %v11894
        %11928 = vst.msk [vmem:[#allocation4 + $0x3c] sm:$0xf] %vm8644, %v11896
        %v11929 = vld [vmem:[%s11672 + $0x2] sm:$0xff]
        %v11930 = vld [vmem:[%s11672 + $0xa] sm:$0xff]
        %v11931 = vld [vmem:[%s11672 + $0x1a] sm:$0xff]
        %v11932 = vld [vmem:[%s11672 + $0x22] sm:$0xff]
        %v11933 = vld [vmem:[%s11672 + $0x32] sm:$0xff]
        %v11934 = vld [vmem:[%s11672 + $0x3a] sm:$0xff]
        %v11935 = vld [vmem:[%s11672 + $0x4a] sm:$0xff]
        %v11936 = vld [vmem:[%s11672 + $0x52] sm:$0xff]
        %v11937 = vld [vmem:[%s11672 + $0x62] sm:$0xff]
        %v11938 = vld [vmem:[%s11672 + $0x6a] sm:$0xff]
        %v11939 = vld [vmem:[%s11672 + $0x7a] sm:$0xff]
        %v11940 = vld [vmem:[%s11672 + $0x82] sm:$0xff]
        %v11941 = vld [vmem:[%s11672 + $0x92] sm:$0xff]
        %v11942 = vld [vmem:[%s11672 + $0x9a] sm:$0xff]
        %v11943 = vld [vmem:[%s11672 + $0xaa] sm:$0xff]
        %v11944 = vld [vmem:[%s11672 + $0xb2] sm:$0xff]
        %v11945 = vpack.c.bf16 %v11930, %v11929
        %v11946 = vpack.c.bf16 %v11932, %v11931
        %v11947 = vpack.c.bf16 %v11934, %v11933
        %v11948 = vpack.c.bf16 %v11936, %v11935
        %v11949 = vpack.c.bf16 %v11938, %v11937
        %v11950 = vpack.c.bf16 %v11940, %v11939
        %v11951 = vpack.c.bf16 %v11942, %v11941
        %v11952 = vpack.c.bf16 %v11944, %v11943
        %v11961 = vunpack.c.l.b16 %v11945
        %v11962 = vunpack.c.h.b16 %v11945
        %v11963 = vunpack.c.l.b16 %v11946
        %v11964 = vunpack.c.h.b16 %v11946
        %v11965 = vunpack.c.l.b16 %v11947
        %v11966 = vunpack.c.h.b16 %v11947
        %v11967 = vunpack.c.l.b16 %v11948
        %v11968 = vunpack.c.h.b16 %v11948
        %v11969 = vunpack.c.l.b16 %v11949
        %v11970 = vunpack.c.h.b16 %v11949
        %v11971 = vunpack.c.l.b16 %v11950
        %v11972 = vunpack.c.h.b16 %v11950
        %v11973 = vunpack.c.l.b16 %v11951
        %v11974 = vunpack.c.h.b16 %v11951
        %v11975 = vunpack.c.l.b16 %v11952
        %v11976 = vunpack.c.h.b16 %v11952
        %v11977 = vpack.c.b16 %v11961, %v11961
        %v11978 = vpack.c.b16 %v11962, %v11962
        %v11979 = vpack.c.b16 %v11963, %v11963
        %v11980 = vpack.c.b16 %v11964, %v11964
        %v11981 = vpack.c.b16 %v11965, %v11965
        %v11982 = vpack.c.b16 %v11966, %v11966
        %v11983 = vpack.c.b16 %v11967, %v11967
        %v11984 = vpack.c.b16 %v11968, %v11968
        %v11985 = vpack.c.b16 %v11969, %v11969
        %v11986 = vpack.c.b16 %v11970, %v11970
        %v11987 = vpack.c.b16 %v11971, %v11971
        %v11988 = vpack.c.b16 %v11972, %v11972
        %v11989 = vpack.c.b16 %v11973, %v11973
        %v11990 = vpack.c.b16 %v11974, %v11974
        %v11991 = vpack.c.b16 %v11975, %v11975
        %v11992 = vpack.c.b16 %v11976, %v11976
        %11993 = vrot.lane.b32.xlu0 %v11977, 64
        %v11994 = vpop.permute.xlu0 %11993
        %11995 = vrot.lane.b32.xlu0 %v11978, 64
        %v11996 = vpop.permute.xlu0 %11995
        %11997 = vrot.lane.b32.xlu0 %v11979, 64
        %v11998 = vpop.permute.xlu0 %11997
        %11999 = vrot.lane.b32.xlu0 %v11980, 64
        %v12000 = vpop.permute.xlu0 %11999
        %12001 = vrot.lane.b32.xlu0 %v11981, 64
        %v12002 = vpop.permute.xlu0 %12001
        %12003 = vrot.lane.b32.xlu0 %v11982, 64
        %v12004 = vpop.permute.xlu0 %12003
        %12005 = vrot.lane.b32.xlu0 %v11983, 64
        %v12006 = vpop.permute.xlu0 %12005
        %12007 = vrot.lane.b32.xlu0 %v11984, 64
        %v12008 = vpop.permute.xlu0 %12007
        %12009 = vrot.lane.b32.xlu0 %v11985, 64
        %v12010 = vpop.permute.xlu0 %12009
        %12011 = vrot.lane.b32.xlu0 %v11986, 64
        %v12012 = vpop.permute.xlu0 %12011
        %12013 = vrot.lane.b32.xlu0 %v11987, 64
        %v12014 = vpop.permute.xlu0 %12013
        %12015 = vrot.lane.b32.xlu0 %v11988, 64
        %v12016 = vpop.permute.xlu0 %12015
        %12017 = vrot.lane.b32.xlu0 %v11989, 64
        %v12018 = vpop.permute.xlu0 %12017
        %12019 = vrot.lane.b32.xlu0 %v11990, 64
        %v12020 = vpop.permute.xlu0 %12019
        %12021 = vrot.lane.b32.xlu0 %v11991, 64
        %v12022 = vpop.permute.xlu0 %12021
        %12023 = vrot.lane.b32.xlu0 %v11992, 64
        %v12024 = vpop.permute.xlu0 %12023
        %12041 = vst.msk [vmem:[#allocation4] sm:$0xf] %vm9683, %v11994
        %12042 = vst.msk [vmem:[#allocation4 + $0x4] sm:$0xf] %vm9683, %v11996
        %12043 = vst.msk [vmem:[#allocation4 + $0x8] sm:$0xf] %vm9683, %v11998
        %12044 = vst.msk [vmem:[#allocation4 + $0xc] sm:$0xf] %vm9683, %v12000
        %12045 = vst.msk [vmem:[#allocation4 + $0x10] sm:$0xf] %vm9683, %v12002
        %12046 = vst.msk [vmem:[#allocation4 + $0x14] sm:$0xf] %vm9683, %v12004
        %12047 = vst.msk [vmem:[#allocation4 + $0x18] sm:$0xf] %vm9683, %v12006
        %12048 = vst.msk [vmem:[#allocation4 + $0x1c] sm:$0xf] %vm9683, %v12008
        %12049 = vst.msk [vmem:[#allocation4 + $0x20] sm:$0xf] %vm9683, %v12010
        %12050 = vst.msk [vmem:[#allocation4 + $0x24] sm:$0xf] %vm9683, %v12012
        %12051 = vst.msk [vmem:[#allocation4 + $0x28] sm:$0xf] %vm9683, %v12014
        %12052 = vst.msk [vmem:[#allocation4 + $0x2c] sm:$0xf] %vm9683, %v12016
        %12053 = vst.msk [vmem:[#allocation4 + $0x30] sm:$0xf] %vm9683, %v12018
        %12054 = vst.msk [vmem:[#allocation4 + $0x34] sm:$0xf] %vm9683, %v12020
        %12055 = vst.msk [vmem:[#allocation4 + $0x38] sm:$0xf] %vm9683, %v12022
        %12056 = vst.msk [vmem:[#allocation4 + $0x3c] sm:$0xf] %vm9683, %v12024
        %v12057 = vld [vmem:[%s4] sm:$0xf]
        %v12058 = vld [vmem:[#allocation4] sm:$0xf]
        %v12059 = vld [vmem:[#allocation4 + $0x4] sm:$0xf]
        %v12060 = vld [vmem:[#allocation4 + $0x8] sm:$0xf]
        %v12061 = vld [vmem:[#allocation4 + $0xc] sm:$0xf]
        %v12062 = vld [vmem:[#allocation4 + $0x10] sm:$0xf]
        %v12063 = vld [vmem:[#allocation4 + $0x14] sm:$0xf]
        %v12064 = vld [vmem:[#allocation4 + $0x18] sm:$0xf]
        %v12065 = vld [vmem:[#allocation4 + $0x1c] sm:$0xf]
        %v12066 = vld [vmem:[#allocation4 + $0x20] sm:$0xf]
        %v12067 = vld [vmem:[#allocation4 + $0x24] sm:$0xf]
        %v12068 = vld [vmem:[#allocation4 + $0x28] sm:$0xf]
        %v12069 = vld [vmem:[#allocation4 + $0x2c] sm:$0xf]
        %v12070 = vld [vmem:[#allocation4 + $0x30] sm:$0xf]
        %v12071 = vld [vmem:[#allocation4 + $0x34] sm:$0xf]
        %v12072 = vld [vmem:[#allocation4 + $0x38] sm:$0xf]
        %v12073 = vld [vmem:[#allocation4 + $0x3c] sm:$0xf]
        %v12074 = vld [vmem:[%s5] sm:$0xff]
        %12076 = vset.pattern.permute.xlu0 0
        %12077 = vperm.xlu0 %12076, %v12074
        %v12078 = vpop.permute.xlu0 %12077
        %v12096 = vunpack.c.l.b16 %v12058
        %v12097 = vunpack.c.l.b16 %v12059
        %v12098 = vunpack.c.l.b16 %v12060
        %v12099 = vunpack.c.l.b16 %v12061
        %v12100 = vunpack.c.l.b16 %v12062
        %v12101 = vunpack.c.l.b16 %v12063
        %v12102 = vunpack.c.l.b16 %v12064
        %v12103 = vunpack.c.l.b16 %v12065
        %v12104 = vunpack.c.l.b16 %v12066
        %v12105 = vunpack.c.l.b16 %v12067
        %v12106 = vunpack.c.l.b16 %v12068
        %v12107 = vunpack.c.l.b16 %v12069
        %v12108 = vunpack.c.l.b16 %v12070
        %v12109 = vunpack.c.l.b16 %v12071
        %v12110 = vunpack.c.l.b16 %v12072
        %v12111 = vunpack.c.l.b16 %v12073
        %v12112 = vpack.c.b16 %v12097, %v12096
        %v12113 = vpack.c.b16 %v12099, %v12098
        %v12114 = vpack.c.b16 %v12101, %v12100
        %v12115 = vpack.c.b16 %v12103, %v12102
        %v12116 = vpack.c.b16 %v12105, %v12104
        %v12117 = vpack.c.b16 %v12107, %v12106
        %v12118 = vpack.c.b16 %v12109, %v12108
        %v12119 = vpack.c.b16 %v12111, %v12110
        %v12121 = vsel %vm9832, %v12057, 0
        %v12124 = vsel %vm9832, %v12112, 0
        %v12127 = vsel %vm9832, %v12113, 0
        %v12130 = vsel %vm9832, %v12114, 0
        %v12133 = vsel %vm9832, %v12115, 0
        %v12136 = vsel %vm9832, %v12116, 0
        %v12139 = vsel %vm9832, %v12117, 0
        %v12142 = vsel %vm9832, %v12118, 0
        %v12145 = vsel %vm9832, %v12119, 0
        %12147 = vmatprep.subr.bf16.mxu0 0
        %12148 = vmatpush1.bf16.xpose.msra.mxu0 %v12145
        %12149 = vmatprep.subr.bf16.mxu0 0
        %12150 = vmatpush1.bf16.xpose.msra.mxu0 %v12142
        %12151 = vmatprep.subr.bf16.mxu0 0
        %12152 = vmatpush1.bf16.xpose.msra.mxu0 %v12139
        %12153 = vmatprep.subr.bf16.mxu0 0
        %12154 = vmatpush1.bf16.xpose.msra.mxu0 %v12136
        %12155 = vmatprep.subr.bf16.mxu0 0
        %12156 = vmatpush1.bf16.xpose.msra.mxu0 %v12133
        %12157 = vmatprep.subr.bf16.mxu0 0
        %12158 = vmatpush1.bf16.xpose.msra.mxu0 %v12130
        %12159 = vmatprep.subr.bf16.mxu0 0
        %12160 = vmatpush1.bf16.xpose.msra.mxu0 %v12127
        %12161 = vmatprep.subr.bf16.mxu0 0
        %12162 = vmatpush1.bf16.xpose.msra.mxu0 %v12124
        %12163 = vmatprep.subr.bf16.mxu0 0
        %12164 = vmatpush2.bf16.xpose.msra.mxu0 0
        %12165 = vmatprep.subr.bf16.mxu0 0
        %12166 = vmatpush2.bf16.xpose.msra.mxu0 0
        %12167 = vmatprep.subr.bf16.mxu0 0
        %12168 = vmatpush2.bf16.xpose.msra.mxu0 0
        %12169 = vmatprep.subr.bf16.mxu0 0
        %12170 = vmatpush2.bf16.xpose.msra.mxu0 0
        %12171 = vmatprep.subr.bf16.mxu0 0
        %12172 = vmatpush2.bf16.xpose.msra.mxu0 0
        %12173 = vmatprep.subr.bf16.mxu0 0
        %12174 = vmatpush2.bf16.xpose.msra.mxu0 0
        %12175 = vmatprep.subr.bf16.mxu0 0
        %12176 = vmatpush2.bf16.xpose.msra.mxu0 0
        %12177 = vmatprep.subr.bf16.mxu0 0
        %12178 = vmatpush2.bf16.xpose.msra.mxu0 0
        %12179 = vmatprep.mubr.bf16.mxu0 0
        %12180 = vmatmul.mubr.bf16.gmra.mxu0 %v12121
        %v12181 = vpop.f32.mrf.mxu0
        %v12182 = vadd.f32 %v12078, %v12181
        %v12183 = vpop.f32.mrf.mxu0
        %v12184 = vpop.f32.mrf.mxu0
        %v12185 = vpop.f32.mrf.mxu0
        %12186 = vdwg.mxu0
        %v12187 = vld [vmem:[%s299] sm:$0xff]
        %v12188 = vadd.f32 %v12182, %v12187
        %12189 = vst [vmem:[%s291] sm:$0xff] %v12188
        %s12190 = sand.u32 %s184, 1
        %s12191 = scalar_lea.sflag [#allocation6], %s12190
        %s12192 = sand.u32 %s184, 1
        %s12193 = smul.addr %s12192, 8
        %s12194 = scalar_lea.vmem [#allocation5], %s12193
        // Predicated region
        $region53: #{tpu_custom_call.1} parent=43 // pred_check
          %p12195 = pneg %p194
        $region54: #{tpu_custom_call.1} parent=43 // pred_check_branch
          %12197 = sbr.rel (%p12195) target = $region56
        $region55: #{tpu_custom_call.1} parent=43 // pred_region
          %s12199 = ssub.s32 128, 128
          %12200 = vsyncadd %s12191, %s12199
          %s12201 = smul.addr %s24, 2
          %s12202 = sadd.s32 %s25, %s12201
          %s12203 = smul.addr %s12202, 128
          %s12204 = scalar_lea.hbm %s6, %s12203
          %s12206 = sshll.u32 %s12194, 4
          %s12207 = int_to_ptr.vmem [resolvable:$true] %s12206
          %12209 = dma.vmem_to_hbm [thread:$0]  %s12207, 128, %s12204, %s12191
        $region56: #{tpu_custom_call.1} parent=43 // pred_fallthru
          _
      $region44: #{tpu_custom_call.1} parent=5 // pred_fallthru
        _
      %p12210 = scmp.le.s32.totalorder 2, %s15
      // Predicated region
      $region57: #{tpu_custom_call.1} parent=5 // pred_check
        %p12211 = pneg %p12210
      $region58: #{tpu_custom_call.1} parent=5 // pred_check_branch
        %12213 = sbr.rel (%p12211) target = $region60
      $region59: #{tpu_custom_call.1} parent=5 // pred_region
        %s12214 = ssub.s32 %s15, 2
        // Predicated region
        $region61: #{tpu_custom_call.1} parent=59 // pred_check
          %p12215 = pneg %p200
        $region62: #{tpu_custom_call.1} parent=59 // pred_check_branch
          %12217 = sbr.rel (%p12215) target = $region64
        $region63: #{tpu_custom_call.1} parent=59 // pred_region
          %s12218 = sand.u32 %s185, 1
          %s12219 = scalar_lea.sflag [#allocation6], %s12218
          %s12220 = sand.u32 %s185, 1
          %s12221 = smul.addr %s12220, 8
          %s12222 = scalar_lea.vmem [#allocation5], %s12221
          %12223 = dma.done %s12219, 128
        $region64: #{tpu_custom_call.1} parent=59 // pred_fallthru
          _
      $region60: #{tpu_custom_call.1} parent=5 // pred_fallthru
        _
    $region6: #{tpu_custom_call.1} parent=1 // loop_footer
      %s19 = sadd.s32 1, %s15
    $region7: #{tpu_custom_call.1} parent=1 // loop_footer_branch
      %14 = sbr.rel target = $region3
    $region8: #{tpu_custom_call.1} parent=1 // loop_exit
      _
    %12224 = vsyncpa [#allocation6], 1
    %s12225 = scalar_lea.sflag [#allocation6], 1
    %12226 = vsyncpa %s12225, 1

</llo_original>
